<compile_context>
chip_gen: v7x
topology: tpu7x:2x2x1
jax: 0.10.0
libtpu: 0.0.40
codegen_flags: <defaults>
</compile_context>

<pallas_src>
import numpy as np
import jax
import jax.numpy as jnp
from jax import lax
from jax.experimental import pallas as pl
from jax.experimental.pallas import tpu as pltpu

K = 5                     # kernel_size (hard-coded to 5 in the PyTorch module)
BN_EPS = 1e-5             # torch BatchNorm1d default, train mode (batch stats)
F32 = jnp.float32

ENC_CH = [8, 16, 32, 64, 64, 128, 128]                       # encoder out-channels
DEC_SPEC = [(128, 128, 2), (128, 64, 1), (64, 64, 2),
            (64, 32, 2), (32, 16, 1), (16, 8, 2)]            # (Cin, Cout, padding)


# ------------------------- in-kernel helpers (on VMEM values) ----------------
# Only Mosaic-friendly primitives: contiguous static slices, concatenate,
# 2-D iota, 2-D matmuls, elementwise ops, keepdims reductions, 2-D transpose.

def _concat(pieces, axis):
    return pieces[0] if len(pieces) == 1 else jnp.concatenate(pieces, axis=axis)


def _sel(n_rows, n_cols, fn):
    """0/1 f32 selection matrix from 2-D iota (maxpool / upsample / flatten)."""
    r = lax.broadcasted_iota(jnp.int32, (n_rows, n_cols), 0)
    c = lax.broadcasted_iota(jnp.int32, (n_rows, n_cols), 1)
    return fn(r, c).astype(F32)


def _im2col(h, B, L, q, layout):
    """Stride-1 im2col with per-batch zero padding q (tap-major patch axis).
    'CL': h=(Cin, B*L) -> (K*Cin, B*Lo);   'LC': h=(B*L, Cin) -> (B*Lo, K*Cin)."""
    Lp = L + 2 * q
    Lo = L + 2 * q - K + 1
    if layout == "CL":
        C = h.shape[0]
        z = jnp.zeros((C, q), F32)
        hpad = _concat(sum([[z, h[:, b * L:(b + 1) * L], z] for b in range(B)], []), 1)
        taps = [_concat([hpad[:, b * Lp + t: b * Lp + t + Lo] for b in range(B)], 1)
                for t in range(K)]
        return _concat(taps, 0), Lo
    else:
        C = h.shape[1]
        z = jnp.zeros((q, C), F32)
        hpad = _concat(sum([[z, h[b * L:(b + 1) * L, :], z] for b in range(B)], []), 0)
        taps = [_concat([hpad[b * Lp + t: b * Lp + t + Lo, :] for b in range(B)], 0)
                for t in range(K)]
        return _concat(taps, 1), Lo


def _maxpool2(y, B, Lo, layout):
    """MaxPool1d(2,2): one combined [even | odd] 0/1 selection matmul (single
    MXU push), then an elementwise max over the two contiguous result halves."""
    n_out = B * (Lo // 2)
    if layout == "CL":
        n_in = y.shape[1]
        S = _sel(n_in, 2 * n_out,
                 lambda r, c: ((c < n_out) & (r == 2 * c)) |
                              ((c >= n_out) & (r == 2 * (c - n_out) + 1)))
        t = jnp.dot(y, S, preferred_element_type=F32)          # (Cout, 2*n_out)
        return jnp.maximum(t[:, :n_out], t[:, n_out:])
    n_in = y.shape[0]
    S = _sel(2 * n_out, n_in,
             lambda r, c: ((r < n_out) & (c == 2 * r)) |
                          ((r >= n_out) & (c == 2 * (r - n_out) + 1)))
    t = jnp.dot(S, y, preferred_element_type=F32)              # (2*n_out, Cout)
    return jnp.maximum(t[:n_out], t[n_out:])


def _upsample2(h, layout):
    """Nearest-neighbor Upsample(scale_factor=2) as a 0/1 matmul."""
    if layout == "CL":
        n = h.shape[1]
        U = _sel(n, 2 * n, lambda r, c: (c == 2 * r) | (c == 2 * r + 1))
        return jnp.dot(h, U, preferred_element_type=F32)
    n = h.shape[0]
    U = _sel(2 * n, n, lambda r, c: (r == 2 * c) | (r == 2 * c + 1))
    return jnp.dot(U, h, preferred_element_type=F32)


def _batchnorm(y, gamma, beta, layout):
    """Train-mode BatchNorm1d over (N, L) per channel (biased var, eps=1e-5)."""
    axis = 1 if layout == "CL" else 0
    n = y.shape[axis]
    mean = jnp.sum(y, axis=axis, keepdims=True) * (1.0 / n)
    d = y - mean
    var = jnp.sum(d * d, axis=axis, keepdims=True) * (1.0 / n)
    return d * lax.rsqrt(var + BN_EPS) * gamma + beta


def _conv_block(h, w, bgb_ref, B, L, q, layout, pool=False, act_bn=True):
    """Conv1d(pad=q, stride=1) as one matmul, optional MaxPool(2,2), bias,
    optional ReLU + BatchNorm1d.  Bias after max-pool == bias before (equiv.)."""
    xcol, Lo = _im2col(h, B, L, q, layout)
    if layout == "CL":
        y = jnp.dot(w, xcol, preferred_element_type=F32)     # (Cout, B*Lo)
    else:
        y = jnp.dot(xcol, w, preferred_element_type=F32)     # (B*Lo, Cout)
    if pool:
        y = _maxpool2(y, B, Lo, layout)
        Lo = Lo // 2
    y = y + bgb_ref[0]
    if act_bn:
        y = jnp.maximum(y, 0.0)
        y = _batchnorm(y, bgb_ref[1], bgb_ref[2], layout)
    return y, Lo


# --------------------------- host-side weight plumbing -----------------------

def _conv_w(w, layout):
    """torch Conv1d weight (Cout, Cin, K) -> matmul operand (tap-major patch axis)."""
    cout, cin, k = w.shape
    m = jnp.transpose(w, (0, 2, 1)).reshape(cout, k * cin)   # (Cout, K*Cin)
    return m if layout == "CL" else m.T


def _ct_as_conv_w(w_ct):
    """ConvTranspose1d(stride=1, padding=p) == Conv1d(padding=K-1-p) with the
    kernel flipped along taps and in/out channel axes swapped."""
    return jnp.flip(jnp.transpose(w_ct, (1, 0, 2)), axis=2)


def _bgb(bias, gamma, beta, layout):
    v = jnp.stack([bias, gamma, beta], axis=0)               # (3, C)
    return v[:, :, None] if layout == "CL" else v[:, None, :]


def _layouts(B, L, flat_dim):
    """Per-layer layout: keep the larger of (channels, batch*length) on lanes."""
    enc, l = [], L
    for cout in ENC_CH:
        l //= 2
        enc.append("CL" if B * l >= cout else "LC")
    dec, l = [], flat_dim
    for (_, cout, p) in DEC_SPEC:
        l = 2 * l + K - 1 - 2 * p
        dec.append("CL" if B * l >= cout else "LC")
    return enc, dec, 2 * l                                    # final per-batch length


# ------------------------------- fused forward -------------------------------

def autoencoder_forward(x, params):
    B, C_in, L = x.shape
    F = params["flat_dim"]
    assert L == F * (2 ** 7), "sequence length must be flat_dim * 128"
    E = params["embed_w"].shape[0]
    enc_lay, dec_lay, L_final = _layouts(B, L, F)
    dec_pads = [p for (_, _, p) in DEC_SPEC]

    # ---- pack kernel inputs (weights re-laid-out once on host) ----
    ops = [x]
    for (w, b, g, bt), lay in zip(params["enc"], enc_lay):
        ops += [_conv_w(w, lay), _bgb(b, g, bt, lay)]
    ew = params["embed_w"]                                            # (E, 128*F)
    ops.append(jnp.transpose(ew.reshape(E, 128, F), (2, 1, 0)))       # (F, 128, E)
    ops.append(params["embed_b"].reshape(1, E))
    dw = params["dec_w"]                                              # (128*F, E)
    ops.append(jnp.transpose(dw.reshape(128, F, E), (1, 2, 0)))       # (F, E, 128)
    ops.append(jnp.transpose(params["dec_b"].reshape(128, F), (1, 0)).reshape(F, 1, 128))
    for (w, b, g, bt, _), lay in zip(params["dec"], dec_lay):
        ops += [_conv_w(_ct_as_conv_w(w), lay), _bgb(b, g, bt, lay)]
    ops.append(_conv_w(params["final_w"], "CL"))
    ops.append(params["final_b"].reshape(1, C_in, 1))

    def kernel(*refs):
        it = iter(refs)
        x_ref = next(it)
        enc_refs = [(next(it), next(it)) for _ in range(len(ENC_CH))]
        ew_ref, eb_ref = next(it), next(it)
        dw_ref, db_ref = next(it), next(it)
        dec_refs = [(next(it), next(it)) for _ in range(len(DEC_SPEC))]
        wf_ref, bf_ref = next(it), next(it)
        z_ref, emb_ref = next(it), next(it)

        # ---------------- encoder: 7x [conv same -> maxpool -> relu -> BN] ----
        h = _concat([x_ref[b] for b in range(B)], axis=1)     # CL: (C_in, B*L)
        cur, l = "CL", L
        for (w_ref, bgb_ref), lay in zip(enc_refs, enc_lay):
            if lay != cur:                                    # layout switch keeps the
                h = h.T                                       # big axis on the lanes
                cur = lay
            h, l = _conv_block(h, w_ref[...], bgb_ref, B, l, K // 2, lay, pool=True)
        if cur != "LC":
            h = h.T                                           # (B*F, 128) for flatten

        # ---------------- embed_linear: Flatten -> Linear ---------------------
        emb = None
        for li in range(F):
            hl = h if F == 1 else jnp.dot(
                _sel(B, B * F, lambda r, c: c == r * F + li), h,
                preferred_element_type=F32)
            t = jnp.dot(hl, ew_ref[li], preferred_element_type=F32)
            emb = t if emb is None else emb + t
        emb = emb + eb_ref[...]
        emb_ref[...] = emb                                    # (B, E)

        # ---------------- decode_linear: Linear -> ReLU, as (B*F, 128) --------
        z = None
        for li in range(F):
            zl = jnp.maximum(
                jnp.dot(emb, dw_ref[li], preferred_element_type=F32) + db_ref[li], 0.0)
            if F > 1:
                zl = jnp.dot(_sel(B * F, B, lambda r, c: r == c * F + li), zl,
                             preferred_element_type=F32)
            z = zl if z is None else z + zl

        # ---------------- decoder: 6x [up x2 -> convT -> relu -> BN] ----------
        cur, l = "LC", F
        for (w_ref, bgb_ref), p, lay in zip(dec_refs, dec_pads, dec_lay):
            if lay != cur:
                z = z.T
                cur = lay
            z = _upsample2(z, lay)
            z, l = _conv_block(z, w_ref[...], bgb_ref, B, 2 * l, K - 1 - p, lay)
        if cur != "CL":
            z = z.T
            cur = "CL"
        z = _upsample2(z, "CL")                               # final: up x2 + conv same
        z, l = _conv_block(z, wf_ref[...], bf_ref, B, 2 * l, K // 2, "CL", act_bn=False)

        for b in range(B):                                    # (C_in, B*Lf)->(B,C_in,Lf)
            z_ref[b] = z[:, b * l:(b + 1) * l]

    vmem = pl.BlockSpec(memory_space=pltpu.MemorySpace.VMEM)
    z, emb = pl.pallas_call(
        kernel,
        out_shape=(jax.ShapeDtypeStruct((B, C_in, L_final), F32),
                   jax.ShapeDtypeStruct((B, E), F32)),
        in_specs=[vmem] * len(ops),
        out_specs=(vmem, vmem),
    )(*ops)
    return z, emb


# ------------------------------ parameter init --------------------------------

def init_params(key, embed_dim, flat_dim, input_channels=1):
    ki = iter(jax.random.split(key, 64))

    def nrm(shape, scale):
        return jax.random.normal(next(ki), shape, F32) * scale

    params = {"flat_dim": flat_dim}
    enc, cin = [], input_channels
    for cout in ENC_CH:
        enc.append((nrm((cout, cin, K), 1.0 / np.sqrt(cin * K)),   # Conv1d (out,in,K)
                    nrm((cout,), 0.02),                            # bias
                    jnp.ones((cout,), F32),                        # BN gamma
                    jnp.zeros((cout,), F32)))                      # BN beta
        cin = cout
    params["enc"] = enc

    fin = 128 * flat_dim
    params["embed_w"] = nrm((embed_dim, fin), 1.0 / np.sqrt(fin))  # torch Linear (out,in)
    params["embed_b"] = nrm((embed_dim,), 0.02)
    params["dec_w"] = nrm((fin, embed_dim), 1.0 / np.sqrt(embed_dim))
    params["dec_b"] = nrm((fin,), 0.02)

    dec = []
    for cin_d, cout_d, pad in DEC_SPEC:
        dec.append((nrm((cin_d, cout_d, K), 1.0 / np.sqrt(cin_d * K)),  # ConvT (in,out,K)
                    nrm((cout_d,), 0.02),
                    jnp.ones((cout_d,), F32),
                    jnp.zeros((cout_d,), F32),
                    pad))
    params["dec"] = dec
    params["final_w"] = nrm((input_channels, 8, K), 1.0 / np.sqrt(8 * K))
    params["final_b"] = nrm((input_channels,), 0.02)
    return params


# ----------------------------------- main --------------------------------------

if __name__ == "__main__":
    key = jax.random.PRNGKey(0)
    pkey, xkey = jax.random.split(key)

    B, C_in, L = 2, 1, 128                 # length must be divisible by 2**7
    flat_dim = L // (2 ** 7)               # -> 1
    embed_dim = 8

    params = init_params(pkey, embed_dim, flat_dim, C_in)
    x = jax.random.normal(xkey, (B, C_in, L), F32)

    fwd = jax.jit(lambda xx: autoencoder_forward(xx, params))
    z, emb = fwd(x)
    jax.block_until_ready((z, emb))

    # Output length follows the PyTorch arithmetic: 128*flat_dim + 72.
    assert emb.shape == (B, embed_dim), emb.shape
    assert z.shape == (B, C_in, 128 * flat_dim + 72), z.shape
    assert bool(jnp.all(jnp.isfinite(z))) and bool(jnp.all(jnp.isfinite(emb)))
    print("KERNEL_OK")
</pallas_src>

<mosaic_0001>
module attributes {stable_mosaic.version = 11 : i64} {
  func.func @kernel(%arg0: memref<2x1x128xf32, #tpu.memory_space<vmem>>, %arg1: memref<8x5xf32, #tpu.memory_space<vmem>>, %arg2: memref<3x8x1xf32, #tpu.memory_space<vmem>>, %arg3: memref<16x40xf32, #tpu.memory_space<vmem>>, %arg4: memref<3x16x1xf32, #tpu.memory_space<vmem>>, %arg5: memref<32x80xf32, #tpu.memory_space<vmem>>, %arg6: memref<3x32x1xf32, #tpu.memory_space<vmem>>, %arg7: memref<160x64xf32, #tpu.memory_space<vmem>>, %arg8: memref<3x1x64xf32, #tpu.memory_space<vmem>>, %arg9: memref<320x64xf32, #tpu.memory_space<vmem>>, %arg10: memref<3x1x64xf32, #tpu.memory_space<vmem>>, %arg11: memref<320x128xf32, #tpu.memory_space<vmem>>, %arg12: memref<3x1x128xf32, #tpu.memory_space<vmem>>, %arg13: memref<640x128xf32, #tpu.memory_space<vmem>>, %arg14: memref<3x1x128xf32, #tpu.memory_space<vmem>>, %arg15: memref<1x128x8xf32, #tpu.memory_space<vmem>>, %arg16: memref<1x8xf32, #tpu.memory_space<vmem>>, %arg17: memref<1x8x128xf32, #tpu.memory_space<vmem>>, %arg18: memref<1x1x128xf32, #tpu.memory_space<vmem>>, %arg19: memref<640x128xf32, #tpu.memory_space<vmem>>, %arg20: memref<3x1x128xf32, #tpu.memory_space<vmem>>, %arg21: memref<640x64xf32, #tpu.memory_space<vmem>>, %arg22: memref<3x1x64xf32, #tpu.memory_space<vmem>>, %arg23: memref<320x64xf32, #tpu.memory_space<vmem>>, %arg24: memref<3x1x64xf32, #tpu.memory_space<vmem>>, %arg25: memref<32x320xf32, #tpu.memory_space<vmem>>, %arg26: memref<3x32x1xf32, #tpu.memory_space<vmem>>, %arg27: memref<16x160xf32, #tpu.memory_space<vmem>>, %arg28: memref<3x16x1xf32, #tpu.memory_space<vmem>>, %arg29: memref<8x80xf32, #tpu.memory_space<vmem>>, %arg30: memref<3x8x1xf32, #tpu.memory_space<vmem>>, %arg31: memref<1x40xf32, #tpu.memory_space<vmem>>, %arg32: memref<1x1x1xf32, #tpu.memory_space<vmem>>, %arg33: memref<2x1x200xf32, #tpu.memory_space<vmem>>, %arg34: memref<2x8xf32, #tpu.memory_space<vmem>>) attributes {dimension_semantics = [], scalar_prefetch = 0 : i64, scratch_operands = 0 : i64, tpu.core_type = #tpu.core_type<tc>} {
    %c0 = arith.constant 0 : index
    %c0_0 = arith.constant 0 : index
    %c0_1 = arith.constant 0 : index
    %0 = vector.load %arg0[%c0, %c0_0, %c0_1] : memref<2x1x128xf32, #tpu.memory_space<vmem>>, vector<1x1x128xf32>
    %1 = vector.shape_cast %0 : vector<1x1x128xf32> to vector<1x128xf32>
    %c1 = arith.constant 1 : index
    %c0_2 = arith.constant 0 : index
    %c0_3 = arith.constant 0 : index
    %2 = vector.load %arg0[%c1, %c0_2, %c0_3] : memref<2x1x128xf32, #tpu.memory_space<vmem>>, vector<1x1x128xf32>
    %3 = vector.shape_cast %2 : vector<1x1x128xf32> to vector<1x128xf32>
    %4 = tpu.concatenate %1, %3 in 1 : vector<1x128xf32>, vector<1x128xf32> -> vector<1x256xf32>
    %c0_4 = arith.constant 0 : index
    %c0_5 = arith.constant 0 : index
    %5 = vector.load %arg1[%c0_4, %c0_5] : memref<8x5xf32, #tpu.memory_space<vmem>>, vector<8x5xf32>
    %cst = arith.constant 0.000000e+00 : f32
    %6 = vector.broadcast %cst : f32 to vector<1x2xf32>
    %7 = vector.extract_strided_slice %4 {offsets = [0, 0], sizes = [1, 128], strides = [1, 1]} : vector<1x256xf32> to vector<1x128xf32>
    %8 = vector.extract_strided_slice %4 {offsets = [0, 128], sizes = [1, 128], strides = [1, 1]} : vector<1x256xf32> to vector<1x128xf32>
    %9 = tpu.concatenate %6, %7, %6, %6, %8, %6 in 1 : vector<1x2xf32>, vector<1x128xf32>, vector<1x2xf32>, vector<1x2xf32>, vector<1x128xf32>, vector<1x2xf32> -> vector<1x264xf32>
    %10 = vector.extract_strided_slice %9 {offsets = [0, 0], sizes = [1, 128], strides = [1, 1]} : vector<1x264xf32> to vector<1x128xf32>
    %11 = vector.extract_strided_slice %9 {offsets = [0, 132], sizes = [1, 128], strides = [1, 1]} : vector<1x264xf32> to vector<1x128xf32>
    %12 = tpu.concatenate %10, %11 in 1 : vector<1x128xf32>, vector<1x128xf32> -> vector<1x256xf32>
    %13 = vector.extract_strided_slice %9 {offsets = [0, 1], sizes = [1, 128], strides = [1, 1]} : vector<1x264xf32> to vector<1x128xf32>
    %14 = vector.extract_strided_slice %9 {offsets = [0, 133], sizes = [1, 128], strides = [1, 1]} : vector<1x264xf32> to vector<1x128xf32>
    %15 = tpu.concatenate %13, %14 in 1 : vector<1x128xf32>, vector<1x128xf32> -> vector<1x256xf32>
    %16 = vector.extract_strided_slice %9 {offsets = [0, 2], sizes = [1, 128], strides = [1, 1]} : vector<1x264xf32> to vector<1x128xf32>
    %17 = vector.extract_strided_slice %9 {offsets = [0, 134], sizes = [1, 128], strides = [1, 1]} : vector<1x264xf32> to vector<1x128xf32>
    %18 = tpu.concatenate %16, %17 in 1 : vector<1x128xf32>, vector<1x128xf32> -> vector<1x256xf32>
    %19 = vector.extract_strided_slice %9 {offsets = [0, 3], sizes = [1, 128], strides = [1, 1]} : vector<1x264xf32> to vector<1x128xf32>
    %20 = vector.extract_strided_slice %9 {offsets = [0, 135], sizes = [1, 128], strides = [1, 1]} : vector<1x264xf32> to vector<1x128xf32>
    %21 = tpu.concatenate %19, %20 in 1 : vector<1x128xf32>, vector<1x128xf32> -> vector<1x256xf32>
    %22 = vector.extract_strided_slice %9 {offsets = [0, 4], sizes = [1, 128], strides = [1, 1]} : vector<1x264xf32> to vector<1x128xf32>
    %23 = vector.extract_strided_slice %9 {offsets = [0, 136], sizes = [1, 128], strides = [1, 1]} : vector<1x264xf32> to vector<1x128xf32>
    %24 = tpu.concatenate %22, %23 in 1 : vector<1x128xf32>, vector<1x128xf32> -> vector<1x256xf32>
    %25 = tpu.concatenate %12, %15, %18, %21, %24 in 0 : vector<1x256xf32>, vector<1x256xf32>, vector<1x256xf32>, vector<1x256xf32>, vector<1x256xf32> -> vector<5x256xf32>
    %cst_6 = arith.constant dense<0.000000e+00> : vector<8x256xf32>
    %26 = tpu.matmul %5, %25, %cst_6 {dimension_numbers = #tpu.dot_dimension_numbers<[1], [0], [0], [1], [0, 0, 1, 1], [], []>} : vector<8x5xf32>, vector<5x256xf32>, vector<8x256xf32> -> vector<8x256xf32>
    %27 = tpu.iota {dimensions = array<i32: 0>} : vector<256x256xi32>
    %28 = tpu.iota {dimensions = array<i32: 1>} : vector<256x256xi32>
    %c128_i32 = arith.constant 128 : i32
    %29 = vector.broadcast %c128_i32 : i32 to vector<256x256xi32>
    %30 = arith.cmpi slt, %28, %29 : vector<256x256xi32>
    %c2_i32 = arith.constant 2 : i32
    %31 = vector.broadcast %c2_i32 : i32 to vector<256x256xi32>
    %32 = arith.muli %31, %28 : vector<256x256xi32>
    %33 = arith.cmpi eq, %27, %32 : vector<256x256xi32>
    %34 = arith.andi %30, %33 : vector<256x256xi1>
    %c128_i32_7 = arith.constant 128 : i32
    %35 = vector.broadcast %c128_i32_7 : i32 to vector<256x256xi32>
    %36 = arith.cmpi sge, %28, %35 : vector<256x256xi32>
    %c128_i32_8 = arith.constant 128 : i32
    %37 = vector.broadcast %c128_i32_8 : i32 to vector<256x256xi32>
    %38 = arith.subi %28, %37 : vector<256x256xi32>
    %c2_i32_9 = arith.constant 2 : i32
    %39 = vector.broadcast %c2_i32_9 : i32 to vector<256x256xi32>
    %40 = arith.muli %39, %38 : vector<256x256xi32>
    %c1_i32 = arith.constant 1 : i32
    %41 = vector.broadcast %c1_i32 : i32 to vector<256x256xi32>
    %42 = arith.addi %40, %41 : vector<256x256xi32>
    %43 = arith.cmpi eq, %27, %42 : vector<256x256xi32>
    %44 = arith.andi %36, %43 : vector<256x256xi1>
    %45 = arith.ori %34, %44 : vector<256x256xi1>
    %46 = arith.extui %45 : vector<256x256xi1> to vector<256x256xi32>
    %47 = arith.sitofp %46 : vector<256x256xi32> to vector<256x256xf32>
    %cst_10 = arith.constant dense<0.000000e+00> : vector<8x256xf32>
    %48 = tpu.matmul %26, %47, %cst_10 {dimension_numbers = #tpu.dot_dimension_numbers<[1], [0], [0], [1], [0, 0, 1, 1], [], []>} : vector<8x256xf32>, vector<256x256xf32>, vector<8x256xf32> -> vector<8x256xf32>
    %49 = vector.extract_strided_slice %48 {offsets = [0, 0], sizes = [8, 128], strides = [1, 1]} : vector<8x256xf32> to vector<8x128xf32>
    %50 = vector.extract_strided_slice %48 {offsets = [0, 128], sizes = [8, 128], strides = [1, 1]} : vector<8x256xf32> to vector<8x128xf32>
    %51 = arith.maximumf %49, %50 : vector<8x128xf32>
    %c0_11 = arith.constant 0 : index
    %c0_12 = arith.constant 0 : index
    %c0_13 = arith.constant 0 : index
    %52 = vector.load %arg2[%c0_11, %c0_12, %c0_13] : memref<3x8x1xf32, #tpu.memory_space<vmem>>, vector<1x8x1xf32>
    %53 = vector.shape_cast %52 : vector<1x8x1xf32> to vector<8x1xf32>
    %54 = vector.broadcast %53 : vector<8x1xf32> to vector<8x128xf32>
    %55 = arith.addf %51, %54 : vector<8x128xf32>
    %cst_14 = arith.constant 0.000000e+00 : f32
    %56 = vector.broadcast %cst_14 : f32 to vector<8x128xf32>
    %57 = arith.maximumf %55, %56 : vector<8x128xf32>
    %c1_15 = arith.constant 1 : index
    %c0_16 = arith.constant 0 : index
    %c0_17 = arith.constant 0 : index
    %58 = vector.load %arg2[%c1_15, %c0_16, %c0_17] : memref<3x8x1xf32, #tpu.memory_space<vmem>>, vector<1x8x1xf32>
    %59 = vector.shape_cast %58 : vector<1x8x1xf32> to vector<8x1xf32>
    %c2 = arith.constant 2 : index
    %c0_18 = arith.constant 0 : index
    %c0_19 = arith.constant 0 : index
    %60 = vector.load %arg2[%c2, %c0_18, %c0_19] : memref<3x8x1xf32, #tpu.memory_space<vmem>>, vector<1x8x1xf32>
    %61 = vector.shape_cast %60 : vector<1x8x1xf32> to vector<8x1xf32>
    %cst_20 = arith.constant dense<0.000000e+00> : vector<8xf32>
    %62 = vector.multi_reduction <add>, %57, %cst_20 [1] : vector<8x128xf32> to vector<8xf32>
    %63 = vector.shape_cast %62 : vector<8xf32> to vector<8x1xf32>
    %cst_21 = arith.constant 7.812500e-03 : f32
    %64 = vector.broadcast %cst_21 : f32 to vector<8x1xf32>
    %65 = arith.mulf %63, %64 : vector<8x1xf32>
    %66 = vector.broadcast %65 : vector<8x1xf32> to vector<8x128xf32>
    %67 = arith.subf %57, %66 : vector<8x128xf32>
    %68 = arith.mulf %67, %67 : vector<8x128xf32>
    %cst_22 = arith.constant dense<0.000000e+00> : vector<8xf32>
    %69 = vector.multi_reduction <add>, %68, %cst_22 [1] : vector<8x128xf32> to vector<8xf32>
    %70 = vector.shape_cast %69 : vector<8xf32> to vector<8x1xf32>
    %cst_23 = arith.constant 7.812500e-03 : f32
    %71 = vector.broadcast %cst_23 : f32 to vector<8x1xf32>
    %72 = arith.mulf %70, %71 : vector<8x1xf32>
    %cst_24 = arith.constant 9.99999974E-6 : f32
    %73 = vector.broadcast %cst_24 : f32 to vector<8x1xf32>
    %74 = arith.addf %72, %73 : vector<8x1xf32>
    %75 = math.rsqrt %74 : vector<8x1xf32>
    %76 = vector.broadcast %75 : vector<8x1xf32> to vector<8x128xf32>
    %77 = arith.mulf %67, %76 : vector<8x128xf32>
    %78 = vector.broadcast %59 : vector<8x1xf32> to vector<8x128xf32>
    %79 = arith.mulf %77, %78 : vector<8x128xf32>
    %80 = vector.broadcast %61 : vector<8x1xf32> to vector<8x128xf32>
    %81 = arith.addf %79, %80 : vector<8x128xf32>
    %c0_25 = arith.constant 0 : index
    %c0_26 = arith.constant 0 : index
    %82 = vector.load %arg3[%c0_25, %c0_26] : memref<16x40xf32, #tpu.memory_space<vmem>>, vector<16x40xf32>
    %cst_27 = arith.constant 0.000000e+00 : f32
    %83 = vector.broadcast %cst_27 : f32 to vector<8x2xf32>
    %84 = vector.extract_strided_slice %81 {offsets = [0, 0], sizes = [8, 64], strides = [1, 1]} : vector<8x128xf32> to vector<8x64xf32>
    %85 = vector.extract_strided_slice %81 {offsets = [0, 64], sizes = [8, 64], strides = [1, 1]} : vector<8x128xf32> to vector<8x64xf32>
    %86 = tpu.concatenate %83, %84, %83, %83, %85, %83 in 1 : vector<8x2xf32>, vector<8x64xf32>, vector<8x2xf32>, vector<8x2xf32>, vector<8x64xf32>, vector<8x2xf32> -> vector<8x136xf32>
    %87 = vector.extract_strided_slice %86 {offsets = [0, 0], sizes = [8, 64], strides = [1, 1]} : vector<8x136xf32> to vector<8x64xf32>
    %88 = vector.extract_strided_slice %86 {offsets = [0, 68], sizes = [8, 64], strides = [1, 1]} : vector<8x136xf32> to vector<8x64xf32>
    %89 = tpu.concatenate %87, %88 in 1 : vector<8x64xf32>, vector<8x64xf32> -> vector<8x128xf32>
    %90 = vector.extract_strided_slice %86 {offsets = [0, 1], sizes = [8, 64], strides = [1, 1]} : vector<8x136xf32> to vector<8x64xf32>
    %91 = vector.extract_strided_slice %86 {offsets = [0, 69], sizes = [8, 64], strides = [1, 1]} : vector<8x136xf32> to vector<8x64xf32>
    %92 = tpu.concatenate %90, %91 in 1 : vector<8x64xf32>, vector<8x64xf32> -> vector<8x128xf32>
    %93 = vector.extract_strided_slice %86 {offsets = [0, 2], sizes = [8, 64], strides = [1, 1]} : vector<8x136xf32> to vector<8x64xf32>
    %94 = vector.extract_strided_slice %86 {offsets = [0, 70], sizes = [8, 64], strides = [1, 1]} : vector<8x136xf32> to vector<8x64xf32>
    %95 = tpu.concatenate %93, %94 in 1 : vector<8x64xf32>, vector<8x64xf32> -> vector<8x128xf32>
    %96 = vector.extract_strided_slice %86 {offsets = [0, 3], sizes = [8, 64], strides = [1, 1]} : vector<8x136xf32> to vector<8x64xf32>
    %97 = vector.extract_strided_slice %86 {offsets = [0, 71], sizes = [8, 64], strides = [1, 1]} : vector<8x136xf32> to vector<8x64xf32>
    %98 = tpu.concatenate %96, %97 in 1 : vector<8x64xf32>, vector<8x64xf32> -> vector<8x128xf32>
    %99 = vector.extract_strided_slice %86 {offsets = [0, 4], sizes = [8, 64], strides = [1, 1]} : vector<8x136xf32> to vector<8x64xf32>
    %100 = vector.extract_strided_slice %86 {offsets = [0, 72], sizes = [8, 64], strides = [1, 1]} : vector<8x136xf32> to vector<8x64xf32>
    %101 = tpu.concatenate %99, %100 in 1 : vector<8x64xf32>, vector<8x64xf32> -> vector<8x128xf32>
    %102 = tpu.concatenate %89, %92, %95, %98, %101 in 0 : vector<8x128xf32>, vector<8x128xf32>, vector<8x128xf32>, vector<8x128xf32>, vector<8x128xf32> -> vector<40x128xf32>
    %cst_28 = arith.constant dense<0.000000e+00> : vector<16x128xf32>
    %103 = tpu.matmul %82, %102, %cst_28 {dimension_numbers = #tpu.dot_dimension_numbers<[1], [0], [0], [1], [0, 0, 1, 1], [], []>} : vector<16x40xf32>, vector<40x128xf32>, vector<16x128xf32> -> vector<16x128xf32>
    %104 = tpu.iota {dimensions = array<i32: 0>} : vector<128x128xi32>
    %105 = tpu.iota {dimensions = array<i32: 1>} : vector<128x128xi32>
    %c64_i32 = arith.constant 64 : i32
    %106 = vector.broadcast %c64_i32 : i32 to vector<128x128xi32>
    %107 = arith.cmpi slt, %105, %106 : vector<128x128xi32>
    %c2_i32_29 = arith.constant 2 : i32
    %108 = vector.broadcast %c2_i32_29 : i32 to vector<128x128xi32>
    %109 = arith.muli %108, %105 : vector<128x128xi32>
    %110 = arith.cmpi eq, %104, %109 : vector<128x128xi32>
    %111 = arith.andi %107, %110 : vector<128x128xi1>
    %c64_i32_30 = arith.constant 64 : i32
    %112 = vector.broadcast %c64_i32_30 : i32 to vector<128x128xi32>
    %113 = arith.cmpi sge, %105, %112 : vector<128x128xi32>
    %c64_i32_31 = arith.constant 64 : i32
    %114 = vector.broadcast %c64_i32_31 : i32 to vector<128x128xi32>
    %115 = arith.subi %105, %114 : vector<128x128xi32>
    %c2_i32_32 = arith.constant 2 : i32
    %116 = vector.broadcast %c2_i32_32 : i32 to vector<128x128xi32>
    %117 = arith.muli %116, %115 : vector<128x128xi32>
    %c1_i32_33 = arith.constant 1 : i32
    %118 = vector.broadcast %c1_i32_33 : i32 to vector<128x128xi32>
    %119 = arith.addi %117, %118 : vector<128x128xi32>
    %120 = arith.cmpi eq, %104, %119 : vector<128x128xi32>
    %121 = arith.andi %113, %120 : vector<128x128xi1>
    %122 = arith.ori %111, %121 : vector<128x128xi1>
    %123 = arith.extui %122 : vector<128x128xi1> to vector<128x128xi32>
    %124 = arith.sitofp %123 : vector<128x128xi32> to vector<128x128xf32>
    %cst_34 = arith.constant dense<0.000000e+00> : vector<16x128xf32>
    %125 = tpu.matmul %103, %124, %cst_34 {dimension_numbers = #tpu.dot_dimension_numbers<[1], [0], [0], [1], [0, 0, 1, 1], [], []>} : vector<16x128xf32>, vector<128x128xf32>, vector<16x128xf32> -> vector<16x128xf32>
    %126 = vector.extract_strided_slice %125 {offsets = [0, 0], sizes = [16, 64], strides = [1, 1]} : vector<16x128xf32> to vector<16x64xf32>
    %127 = vector.extract_strided_slice %125 {offsets = [0, 64], sizes = [16, 64], strides = [1, 1]} : vector<16x128xf32> to vector<16x64xf32>
    %128 = arith.maximumf %126, %127 : vector<16x64xf32>
    %c0_35 = arith.constant 0 : index
    %c0_36 = arith.constant 0 : index
    %c0_37 = arith.constant 0 : index
    %129 = vector.load %arg4[%c0_35, %c0_36, %c0_37] : memref<3x16x1xf32, #tpu.memory_space<vmem>>, vector<1x16x1xf32>
    %130 = vector.shape_cast %129 : vector<1x16x1xf32> to vector<16x1xf32>
    %131 = vector.broadcast %130 : vector<16x1xf32> to vector<16x64xf32>
    %132 = arith.addf %128, %131 : vector<16x64xf32>
    %cst_38 = arith.constant 0.000000e+00 : f32
    %133 = vector.broadcast %cst_38 : f32 to vector<16x64xf32>
    %134 = arith.maximumf %132, %133 : vector<16x64xf32>
    %c1_39 = arith.constant 1 : index
    %c0_40 = arith.constant 0 : index
    %c0_41 = arith.constant 0 : index
    %135 = vector.load %arg4[%c1_39, %c0_40, %c0_41] : memref<3x16x1xf32, #tpu.memory_space<vmem>>, vector<1x16x1xf32>
    %136 = vector.shape_cast %135 : vector<1x16x1xf32> to vector<16x1xf32>
    %c2_42 = arith.constant 2 : index
    %c0_43 = arith.constant 0 : index
    %c0_44 = arith.constant 0 : index
    %137 = vector.load %arg4[%c2_42, %c0_43, %c0_44] : memref<3x16x1xf32, #tpu.memory_space<vmem>>, vector<1x16x1xf32>
    %138 = vector.shape_cast %137 : vector<1x16x1xf32> to vector<16x1xf32>
    %cst_45 = arith.constant dense<0.000000e+00> : vector<16xf32>
    %139 = vector.multi_reduction <add>, %134, %cst_45 [1] : vector<16x64xf32> to vector<16xf32>
    %140 = vector.shape_cast %139 : vector<16xf32> to vector<16x1xf32>
    %cst_46 = arith.constant 1.562500e-02 : f32
    %141 = vector.broadcast %cst_46 : f32 to vector<16x1xf32>
    %142 = arith.mulf %140, %141 : vector<16x1xf32>
    %143 = vector.broadcast %142 : vector<16x1xf32> to vector<16x64xf32>
    %144 = arith.subf %134, %143 : vector<16x64xf32>
    %145 = arith.mulf %144, %144 : vector<16x64xf32>
    %cst_47 = arith.constant dense<0.000000e+00> : vector<16xf32>
    %146 = vector.multi_reduction <add>, %145, %cst_47 [1] : vector<16x64xf32> to vector<16xf32>
    %147 = vector.shape_cast %146 : vector<16xf32> to vector<16x1xf32>
    %cst_48 = arith.constant 1.562500e-02 : f32
    %148 = vector.broadcast %cst_48 : f32 to vector<16x1xf32>
    %149 = arith.mulf %147, %148 : vector<16x1xf32>
    %cst_49 = arith.constant 9.99999974E-6 : f32
    %150 = vector.broadcast %cst_49 : f32 to vector<16x1xf32>
    %151 = arith.addf %149, %150 : vector<16x1xf32>
    %152 = math.rsqrt %151 : vector<16x1xf32>
    %153 = vector.broadcast %152 : vector<16x1xf32> to vector<16x64xf32>
    %154 = arith.mulf %144, %153 : vector<16x64xf32>
    %155 = vector.broadcast %136 : vector<16x1xf32> to vector<16x64xf32>
    %156 = arith.mulf %154, %155 : vector<16x64xf32>
    %157 = vector.broadcast %138 : vector<16x1xf32> to vector<16x64xf32>
    %158 = arith.addf %156, %157 : vector<16x64xf32>
    %c0_50 = arith.constant 0 : index
    %c0_51 = arith.constant 0 : index
    %159 = vector.load %arg5[%c0_50, %c0_51] : memref<32x80xf32, #tpu.memory_space<vmem>>, vector<32x80xf32>
    %cst_52 = arith.constant 0.000000e+00 : f32
    %160 = vector.broadcast %cst_52 : f32 to vector<16x2xf32>
    %161 = vector.extract_strided_slice %158 {offsets = [0, 0], sizes = [16, 32], strides = [1, 1]} : vector<16x64xf32> to vector<16x32xf32>
    %162 = vector.extract_strided_slice %158 {offsets = [0, 32], sizes = [16, 32], strides = [1, 1]} : vector<16x64xf32> to vector<16x32xf32>
    %163 = tpu.concatenate %160, %161, %160, %160, %162, %160 in 1 : vector<16x2xf32>, vector<16x32xf32>, vector<16x2xf32>, vector<16x2xf32>, vector<16x32xf32>, vector<16x2xf32> -> vector<16x72xf32>
    %164 = vector.extract_strided_slice %163 {offsets = [0, 0], sizes = [16, 32], strides = [1, 1]} : vector<16x72xf32> to vector<16x32xf32>
    %165 = vector.extract_strided_slice %163 {offsets = [0, 36], sizes = [16, 32], strides = [1, 1]} : vector<16x72xf32> to vector<16x32xf32>
    %166 = tpu.concatenate %164, %165 in 1 : vector<16x32xf32>, vector<16x32xf32> -> vector<16x64xf32>
    %167 = vector.extract_strided_slice %163 {offsets = [0, 1], sizes = [16, 32], strides = [1, 1]} : vector<16x72xf32> to vector<16x32xf32>
    %168 = vector.extract_strided_slice %163 {offsets = [0, 37], sizes = [16, 32], strides = [1, 1]} : vector<16x72xf32> to vector<16x32xf32>
    %169 = tpu.concatenate %167, %168 in 1 : vector<16x32xf32>, vector<16x32xf32> -> vector<16x64xf32>
    %170 = vector.extract_strided_slice %163 {offsets = [0, 2], sizes = [16, 32], strides = [1, 1]} : vector<16x72xf32> to vector<16x32xf32>
    %171 = vector.extract_strided_slice %163 {offsets = [0, 38], sizes = [16, 32], strides = [1, 1]} : vector<16x72xf32> to vector<16x32xf32>
    %172 = tpu.concatenate %170, %171 in 1 : vector<16x32xf32>, vector<16x32xf32> -> vector<16x64xf32>
    %173 = vector.extract_strided_slice %163 {offsets = [0, 3], sizes = [16, 32], strides = [1, 1]} : vector<16x72xf32> to vector<16x32xf32>
    %174 = vector.extract_strided_slice %163 {offsets = [0, 39], sizes = [16, 32], strides = [1, 1]} : vector<16x72xf32> to vector<16x32xf32>
    %175 = tpu.concatenate %173, %174 in 1 : vector<16x32xf32>, vector<16x32xf32> -> vector<16x64xf32>
    %176 = vector.extract_strided_slice %163 {offsets = [0, 4], sizes = [16, 32], strides = [1, 1]} : vector<16x72xf32> to vector<16x32xf32>
    %177 = vector.extract_strided_slice %163 {offsets = [0, 40], sizes = [16, 32], strides = [1, 1]} : vector<16x72xf32> to vector<16x32xf32>
    %178 = tpu.concatenate %176, %177 in 1 : vector<16x32xf32>, vector<16x32xf32> -> vector<16x64xf32>
    %179 = tpu.concatenate %166, %169, %172, %175, %178 in 0 : vector<16x64xf32>, vector<16x64xf32>, vector<16x64xf32>, vector<16x64xf32>, vector<16x64xf32> -> vector<80x64xf32>
    %cst_53 = arith.constant dense<0.000000e+00> : vector<32x64xf32>
    %180 = tpu.matmul %159, %179, %cst_53 {dimension_numbers = #tpu.dot_dimension_numbers<[1], [0], [0], [1], [0, 0, 1, 1], [], []>} : vector<32x80xf32>, vector<80x64xf32>, vector<32x64xf32> -> vector<32x64xf32>
    %181 = tpu.iota {dimensions = array<i32: 0>} : vector<64x64xi32>
    %182 = tpu.iota {dimensions = array<i32: 1>} : vector<64x64xi32>
    %c32_i32 = arith.constant 32 : i32
    %183 = vector.broadcast %c32_i32 : i32 to vector<64x64xi32>
    %184 = arith.cmpi slt, %182, %183 : vector<64x64xi32>
    %c2_i32_54 = arith.constant 2 : i32
    %185 = vector.broadcast %c2_i32_54 : i32 to vector<64x64xi32>
    %186 = arith.muli %185, %182 : vector<64x64xi32>
    %187 = arith.cmpi eq, %181, %186 : vector<64x64xi32>
    %188 = arith.andi %184, %187 : vector<64x64xi1>
    %c32_i32_55 = arith.constant 32 : i32
    %189 = vector.broadcast %c32_i32_55 : i32 to vector<64x64xi32>
    %190 = arith.cmpi sge, %182, %189 : vector<64x64xi32>
    %c32_i32_56 = arith.constant 32 : i32
    %191 = vector.broadcast %c32_i32_56 : i32 to vector<64x64xi32>
    %192 = arith.subi %182, %191 : vector<64x64xi32>
    %c2_i32_57 = arith.constant 2 : i32
    %193 = vector.broadcast %c2_i32_57 : i32 to vector<64x64xi32>
    %194 = arith.muli %193, %192 : vector<64x64xi32>
    %c1_i32_58 = arith.constant 1 : i32
    %195 = vector.broadcast %c1_i32_58 : i32 to vector<64x64xi32>
    %196 = arith.addi %194, %195 : vector<64x64xi32>
    %197 = arith.cmpi eq, %181, %196 : vector<64x64xi32>
    %198 = arith.andi %190, %197 : vector<64x64xi1>
    %199 = arith.ori %188, %198 : vector<64x64xi1>
    %200 = arith.extui %199 : vector<64x64xi1> to vector<64x64xi32>
    %201 = arith.sitofp %200 : vector<64x64xi32> to vector<64x64xf32>
    %cst_59 = arith.constant dense<0.000000e+00> : vector<32x64xf32>
    %202 = tpu.matmul %180, %201, %cst_59 {dimension_numbers = #tpu.dot_dimension_numbers<[1], [0], [0], [1], [0, 0, 1, 1], [], []>} : vector<32x64xf32>, vector<64x64xf32>, vector<32x64xf32> -> vector<32x64xf32>
    %203 = vector.extract_strided_slice %202 {offsets = [0, 0], sizes = [32, 32], strides = [1, 1]} : vector<32x64xf32> to vector<32x32xf32>
    %204 = vector.extract_strided_slice %202 {offsets = [0, 32], sizes = [32, 32], strides = [1, 1]} : vector<32x64xf32> to vector<32x32xf32>
    %205 = arith.maximumf %203, %204 : vector<32x32xf32>
    %c0_60 = arith.constant 0 : index
    %c0_61 = arith.constant 0 : index
    %c0_62 = arith.constant 0 : index
    %206 = vector.load %arg6[%c0_60, %c0_61, %c0_62] : memref<3x32x1xf32, #tpu.memory_space<vmem>>, vector<1x32x1xf32>
    %207 = vector.shape_cast %206 : vector<1x32x1xf32> to vector<32x1xf32>
    %208 = vector.broadcast %207 : vector<32x1xf32> to vector<32x32xf32>
    %209 = arith.addf %205, %208 : vector<32x32xf32>
    %cst_63 = arith.constant 0.000000e+00 : f32
    %210 = vector.broadcast %cst_63 : f32 to vector<32x32xf32>
    %211 = arith.maximumf %209, %210 : vector<32x32xf32>
    %c1_64 = arith.constant 1 : index
    %c0_65 = arith.constant 0 : index
    %c0_66 = arith.constant 0 : index
    %212 = vector.load %arg6[%c1_64, %c0_65, %c0_66] : memref<3x32x1xf32, #tpu.memory_space<vmem>>, vector<1x32x1xf32>
    %213 = vector.shape_cast %212 : vector<1x32x1xf32> to vector<32x1xf32>
    %c2_67 = arith.constant 2 : index
    %c0_68 = arith.constant 0 : index
    %c0_69 = arith.constant 0 : index
    %214 = vector.load %arg6[%c2_67, %c0_68, %c0_69] : memref<3x32x1xf32, #tpu.memory_space<vmem>>, vector<1x32x1xf32>
    %215 = vector.shape_cast %214 : vector<1x32x1xf32> to vector<32x1xf32>
    %cst_70 = arith.constant dense<0.000000e+00> : vector<32xf32>
    %216 = vector.multi_reduction <add>, %211, %cst_70 [1] : vector<32x32xf32> to vector<32xf32>
    %217 = vector.shape_cast %216 : vector<32xf32> to vector<32x1xf32>
    %cst_71 = arith.constant 3.125000e-02 : f32
    %218 = vector.broadcast %cst_71 : f32 to vector<32x1xf32>
    %219 = arith.mulf %217, %218 : vector<32x1xf32>
    %220 = vector.broadcast %219 : vector<32x1xf32> to vector<32x32xf32>
    %221 = arith.subf %211, %220 : vector<32x32xf32>
    %222 = arith.mulf %221, %221 : vector<32x32xf32>
    %cst_72 = arith.constant dense<0.000000e+00> : vector<32xf32>
    %223 = vector.multi_reduction <add>, %222, %cst_72 [1] : vector<32x32xf32> to vector<32xf32>
    %224 = vector.shape_cast %223 : vector<32xf32> to vector<32x1xf32>
    %cst_73 = arith.constant 3.125000e-02 : f32
    %225 = vector.broadcast %cst_73 : f32 to vector<32x1xf32>
    %226 = arith.mulf %224, %225 : vector<32x1xf32>
    %cst_74 = arith.constant 9.99999974E-6 : f32
    %227 = vector.broadcast %cst_74 : f32 to vector<32x1xf32>
    %228 = arith.addf %226, %227 : vector<32x1xf32>
    %229 = math.rsqrt %228 : vector<32x1xf32>
    %230 = vector.broadcast %229 : vector<32x1xf32> to vector<32x32xf32>
    %231 = arith.mulf %221, %230 : vector<32x32xf32>
    %232 = vector.broadcast %213 : vector<32x1xf32> to vector<32x32xf32>
    %233 = arith.mulf %231, %232 : vector<32x32xf32>
    %234 = vector.broadcast %215 : vector<32x1xf32> to vector<32x32xf32>
    %235 = arith.addf %233, %234 : vector<32x32xf32>
    %236 = tpu.transpose %235, [1, 0] : vector<32x32xf32> -> vector<32x32xf32>
    %c0_75 = arith.constant 0 : index
    %c0_76 = arith.constant 0 : index
    %237 = vector.load %arg7[%c0_75, %c0_76] : memref<160x64xf32, #tpu.memory_space<vmem>>, vector<160x64xf32>
    %cst_77 = arith.constant 0.000000e+00 : f32
    %238 = vector.broadcast %cst_77 : f32 to vector<2x32xf32>
    %239 = vector.extract_strided_slice %236 {offsets = [0, 0], sizes = [16, 32], strides = [1, 1]} : vector<32x32xf32> to vector<16x32xf32>
    %240 = vector.extract_strided_slice %236 {offsets = [16, 0], sizes = [16, 32], strides = [1, 1]} : vector<32x32xf32> to vector<16x32xf32>
    %241 = tpu.concatenate %238, %239, %238, %238, %240, %238 in 0 : vector<2x32xf32>, vector<16x32xf32>, vector<2x32xf32>, vector<2x32xf32>, vector<16x32xf32>, vector<2x32xf32> -> vector<40x32xf32>
    %242 = vector.extract_strided_slice %241 {offsets = [0, 0], sizes = [16, 32], strides = [1, 1]} : vector<40x32xf32> to vector<16x32xf32>
    %243 = vector.extract_strided_slice %241 {offsets = [20, 0], sizes = [16, 32], strides = [1, 1]} : vector<40x32xf32> to vector<16x32xf32>
    %244 = tpu.concatenate %242, %243 in 0 : vector<16x32xf32>, vector<16x32xf32> -> vector<32x32xf32>
    %245 = vector.extract_strided_slice %241 {offsets = [1, 0], sizes = [16, 32], strides = [1, 1]} : vector<40x32xf32> to vector<16x32xf32>
    %246 = vector.extract_strided_slice %241 {offsets = [21, 0], sizes = [16, 32], strides = [1, 1]} : vector<40x32xf32> to vector<16x32xf32>
    %247 = tpu.concatenate %245, %246 in 0 : vector<16x32xf32>, vector<16x32xf32> -> vector<32x32xf32>
    %248 = vector.extract_strided_slice %241 {offsets = [2, 0], sizes = [16, 32], strides = [1, 1]} : vector<40x32xf32> to vector<16x32xf32>
    %249 = vector.extract_strided_slice %241 {offsets = [22, 0], sizes = [16, 32], strides = [1, 1]} : vector<40x32xf32> to vector<16x32xf32>
    %250 = tpu.concatenate %248, %249 in 0 : vector<16x32xf32>, vector<16x32xf32> -> vector<32x32xf32>
    %251 = vector.extract_strided_slice %241 {offsets = [3, 0], sizes = [16, 32], strides = [1, 1]} : vector<40x32xf32> to vector<16x32xf32>
    %252 = vector.extract_strided_slice %241 {offsets = [23, 0], sizes = [16, 32], strides = [1, 1]} : vector<40x32xf32> to vector<16x32xf32>
    %253 = tpu.concatenate %251, %252 in 0 : vector<16x32xf32>, vector<16x32xf32> -> vector<32x32xf32>
    %254 = vector.extract_strided_slice %241 {offsets = [4, 0], sizes = [16, 32], strides = [1, 1]} : vector<40x32xf32> to vector<16x32xf32>
    %255 = vector.extract_strided_slice %241 {offsets = [24, 0], sizes = [16, 32], strides = [1, 1]} : vector<40x32xf32> to vector<16x32xf32>
    %256 = tpu.concatenate %254, %255 in 0 : vector<16x32xf32>, vector<16x32xf32> -> vector<32x32xf32>
    %257 = tpu.concatenate %244, %247, %250, %253, %256 in 1 : vector<32x32xf32>, vector<32x32xf32>, vector<32x32xf32>, vector<32x32xf32>, vector<32x32xf32> -> vector<32x160xf32>
    %cst_78 = arith.constant dense<0.000000e+00> : vector<32x64xf32>
    %258 = tpu.matmul %257, %237, %cst_78 {dimension_numbers = #tpu.dot_dimension_numbers<[1], [0], [0], [1], [0, 0, 1, 1], [], []>} : vector<32x160xf32>, vector<160x64xf32>, vector<32x64xf32> -> vector<32x64xf32>
    %259 = tpu.iota {dimensions = array<i32: 0>} : vector<32x32xi32>
    %260 = tpu.iota {dimensions = array<i32: 1>} : vector<32x32xi32>
    %c16_i32 = arith.constant 16 : i32
    %261 = vector.broadcast %c16_i32 : i32 to vector<32x32xi32>
    %262 = arith.cmpi slt, %259, %261 : vector<32x32xi32>
    %c2_i32_79 = arith.constant 2 : i32
    %263 = vector.broadcast %c2_i32_79 : i32 to vector<32x32xi32>
    %264 = arith.muli %263, %259 : vector<32x32xi32>
    %265 = arith.cmpi eq, %260, %264 : vector<32x32xi32>
    %266 = arith.andi %262, %265 : vector<32x32xi1>
    %c16_i32_80 = arith.constant 16 : i32
    %267 = vector.broadcast %c16_i32_80 : i32 to vector<32x32xi32>
    %268 = arith.cmpi sge, %259, %267 : vector<32x32xi32>
    %c16_i32_81 = arith.constant 16 : i32
    %269 = vector.broadcast %c16_i32_81 : i32 to vector<32x32xi32>
    %270 = arith.subi %259, %269 : vector<32x32xi32>
    %c2_i32_82 = arith.constant 2 : i32
    %271 = vector.broadcast %c2_i32_82 : i32 to vector<32x32xi32>
    %272 = arith.muli %271, %270 : vector<32x32xi32>
    %c1_i32_83 = arith.constant 1 : i32
    %273 = vector.broadcast %c1_i32_83 : i32 to vector<32x32xi32>
    %274 = arith.addi %272, %273 : vector<32x32xi32>
    %275 = arith.cmpi eq, %260, %274 : vector<32x32xi32>
    %276 = arith.andi %268, %275 : vector<32x32xi1>
    %277 = arith.ori %266, %276 : vector<32x32xi1>
    %278 = arith.extui %277 : vector<32x32xi1> to vector<32x32xi32>
    %279 = arith.sitofp %278 : vector<32x32xi32> to vector<32x32xf32>
    %cst_84 = arith.constant dense<0.000000e+00> : vector<32x64xf32>
    %280 = tpu.matmul %279, %258, %cst_84 {dimension_numbers = #tpu.dot_dimension_numbers<[1], [0], [0], [1], [0, 0, 1, 1], [], []>} : vector<32x32xf32>, vector<32x64xf32>, vector<32x64xf32> -> vector<32x64xf32>
    %281 = vector.extract_strided_slice %280 {offsets = [0, 0], sizes = [16, 64], strides = [1, 1]} : vector<32x64xf32> to vector<16x64xf32>
    %282 = vector.extract_strided_slice %280 {offsets = [16, 0], sizes = [16, 64], strides = [1, 1]} : vector<32x64xf32> to vector<16x64xf32>
    %283 = arith.maximumf %281, %282 : vector<16x64xf32>
    %c0_85 = arith.constant 0 : index
    %c0_86 = arith.constant 0 : index
    %c0_87 = arith.constant 0 : index
    %284 = vector.load %arg8[%c0_85, %c0_86, %c0_87] : memref<3x1x64xf32, #tpu.memory_space<vmem>>, vector<1x1x64xf32>
    %285 = vector.shape_cast %284 : vector<1x1x64xf32> to vector<1x64xf32>
    %286 = vector.broadcast %285 : vector<1x64xf32> to vector<16x64xf32>
    %287 = arith.addf %283, %286 : vector<16x64xf32>
    %cst_88 = arith.constant 0.000000e+00 : f32
    %288 = vector.broadcast %cst_88 : f32 to vector<16x64xf32>
    %289 = arith.maximumf %287, %288 : vector<16x64xf32>
    %c1_89 = arith.constant 1 : index
    %c0_90 = arith.constant 0 : index
    %c0_91 = arith.constant 0 : index
    %290 = vector.load %arg8[%c1_89, %c0_90, %c0_91] : memref<3x1x64xf32, #tpu.memory_space<vmem>>, vector<1x1x64xf32>
    %291 = vector.shape_cast %290 : vector<1x1x64xf32> to vector<1x64xf32>
    %c2_92 = arith.constant 2 : index
    %c0_93 = arith.constant 0 : index
    %c0_94 = arith.constant 0 : index
    %292 = vector.load %arg8[%c2_92, %c0_93, %c0_94] : memref<3x1x64xf32, #tpu.memory_space<vmem>>, vector<1x1x64xf32>
    %293 = vector.shape_cast %292 : vector<1x1x64xf32> to vector<1x64xf32>
    %cst_95 = arith.constant dense<0.000000e+00> : vector<64xf32>
    %294 = vector.multi_reduction <add>, %289, %cst_95 [0] : vector<16x64xf32> to vector<64xf32>
    %295 = vector.shape_cast %294 : vector<64xf32> to vector<1x64xf32>
    %cst_96 = arith.constant 6.250000e-02 : f32
    %296 = vector.broadcast %cst_96 : f32 to vector<1x64xf32>
    %297 = arith.mulf %295, %296 : vector<1x64xf32>
    %298 = vector.broadcast %297 : vector<1x64xf32> to vector<16x64xf32>
    %299 = arith.subf %289, %298 : vector<16x64xf32>
    %300 = arith.mulf %299, %299 : vector<16x64xf32>
    %cst_97 = arith.constant dense<0.000000e+00> : vector<64xf32>
    %301 = vector.multi_reduction <add>, %300, %cst_97 [0] : vector<16x64xf32> to vector<64xf32>
    %302 = vector.shape_cast %301 : vector<64xf32> to vector<1x64xf32>
    %cst_98 = arith.constant 6.250000e-02 : f32
    %303 = vector.broadcast %cst_98 : f32 to vector<1x64xf32>
    %304 = arith.mulf %302, %303 : vector<1x64xf32>
    %cst_99 = arith.constant 9.99999974E-6 : f32
    %305 = vector.broadcast %cst_99 : f32 to vector<1x64xf32>
    %306 = arith.addf %304, %305 : vector<1x64xf32>
    %307 = math.rsqrt %306 : vector<1x64xf32>
    %308 = vector.broadcast %307 : vector<1x64xf32> to vector<16x64xf32>
    %309 = arith.mulf %299, %308 : vector<16x64xf32>
    %310 = vector.broadcast %291 : vector<1x64xf32> to vector<16x64xf32>
    %311 = arith.mulf %309, %310 : vector<16x64xf32>
    %312 = vector.broadcast %293 : vector<1x64xf32> to vector<16x64xf32>
    %313 = arith.addf %311, %312 : vector<16x64xf32>
    %c0_100 = arith.constant 0 : index
    %c0_101 = arith.constant 0 : index
    %314 = vector.load %arg9[%c0_100, %c0_101] : memref<320x64xf32, #tpu.memory_space<vmem>>, vector<320x64xf32>
    %cst_102 = arith.constant 0.000000e+00 : f32
    %315 = vector.broadcast %cst_102 : f32 to vector<2x64xf32>
    %316 = vector.extract_strided_slice %313 {offsets = [0, 0], sizes = [8, 64], strides = [1, 1]} : vector<16x64xf32> to vector<8x64xf32>
    %317 = vector.extract_strided_slice %313 {offsets = [8, 0], sizes = [8, 64], strides = [1, 1]} : vector<16x64xf32> to vector<8x64xf32>
    %318 = tpu.concatenate %315, %316, %315, %315, %317, %315 in 0 : vector<2x64xf32>, vector<8x64xf32>, vector<2x64xf32>, vector<2x64xf32>, vector<8x64xf32>, vector<2x64xf32> -> vector<24x64xf32>
    %319 = vector.extract_strided_slice %318 {offsets = [0, 0], sizes = [8, 64], strides = [1, 1]} : vector<24x64xf32> to vector<8x64xf32>
    %320 = vector.extract_strided_slice %318 {offsets = [12, 0], sizes = [8, 64], strides = [1, 1]} : vector<24x64xf32> to vector<8x64xf32>
    %321 = tpu.concatenate %319, %320 in 0 : vector<8x64xf32>, vector<8x64xf32> -> vector<16x64xf32>
    %322 = vector.extract_strided_slice %318 {offsets = [1, 0], sizes = [8, 64], strides = [1, 1]} : vector<24x64xf32> to vector<8x64xf32>
    %323 = vector.extract_strided_slice %318 {offsets = [13, 0], sizes = [8, 64], strides = [1, 1]} : vector<24x64xf32> to vector<8x64xf32>
    %324 = tpu.concatenate %322, %323 in 0 : vector<8x64xf32>, vector<8x64xf32> -> vector<16x64xf32>
    %325 = vector.extract_strided_slice %318 {offsets = [2, 0], sizes = [8, 64], strides = [1, 1]} : vector<24x64xf32> to vector<8x64xf32>
    %326 = vector.extract_strided_slice %318 {offsets = [14, 0], sizes = [8, 64], strides = [1, 1]} : vector<24x64xf32> to vector<8x64xf32>
    %327 = tpu.concatenate %325, %326 in 0 : vector<8x64xf32>, vector<8x64xf32> -> vector<16x64xf32>
    %328 = vector.extract_strided_slice %318 {offsets = [3, 0], sizes = [8, 64], strides = [1, 1]} : vector<24x64xf32> to vector<8x64xf32>
    %329 = vector.extract_strided_slice %318 {offsets = [15, 0], sizes = [8, 64], strides = [1, 1]} : vector<24x64xf32> to vector<8x64xf32>
    %330 = tpu.concatenate %328, %329 in 0 : vector<8x64xf32>, vector<8x64xf32> -> vector<16x64xf32>
    %331 = vector.extract_strided_slice %318 {offsets = [4, 0], sizes = [8, 64], strides = [1, 1]} : vector<24x64xf32> to vector<8x64xf32>
    %332 = vector.extract_strided_slice %318 {offsets = [16, 0], sizes = [8, 64], strides = [1, 1]} : vector<24x64xf32> to vector<8x64xf32>
    %333 = tpu.concatenate %331, %332 in 0 : vector<8x64xf32>, vector<8x64xf32> -> vector<16x64xf32>
    %334 = tpu.concatenate %321, %324, %327, %330, %333 in 1 : vector<16x64xf32>, vector<16x64xf32>, vector<16x64xf32>, vector<16x64xf32>, vector<16x64xf32> -> vector<16x320xf32>
    %cst_103 = arith.constant dense<0.000000e+00> : vector<16x64xf32>
    %335 = tpu.matmul %334, %314, %cst_103 {dimension_numbers = #tpu.dot_dimension_numbers<[1], [0], [0], [1], [0, 0, 1, 1], [], []>} : vector<16x320xf32>, vector<320x64xf32>, vector<16x64xf32> -> vector<16x64xf32>
    %336 = tpu.iota {dimensions = array<i32: 0>} : vector<16x16xi32>
    %337 = tpu.iota {dimensions = array<i32: 1>} : vector<16x16xi32>
    %c8_i32 = arith.constant 8 : i32
    %338 = vector.broadcast %c8_i32 : i32 to vector<16x16xi32>
    %339 = arith.cmpi slt, %336, %338 : vector<16x16xi32>
    %c2_i32_104 = arith.constant 2 : i32
    %340 = vector.broadcast %c2_i32_104 : i32 to vector<16x16xi32>
    %341 = arith.muli %340, %336 : vector<16x16xi32>
    %342 = arith.cmpi eq, %337, %341 : vector<16x16xi32>
    %343 = arith.andi %339, %342 : vector<16x16xi1>
    %c8_i32_105 = arith.constant 8 : i32
    %344 = vector.broadcast %c8_i32_105 : i32 to vector<16x16xi32>
    %345 = arith.cmpi sge, %336, %344 : vector<16x16xi32>
    %c8_i32_106 = arith.constant 8 : i32
    %346 = vector.broadcast %c8_i32_106 : i32 to vector<16x16xi32>
    %347 = arith.subi %336, %346 : vector<16x16xi32>
    %c2_i32_107 = arith.constant 2 : i32
    %348 = vector.broadcast %c2_i32_107 : i32 to vector<16x16xi32>
    %349 = arith.muli %348, %347 : vector<16x16xi32>
    %c1_i32_108 = arith.constant 1 : i32
    %350 = vector.broadcast %c1_i32_108 : i32 to vector<16x16xi32>
    %351 = arith.addi %349, %350 : vector<16x16xi32>
    %352 = arith.cmpi eq, %337, %351 : vector<16x16xi32>
    %353 = arith.andi %345, %352 : vector<16x16xi1>
    %354 = arith.ori %343, %353 : vector<16x16xi1>
    %355 = arith.extui %354 : vector<16x16xi1> to vector<16x16xi32>
    %356 = arith.sitofp %355 : vector<16x16xi32> to vector<16x16xf32>
    %cst_109 = arith.constant dense<0.000000e+00> : vector<16x64xf32>
    %357 = tpu.matmul %356, %335, %cst_109 {dimension_numbers = #tpu.dot_dimension_numbers<[1], [0], [0], [1], [0, 0, 1, 1], [], []>} : vector<16x16xf32>, vector<16x64xf32>, vector<16x64xf32> -> vector<16x64xf32>
    %358 = vector.extract_strided_slice %357 {offsets = [0, 0], sizes = [8, 64], strides = [1, 1]} : vector<16x64xf32> to vector<8x64xf32>
    %359 = vector.extract_strided_slice %357 {offsets = [8, 0], sizes = [8, 64], strides = [1, 1]} : vector<16x64xf32> to vector<8x64xf32>
    %360 = arith.maximumf %358, %359 : vector<8x64xf32>
    %c0_110 = arith.constant 0 : index
    %c0_111 = arith.constant 0 : index
    %c0_112 = arith.constant 0 : index
    %361 = vector.load %arg10[%c0_110, %c0_111, %c0_112] : memref<3x1x64xf32, #tpu.memory_space<vmem>>, vector<1x1x64xf32>
    %362 = vector.shape_cast %361 : vector<1x1x64xf32> to vector<1x64xf32>
    %363 = vector.broadcast %362 : vector<1x64xf32> to vector<8x64xf32>
    %364 = arith.addf %360, %363 : vector<8x64xf32>
    %cst_113 = arith.constant 0.000000e+00 : f32
    %365 = vector.broadcast %cst_113 : f32 to vector<8x64xf32>
    %366 = arith.maximumf %364, %365 : vector<8x64xf32>
    %c1_114 = arith.constant 1 : index
    %c0_115 = arith.constant 0 : index
    %c0_116 = arith.constant 0 : index
    %367 = vector.load %arg10[%c1_114, %c0_115, %c0_116] : memref<3x1x64xf32, #tpu.memory_space<vmem>>, vector<1x1x64xf32>
    %368 = vector.shape_cast %367 : vector<1x1x64xf32> to vector<1x64xf32>
    %c2_117 = arith.constant 2 : index
    %c0_118 = arith.constant 0 : index
    %c0_119 = arith.constant 0 : index
    %369 = vector.load %arg10[%c2_117, %c0_118, %c0_119] : memref<3x1x64xf32, #tpu.memory_space<vmem>>, vector<1x1x64xf32>
    %370 = vector.shape_cast %369 : vector<1x1x64xf32> to vector<1x64xf32>
    %cst_120 = arith.constant dense<0.000000e+00> : vector<64xf32>
    %371 = vector.multi_reduction <add>, %366, %cst_120 [0] : vector<8x64xf32> to vector<64xf32>
    %372 = vector.shape_cast %371 : vector<64xf32> to vector<1x64xf32>
    %cst_121 = arith.constant 1.250000e-01 : f32
    %373 = vector.broadcast %cst_121 : f32 to vector<1x64xf32>
    %374 = arith.mulf %372, %373 : vector<1x64xf32>
    %375 = vector.broadcast %374 : vector<1x64xf32> to vector<8x64xf32>
    %376 = arith.subf %366, %375 : vector<8x64xf32>
    %377 = arith.mulf %376, %376 : vector<8x64xf32>
    %cst_122 = arith.constant dense<0.000000e+00> : vector<64xf32>
    %378 = vector.multi_reduction <add>, %377, %cst_122 [0] : vector<8x64xf32> to vector<64xf32>
    %379 = vector.shape_cast %378 : vector<64xf32> to vector<1x64xf32>
    %cst_123 = arith.constant 1.250000e-01 : f32
    %380 = vector.broadcast %cst_123 : f32 to vector<1x64xf32>
    %381 = arith.mulf %379, %380 : vector<1x64xf32>
    %cst_124 = arith.constant 9.99999974E-6 : f32
    %382 = vector.broadcast %cst_124 : f32 to vector<1x64xf32>
    %383 = arith.addf %381, %382 : vector<1x64xf32>
    %384 = math.rsqrt %383 : vector<1x64xf32>
    %385 = vector.broadcast %384 : vector<1x64xf32> to vector<8x64xf32>
    %386 = arith.mulf %376, %385 : vector<8x64xf32>
    %387 = vector.broadcast %368 : vector<1x64xf32> to vector<8x64xf32>
    %388 = arith.mulf %386, %387 : vector<8x64xf32>
    %389 = vector.broadcast %370 : vector<1x64xf32> to vector<8x64xf32>
    %390 = arith.addf %388, %389 : vector<8x64xf32>
    %c0_125 = arith.constant 0 : index
    %c0_126 = arith.constant 0 : index
    %391 = vector.load %arg11[%c0_125, %c0_126] : memref<320x128xf32, #tpu.memory_space<vmem>>, vector<320x128xf32>
    %cst_127 = arith.constant 0.000000e+00 : f32
    %392 = vector.broadcast %cst_127 : f32 to vector<2x64xf32>
    %393 = vector.extract_strided_slice %390 {offsets = [0, 0], sizes = [4, 64], strides = [1, 1]} : vector<8x64xf32> to vector<4x64xf32>
    %394 = vector.extract_strided_slice %390 {offsets = [4, 0], sizes = [4, 64], strides = [1, 1]} : vector<8x64xf32> to vector<4x64xf32>
    %395 = tpu.concatenate %392, %393, %392, %392, %394, %392 in 0 : vector<2x64xf32>, vector<4x64xf32>, vector<2x64xf32>, vector<2x64xf32>, vector<4x64xf32>, vector<2x64xf32> -> vector<16x64xf32>
    %396 = vector.extract_strided_slice %395 {offsets = [0, 0], sizes = [4, 64], strides = [1, 1]} : vector<16x64xf32> to vector<4x64xf32>
    %397 = vector.extract_strided_slice %395 {offsets = [8, 0], sizes = [4, 64], strides = [1, 1]} : vector<16x64xf32> to vector<4x64xf32>
    %398 = tpu.concatenate %396, %397 in 0 : vector<4x64xf32>, vector<4x64xf32> -> vector<8x64xf32>
    %399 = vector.extract_strided_slice %395 {offsets = [1, 0], sizes = [4, 64], strides = [1, 1]} : vector<16x64xf32> to vector<4x64xf32>
    %400 = vector.extract_strided_slice %395 {offsets = [9, 0], sizes = [4, 64], strides = [1, 1]} : vector<16x64xf32> to vector<4x64xf32>
    %401 = tpu.concatenate %399, %400 in 0 : vector<4x64xf32>, vector<4x64xf32> -> vector<8x64xf32>
    %402 = vector.extract_strided_slice %395 {offsets = [2, 0], sizes = [4, 64], strides = [1, 1]} : vector<16x64xf32> to vector<4x64xf32>
    %403 = vector.extract_strided_slice %395 {offsets = [10, 0], sizes = [4, 64], strides = [1, 1]} : vector<16x64xf32> to vector<4x64xf32>
    %404 = tpu.concatenate %402, %403 in 0 : vector<4x64xf32>, vector<4x64xf32> -> vector<8x64xf32>
    %405 = vector.extract_strided_slice %395 {offsets = [3, 0], sizes = [4, 64], strides = [1, 1]} : vector<16x64xf32> to vector<4x64xf32>
    %406 = vector.extract_strided_slice %395 {offsets = [11, 0], sizes = [4, 64], strides = [1, 1]} : vector<16x64xf32> to vector<4x64xf32>
    %407 = tpu.concatenate %405, %406 in 0 : vector<4x64xf32>, vector<4x64xf32> -> vector<8x64xf32>
    %408 = vector.extract_strided_slice %395 {offsets = [4, 0], sizes = [4, 64], strides = [1, 1]} : vector<16x64xf32> to vector<4x64xf32>
    %409 = vector.extract_strided_slice %395 {offsets = [12, 0], sizes = [4, 64], strides = [1, 1]} : vector<16x64xf32> to vector<4x64xf32>
    %410 = tpu.concatenate %408, %409 in 0 : vector<4x64xf32>, vector<4x64xf32> -> vector<8x64xf32>
    %411 = tpu.concatenate %398, %401, %404, %407, %410 in 1 : vector<8x64xf32>, vector<8x64xf32>, vector<8x64xf32>, vector<8x64xf32>, vector<8x64xf32> -> vector<8x320xf32>
    %cst_128 = arith.constant dense<0.000000e+00> : vector<8x128xf32>
    %412 = tpu.matmul %411, %391, %cst_128 {dimension_numbers = #tpu.dot_dimension_numbers<[1], [0], [0], [1], [0, 0, 1, 1], [], []>} : vector<8x320xf32>, vector<320x128xf32>, vector<8x128xf32> -> vector<8x128xf32>
    %413 = tpu.iota {dimensions = array<i32: 0>} : vector<8x8xi32>
    %414 = tpu.iota {dimensions = array<i32: 1>} : vector<8x8xi32>
    %c4_i32 = arith.constant 4 : i32
    %415 = vector.broadcast %c4_i32 : i32 to vector<8x8xi32>
    %416 = arith.cmpi slt, %413, %415 : vector<8x8xi32>
    %c2_i32_129 = arith.constant 2 : i32
    %417 = vector.broadcast %c2_i32_129 : i32 to vector<8x8xi32>
    %418 = arith.muli %417, %413 : vector<8x8xi32>
    %419 = arith.cmpi eq, %414, %418 : vector<8x8xi32>
    %420 = arith.andi %416, %419 : vector<8x8xi1>
    %c4_i32_130 = arith.constant 4 : i32
    %421 = vector.broadcast %c4_i32_130 : i32 to vector<8x8xi32>
    %422 = arith.cmpi sge, %413, %421 : vector<8x8xi32>
    %c4_i32_131 = arith.constant 4 : i32
    %423 = vector.broadcast %c4_i32_131 : i32 to vector<8x8xi32>
    %424 = arith.subi %413, %423 : vector<8x8xi32>
    %c2_i32_132 = arith.constant 2 : i32
    %425 = vector.broadcast %c2_i32_132 : i32 to vector<8x8xi32>
    %426 = arith.muli %425, %424 : vector<8x8xi32>
    %c1_i32_133 = arith.constant 1 : i32
    %427 = vector.broadcast %c1_i32_133 : i32 to vector<8x8xi32>
    %428 = arith.addi %426, %427 : vector<8x8xi32>
    %429 = arith.cmpi eq, %414, %428 : vector<8x8xi32>
    %430 = arith.andi %422, %429 : vector<8x8xi1>
    %431 = arith.ori %420, %430 : vector<8x8xi1>
    %432 = arith.extui %431 : vector<8x8xi1> to vector<8x8xi32>
    %433 = arith.sitofp %432 : vector<8x8xi32> to vector<8x8xf32>
    %cst_134 = arith.constant dense<0.000000e+00> : vector<8x128xf32>
    %434 = tpu.matmul %433, %412, %cst_134 {dimension_numbers = #tpu.dot_dimension_numbers<[1], [0], [0], [1], [0, 0, 1, 1], [], []>} : vector<8x8xf32>, vector<8x128xf32>, vector<8x128xf32> -> vector<8x128xf32>
    %435 = vector.extract_strided_slice %434 {offsets = [0, 0], sizes = [4, 128], strides = [1, 1]} : vector<8x128xf32> to vector<4x128xf32>
    %436 = vector.extract_strided_slice %434 {offsets = [4, 0], sizes = [4, 128], strides = [1, 1]} : vector<8x128xf32> to vector<4x128xf32>
    %437 = arith.maximumf %435, %436 : vector<4x128xf32>
    %c0_135 = arith.constant 0 : index
    %c0_136 = arith.constant 0 : index
    %c0_137 = arith.constant 0 : index
    %438 = vector.load %arg12[%c0_135, %c0_136, %c0_137] : memref<3x1x128xf32, #tpu.memory_space<vmem>>, vector<1x1x128xf32>
    %439 = vector.shape_cast %438 : vector<1x1x128xf32> to vector<1x128xf32>
    %440 = vector.broadcast %439 : vector<1x128xf32> to vector<4x128xf32>
    %441 = arith.addf %437, %440 : vector<4x128xf32>
    %cst_138 = arith.constant 0.000000e+00 : f32
    %442 = vector.broadcast %cst_138 : f32 to vector<4x128xf32>
    %443 = arith.maximumf %441, %442 : vector<4x128xf32>
    %c1_139 = arith.constant 1 : index
    %c0_140 = arith.constant 0 : index
    %c0_141 = arith.constant 0 : index
    %444 = vector.load %arg12[%c1_139, %c0_140, %c0_141] : memref<3x1x128xf32, #tpu.memory_space<vmem>>, vector<1x1x128xf32>
    %445 = vector.shape_cast %444 : vector<1x1x128xf32> to vector<1x128xf32>
    %c2_142 = arith.constant 2 : index
    %c0_143 = arith.constant 0 : index
    %c0_144 = arith.constant 0 : index
    %446 = vector.load %arg12[%c2_142, %c0_143, %c0_144] : memref<3x1x128xf32, #tpu.memory_space<vmem>>, vector<1x1x128xf32>
    %447 = vector.shape_cast %446 : vector<1x1x128xf32> to vector<1x128xf32>
    %cst_145 = arith.constant dense<0.000000e+00> : vector<128xf32>
    %448 = vector.multi_reduction <add>, %443, %cst_145 [0] : vector<4x128xf32> to vector<128xf32>
    %449 = vector.shape_cast %448 : vector<128xf32> to vector<1x128xf32>
    %cst_146 = arith.constant 2.500000e-01 : f32
    %450 = vector.broadcast %cst_146 : f32 to vector<1x128xf32>
    %451 = arith.mulf %449, %450 : vector<1x128xf32>
    %452 = vector.broadcast %451 : vector<1x128xf32> to vector<4x128xf32>
    %453 = arith.subf %443, %452 : vector<4x128xf32>
    %454 = arith.mulf %453, %453 : vector<4x128xf32>
    %cst_147 = arith.constant dense<0.000000e+00> : vector<128xf32>
    %455 = vector.multi_reduction <add>, %454, %cst_147 [0] : vector<4x128xf32> to vector<128xf32>
    %456 = vector.shape_cast %455 : vector<128xf32> to vector<1x128xf32>
    %cst_148 = arith.constant 2.500000e-01 : f32
    %457 = vector.broadcast %cst_148 : f32 to vector<1x128xf32>
    %458 = arith.mulf %456, %457 : vector<1x128xf32>
    %cst_149 = arith.constant 9.99999974E-6 : f32
    %459 = vector.broadcast %cst_149 : f32 to vector<1x128xf32>
    %460 = arith.addf %458, %459 : vector<1x128xf32>
    %461 = math.rsqrt %460 : vector<1x128xf32>
    %462 = vector.broadcast %461 : vector<1x128xf32> to vector<4x128xf32>
    %463 = arith.mulf %453, %462 : vector<4x128xf32>
    %464 = vector.broadcast %445 : vector<1x128xf32> to vector<4x128xf32>
    %465 = arith.mulf %463, %464 : vector<4x128xf32>
    %466 = vector.broadcast %447 : vector<1x128xf32> to vector<4x128xf32>
    %467 = arith.addf %465, %466 : vector<4x128xf32>
    %c0_150 = arith.constant 0 : index
    %c0_151 = arith.constant 0 : index
    %468 = vector.load %arg13[%c0_150, %c0_151] : memref<640x128xf32, #tpu.memory_space<vmem>>, vector<640x128xf32>
    %cst_152 = arith.constant 0.000000e+00 : f32
    %469 = vector.broadcast %cst_152 : f32 to vector<2x128xf32>
    %470 = vector.extract_strided_slice %467 {offsets = [0, 0], sizes = [2, 128], strides = [1, 1]} : vector<4x128xf32> to vector<2x128xf32>
    %471 = vector.extract_strided_slice %467 {offsets = [2, 0], sizes = [2, 128], strides = [1, 1]} : vector<4x128xf32> to vector<2x128xf32>
    %472 = tpu.concatenate %469, %470, %469, %469, %471, %469 in 0 : vector<2x128xf32>, vector<2x128xf32>, vector<2x128xf32>, vector<2x128xf32>, vector<2x128xf32>, vector<2x128xf32> -> vector<12x128xf32>
    %473 = vector.extract_strided_slice %472 {offsets = [0, 0], sizes = [2, 128], strides = [1, 1]} : vector<12x128xf32> to vector<2x128xf32>
    %474 = vector.extract_strided_slice %472 {offsets = [6, 0], sizes = [2, 128], strides = [1, 1]} : vector<12x128xf32> to vector<2x128xf32>
    %475 = tpu.concatenate %473, %474 in 0 : vector<2x128xf32>, vector<2x128xf32> -> vector<4x128xf32>
    %476 = vector.extract_strided_slice %472 {offsets = [1, 0], sizes = [2, 128], strides = [1, 1]} : vector<12x128xf32> to vector<2x128xf32>
    %477 = vector.extract_strided_slice %472 {offsets = [7, 0], sizes = [2, 128], strides = [1, 1]} : vector<12x128xf32> to vector<2x128xf32>
    %478 = tpu.concatenate %476, %477 in 0 : vector<2x128xf32>, vector<2x128xf32> -> vector<4x128xf32>
    %479 = vector.extract_strided_slice %472 {offsets = [2, 0], sizes = [2, 128], strides = [1, 1]} : vector<12x128xf32> to vector<2x128xf32>
    %480 = vector.extract_strided_slice %472 {offsets = [8, 0], sizes = [2, 128], strides = [1, 1]} : vector<12x128xf32> to vector<2x128xf32>
    %481 = tpu.concatenate %479, %480 in 0 : vector<2x128xf32>, vector<2x128xf32> -> vector<4x128xf32>
    %482 = vector.extract_strided_slice %472 {offsets = [3, 0], sizes = [2, 128], strides = [1, 1]} : vector<12x128xf32> to vector<2x128xf32>
    %483 = vector.extract_strided_slice %472 {offsets = [9, 0], sizes = [2, 128], strides = [1, 1]} : vector<12x128xf32> to vector<2x128xf32>
    %484 = tpu.concatenate %482, %483 in 0 : vector<2x128xf32>, vector<2x128xf32> -> vector<4x128xf32>
    %485 = vector.extract_strided_slice %472 {offsets = [4, 0], sizes = [2, 128], strides = [1, 1]} : vector<12x128xf32> to vector<2x128xf32>
    %486 = vector.extract_strided_slice %472 {offsets = [10, 0], sizes = [2, 128], strides = [1, 1]} : vector<12x128xf32> to vector<2x128xf32>
    %487 = tpu.concatenate %485, %486 in 0 : vector<2x128xf32>, vector<2x128xf32> -> vector<4x128xf32>
    %488 = tpu.concatenate %475, %478, %481, %484, %487 in 1 : vector<4x128xf32>, vector<4x128xf32>, vector<4x128xf32>, vector<4x128xf32>, vector<4x128xf32> -> vector<4x640xf32>
    %cst_153 = arith.constant dense<0.000000e+00> : vector<4x128xf32>
    %489 = tpu.matmul %488, %468, %cst_153 {dimension_numbers = #tpu.dot_dimension_numbers<[1], [0], [0], [1], [0, 0, 1, 1], [], []>} : vector<4x640xf32>, vector<640x128xf32>, vector<4x128xf32> -> vector<4x128xf32>
    %490 = tpu.iota {dimensions = array<i32: 0>} : vector<4x4xi32>
    %491 = tpu.iota {dimensions = array<i32: 1>} : vector<4x4xi32>
    %c2_i32_154 = arith.constant 2 : i32
    %492 = vector.broadcast %c2_i32_154 : i32 to vector<4x4xi32>
    %493 = arith.cmpi slt, %490, %492 : vector<4x4xi32>
    %c2_i32_155 = arith.constant 2 : i32
    %494 = vector.broadcast %c2_i32_155 : i32 to vector<4x4xi32>
    %495 = arith.muli %494, %490 : vector<4x4xi32>
    %496 = arith.cmpi eq, %491, %495 : vector<4x4xi32>
    %497 = arith.andi %493, %496 : vector<4x4xi1>
    %c2_i32_156 = arith.constant 2 : i32
    %498 = vector.broadcast %c2_i32_156 : i32 to vector<4x4xi32>
    %499 = arith.cmpi sge, %490, %498 : vector<4x4xi32>
    %c2_i32_157 = arith.constant 2 : i32
    %500 = vector.broadcast %c2_i32_157 : i32 to vector<4x4xi32>
    %501 = arith.subi %490, %500 : vector<4x4xi32>
    %c2_i32_158 = arith.constant 2 : i32
    %502 = vector.broadcast %c2_i32_158 : i32 to vector<4x4xi32>
    %503 = arith.muli %502, %501 : vector<4x4xi32>
    %c1_i32_159 = arith.constant 1 : i32
    %504 = vector.broadcast %c1_i32_159 : i32 to vector<4x4xi32>
    %505 = arith.addi %503, %504 : vector<4x4xi32>
    %506 = arith.cmpi eq, %491, %505 : vector<4x4xi32>
    %507 = arith.andi %499, %506 : vector<4x4xi1>
    %508 = arith.ori %497, %507 : vector<4x4xi1>
    %509 = arith.extui %508 : vector<4x4xi1> to vector<4x4xi32>
    %510 = arith.sitofp %509 : vector<4x4xi32> to vector<4x4xf32>
    %cst_160 = arith.constant dense<0.000000e+00> : vector<4x128xf32>
    %511 = tpu.matmul %510, %489, %cst_160 {dimension_numbers = #tpu.dot_dimension_numbers<[1], [0], [0], [1], [0, 0, 1, 1], [], []>} : vector<4x4xf32>, vector<4x128xf32>, vector<4x128xf32> -> vector<4x128xf32>
    %512 = vector.extract_strided_slice %511 {offsets = [0, 0], sizes = [2, 128], strides = [1, 1]} : vector<4x128xf32> to vector<2x128xf32>
    %513 = vector.extract_strided_slice %511 {offsets = [2, 0], sizes = [2, 128], strides = [1, 1]} : vector<4x128xf32> to vector<2x128xf32>
    %514 = arith.maximumf %512, %513 : vector<2x128xf32>
    %c0_161 = arith.constant 0 : index
    %c0_162 = arith.constant 0 : index
    %c0_163 = arith.constant 0 : index
    %515 = vector.load %arg14[%c0_161, %c0_162, %c0_163] : memref<3x1x128xf32, #tpu.memory_space<vmem>>, vector<1x1x128xf32>
    %516 = vector.shape_cast %515 : vector<1x1x128xf32> to vector<1x128xf32>
    %517 = vector.broadcast %516 : vector<1x128xf32> to vector<2x128xf32>
    %518 = arith.addf %514, %517 : vector<2x128xf32>
    %cst_164 = arith.constant 0.000000e+00 : f32
    %519 = vector.broadcast %cst_164 : f32 to vector<2x128xf32>
    %520 = arith.maximumf %518, %519 : vector<2x128xf32>
    %c1_165 = arith.constant 1 : index
    %c0_166 = arith.constant 0 : index
    %c0_167 = arith.constant 0 : index
    %521 = vector.load %arg14[%c1_165, %c0_166, %c0_167] : memref<3x1x128xf32, #tpu.memory_space<vmem>>, vector<1x1x128xf32>
    %522 = vector.shape_cast %521 : vector<1x1x128xf32> to vector<1x128xf32>
    %c2_168 = arith.constant 2 : index
    %c0_169 = arith.constant 0 : index
    %c0_170 = arith.constant 0 : index
    %523 = vector.load %arg14[%c2_168, %c0_169, %c0_170] : memref<3x1x128xf32, #tpu.memory_space<vmem>>, vector<1x1x128xf32>
    %524 = vector.shape_cast %523 : vector<1x1x128xf32> to vector<1x128xf32>
    %cst_171 = arith.constant dense<0.000000e+00> : vector<128xf32>
    %525 = vector.multi_reduction <add>, %520, %cst_171 [0] : vector<2x128xf32> to vector<128xf32>
    %526 = vector.shape_cast %525 : vector<128xf32> to vector<1x128xf32>
    %cst_172 = arith.constant 5.000000e-01 : f32
    %527 = vector.broadcast %cst_172 : f32 to vector<1x128xf32>
    %528 = arith.mulf %526, %527 : vector<1x128xf32>
    %529 = vector.broadcast %528 : vector<1x128xf32> to vector<2x128xf32>
    %530 = arith.subf %520, %529 : vector<2x128xf32>
    %531 = arith.mulf %530, %530 : vector<2x128xf32>
    %cst_173 = arith.constant dense<0.000000e+00> : vector<128xf32>
    %532 = vector.multi_reduction <add>, %531, %cst_173 [0] : vector<2x128xf32> to vector<128xf32>
    %533 = vector.shape_cast %532 : vector<128xf32> to vector<1x128xf32>
    %cst_174 = arith.constant 5.000000e-01 : f32
    %534 = vector.broadcast %cst_174 : f32 to vector<1x128xf32>
    %535 = arith.mulf %533, %534 : vector<1x128xf32>
    %cst_175 = arith.constant 9.99999974E-6 : f32
    %536 = vector.broadcast %cst_175 : f32 to vector<1x128xf32>
    %537 = arith.addf %535, %536 : vector<1x128xf32>
    %538 = math.rsqrt %537 : vector<1x128xf32>
    %539 = vector.broadcast %538 : vector<1x128xf32> to vector<2x128xf32>
    %540 = arith.mulf %530, %539 : vector<2x128xf32>
    %541 = vector.broadcast %522 : vector<1x128xf32> to vector<2x128xf32>
    %542 = arith.mulf %540, %541 : vector<2x128xf32>
    %543 = vector.broadcast %524 : vector<1x128xf32> to vector<2x128xf32>
    %544 = arith.addf %542, %543 : vector<2x128xf32>
    %c0_176 = arith.constant 0 : index
    %c0_177 = arith.constant 0 : index
    %c0_178 = arith.constant 0 : index
    %545 = vector.load %arg15[%c0_176, %c0_177, %c0_178] : memref<1x128x8xf32, #tpu.memory_space<vmem>>, vector<1x128x8xf32>
    %546 = vector.shape_cast %545 : vector<1x128x8xf32> to vector<128x8xf32>
    %cst_179 = arith.constant dense<0.000000e+00> : vector<2x8xf32>
    %547 = tpu.matmul %544, %546, %cst_179 {dimension_numbers = #tpu.dot_dimension_numbers<[1], [0], [0], [1], [0, 0, 1, 1], [], []>} : vector<2x128xf32>, vector<128x8xf32>, vector<2x8xf32> -> vector<2x8xf32>
    %c0_180 = arith.constant 0 : index
    %c0_181 = arith.constant 0 : index
    %548 = vector.load %arg16[%c0_180, %c0_181] : memref<1x8xf32, #tpu.memory_space<vmem>>, vector<1x8xf32>
    %549 = vector.broadcast %548 : vector<1x8xf32> to vector<2x8xf32>
    %550 = arith.addf %547, %549 : vector<2x8xf32>
    %c0_182 = arith.constant 0 : index
    %c0_183 = arith.constant 0 : index
    %551 = vector.load %arg34[%c0_182, %c0_183] : memref<2x8xf32, #tpu.memory_space<vmem>>, vector<2x8xf32>
    tpu.vector_store %arg34[%c0_182, %c0_183], %550 {strides = array<i32>} : memref<2x8xf32, #tpu.memory_space<vmem>>, vector<2x8xf32>,
    %c0_184 = arith.constant 0 : index
    %c0_185 = arith.constant 0 : index
    %c0_186 = arith.constant 0 : index
    %552 = vector.load %arg17[%c0_184, %c0_185, %c0_186] : memref<1x8x128xf32, #tpu.memory_space<vmem>>, vector<1x8x128xf32>
    %553 = vector.shape_cast %552 : vector<1x8x128xf32> to vector<8x128xf32>
    %cst_187 = arith.constant dense<0.000000e+00> : vector<2x128xf32>
    %554 = tpu.matmul %550, %553, %cst_187 {dimension_numbers = #tpu.dot_dimension_numbers<[1], [0], [0], [1], [0, 0, 1, 1], [], []>} : vector<2x8xf32>, vector<8x128xf32>, vector<2x128xf32> -> vector<2x128xf32>
    %c0_188 = arith.constant 0 : index
    %c0_189 = arith.constant 0 : index
    %c0_190 = arith.constant 0 : index
    %555 = vector.load %arg18[%c0_188, %c0_189, %c0_190] : memref<1x1x128xf32, #tpu.memory_space<vmem>>, vector<1x1x128xf32>
    %556 = vector.shape_cast %555 : vector<1x1x128xf32> to vector<1x128xf32>
    %557 = vector.broadcast %556 : vector<1x128xf32> to vector<2x128xf32>
    %558 = arith.addf %554, %557 : vector<2x128xf32>
    %cst_191 = arith.constant 0.000000e+00 : f32
    %559 = vector.broadcast %cst_191 : f32 to vector<2x128xf32>
    %560 = arith.maximumf %558, %559 : vector<2x128xf32>
    %561 = tpu.iota {dimensions = array<i32: 0>} : vector<4x2xi32>
    %562 = tpu.iota {dimensions = array<i32: 1>} : vector<4x2xi32>
    %c2_i32_192 = arith.constant 2 : i32
    %563 = vector.broadcast %c2_i32_192 : i32 to vector<4x2xi32>
    %564 = arith.muli %563, %562 : vector<4x2xi32>
    %565 = arith.cmpi eq, %561, %564 : vector<4x2xi32>
    %c2_i32_193 = arith.constant 2 : i32
    %566 = vector.broadcast %c2_i32_193 : i32 to vector<4x2xi32>
    %567 = arith.muli %566, %562 : vector<4x2xi32>
    %c1_i32_194 = arith.constant 1 : i32
    %568 = vector.broadcast %c1_i32_194 : i32 to vector<4x2xi32>
    %569 = arith.addi %567, %568 : vector<4x2xi32>
    %570 = arith.cmpi eq, %561, %569 : vector<4x2xi32>
    %571 = arith.ori %565, %570 : vector<4x2xi1>
    %572 = arith.extui %571 : vector<4x2xi1> to vector<4x2xi32>
    %573 = arith.sitofp %572 : vector<4x2xi32> to vector<4x2xf32>
    %cst_195 = arith.constant dense<0.000000e+00> : vector<4x128xf32>
    %574 = tpu.matmul %573, %560, %cst_195 {dimension_numbers = #tpu.dot_dimension_numbers<[1], [0], [0], [1], [0, 0, 1, 1], [], []>} : vector<4x2xf32>, vector<2x128xf32>, vector<4x128xf32> -> vector<4x128xf32>
    %c0_196 = arith.constant 0 : index
    %c0_197 = arith.constant 0 : index
    %575 = vector.load %arg19[%c0_196, %c0_197] : memref<640x128xf32, #tpu.memory_space<vmem>>, vector<640x128xf32>
    %cst_198 = arith.constant 0.000000e+00 : f32
    %576 = vector.broadcast %cst_198 : f32 to vector<2x128xf32>
    %577 = vector.extract_strided_slice %574 {offsets = [0, 0], sizes = [2, 128], strides = [1, 1]} : vector<4x128xf32> to vector<2x128xf32>
    %578 = vector.extract_strided_slice %574 {offsets = [2, 0], sizes = [2, 128], strides = [1, 1]} : vector<4x128xf32> to vector<2x128xf32>
    %579 = tpu.concatenate %576, %577, %576, %576, %578, %576 in 0 : vector<2x128xf32>, vector<2x128xf32>, vector<2x128xf32>, vector<2x128xf32>, vector<2x128xf32>, vector<2x128xf32> -> vector<12x128xf32>
    %580 = vector.extract_strided_slice %579 {offsets = [0, 0], sizes = [2, 128], strides = [1, 1]} : vector<12x128xf32> to vector<2x128xf32>
    %581 = vector.extract_strided_slice %579 {offsets = [6, 0], sizes = [2, 128], strides = [1, 1]} : vector<12x128xf32> to vector<2x128xf32>
    %582 = tpu.concatenate %580, %581 in 0 : vector<2x128xf32>, vector<2x128xf32> -> vector<4x128xf32>
    %583 = vector.extract_strided_slice %579 {offsets = [1, 0], sizes = [2, 128], strides = [1, 1]} : vector<12x128xf32> to vector<2x128xf32>
    %584 = vector.extract_strided_slice %579 {offsets = [7, 0], sizes = [2, 128], strides = [1, 1]} : vector<12x128xf32> to vector<2x128xf32>
    %585 = tpu.concatenate %583, %584 in 0 : vector<2x128xf32>, vector<2x128xf32> -> vector<4x128xf32>
    %586 = vector.extract_strided_slice %579 {offsets = [2, 0], sizes = [2, 128], strides = [1, 1]} : vector<12x128xf32> to vector<2x128xf32>
    %587 = vector.extract_strided_slice %579 {offsets = [8, 0], sizes = [2, 128], strides = [1, 1]} : vector<12x128xf32> to vector<2x128xf32>
    %588 = tpu.concatenate %586, %587 in 0 : vector<2x128xf32>, vector<2x128xf32> -> vector<4x128xf32>
    %589 = vector.extract_strided_slice %579 {offsets = [3, 0], sizes = [2, 128], strides = [1, 1]} : vector<12x128xf32> to vector<2x128xf32>
    %590 = vector.extract_strided_slice %579 {offsets = [9, 0], sizes = [2, 128], strides = [1, 1]} : vector<12x128xf32> to vector<2x128xf32>
    %591 = tpu.concatenate %589, %590 in 0 : vector<2x128xf32>, vector<2x128xf32> -> vector<4x128xf32>
    %592 = vector.extract_strided_slice %579 {offsets = [4, 0], sizes = [2, 128], strides = [1, 1]} : vector<12x128xf32> to vector<2x128xf32>
    %593 = vector.extract_strided_slice %579 {offsets = [10, 0], sizes = [2, 128], strides = [1, 1]} : vector<12x128xf32> to vector<2x128xf32>
    %594 = tpu.concatenate %592, %593 in 0 : vector<2x128xf32>, vector<2x128xf32> -> vector<4x128xf32>
    %595 = tpu.concatenate %582, %585, %588, %591, %594 in 1 : vector<4x128xf32>, vector<4x128xf32>, vector<4x128xf32>, vector<4x128xf32>, vector<4x128xf32> -> vector<4x640xf32>
    %cst_199 = arith.constant dense<0.000000e+00> : vector<4x128xf32>
    %596 = tpu.matmul %595, %575, %cst_199 {dimension_numbers = #tpu.dot_dimension_numbers<[1], [0], [0], [1], [0, 0, 1, 1], [], []>} : vector<4x640xf32>, vector<640x128xf32>, vector<4x128xf32> -> vector<4x128xf32>
    %c0_200 = arith.constant 0 : index
    %c0_201 = arith.constant 0 : index
    %c0_202 = arith.constant 0 : index
    %597 = vector.load %arg20[%c0_200, %c0_201, %c0_202] : memref<3x1x128xf32, #tpu.memory_space<vmem>>, vector<1x1x128xf32>
    %598 = vector.shape_cast %597 : vector<1x1x128xf32> to vector<1x128xf32>
    %599 = vector.broadcast %598 : vector<1x128xf32> to vector<4x128xf32>
    %600 = arith.addf %596, %599 : vector<4x128xf32>
    %cst_203 = arith.constant 0.000000e+00 : f32
    %601 = vector.broadcast %cst_203 : f32 to vector<4x128xf32>
    %602 = arith.maximumf %600, %601 : vector<4x128xf32>
    %c1_204 = arith.constant 1 : index
    %c0_205 = arith.constant 0 : index
    %c0_206 = arith.constant 0 : index
    %603 = vector.load %arg20[%c1_204, %c0_205, %c0_206] : memref<3x1x128xf32, #tpu.memory_space<vmem>>, vector<1x1x128xf32>
    %604 = vector.shape_cast %603 : vector<1x1x128xf32> to vector<1x128xf32>
    %c2_207 = arith.constant 2 : index
    %c0_208 = arith.constant 0 : index
    %c0_209 = arith.constant 0 : index
    %605 = vector.load %arg20[%c2_207, %c0_208, %c0_209] : memref<3x1x128xf32, #tpu.memory_space<vmem>>, vector<1x1x128xf32>
    %606 = vector.shape_cast %605 : vector<1x1x128xf32> to vector<1x128xf32>
    %cst_210 = arith.constant dense<0.000000e+00> : vector<128xf32>
    %607 = vector.multi_reduction <add>, %602, %cst_210 [0] : vector<4x128xf32> to vector<128xf32>
    %608 = vector.shape_cast %607 : vector<128xf32> to vector<1x128xf32>
    %cst_211 = arith.constant 2.500000e-01 : f32
    %609 = vector.broadcast %cst_211 : f32 to vector<1x128xf32>
    %610 = arith.mulf %608, %609 : vector<1x128xf32>
    %611 = vector.broadcast %610 : vector<1x128xf32> to vector<4x128xf32>
    %612 = arith.subf %602, %611 : vector<4x128xf32>
    %613 = arith.mulf %612, %612 : vector<4x128xf32>
    %cst_212 = arith.constant dense<0.000000e+00> : vector<128xf32>
    %614 = vector.multi_reduction <add>, %613, %cst_212 [0] : vector<4x128xf32> to vector<128xf32>
    %615 = vector.shape_cast %614 : vector<128xf32> to vector<1x128xf32>
    %cst_213 = arith.constant 2.500000e-01 : f32
    %616 = vector.broadcast %cst_213 : f32 to vector<1x128xf32>
    %617 = arith.mulf %615, %616 : vector<1x128xf32>
    %cst_214 = arith.constant 9.99999974E-6 : f32
    %618 = vector.broadcast %cst_214 : f32 to vector<1x128xf32>
    %619 = arith.addf %617, %618 : vector<1x128xf32>
    %620 = math.rsqrt %619 : vector<1x128xf32>
    %621 = vector.broadcast %620 : vector<1x128xf32> to vector<4x128xf32>
    %622 = arith.mulf %612, %621 : vector<4x128xf32>
    %623 = vector.broadcast %604 : vector<1x128xf32> to vector<4x128xf32>
    %624 = arith.mulf %622, %623 : vector<4x128xf32>
    %625 = vector.broadcast %606 : vector<1x128xf32> to vector<4x128xf32>
    %626 = arith.addf %624, %625 : vector<4x128xf32>
    %627 = tpu.iota {dimensions = array<i32: 0>} : vector<8x4xi32>
    %628 = tpu.iota {dimensions = array<i32: 1>} : vector<8x4xi32>
    %c2_i32_215 = arith.constant 2 : i32
    %629 = vector.broadcast %c2_i32_215 : i32 to vector<8x4xi32>
    %630 = arith.muli %629, %628 : vector<8x4xi32>
    %631 = arith.cmpi eq, %627, %630 : vector<8x4xi32>
    %c2_i32_216 = arith.constant 2 : i32
    %632 = vector.broadcast %c2_i32_216 : i32 to vector<8x4xi32>
    %633 = arith.muli %632, %628 : vector<8x4xi32>
    %c1_i32_217 = arith.constant 1 : i32
    %634 = vector.broadcast %c1_i32_217 : i32 to vector<8x4xi32>
    %635 = arith.addi %633, %634 : vector<8x4xi32>
    %636 = arith.cmpi eq, %627, %635 : vector<8x4xi32>
    %637 = arith.ori %631, %636 : vector<8x4xi1>
    %638 = arith.extui %637 : vector<8x4xi1> to vector<8x4xi32>
    %639 = arith.sitofp %638 : vector<8x4xi32> to vector<8x4xf32>
    %cst_218 = arith.constant dense<0.000000e+00> : vector<8x128xf32>
    %640 = tpu.matmul %639, %626, %cst_218 {dimension_numbers = #tpu.dot_dimension_numbers<[1], [0], [0], [1], [0, 0, 1, 1], [], []>} : vector<8x4xf32>, vector<4x128xf32>, vector<8x128xf32> -> vector<8x128xf32>
    %c0_219 = arith.constant 0 : index
    %c0_220 = arith.constant 0 : index
    %641 = vector.load %arg21[%c0_219, %c0_220] : memref<640x64xf32, #tpu.memory_space<vmem>>, vector<640x64xf32>
    %cst_221 = arith.constant 0.000000e+00 : f32
    %642 = vector.broadcast %cst_221 : f32 to vector<3x128xf32>
    %643 = vector.extract_strided_slice %640 {offsets = [0, 0], sizes = [4, 128], strides = [1, 1]} : vector<8x128xf32> to vector<4x128xf32>
    %644 = vector.extract_strided_slice %640 {offsets = [4, 0], sizes = [4, 128], strides = [1, 1]} : vector<8x128xf32> to vector<4x128xf32>
    %645 = tpu.concatenate %642, %643, %642, %642, %644, %642 in 0 : vector<3x128xf32>, vector<4x128xf32>, vector<3x128xf32>, vector<3x128xf32>, vector<4x128xf32>, vector<3x128xf32> -> vector<20x128xf32>
    %646 = vector.extract_strided_slice %645 {offsets = [0, 0], sizes = [6, 128], strides = [1, 1]} : vector<20x128xf32> to vector<6x128xf32>
    %647 = vector.extract_strided_slice %645 {offsets = [10, 0], sizes = [6, 128], strides = [1, 1]} : vector<20x128xf32> to vector<6x128xf32>
    %648 = tpu.concatenate %646, %647 in 0 : vector<6x128xf32>, vector<6x128xf32> -> vector<12x128xf32>
    %649 = vector.extract_strided_slice %645 {offsets = [1, 0], sizes = [6, 128], strides = [1, 1]} : vector<20x128xf32> to vector<6x128xf32>
    %650 = vector.extract_strided_slice %645 {offsets = [11, 0], sizes = [6, 128], strides = [1, 1]} : vector<20x128xf32> to vector<6x128xf32>
    %651 = tpu.concatenate %649, %650 in 0 : vector<6x128xf32>, vector<6x128xf32> -> vector<12x128xf32>
    %652 = vector.extract_strided_slice %645 {offsets = [2, 0], sizes = [6, 128], strides = [1, 1]} : vector<20x128xf32> to vector<6x128xf32>
    %653 = vector.extract_strided_slice %645 {offsets = [12, 0], sizes = [6, 128], strides = [1, 1]} : vector<20x128xf32> to vector<6x128xf32>
    %654 = tpu.concatenate %652, %653 in 0 : vector<6x128xf32>, vector<6x128xf32> -> vector<12x128xf32>
    %655 = vector.extract_strided_slice %645 {offsets = [3, 0], sizes = [6, 128], strides = [1, 1]} : vector<20x128xf32> to vector<6x128xf32>
    %656 = vector.extract_strided_slice %645 {offsets = [13, 0], sizes = [6, 128], strides = [1, 1]} : vector<20x128xf32> to vector<6x128xf32>
    %657 = tpu.concatenate %655, %656 in 0 : vector<6x128xf32>, vector<6x128xf32> -> vector<12x128xf32>
    %658 = vector.extract_strided_slice %645 {offsets = [4, 0], sizes = [6, 128], strides = [1, 1]} : vector<20x128xf32> to vector<6x128xf32>
    %659 = vector.extract_strided_slice %645 {offsets = [14, 0], sizes = [6, 128], strides = [1, 1]} : vector<20x128xf32> to vector<6x128xf32>
    %660 = tpu.concatenate %658, %659 in 0 : vector<6x128xf32>, vector<6x128xf32> -> vector<12x128xf32>
    %661 = tpu.concatenate %648, %651, %654, %657, %660 in 1 : vector<12x128xf32>, vector<12x128xf32>, vector<12x128xf32>, vector<12x128xf32>, vector<12x128xf32> -> vector<12x640xf32>
    %cst_222 = arith.constant dense<0.000000e+00> : vector<12x64xf32>
    %662 = tpu.matmul %661, %641, %cst_222 {dimension_numbers = #tpu.dot_dimension_numbers<[1], [0], [0], [1], [0, 0, 1, 1], [], []>} : vector<12x640xf32>, vector<640x64xf32>, vector<12x64xf32> -> vector<12x64xf32>
    %c0_223 = arith.constant 0 : index
    %c0_224 = arith.constant 0 : index
    %c0_225 = arith.constant 0 : index
    %663 = vector.load %arg22[%c0_223, %c0_224, %c0_225] : memref<3x1x64xf32, #tpu.memory_space<vmem>>, vector<1x1x64xf32>
    %664 = vector.shape_cast %663 : vector<1x1x64xf32> to vector<1x64xf32>
    %665 = vector.broadcast %664 : vector<1x64xf32> to vector<12x64xf32>
    %666 = arith.addf %662, %665 : vector<12x64xf32>
    %cst_226 = arith.constant 0.000000e+00 : f32
    %667 = vector.broadcast %cst_226 : f32 to vector<12x64xf32>
    %668 = arith.maximumf %666, %667 : vector<12x64xf32>
    %c1_227 = arith.constant 1 : index
    %c0_228 = arith.constant 0 : index
    %c0_229 = arith.constant 0 : index
    %669 = vector.load %arg22[%c1_227, %c0_228, %c0_229] : memref<3x1x64xf32, #tpu.memory_space<vmem>>, vector<1x1x64xf32>
    %670 = vector.shape_cast %669 : vector<1x1x64xf32> to vector<1x64xf32>
    %c2_230 = arith.constant 2 : index
    %c0_231 = arith.constant 0 : index
    %c0_232 = arith.constant 0 : index
    %671 = vector.load %arg22[%c2_230, %c0_231, %c0_232] : memref<3x1x64xf32, #tpu.memory_space<vmem>>, vector<1x1x64xf32>
    %672 = vector.shape_cast %671 : vector<1x1x64xf32> to vector<1x64xf32>
    %cst_233 = arith.constant dense<0.000000e+00> : vector<64xf32>
    %673 = vector.multi_reduction <add>, %668, %cst_233 [0] : vector<12x64xf32> to vector<64xf32>
    %674 = vector.shape_cast %673 : vector<64xf32> to vector<1x64xf32>
    %cst_234 = arith.constant 0.0833333358 : f32
    %675 = vector.broadcast %cst_234 : f32 to vector<1x64xf32>
    %676 = arith.mulf %674, %675 : vector<1x64xf32>
    %677 = vector.broadcast %676 : vector<1x64xf32> to vector<12x64xf32>
    %678 = arith.subf %668, %677 : vector<12x64xf32>
    %679 = arith.mulf %678, %678 : vector<12x64xf32>
    %cst_235 = arith.constant dense<0.000000e+00> : vector<64xf32>
    %680 = vector.multi_reduction <add>, %679, %cst_235 [0] : vector<12x64xf32> to vector<64xf32>
    %681 = vector.shape_cast %680 : vector<64xf32> to vector<1x64xf32>
    %cst_236 = arith.constant 0.0833333358 : f32
    %682 = vector.broadcast %cst_236 : f32 to vector<1x64xf32>
    %683 = arith.mulf %681, %682 : vector<1x64xf32>
    %cst_237 = arith.constant 9.99999974E-6 : f32
    %684 = vector.broadcast %cst_237 : f32 to vector<1x64xf32>
    %685 = arith.addf %683, %684 : vector<1x64xf32>
    %686 = math.rsqrt %685 : vector<1x64xf32>
    %687 = vector.broadcast %686 : vector<1x64xf32> to vector<12x64xf32>
    %688 = arith.mulf %678, %687 : vector<12x64xf32>
    %689 = vector.broadcast %670 : vector<1x64xf32> to vector<12x64xf32>
    %690 = arith.mulf %688, %689 : vector<12x64xf32>
    %691 = vector.broadcast %672 : vector<1x64xf32> to vector<12x64xf32>
    %692 = arith.addf %690, %691 : vector<12x64xf32>
    %693 = tpu.iota {dimensions = array<i32: 0>} : vector<24x12xi32>
    %694 = tpu.iota {dimensions = array<i32: 1>} : vector<24x12xi32>
    %c2_i32_238 = arith.constant 2 : i32
    %695 = vector.broadcast %c2_i32_238 : i32 to vector<24x12xi32>
    %696 = arith.muli %695, %694 : vector<24x12xi32>
    %697 = arith.cmpi eq, %693, %696 : vector<24x12xi32>
    %c2_i32_239 = arith.constant 2 : i32
    %698 = vector.broadcast %c2_i32_239 : i32 to vector<24x12xi32>
    %699 = arith.muli %698, %694 : vector<24x12xi32>
    %c1_i32_240 = arith.constant 1 : i32
    %700 = vector.broadcast %c1_i32_240 : i32 to vector<24x12xi32>
    %701 = arith.addi %699, %700 : vector<24x12xi32>
    %702 = arith.cmpi eq, %693, %701 : vector<24x12xi32>
    %703 = arith.ori %697, %702 : vector<24x12xi1>
    %704 = arith.extui %703 : vector<24x12xi1> to vector<24x12xi32>
    %705 = arith.sitofp %704 : vector<24x12xi32> to vector<24x12xf32>
    %cst_241 = arith.constant dense<0.000000e+00> : vector<24x64xf32>
    %706 = tpu.matmul %705, %692, %cst_241 {dimension_numbers = #tpu.dot_dimension_numbers<[1], [0], [0], [1], [0, 0, 1, 1], [], []>} : vector<24x12xf32>, vector<12x64xf32>, vector<24x64xf32> -> vector<24x64xf32>
    %c0_242 = arith.constant 0 : index
    %c0_243 = arith.constant 0 : index
    %707 = vector.load %arg23[%c0_242, %c0_243] : memref<320x64xf32, #tpu.memory_space<vmem>>, vector<320x64xf32>
    %cst_244 = arith.constant 0.000000e+00 : f32
    %708 = vector.broadcast %cst_244 : f32 to vector<2x64xf32>
    %709 = vector.extract_strided_slice %706 {offsets = [0, 0], sizes = [12, 64], strides = [1, 1]} : vector<24x64xf32> to vector<12x64xf32>
    %710 = vector.extract_strided_slice %706 {offsets = [12, 0], sizes = [12, 64], strides = [1, 1]} : vector<24x64xf32> to vector<12x64xf32>
    %711 = tpu.concatenate %708, %709, %708, %708, %710, %708 in 0 : vector<2x64xf32>, vector<12x64xf32>, vector<2x64xf32>, vector<2x64xf32>, vector<12x64xf32>, vector<2x64xf32> -> vector<32x64xf32>
    %712 = vector.extract_strided_slice %711 {offsets = [0, 0], sizes = [12, 64], strides = [1, 1]} : vector<32x64xf32> to vector<12x64xf32>
    %713 = vector.extract_strided_slice %711 {offsets = [16, 0], sizes = [12, 64], strides = [1, 1]} : vector<32x64xf32> to vector<12x64xf32>
    %714 = tpu.concatenate %712, %713 in 0 : vector<12x64xf32>, vector<12x64xf32> -> vector<24x64xf32>
    %715 = vector.extract_strided_slice %711 {offsets = [1, 0], sizes = [12, 64], strides = [1, 1]} : vector<32x64xf32> to vector<12x64xf32>
    %716 = vector.extract_strided_slice %711 {offsets = [17, 0], sizes = [12, 64], strides = [1, 1]} : vector<32x64xf32> to vector<12x64xf32>
    %717 = tpu.concatenate %715, %716 in 0 : vector<12x64xf32>, vector<12x64xf32> -> vector<24x64xf32>
    %718 = vector.extract_strided_slice %711 {offsets = [2, 0], sizes = [12, 64], strides = [1, 1]} : vector<32x64xf32> to vector<12x64xf32>
    %719 = vector.extract_strided_slice %711 {offsets = [18, 0], sizes = [12, 64], strides = [1, 1]} : vector<32x64xf32> to vector<12x64xf32>
    %720 = tpu.concatenate %718, %719 in 0 : vector<12x64xf32>, vector<12x64xf32> -> vector<24x64xf32>
    %721 = vector.extract_strided_slice %711 {offsets = [3, 0], sizes = [12, 64], strides = [1, 1]} : vector<32x64xf32> to vector<12x64xf32>
    %722 = vector.extract_strided_slice %711 {offsets = [19, 0], sizes = [12, 64], strides = [1, 1]} : vector<32x64xf32> to vector<12x64xf32>
    %723 = tpu.concatenate %721, %722 in 0 : vector<12x64xf32>, vector<12x64xf32> -> vector<24x64xf32>
    %724 = vector.extract_strided_slice %711 {offsets = [4, 0], sizes = [12, 64], strides = [1, 1]} : vector<32x64xf32> to vector<12x64xf32>
    %725 = vector.extract_strided_slice %711 {offsets = [20, 0], sizes = [12, 64], strides = [1, 1]} : vector<32x64xf32> to vector<12x64xf32>
    %726 = tpu.concatenate %724, %725 in 0 : vector<12x64xf32>, vector<12x64xf32> -> vector<24x64xf32>
    %727 = tpu.concatenate %714, %717, %720, %723, %726 in 1 : vector<24x64xf32>, vector<24x64xf32>, vector<24x64xf32>, vector<24x64xf32>, vector<24x64xf32> -> vector<24x320xf32>
    %cst_245 = arith.constant dense<0.000000e+00> : vector<24x64xf32>
    %728 = tpu.matmul %727, %707, %cst_245 {dimension_numbers = #tpu.dot_dimension_numbers<[1], [0], [0], [1], [0, 0, 1, 1], [], []>} : vector<24x320xf32>, vector<320x64xf32>, vector<24x64xf32> -> vector<24x64xf32>
    %c0_246 = arith.constant 0 : index
    %c0_247 = arith.constant 0 : index
    %c0_248 = arith.constant 0 : index
    %729 = vector.load %arg24[%c0_246, %c0_247, %c0_248] : memref<3x1x64xf32, #tpu.memory_space<vmem>>, vector<1x1x64xf32>
    %730 = vector.shape_cast %729 : vector<1x1x64xf32> to vector<1x64xf32>
    %731 = vector.broadcast %730 : vector<1x64xf32> to vector<24x64xf32>
    %732 = arith.addf %728, %731 : vector<24x64xf32>
    %cst_249 = arith.constant 0.000000e+00 : f32
    %733 = vector.broadcast %cst_249 : f32 to vector<24x64xf32>
    %734 = arith.maximumf %732, %733 : vector<24x64xf32>
    %c1_250 = arith.constant 1 : index
    %c0_251 = arith.constant 0 : index
    %c0_252 = arith.constant 0 : index
    %735 = vector.load %arg24[%c1_250, %c0_251, %c0_252] : memref<3x1x64xf32, #tpu.memory_space<vmem>>, vector<1x1x64xf32>
    %736 = vector.shape_cast %735 : vector<1x1x64xf32> to vector<1x64xf32>
    %c2_253 = arith.constant 2 : index
    %c0_254 = arith.constant 0 : index
    %c0_255 = arith.constant 0 : index
    %737 = vector.load %arg24[%c2_253, %c0_254, %c0_255] : memref<3x1x64xf32, #tpu.memory_space<vmem>>, vector<1x1x64xf32>
    %738 = vector.shape_cast %737 : vector<1x1x64xf32> to vector<1x64xf32>
    %cst_256 = arith.constant dense<0.000000e+00> : vector<64xf32>
    %739 = vector.multi_reduction <add>, %734, %cst_256 [0] : vector<24x64xf32> to vector<64xf32>
    %740 = vector.shape_cast %739 : vector<64xf32> to vector<1x64xf32>
    %cst_257 = arith.constant 0.0416666679 : f32
    %741 = vector.broadcast %cst_257 : f32 to vector<1x64xf32>
    %742 = arith.mulf %740, %741 : vector<1x64xf32>
    %743 = vector.broadcast %742 : vector<1x64xf32> to vector<24x64xf32>
    %744 = arith.subf %734, %743 : vector<24x64xf32>
    %745 = arith.mulf %744, %744 : vector<24x64xf32>
    %cst_258 = arith.constant dense<0.000000e+00> : vector<64xf32>
    %746 = vector.multi_reduction <add>, %745, %cst_258 [0] : vector<24x64xf32> to vector<64xf32>
    %747 = vector.shape_cast %746 : vector<64xf32> to vector<1x64xf32>
    %cst_259 = arith.constant 0.0416666679 : f32
    %748 = vector.broadcast %cst_259 : f32 to vector<1x64xf32>
    %749 = arith.mulf %747, %748 : vector<1x64xf32>
    %cst_260 = arith.constant 9.99999974E-6 : f32
    %750 = vector.broadcast %cst_260 : f32 to vector<1x64xf32>
    %751 = arith.addf %749, %750 : vector<1x64xf32>
    %752 = math.rsqrt %751 : vector<1x64xf32>
    %753 = vector.broadcast %752 : vector<1x64xf32> to vector<24x64xf32>
    %754 = arith.mulf %744, %753 : vector<24x64xf32>
    %755 = vector.broadcast %736 : vector<1x64xf32> to vector<24x64xf32>
    %756 = arith.mulf %754, %755 : vector<24x64xf32>
    %757 = vector.broadcast %738 : vector<1x64xf32> to vector<24x64xf32>
    %758 = arith.addf %756, %757 : vector<24x64xf32>
    %759 = tpu.transpose %758, [1, 0] : vector<24x64xf32> -> vector<64x24xf32>
    %760 = tpu.iota {dimensions = array<i32: 0>} : vector<24x48xi32>
    %761 = tpu.iota {dimensions = array<i32: 1>} : vector<24x48xi32>
    %c2_i32_261 = arith.constant 2 : i32
    %762 = vector.broadcast %c2_i32_261 : i32 to vector<24x48xi32>
    %763 = arith.muli %762, %760 : vector<24x48xi32>
    %764 = arith.cmpi eq, %761, %763 : vector<24x48xi32>
    %c2_i32_262 = arith.constant 2 : i32
    %765 = vector.broadcast %c2_i32_262 : i32 to vector<24x48xi32>
    %766 = arith.muli %765, %760 : vector<24x48xi32>
    %c1_i32_263 = arith.constant 1 : i32
    %767 = vector.broadcast %c1_i32_263 : i32 to vector<24x48xi32>
    %768 = arith.addi %766, %767 : vector<24x48xi32>
    %769 = arith.cmpi eq, %761, %768 : vector<24x48xi32>
    %770 = arith.ori %764, %769 : vector<24x48xi1>
    %771 = arith.extui %770 : vector<24x48xi1> to vector<24x48xi32>
    %772 = arith.sitofp %771 : vector<24x48xi32> to vector<24x48xf32>
    %cst_264 = arith.constant dense<0.000000e+00> : vector<64x48xf32>
    %773 = tpu.matmul %759, %772, %cst_264 {dimension_numbers = #tpu.dot_dimension_numbers<[1], [0], [0], [1], [0, 0, 1, 1], [], []>} : vector<64x24xf32>, vector<24x48xf32>, vector<64x48xf32> -> vector<64x48xf32>
    %c0_265 = arith.constant 0 : index
    %c0_266 = arith.constant 0 : index
    %774 = vector.load %arg25[%c0_265, %c0_266] : memref<32x320xf32, #tpu.memory_space<vmem>>, vector<32x320xf32>
    %cst_267 = arith.constant 0.000000e+00 : f32
    %775 = vector.broadcast %cst_267 : f32 to vector<64x2xf32>
    %776 = vector.extract_strided_slice %773 {offsets = [0, 0], sizes = [64, 24], strides = [1, 1]} : vector<64x48xf32> to vector<64x24xf32>
    %777 = vector.extract_strided_slice %773 {offsets = [0, 24], sizes = [64, 24], strides = [1, 1]} : vector<64x48xf32> to vector<64x24xf32>
    %778 = tpu.concatenate %775, %776, %775, %775, %777, %775 in 1 : vector<64x2xf32>, vector<64x24xf32>, vector<64x2xf32>, vector<64x2xf32>, vector<64x24xf32>, vector<64x2xf32> -> vector<64x56xf32>
    %779 = vector.extract_strided_slice %778 {offsets = [0, 0], sizes = [64, 24], strides = [1, 1]} : vector<64x56xf32> to vector<64x24xf32>
    %780 = vector.extract_strided_slice %778 {offsets = [0, 28], sizes = [64, 24], strides = [1, 1]} : vector<64x56xf32> to vector<64x24xf32>
    %781 = tpu.concatenate %779, %780 in 1 : vector<64x24xf32>, vector<64x24xf32> -> vector<64x48xf32>
    %782 = vector.extract_strided_slice %778 {offsets = [0, 1], sizes = [64, 24], strides = [1, 1]} : vector<64x56xf32> to vector<64x24xf32>
    %783 = vector.extract_strided_slice %778 {offsets = [0, 29], sizes = [64, 24], strides = [1, 1]} : vector<64x56xf32> to vector<64x24xf32>
    %784 = tpu.concatenate %782, %783 in 1 : vector<64x24xf32>, vector<64x24xf32> -> vector<64x48xf32>
    %785 = vector.extract_strided_slice %778 {offsets = [0, 2], sizes = [64, 24], strides = [1, 1]} : vector<64x56xf32> to vector<64x24xf32>
    %786 = vector.extract_strided_slice %778 {offsets = [0, 30], sizes = [64, 24], strides = [1, 1]} : vector<64x56xf32> to vector<64x24xf32>
    %787 = tpu.concatenate %785, %786 in 1 : vector<64x24xf32>, vector<64x24xf32> -> vector<64x48xf32>
    %788 = vector.extract_strided_slice %778 {offsets = [0, 3], sizes = [64, 24], strides = [1, 1]} : vector<64x56xf32> to vector<64x24xf32>
    %789 = vector.extract_strided_slice %778 {offsets = [0, 31], sizes = [64, 24], strides = [1, 1]} : vector<64x56xf32> to vector<64x24xf32>
    %790 = tpu.concatenate %788, %789 in 1 : vector<64x24xf32>, vector<64x24xf32> -> vector<64x48xf32>
    %791 = vector.extract_strided_slice %778 {offsets = [0, 4], sizes = [64, 24], strides = [1, 1]} : vector<64x56xf32> to vector<64x24xf32>
    %792 = vector.extract_strided_slice %778 {offsets = [0, 32], sizes = [64, 24], strides = [1, 1]} : vector<64x56xf32> to vector<64x24xf32>
    %793 = tpu.concatenate %791, %792 in 1 : vector<64x24xf32>, vector<64x24xf32> -> vector<64x48xf32>
    %794 = tpu.concatenate %781, %784, %787, %790, %793 in 0 : vector<64x48xf32>, vector<64x48xf32>, vector<64x48xf32>, vector<64x48xf32>, vector<64x48xf32> -> vector<320x48xf32>
    %cst_268 = arith.constant dense<0.000000e+00> : vector<32x48xf32>
    %795 = tpu.matmul %774, %794, %cst_268 {dimension_numbers = #tpu.dot_dimension_numbers<[1], [0], [0], [1], [0, 0, 1, 1], [], []>} : vector<32x320xf32>, vector<320x48xf32>, vector<32x48xf32> -> vector<32x48xf32>
    %c0_269 = arith.constant 0 : index
    %c0_270 = arith.constant 0 : index
    %c0_271 = arith.constant 0 : index
    %796 = vector.load %arg26[%c0_269, %c0_270, %c0_271] : memref<3x32x1xf32, #tpu.memory_space<vmem>>, vector<1x32x1xf32>
    %797 = vector.shape_cast %796 : vector<1x32x1xf32> to vector<32x1xf32>
    %798 = vector.broadcast %797 : vector<32x1xf32> to vector<32x48xf32>
    %799 = arith.addf %795, %798 : vector<32x48xf32>
    %cst_272 = arith.constant 0.000000e+00 : f32
    %800 = vector.broadcast %cst_272 : f32 to vector<32x48xf32>
    %801 = arith.maximumf %799, %800 : vector<32x48xf32>
    %c1_273 = arith.constant 1 : index
    %c0_274 = arith.constant 0 : index
    %c0_275 = arith.constant 0 : index
    %802 = vector.load %arg26[%c1_273, %c0_274, %c0_275] : memref<3x32x1xf32, #tpu.memory_space<vmem>>, vector<1x32x1xf32>
    %803 = vector.shape_cast %802 : vector<1x32x1xf32> to vector<32x1xf32>
    %c2_276 = arith.constant 2 : index
    %c0_277 = arith.constant 0 : index
    %c0_278 = arith.constant 0 : index
    %804 = vector.load %arg26[%c2_276, %c0_277, %c0_278] : memref<3x32x1xf32, #tpu.memory_space<vmem>>, vector<1x32x1xf32>
    %805 = vector.shape_cast %804 : vector<1x32x1xf32> to vector<32x1xf32>
    %cst_279 = arith.constant dense<0.000000e+00> : vector<32xf32>
    %806 = vector.multi_reduction <add>, %801, %cst_279 [1] : vector<32x48xf32> to vector<32xf32>
    %807 = vector.shape_cast %806 : vector<32xf32> to vector<32x1xf32>
    %cst_280 = arith.constant 0.020833334 : f32
    %808 = vector.broadcast %cst_280 : f32 to vector<32x1xf32>
    %809 = arith.mulf %807, %808 : vector<32x1xf32>
    %810 = vector.broadcast %809 : vector<32x1xf32> to vector<32x48xf32>
    %811 = arith.subf %801, %810 : vector<32x48xf32>
    %812 = arith.mulf %811, %811 : vector<32x48xf32>
    %cst_281 = arith.constant dense<0.000000e+00> : vector<32xf32>
    %813 = vector.multi_reduction <add>, %812, %cst_281 [1] : vector<32x48xf32> to vector<32xf32>
    %814 = vector.shape_cast %813 : vector<32xf32> to vector<32x1xf32>
    %cst_282 = arith.constant 0.020833334 : f32
    %815 = vector.broadcast %cst_282 : f32 to vector<32x1xf32>
    %816 = arith.mulf %814, %815 : vector<32x1xf32>
    %cst_283 = arith.constant 9.99999974E-6 : f32
    %817 = vector.broadcast %cst_283 : f32 to vector<32x1xf32>
    %818 = arith.addf %816, %817 : vector<32x1xf32>
    %819 = math.rsqrt %818 : vector<32x1xf32>
    %820 = vector.broadcast %819 : vector<32x1xf32> to vector<32x48xf32>
    %821 = arith.mulf %811, %820 : vector<32x48xf32>
    %822 = vector.broadcast %803 : vector<32x1xf32> to vector<32x48xf32>
    %823 = arith.mulf %821, %822 : vector<32x48xf32>
    %824 = vector.broadcast %805 : vector<32x1xf32> to vector<32x48xf32>
    %825 = arith.addf %823, %824 : vector<32x48xf32>
    %826 = tpu.iota {dimensions = array<i32: 0>} : vector<48x96xi32>
    %827 = tpu.iota {dimensions = array<i32: 1>} : vector<48x96xi32>
    %c2_i32_284 = arith.constant 2 : i32
    %828 = vector.broadcast %c2_i32_284 : i32 to vector<48x96xi32>
    %829 = arith.muli %828, %826 : vector<48x96xi32>
    %830 = arith.cmpi eq, %827, %829 : vector<48x96xi32>
    %c2_i32_285 = arith.constant 2 : i32
    %831 = vector.broadcast %c2_i32_285 : i32 to vector<48x96xi32>
    %832 = arith.muli %831, %826 : vector<48x96xi32>
    %c1_i32_286 = arith.constant 1 : i32
    %833 = vector.broadcast %c1_i32_286 : i32 to vector<48x96xi32>
    %834 = arith.addi %832, %833 : vector<48x96xi32>
    %835 = arith.cmpi eq, %827, %834 : vector<48x96xi32>
    %836 = arith.ori %830, %835 : vector<48x96xi1>
    %837 = arith.extui %836 : vector<48x96xi1> to vector<48x96xi32>
    %838 = arith.sitofp %837 : vector<48x96xi32> to vector<48x96xf32>
    %cst_287 = arith.constant dense<0.000000e+00> : vector<32x96xf32>
    %839 = tpu.matmul %825, %838, %cst_287 {dimension_numbers = #tpu.dot_dimension_numbers<[1], [0], [0], [1], [0, 0, 1, 1], [], []>} : vector<32x48xf32>, vector<48x96xf32>, vector<32x96xf32> -> vector<32x96xf32>
    %c0_288 = arith.constant 0 : index
    %c0_289 = arith.constant 0 : index
    %840 = vector.load %arg27[%c0_288, %c0_289] : memref<16x160xf32, #tpu.memory_space<vmem>>, vector<16x160xf32>
    %cst_290 = arith.constant 0.000000e+00 : f32
    %841 = vector.broadcast %cst_290 : f32 to vector<32x3xf32>
    %842 = vector.extract_strided_slice %839 {offsets = [0, 0], sizes = [32, 48], strides = [1, 1]} : vector<32x96xf32> to vector<32x48xf32>
    %843 = vector.extract_strided_slice %839 {offsets = [0, 48], sizes = [32, 48], strides = [1, 1]} : vector<32x96xf32> to vector<32x48xf32>
    %844 = tpu.concatenate %841, %842, %841, %841, %843, %841 in 1 : vector<32x3xf32>, vector<32x48xf32>, vector<32x3xf32>, vector<32x3xf32>, vector<32x48xf32>, vector<32x3xf32> -> vector<32x108xf32>
    %845 = vector.extract_strided_slice %844 {offsets = [0, 0], sizes = [32, 50], strides = [1, 1]} : vector<32x108xf32> to vector<32x50xf32>
    %846 = vector.extract_strided_slice %844 {offsets = [0, 54], sizes = [32, 50], strides = [1, 1]} : vector<32x108xf32> to vector<32x50xf32>
    %847 = tpu.concatenate %845, %846 in 1 : vector<32x50xf32>, vector<32x50xf32> -> vector<32x100xf32>
    %848 = vector.extract_strided_slice %844 {offsets = [0, 1], sizes = [32, 50], strides = [1, 1]} : vector<32x108xf32> to vector<32x50xf32>
    %849 = vector.extract_strided_slice %844 {offsets = [0, 55], sizes = [32, 50], strides = [1, 1]} : vector<32x108xf32> to vector<32x50xf32>
    %850 = tpu.concatenate %848, %849 in 1 : vector<32x50xf32>, vector<32x50xf32> -> vector<32x100xf32>
    %851 = vector.extract_strided_slice %844 {offsets = [0, 2], sizes = [32, 50], strides = [1, 1]} : vector<32x108xf32> to vector<32x50xf32>
    %852 = vector.extract_strided_slice %844 {offsets = [0, 56], sizes = [32, 50], strides = [1, 1]} : vector<32x108xf32> to vector<32x50xf32>
    %853 = tpu.concatenate %851, %852 in 1 : vector<32x50xf32>, vector<32x50xf32> -> vector<32x100xf32>
    %854 = vector.extract_strided_slice %844 {offsets = [0, 3], sizes = [32, 50], strides = [1, 1]} : vector<32x108xf32> to vector<32x50xf32>
    %855 = vector.extract_strided_slice %844 {offsets = [0, 57], sizes = [32, 50], strides = [1, 1]} : vector<32x108xf32> to vector<32x50xf32>
    %856 = tpu.concatenate %854, %855 in 1 : vector<32x50xf32>, vector<32x50xf32> -> vector<32x100xf32>
    %857 = vector.extract_strided_slice %844 {offsets = [0, 4], sizes = [32, 50], strides = [1, 1]} : vector<32x108xf32> to vector<32x50xf32>
    %858 = vector.extract_strided_slice %844 {offsets = [0, 58], sizes = [32, 50], strides = [1, 1]} : vector<32x108xf32> to vector<32x50xf32>
    %859 = tpu.concatenate %857, %858 in 1 : vector<32x50xf32>, vector<32x50xf32> -> vector<32x100xf32>
    %860 = tpu.concatenate %847, %850, %853, %856, %859 in 0 : vector<32x100xf32>, vector<32x100xf32>, vector<32x100xf32>, vector<32x100xf32>, vector<32x100xf32> -> vector<160x100xf32>
    %cst_291 = arith.constant dense<0.000000e+00> : vector<16x100xf32>
    %861 = tpu.matmul %840, %860, %cst_291 {dimension_numbers = #tpu.dot_dimension_numbers<[1], [0], [0], [1], [0, 0, 1, 1], [], []>} : vector<16x160xf32>, vector<160x100xf32>, vector<16x100xf32> -> vector<16x100xf32>
    %c0_292 = arith.constant 0 : index
    %c0_293 = arith.constant 0 : index
    %c0_294 = arith.constant 0 : index
    %862 = vector.load %arg28[%c0_292, %c0_293, %c0_294] : memref<3x16x1xf32, #tpu.memory_space<vmem>>, vector<1x16x1xf32>
    %863 = vector.shape_cast %862 : vector<1x16x1xf32> to vector<16x1xf32>
    %864 = vector.broadcast %863 : vector<16x1xf32> to vector<16x100xf32>
    %865 = arith.addf %861, %864 : vector<16x100xf32>
    %cst_295 = arith.constant 0.000000e+00 : f32
    %866 = vector.broadcast %cst_295 : f32 to vector<16x100xf32>
    %867 = arith.maximumf %865, %866 : vector<16x100xf32>
    %c1_296 = arith.constant 1 : index
    %c0_297 = arith.constant 0 : index
    %c0_298 = arith.constant 0 : index
    %868 = vector.load %arg28[%c1_296, %c0_297, %c0_298] : memref<3x16x1xf32, #tpu.memory_space<vmem>>, vector<1x16x1xf32>
    %869 = vector.shape_cast %868 : vector<1x16x1xf32> to vector<16x1xf32>
    %c2_299 = arith.constant 2 : index
    %c0_300 = arith.constant 0 : index
    %c0_301 = arith.constant 0 : index
    %870 = vector.load %arg28[%c2_299, %c0_300, %c0_301] : memref<3x16x1xf32, #tpu.memory_space<vmem>>, vector<1x16x1xf32>
    %871 = vector.shape_cast %870 : vector<1x16x1xf32> to vector<16x1xf32>
    %cst_302 = arith.constant dense<0.000000e+00> : vector<16xf32>
    %872 = vector.multi_reduction <add>, %867, %cst_302 [1] : vector<16x100xf32> to vector<16xf32>
    %873 = vector.shape_cast %872 : vector<16xf32> to vector<16x1xf32>
    %cst_303 = arith.constant 0.00999999977 : f32
    %874 = vector.broadcast %cst_303 : f32 to vector<16x1xf32>
    %875 = arith.mulf %873, %874 : vector<16x1xf32>
    %876 = vector.broadcast %875 : vector<16x1xf32> to vector<16x100xf32>
    %877 = arith.subf %867, %876 : vector<16x100xf32>
    %878 = arith.mulf %877, %877 : vector<16x100xf32>
    %cst_304 = arith.constant dense<0.000000e+00> : vector<16xf32>
    %879 = vector.multi_reduction <add>, %878, %cst_304 [1] : vector<16x100xf32> to vector<16xf32>
    %880 = vector.shape_cast %879 : vector<16xf32> to vector<16x1xf32>
    %cst_305 = arith.constant 0.00999999977 : f32
    %881 = vector.broadcast %cst_305 : f32 to vector<16x1xf32>
    %882 = arith.mulf %880, %881 : vector<16x1xf32>
    %cst_306 = arith.constant 9.99999974E-6 : f32
    %883 = vector.broadcast %cst_306 : f32 to vector<16x1xf32>
    %884 = arith.addf %882, %883 : vector<16x1xf32>
    %885 = math.rsqrt %884 : vector<16x1xf32>
    %886 = vector.broadcast %885 : vector<16x1xf32> to vector<16x100xf32>
    %887 = arith.mulf %877, %886 : vector<16x100xf32>
    %888 = vector.broadcast %869 : vector<16x1xf32> to vector<16x100xf32>
    %889 = arith.mulf %887, %888 : vector<16x100xf32>
    %890 = vector.broadcast %871 : vector<16x1xf32> to vector<16x100xf32>
    %891 = arith.addf %889, %890 : vector<16x100xf32>
    %892 = tpu.iota {dimensions = array<i32: 0>} : vector<100x200xi32>
    %893 = tpu.iota {dimensions = array<i32: 1>} : vector<100x200xi32>
    %c2_i32_307 = arith.constant 2 : i32
    %894 = vector.broadcast %c2_i32_307 : i32 to vector<100x200xi32>
    %895 = arith.muli %894, %892 : vector<100x200xi32>
    %896 = arith.cmpi eq, %893, %895 : vector<100x200xi32>
    %c2_i32_308 = arith.constant 2 : i32
    %897 = vector.broadcast %c2_i32_308 : i32 to vector<100x200xi32>
    %898 = arith.muli %897, %892 : vector<100x200xi32>
    %c1_i32_309 = arith.constant 1 : i32
    %899 = vector.broadcast %c1_i32_309 : i32 to vector<100x200xi32>
    %900 = arith.addi %898, %899 : vector<100x200xi32>
    %901 = arith.cmpi eq, %893, %900 : vector<100x200xi32>
    %902 = arith.ori %896, %901 : vector<100x200xi1>
    %903 = arith.extui %902 : vector<100x200xi1> to vector<100x200xi32>
    %904 = arith.sitofp %903 : vector<100x200xi32> to vector<100x200xf32>
    %cst_310 = arith.constant dense<0.000000e+00> : vector<16x200xf32>
    %905 = tpu.matmul %891, %904, %cst_310 {dimension_numbers = #tpu.dot_dimension_numbers<[1], [0], [0], [1], [0, 0, 1, 1], [], []>} : vector<16x100xf32>, vector<100x200xf32>, vector<16x200xf32> -> vector<16x200xf32>
    %c0_311 = arith.constant 0 : index
    %c0_312 = arith.constant 0 : index
    %906 = vector.load %arg29[%c0_311, %c0_312] : memref<8x80xf32, #tpu.memory_space<vmem>>, vector<8x80xf32>
    %cst_313 = arith.constant 0.000000e+00 : f32
    %907 = vector.broadcast %cst_313 : f32 to vector<16x2xf32>
    %908 = vector.extract_strided_slice %905 {offsets = [0, 0], sizes = [16, 100], strides = [1, 1]} : vector<16x200xf32> to vector<16x100xf32>
    %909 = vector.extract_strided_slice %905 {offsets = [0, 100], sizes = [16, 100], strides = [1, 1]} : vector<16x200xf32> to vector<16x100xf32>
    %910 = tpu.concatenate %907, %908, %907, %907, %909, %907 in 1 : vector<16x2xf32>, vector<16x100xf32>, vector<16x2xf32>, vector<16x2xf32>, vector<16x100xf32>, vector<16x2xf32> -> vector<16x208xf32>
    %911 = vector.extract_strided_slice %910 {offsets = [0, 0], sizes = [16, 100], strides = [1, 1]} : vector<16x208xf32> to vector<16x100xf32>
    %912 = vector.extract_strided_slice %910 {offsets = [0, 104], sizes = [16, 100], strides = [1, 1]} : vector<16x208xf32> to vector<16x100xf32>
    %913 = tpu.concatenate %911, %912 in 1 : vector<16x100xf32>, vector<16x100xf32> -> vector<16x200xf32>
    %914 = vector.extract_strided_slice %910 {offsets = [0, 1], sizes = [16, 100], strides = [1, 1]} : vector<16x208xf32> to vector<16x100xf32>
    %915 = vector.extract_strided_slice %910 {offsets = [0, 105], sizes = [16, 100], strides = [1, 1]} : vector<16x208xf32> to vector<16x100xf32>
    %916 = tpu.concatenate %914, %915 in 1 : vector<16x100xf32>, vector<16x100xf32> -> vector<16x200xf32>
    %917 = vector.extract_strided_slice %910 {offsets = [0, 2], sizes = [16, 100], strides = [1, 1]} : vector<16x208xf32> to vector<16x100xf32>
    %918 = vector.extract_strided_slice %910 {offsets = [0, 106], sizes = [16, 100], strides = [1, 1]} : vector<16x208xf32> to vector<16x100xf32>
    %919 = tpu.concatenate %917, %918 in 1 : vector<16x100xf32>, vector<16x100xf32> -> vector<16x200xf32>
    %920 = vector.extract_strided_slice %910 {offsets = [0, 3], sizes = [16, 100], strides = [1, 1]} : vector<16x208xf32> to vector<16x100xf32>
    %921 = vector.extract_strided_slice %910 {offsets = [0, 107], sizes = [16, 100], strides = [1, 1]} : vector<16x208xf32> to vector<16x100xf32>
    %922 = tpu.concatenate %920, %921 in 1 : vector<16x100xf32>, vector<16x100xf32> -> vector<16x200xf32>
    %923 = vector.extract_strided_slice %910 {offsets = [0, 4], sizes = [16, 100], strides = [1, 1]} : vector<16x208xf32> to vector<16x100xf32>
    %924 = vector.extract_strided_slice %910 {offsets = [0, 108], sizes = [16, 100], strides = [1, 1]} : vector<16x208xf32> to vector<16x100xf32>
    %925 = tpu.concatenate %923, %924 in 1 : vector<16x100xf32>, vector<16x100xf32> -> vector<16x200xf32>
    %926 = tpu.concatenate %913, %916, %919, %922, %925 in 0 : vector<16x200xf32>, vector<16x200xf32>, vector<16x200xf32>, vector<16x200xf32>, vector<16x200xf32> -> vector<80x200xf32>
    %cst_314 = arith.constant dense<0.000000e+00> : vector<8x200xf32>
    %927 = tpu.matmul %906, %926, %cst_314 {dimension_numbers = #tpu.dot_dimension_numbers<[1], [0], [0], [1], [0, 0, 1, 1], [], []>} : vector<8x80xf32>, vector<80x200xf32>, vector<8x200xf32> -> vector<8x200xf32>
    %c0_315 = arith.constant 0 : index
    %c0_316 = arith.constant 0 : index
    %c0_317 = arith.constant 0 : index
    %928 = vector.load %arg30[%c0_315, %c0_316, %c0_317] : memref<3x8x1xf32, #tpu.memory_space<vmem>>, vector<1x8x1xf32>
    %929 = vector.shape_cast %928 : vector<1x8x1xf32> to vector<8x1xf32>
    %930 = vector.broadcast %929 : vector<8x1xf32> to vector<8x200xf32>
    %931 = arith.addf %927, %930 : vector<8x200xf32>
    %cst_318 = arith.constant 0.000000e+00 : f32
    %932 = vector.broadcast %cst_318 : f32 to vector<8x200xf32>
    %933 = arith.maximumf %931, %932 : vector<8x200xf32>
    %c1_319 = arith.constant 1 : index
    %c0_320 = arith.constant 0 : index
    %c0_321 = arith.constant 0 : index
    %934 = vector.load %arg30[%c1_319, %c0_320, %c0_321] : memref<3x8x1xf32, #tpu.memory_space<vmem>>, vector<1x8x1xf32>
    %935 = vector.shape_cast %934 : vector<1x8x1xf32> to vector<8x1xf32>
    %c2_322 = arith.constant 2 : index
    %c0_323 = arith.constant 0 : index
    %c0_324 = arith.constant 0 : index
    %936 = vector.load %arg30[%c2_322, %c0_323, %c0_324] : memref<3x8x1xf32, #tpu.memory_space<vmem>>, vector<1x8x1xf32>
    %937 = vector.shape_cast %936 : vector<1x8x1xf32> to vector<8x1xf32>
    %cst_325 = arith.constant dense<0.000000e+00> : vector<8xf32>
    %938 = vector.multi_reduction <add>, %933, %cst_325 [1] : vector<8x200xf32> to vector<8xf32>
    %939 = vector.shape_cast %938 : vector<8xf32> to vector<8x1xf32>
    %cst_326 = arith.constant 5.000000e-03 : f32
    %940 = vector.broadcast %cst_326 : f32 to vector<8x1xf32>
    %941 = arith.mulf %939, %940 : vector<8x1xf32>
    %942 = vector.broadcast %941 : vector<8x1xf32> to vector<8x200xf32>
    %943 = arith.subf %933, %942 : vector<8x200xf32>
    %944 = arith.mulf %943, %943 : vector<8x200xf32>
    %cst_327 = arith.constant dense<0.000000e+00> : vector<8xf32>
    %945 = vector.multi_reduction <add>, %944, %cst_327 [1] : vector<8x200xf32> to vector<8xf32>
    %946 = vector.shape_cast %945 : vector<8xf32> to vector<8x1xf32>
    %cst_328 = arith.constant 5.000000e-03 : f32
    %947 = vector.broadcast %cst_328 : f32 to vector<8x1xf32>
    %948 = arith.mulf %946, %947 : vector<8x1xf32>
    %cst_329 = arith.constant 9.99999974E-6 : f32
    %949 = vector.broadcast %cst_329 : f32 to vector<8x1xf32>
    %950 = arith.addf %948, %949 : vector<8x1xf32>
    %951 = math.rsqrt %950 : vector<8x1xf32>
    %952 = vector.broadcast %951 : vector<8x1xf32> to vector<8x200xf32>
    %953 = arith.mulf %943, %952 : vector<8x200xf32>
    %954 = vector.broadcast %935 : vector<8x1xf32> to vector<8x200xf32>
    %955 = arith.mulf %953, %954 : vector<8x200xf32>
    %956 = vector.broadcast %937 : vector<8x1xf32> to vector<8x200xf32>
    %957 = arith.addf %955, %956 : vector<8x200xf32>
    %958 = tpu.iota {dimensions = array<i32: 0>} : vector<200x400xi32>
    %959 = tpu.iota {dimensions = array<i32: 1>} : vector<200x400xi32>
    %c2_i32_330 = arith.constant 2 : i32
    %960 = vector.broadcast %c2_i32_330 : i32 to vector<200x400xi32>
    %961 = arith.muli %960, %958 : vector<200x400xi32>
    %962 = arith.cmpi eq, %959, %961 : vector<200x400xi32>
    %c2_i32_331 = arith.constant 2 : i32
    %963 = vector.broadcast %c2_i32_331 : i32 to vector<200x400xi32>
    %964 = arith.muli %963, %958 : vector<200x400xi32>
    %c1_i32_332 = arith.constant 1 : i32
    %965 = vector.broadcast %c1_i32_332 : i32 to vector<200x400xi32>
    %966 = arith.addi %964, %965 : vector<200x400xi32>
    %967 = arith.cmpi eq, %959, %966 : vector<200x400xi32>
    %968 = arith.ori %962, %967 : vector<200x400xi1>
    %969 = arith.extui %968 : vector<200x400xi1> to vector<200x400xi32>
    %970 = arith.sitofp %969 : vector<200x400xi32> to vector<200x400xf32>
    %cst_333 = arith.constant dense<0.000000e+00> : vector<8x400xf32>
    %971 = tpu.matmul %957, %970, %cst_333 {dimension_numbers = #tpu.dot_dimension_numbers<[1], [0], [0], [1], [0, 0, 1, 1], [], []>} : vector<8x200xf32>, vector<200x400xf32>, vector<8x400xf32> -> vector<8x400xf32>
    %c0_334 = arith.constant 0 : index
    %c0_335 = arith.constant 0 : index
    %972 = vector.load %arg31[%c0_334, %c0_335] : memref<1x40xf32, #tpu.memory_space<vmem>>, vector<1x40xf32>
    %cst_336 = arith.constant 0.000000e+00 : f32
    %973 = vector.broadcast %cst_336 : f32 to vector<8x2xf32>
    %974 = vector.extract_strided_slice %971 {offsets = [0, 0], sizes = [8, 200], strides = [1, 1]} : vector<8x400xf32> to vector<8x200xf32>
    %975 = vector.extract_strided_slice %971 {offsets = [0, 200], sizes = [8, 200], strides = [1, 1]} : vector<8x400xf32> to vector<8x200xf32>
    %976 = tpu.concatenate %973, %974, %973, %973, %975, %973 in 1 : vector<8x2xf32>, vector<8x200xf32>, vector<8x2xf32>, vector<8x2xf32>, vector<8x200xf32>, vector<8x2xf32> -> vector<8x408xf32>
    %977 = vector.extract_strided_slice %976 {offsets = [0, 0], sizes = [8, 200], strides = [1, 1]} : vector<8x408xf32> to vector<8x200xf32>
    %978 = vector.extract_strided_slice %976 {offsets = [0, 204], sizes = [8, 200], strides = [1, 1]} : vector<8x408xf32> to vector<8x200xf32>
    %979 = tpu.concatenate %977, %978 in 1 : vector<8x200xf32>, vector<8x200xf32> -> vector<8x400xf32>
    %980 = vector.extract_strided_slice %976 {offsets = [0, 1], sizes = [8, 200], strides = [1, 1]} : vector<8x408xf32> to vector<8x200xf32>
    %981 = vector.extract_strided_slice %976 {offsets = [0, 205], sizes = [8, 200], strides = [1, 1]} : vector<8x408xf32> to vector<8x200xf32>
    %982 = tpu.concatenate %980, %981 in 1 : vector<8x200xf32>, vector<8x200xf32> -> vector<8x400xf32>
    %983 = vector.extract_strided_slice %976 {offsets = [0, 2], sizes = [8, 200], strides = [1, 1]} : vector<8x408xf32> to vector<8x200xf32>
    %984 = vector.extract_strided_slice %976 {offsets = [0, 206], sizes = [8, 200], strides = [1, 1]} : vector<8x408xf32> to vector<8x200xf32>
    %985 = tpu.concatenate %983, %984 in 1 : vector<8x200xf32>, vector<8x200xf32> -> vector<8x400xf32>
    %986 = vector.extract_strided_slice %976 {offsets = [0, 3], sizes = [8, 200], strides = [1, 1]} : vector<8x408xf32> to vector<8x200xf32>
    %987 = vector.extract_strided_slice %976 {offsets = [0, 207], sizes = [8, 200], strides = [1, 1]} : vector<8x408xf32> to vector<8x200xf32>
    %988 = tpu.concatenate %986, %987 in 1 : vector<8x200xf32>, vector<8x200xf32> -> vector<8x400xf32>
    %989 = vector.extract_strided_slice %976 {offsets = [0, 4], sizes = [8, 200], strides = [1, 1]} : vector<8x408xf32> to vector<8x200xf32>
    %990 = vector.extract_strided_slice %976 {offsets = [0, 208], sizes = [8, 200], strides = [1, 1]} : vector<8x408xf32> to vector<8x200xf32>
    %991 = tpu.concatenate %989, %990 in 1 : vector<8x200xf32>, vector<8x200xf32> -> vector<8x400xf32>
    %992 = tpu.concatenate %979, %982, %985, %988, %991 in 0 : vector<8x400xf32>, vector<8x400xf32>, vector<8x400xf32>, vector<8x400xf32>, vector<8x400xf32> -> vector<40x400xf32>
    %cst_337 = arith.constant dense<0.000000e+00> : vector<1x400xf32>
    %993 = tpu.matmul %972, %992, %cst_337 {dimension_numbers = #tpu.dot_dimension_numbers<[1], [0], [0], [1], [0, 0, 1, 1], [], []>} : vector<1x40xf32>, vector<40x400xf32>, vector<1x400xf32> -> vector<1x400xf32>
    %c0_338 = arith.constant 0 : index
    %c0_339 = arith.constant 0 : index
    %c0_340 = arith.constant 0 : index
    %994 = vector.load %arg32[%c0_338, %c0_339, %c0_340] : memref<1x1x1xf32, #tpu.memory_space<vmem>>, vector<1x1x1xf32>
    %995 = vector.shape_cast %994 : vector<1x1x1xf32> to vector<1x1xf32>
    %996 = vector.broadcast %995 : vector<1x1xf32> to vector<1x400xf32>
    %997 = arith.addf %993, %996 : vector<1x400xf32>
    %998 = vector.extract_strided_slice %997 {offsets = [0, 0], sizes = [1, 200], strides = [1, 1]} : vector<1x400xf32> to vector<1x200xf32>
    %c0_341 = arith.constant 0 : index
    %c0_342 = arith.constant 0 : index
    %c0_343 = arith.constant 0 : index
    %999 = vector.load %arg33[%c0_341, %c0_342, %c0_343] : memref<2x1x200xf32, #tpu.memory_space<vmem>>, vector<1x1x200xf32>
    %1000 = vector.shape_cast %999 : vector<1x1x200xf32> to vector<1x200xf32>
    %1001 = vector.shape_cast %998 : vector<1x200xf32> to vector<1x1x200xf32>
    tpu.vector_store %arg33[%c0_341, %c0_342, %c0_343], %1001 {strides = array<i32>} : memref<2x1x200xf32, #tpu.memory_space<vmem>>, vector<1x1x200xf32>,
    %1002 = vector.extract_strided_slice %997 {offsets = [0, 200], sizes = [1, 200], strides = [1, 1]} : vector<1x400xf32> to vector<1x200xf32>
    %c1_344 = arith.constant 1 : index
    %c0_345 = arith.constant 0 : index
    %c0_346 = arith.constant 0 : index
    %1003 = vector.load %arg33[%c1_344, %c0_345, %c0_346] : memref<2x1x200xf32, #tpu.memory_space<vmem>>, vector<1x1x200xf32>
    %1004 = vector.shape_cast %1003 : vector<1x1x200xf32> to vector<1x200xf32>
    %1005 = vector.shape_cast %1002 : vector<1x200xf32> to vector<1x1x200xf32>
    tpu.vector_store %arg33[%c1_344, %c0_345, %c0_346], %1005 {strides = array<i32>} : memref<2x1x200xf32, #tpu.memory_space<vmem>>, vector<1x1x200xf32>,
    return
  }
}

</mosaic_0001>

<llo_original>
// kernel: _lambda_.1
$region0: #{_lambda_.1}
  #allocation0 [shape = 'u32[]', space=smem, size = 0x4, offset = 0x4, fixed_abs, tag = 'smem constant byte address 0x4 - core index']
  #allocation1 [shape = 'u32[144,128]{1,0:T(1,128)}', space=vmem, size = 0x12000, scoped, tag = 'internal scratch']
  #allocation2 [shape = 'f32[1,1,1]{2,1,0:T(1,128)S(1)}', space=vmem, size = 0x200, scoped, tag = 'scoped memory for _lambda_.1']
  %s0 = inlined_call_operand.smem [shape: u32[35], index: -1, kind: input, shape index: {}]
  %s1 = sld [smem:[%s0]]
  %s2 = scalar_lea.smem %s0, 1
  %s3 = sld [smem:[%s2]]
  %s4 = scalar_lea.smem %s0, 2
  %s5 = sld [smem:[%s4]]
  %s6 = scalar_lea.smem %s0, 3
  %s7 = sld [smem:[%s6]]
  %s8 = scalar_lea.smem %s0, 4
  %s9 = sld [smem:[%s8]]
  %s10 = scalar_lea.smem %s0, 5
  %s11 = sld [smem:[%s10]]
  %s12 = scalar_lea.smem %s0, 6
  %s13 = sld [smem:[%s12]]
  %s14 = scalar_lea.smem %s0, 7
  %s15 = sld [smem:[%s14]]
  %s16 = scalar_lea.smem %s0, 8
  %s17 = sld [smem:[%s16]]
  %s18 = scalar_lea.smem %s0, 9
  %s19 = sld [smem:[%s18]]
  %s20 = scalar_lea.smem %s0, 10
  %s21 = sld [smem:[%s20]]
  %s22 = scalar_lea.smem %s0, 11
  %s23 = sld [smem:[%s22]]
  %s24 = scalar_lea.smem %s0, 12
  %s25 = sld [smem:[%s24]]
  %s26 = scalar_lea.smem %s0, 13
  %s27 = sld [smem:[%s26]]
  %s28 = scalar_lea.smem %s0, 14
  %s29 = sld [smem:[%s28]]
  %s30 = scalar_lea.smem %s0, 15
  %s31 = sld [smem:[%s30]]
  %s32 = scalar_lea.smem %s0, 16
  %s33 = sld [smem:[%s32]]
  %s34 = scalar_lea.smem %s0, 17
  %s35 = sld [smem:[%s34]]
  %s36 = scalar_lea.smem %s0, 18
  %s37 = sld [smem:[%s36]]
  %s38 = scalar_lea.smem %s0, 19
  %s39 = sld [smem:[%s38]]
  %s40 = scalar_lea.smem %s0, 20
  %s41 = sld [smem:[%s40]]
  %s42 = scalar_lea.smem %s0, 21
  %s43 = sld [smem:[%s42]]
  %s44 = scalar_lea.smem %s0, 22
  %s45 = sld [smem:[%s44]]
  %s46 = scalar_lea.smem %s0, 23
  %s47 = sld [smem:[%s46]]
  %s48 = scalar_lea.smem %s0, 24
  %s49 = sld [smem:[%s48]]
  %s50 = scalar_lea.smem %s0, 25
  %s51 = sld [smem:[%s50]]
  %s52 = scalar_lea.smem %s0, 26
  %s53 = sld [smem:[%s52]]
  %s54 = scalar_lea.smem %s0, 27
  %s55 = sld [smem:[%s54]]
  %s56 = scalar_lea.smem %s0, 28
  %s57 = sld [smem:[%s56]]
  %s58 = scalar_lea.smem %s0, 29
  %s59 = sld [smem:[%s58]]
  %s60 = scalar_lea.smem %s0, 30
  %s61 = sld [smem:[%s60]]
  %s62 = scalar_lea.smem %s0, 31
  %s63 = sld [smem:[%s62]]
  %s64 = scalar_lea.smem %s0, 32
  %s65 = sld [smem:[%s64]]
  %s66 = scalar_lea.smem %s0, 33
  %s67 = sld [smem:[%s66]]
  %s68 = scalar_lea.smem %s0, 34
  %s69 = sld [smem:[%s68]]
  %70 = xla_tuple %s67, %s69
  %s71 = sld [smem:[#allocation0]]
  $region258: #{_lambda_.1} parent=0
    _
  %s73 = ssub.s32 1, %s71
  %s74 = scalar_select 0, %s73, %s71
  %v75 = vstv %s65
  %76 = vst [vmem:[#allocation2] sm:$0x1] %v75
  $region1: #{_lambda_.1} parent=0
    #allocation3 [shape = 'u8[1024]{0}', space=vmem, size = 0x400, scoped, tag = 'input window, operand 0, single buffered']
    #allocation4 [shape = 's32[1]{0}', space=sflag, size = 0x4, scoped, tag = 'scoped memory for _lambda_.1']
    #allocation5 [shape = 's32[1]{0}', space=sflag, size = 0x4, scoped, tag = 'scoped memory for _lambda_.1']
    #allocation6 [shape = 'u8[4096]{0}', space=vmem, size = 0x1000, scoped, tag = 'input window, operand 1, single buffered']
    #allocation7 [shape = 's32[1]{0}', space=sflag, size = 0x4, scoped, tag = 'scoped memory for _lambda_.1']
    #allocation8 [shape = 'u8[12288]{0}', space=vmem, size = 0x3000, scoped, tag = 'input window, operand 2, single buffered']
    #allocation9 [shape = 'u8[8192]{0}', space=vmem, size = 0x2000, scoped, tag = 'input window, operand 3, single buffered']
    #allocation10 [shape = 's32[1]{0}', space=sflag, size = 0x4, scoped, tag = 'scoped memory for _lambda_.1']
    #allocation11 [shape = 'u8[24576]{0}', space=vmem, size = 0x6000, scoped, tag = 'input window, operand 4, single buffered']
    #allocation12 [shape = 'u8[16384]{0}', space=vmem, size = 0x4000, scoped, tag = 'input window, operand 5, single buffered']
    #allocation13 [shape = 's32[1]{0}', space=sflag, size = 0x4, scoped, tag = 'scoped memory for _lambda_.1']
    #allocation14 [shape = 'u8[49152]{0}', space=vmem, size = 0xc000, scoped, tag = 'input window, operand 6, single buffered']
    #allocation15 [shape = 'u8[81920]{0}', space=vmem, size = 0x14000, scoped, tag = 'input window, operand 7, single buffered']
    #allocation16 [shape = 's32[1]{0}', space=sflag, size = 0x4, scoped, tag = 'scoped memory for _lambda_.1']
    #allocation17 [shape = 'u8[1536]{0}', space=vmem, size = 0x800, scoped, tag = 'input window, operand 8, single buffered']
    #allocation18 [shape = 'u8[163840]{0}', space=vmem, size = 0x28000, scoped, tag = 'input window, operand 9, single buffered']
    #allocation19 [shape = 's32[1]{0}', space=sflag, size = 0x4, scoped, tag = 'scoped memory for _lambda_.1']
    #allocation20 [shape = 'u8[1536]{0}', space=vmem, size = 0x800, scoped, tag = 'input window, operand 10, single buffered']
    #allocation21 [shape = 'u8[163840]{0}', space=vmem, size = 0x28000, scoped, tag = 'input window, operand 11, single buffered']
    #allocation22 [shape = 's32[1]{0}', space=sflag, size = 0x4, scoped, tag = 'scoped memory for _lambda_.1']
    #allocation23 [shape = 'u8[1536]{0}', space=vmem, size = 0x800, scoped, tag = 'input window, operand 12, single buffered']
    #allocation24 [shape = 'u8[327680]{0}', space=vmem, size = 0x50000, scoped, tag = 'input window, operand 13, single buffered']
    #allocation25 [shape = 's32[1]{0}', space=sflag, size = 0x4, scoped, tag = 'scoped memory for _lambda_.1']
    #allocation26 [shape = 'u8[65536]{0}', space=vmem, size = 0x10000, scoped, tag = 'input window, operand 15, single buffered']
    #allocation27 [shape = 'u8[4096]{0}', space=vmem, size = 0x1000, scoped, tag = 'input window, operand 17, single buffered']
    #allocation28 [shape = 's32[1]{0}', space=sflag, size = 0x4, scoped, tag = 'scoped memory for _lambda_.1']
    #allocation29 [shape = 'u8[327680]{0}', space=vmem, size = 0x50000, scoped, tag = 'input window, operand 19, single buffered']
    #allocation30 [shape = 'u8[1536]{0}', space=vmem, size = 0x800, scoped, tag = 'input window, operand 20, single buffered']
    #allocation31 [shape = 's32[1]{0}', space=sflag, size = 0x4, scoped, tag = 'scoped memory for _lambda_.1']
    #allocation32 [shape = 'u8[327680]{0}', space=vmem, size = 0x50000, scoped, tag = 'input window, operand 21, single buffered']
    #allocation33 [shape = 'u8[1536]{0}', space=vmem, size = 0x800, scoped, tag = 'input window, operand 22, single buffered']
    #allocation34 [shape = 's32[1]{0}', space=sflag, size = 0x4, scoped, tag = 'scoped memory for _lambda_.1']
    #allocation35 [shape = 'u8[163840]{0}', space=vmem, size = 0x28000, scoped, tag = 'input window, operand 23, single buffered']
    #allocation36 [shape = 'u8[1536]{0}', space=vmem, size = 0x800, scoped, tag = 'input window, operand 24, single buffered']
    #allocation37 [shape = 's32[1]{0}', space=sflag, size = 0x4, scoped, tag = 'scoped memory for _lambda_.1']
    #allocation38 [shape = 'u8[49152]{0}', space=vmem, size = 0xc000, scoped, tag = 'input window, operand 26, single buffered']
    #allocation39 [shape = 'u8[16384]{0}', space=vmem, size = 0x4000, scoped, tag = 'input window, operand 27, single buffered']
    #allocation40 [shape = 's32[1]{0}', space=sflag, size = 0x4, scoped, tag = 'scoped memory for _lambda_.1']
    #allocation41 [shape = 'u8[24576]{0}', space=vmem, size = 0x6000, scoped, tag = 'input window, operand 28, single buffered']
    #allocation42 [shape = 'u8[12288]{0}', space=vmem, size = 0x3000, scoped, tag = 'input window, operand 30, single buffered']
    #allocation43 [shape = 's32[1]{0}', space=sflag, size = 0x4, scoped, tag = 'scoped memory for _lambda_.1']
    #allocation44 [shape = 'u8[512]{0}', space=vmem, size = 0x400, scoped, tag = 'input window, operand 31, single buffered']
    #allocation45 [shape = 'u8[2048]{0}', space=vmem, size = 0x800, scoped, tag = 'output window, operand 0, single buffered']
    #allocation46 [shape = 'u8[1024]{0}', space=vmem, size = 0x400, scoped, tag = 'output window, operand 1, single buffered']
    #allocation47 [shape = 's32[1]{0}', space=sflag, size = 0x4, scoped, tag = 'scoped memory for _lambda_.1']
    %77 = vsyncpa [#allocation4], 0
    %78 = vsyncpa [#allocation7], 0
    %79 = vsyncpa [#allocation10], 0
    %80 = vsyncpa [#allocation13], 0
    %81 = vsyncpa [#allocation16], 0
    %82 = vsyncpa [#allocation19], 0
    %83 = vsyncpa [#allocation22], 0
    %84 = vsyncpa [#allocation25], 0
    %85 = vsyncpa [#allocation28], 0
    %86 = vsyncpa [#allocation31], 0
    %87 = vsyncpa [#allocation34], 0
    %88 = vsyncpa [#allocation37], 0
    %89 = vsyncpa [#allocation40], 0
    %90 = vsyncpa [#allocation43], 0
    %91 = vsyncpa [#allocation5], 0
    %92 = vsyncpa [#allocation47], 0
    // Predicated region
    $region2: #{_lambda_.1} parent=1 // pred_check
      _
    $region3: #{_lambda_.1} parent=1 // pred_check_branch
      %94 = sbr.rel (0) target = $region5
    $region4: #{_lambda_.1} parent=1 // pred_region
      %s96 = ssub.s32 32, 32
      %97 = vsyncadd [#allocation4], %s96
      %s98 = sshll.u32 [#allocation3], 4
      %s99 = int_to_ptr.vmem [resolvable:$true] %s98
      %104 = dma.hbm_to_vmem [thread:$0]  %s1, 32, %s99, [#allocation4], 16, 16, 1
    $region5: #{_lambda_.1} parent=1 // pred_fallthru
      _
    // Predicated region
    $region6: #{_lambda_.1} parent=1 // pred_check
      _
    $region7: #{_lambda_.1} parent=1 // pred_check_branch
      %106 = sbr.rel (0) target = $region9
    $region8: #{_lambda_.1} parent=1 // pred_region
      %s108 = ssub.s32 128, 128
      %109 = vsyncadd [#allocation7], %s108
      %s111 = sshll.u32 [#allocation6], 4
      %s112 = int_to_ptr.vmem [resolvable:$true] %s111
      %114 = dma.hbm_to_vmem [thread:$0]  %s3, 128, %s112, [#allocation7]
    $region9: #{_lambda_.1} parent=1 // pred_fallthru
      _
    // Predicated region
    $region10: #{_lambda_.1} parent=1 // pred_check
      _
    $region11: #{_lambda_.1} parent=1 // pred_check_branch
      %116 = sbr.rel (0) target = $region13
    $region12: #{_lambda_.1} parent=1 // pred_region
      %s118 = ssub.s32 384, 384
      %119 = vsyncadd [#allocation7], %s118
      %s120 = sshll.u32 [#allocation8], 4
      %s121 = int_to_ptr.vmem [resolvable:$true] %s120
      %126 = dma.hbm_to_vmem [thread:$0]  %s5, 384, %s121, [#allocation7], 128, 128, 8
    $region13: #{_lambda_.1} parent=1 // pred_fallthru
      _
    // Predicated region
    $region14: #{_lambda_.1} parent=1 // pred_check
      _
    $region15: #{_lambda_.1} parent=1 // pred_check_branch
      %128 = sbr.rel (0) target = $region17
    $region16: #{_lambda_.1} parent=1 // pred_region
      %s130 = ssub.s32 256, 256
      %131 = vsyncadd [#allocation10], %s130
      %s132 = sshll.u32 [#allocation9], 4
      %s133 = int_to_ptr.vmem [resolvable:$true] %s132
      %138 = dma.hbm_to_vmem [thread:$0]  %s7, 256, %s133, [#allocation10], 128, 128, 8
    $region17: #{_lambda_.1} parent=1 // pred_fallthru
      _
    // Predicated region
    $region18: #{_lambda_.1} parent=1 // pred_check
      _
    $region19: #{_lambda_.1} parent=1 // pred_check_branch
      %140 = sbr.rel (0) target = $region21
    $region20: #{_lambda_.1} parent=1 // pred_region
      %s142 = ssub.s32 768, 768
      %143 = vsyncadd [#allocation10], %s142
      %s144 = sshll.u32 [#allocation11], 4
      %s145 = int_to_ptr.vmem [resolvable:$true] %s144
      %150 = dma.hbm_to_vmem [thread:$0]  %s9, 768, %s145, [#allocation10], 128, 128, 8
    $region21: #{_lambda_.1} parent=1 // pred_fallthru
      _
    // Predicated region
    $region22: #{_lambda_.1} parent=1 // pred_check
      _
    $region23: #{_lambda_.1} parent=1 // pred_check_branch
      %152 = sbr.rel (0) target = $region25
    $region24: #{_lambda_.1} parent=1 // pred_region
      %s154 = ssub.s32 512, 512
      %155 = vsyncadd [#allocation13], %s154
      %s156 = sshll.u32 [#allocation12], 4
      %s157 = int_to_ptr.vmem [resolvable:$true] %s156
      %162 = dma.hbm_to_vmem [thread:$0]  %s11, 512, %s157, [#allocation13], 128, 128, 8
    $region25: #{_lambda_.1} parent=1 // pred_fallthru
      _
    // Predicated region
    $region26: #{_lambda_.1} parent=1 // pred_check
      _
    $region27: #{_lambda_.1} parent=1 // pred_check_branch
      %164 = sbr.rel (0) target = $region29
    $region28: #{_lambda_.1} parent=1 // pred_region
      %s166 = ssub.s32 1536, 1536
      %167 = vsyncadd [#allocation13], %s166
      %s168 = sshll.u32 [#allocation14], 4
      %s169 = int_to_ptr.vmem [resolvable:$true] %s168
      %174 = dma.hbm_to_vmem [thread:$0]  %s13, 1536, %s169, [#allocation13], 128, 128, 8
    $region29: #{_lambda_.1} parent=1 // pred_fallthru
      _
    // Predicated region
    $region30: #{_lambda_.1} parent=1 // pred_check
      _
    $region31: #{_lambda_.1} parent=1 // pred_check_branch
      %176 = sbr.rel (0) target = $region33
    $region32: #{_lambda_.1} parent=1 // pred_region
      %s178 = ssub.s32 2560, 2560
      %179 = vsyncadd [#allocation16], %s178
      %s180 = sshll.u32 [#allocation15], 4
      %s181 = int_to_ptr.vmem [resolvable:$true] %s180
      %186 = dma.hbm_to_vmem [thread:$0]  %s15, 2560, %s181, [#allocation16], 128, 128, 8
    $region33: #{_lambda_.1} parent=1 // pred_fallthru
      _
    // Predicated region
    $region34: #{_lambda_.1} parent=1 // pred_check
      _
    $region35: #{_lambda_.1} parent=1 // pred_check_branch
      %188 = sbr.rel (0) target = $region37
    $region36: #{_lambda_.1} parent=1 // pred_region
      %s190 = ssub.s32 48, 48
      %191 = vsyncadd [#allocation16], %s190
      %s192 = sshll.u32 [#allocation17], 4
      %s193 = int_to_ptr.vmem [resolvable:$true] %s192
      %198 = dma.hbm_to_vmem [thread:$0]  %s17, 48, %s193, [#allocation16], 16, 16, 1
    $region37: #{_lambda_.1} parent=1 // pred_fallthru
      _
    // Predicated region
    $region38: #{_lambda_.1} parent=1 // pred_check
      _
    $region39: #{_lambda_.1} parent=1 // pred_check_branch
      %200 = sbr.rel (0) target = $region41
    $region40: #{_lambda_.1} parent=1 // pred_region
      %s202 = ssub.s32 5120, 5120
      %203 = vsyncadd [#allocation19], %s202
      %s204 = sshll.u32 [#allocation18], 4
      %s205 = int_to_ptr.vmem [resolvable:$true] %s204
      %210 = dma.hbm_to_vmem [thread:$0]  %s19, 5120, %s205, [#allocation19], 128, 128, 8
    $region41: #{_lambda_.1} parent=1 // pred_fallthru
      _
    // Predicated region
    $region42: #{_lambda_.1} parent=1 // pred_check
      _
    $region43: #{_lambda_.1} parent=1 // pred_check_branch
      %212 = sbr.rel (0) target = $region45
    $region44: #{_lambda_.1} parent=1 // pred_region
      %s214 = ssub.s32 48, 48
      %215 = vsyncadd [#allocation19], %s214
      %s216 = sshll.u32 [#allocation20], 4
      %s217 = int_to_ptr.vmem [resolvable:$true] %s216
      %222 = dma.hbm_to_vmem [thread:$0]  %s21, 48, %s217, [#allocation19], 16, 16, 1
    $region45: #{_lambda_.1} parent=1 // pred_fallthru
      _
    // Predicated region
    $region46: #{_lambda_.1} parent=1 // pred_check
      _
    $region47: #{_lambda_.1} parent=1 // pred_check_branch
      %224 = sbr.rel (0) target = $region49
    $region48: #{_lambda_.1} parent=1 // pred_region
      %s226 = ssub.s32 5120, 5120
      %227 = vsyncadd [#allocation22], %s226
      %s228 = sshll.u32 [#allocation21], 4
      %s229 = int_to_ptr.vmem [resolvable:$true] %s228
      %234 = dma.hbm_to_vmem [thread:$0]  %s23, 5120, %s229, [#allocation22], 128, 128, 8
    $region49: #{_lambda_.1} parent=1 // pred_fallthru
      _
    // Predicated region
    $region50: #{_lambda_.1} parent=1 // pred_check
      _
    $region51: #{_lambda_.1} parent=1 // pred_check_branch
      %236 = sbr.rel (0) target = $region53
    $region52: #{_lambda_.1} parent=1 // pred_region
      %s238 = ssub.s32 48, 48
      %239 = vsyncadd [#allocation22], %s238
      %s240 = sshll.u32 [#allocation23], 4
      %s241 = int_to_ptr.vmem [resolvable:$true] %s240
      %246 = dma.hbm_to_vmem [thread:$0]  %s25, 48, %s241, [#allocation22], 16, 16, 1
    $region53: #{_lambda_.1} parent=1 // pred_fallthru
      _
    // Predicated region
    $region54: #{_lambda_.1} parent=1 // pred_check
      _
    $region55: #{_lambda_.1} parent=1 // pred_check_branch
      %248 = sbr.rel (0) target = $region57
    $region56: #{_lambda_.1} parent=1 // pred_region
      %s250 = ssub.s32 10240, 10240
      %251 = vsyncadd [#allocation25], %s250
      %s252 = sshll.u32 [#allocation24], 4
      %s253 = int_to_ptr.vmem [resolvable:$true] %s252
      %258 = dma.hbm_to_vmem [thread:$0]  %s27, 10240, %s253, [#allocation25], 128, 128, 8
    $region57: #{_lambda_.1} parent=1 // pred_fallthru
      _
    // Predicated region
    $region58: #{_lambda_.1} parent=1 // pred_check
      _
    $region59: #{_lambda_.1} parent=1 // pred_check_branch
      %260 = sbr.rel (0) target = $region61
    $region60: #{_lambda_.1} parent=1 // pred_region
      _
    $region61: #{_lambda_.1} parent=1 // pred_fallthru
      _
    // Predicated region
    $region62: #{_lambda_.1} parent=1 // pred_check
      _
    $region63: #{_lambda_.1} parent=1 // pred_check_branch
      %262 = sbr.rel (0) target = $region65
    $region64: #{_lambda_.1} parent=1 // pred_region
      %s264 = ssub.s32 2048, 2048
      %265 = vsyncadd [#allocation25], %s264
      %s266 = sshll.u32 [#allocation26], 4
      %s267 = int_to_ptr.vmem [resolvable:$true] %s266
      %272 = dma.hbm_to_vmem [thread:$0]  %s31, 2048, %s267, [#allocation25], 128, 128, 8
    $region65: #{_lambda_.1} parent=1 // pred_fallthru
      _
    // Predicated region
    $region66: #{_lambda_.1} parent=1 // pred_check
      _
    $region67: #{_lambda_.1} parent=1 // pred_check_branch
      %274 = sbr.rel (0) target = $region69
    $region68: #{_lambda_.1} parent=1 // pred_region
      _
    $region69: #{_lambda_.1} parent=1 // pred_fallthru
      _
    // Predicated region
    $region70: #{_lambda_.1} parent=1 // pred_check
      _
    $region71: #{_lambda_.1} parent=1 // pred_check_branch
      %276 = sbr.rel (0) target = $region73
    $region72: #{_lambda_.1} parent=1 // pred_region
      %s278 = ssub.s32 128, 128
      %279 = vsyncadd [#allocation28], %s278
      %s281 = sshll.u32 [#allocation27], 4
      %s282 = int_to_ptr.vmem [resolvable:$true] %s281
      %284 = dma.hbm_to_vmem [thread:$0]  %s35, 128, %s282, [#allocation28]
    $region73: #{_lambda_.1} parent=1 // pred_fallthru
      _
    // Predicated region
    $region74: #{_lambda_.1} parent=1 // pred_check
      _
    $region75: #{_lambda_.1} parent=1 // pred_check_branch
      %286 = sbr.rel (0) target = $region77
    $region76: #{_lambda_.1} parent=1 // pred_region
      _
    $region77: #{_lambda_.1} parent=1 // pred_fallthru
      _
    // Predicated region
    $region78: #{_lambda_.1} parent=1 // pred_check
      _
    $region79: #{_lambda_.1} parent=1 // pred_check_branch
      %288 = sbr.rel (0) target = $region81
    $region80: #{_lambda_.1} parent=1 // pred_region
      %s290 = ssub.s32 10240, 10240
      %291 = vsyncadd [#allocation28], %s290
      %s292 = sshll.u32 [#allocation29], 4
      %s293 = int_to_ptr.vmem [resolvable:$true] %s292
      %298 = dma.hbm_to_vmem [thread:$0]  %s39, 10240, %s293, [#allocation28], 128, 128, 8
    $region81: #{_lambda_.1} parent=1 // pred_fallthru
      _
    // Predicated region
    $region82: #{_lambda_.1} parent=1 // pred_check
      _
    $region83: #{_lambda_.1} parent=1 // pred_check_branch
      %300 = sbr.rel (0) target = $region85
    $region84: #{_lambda_.1} parent=1 // pred_region
      %s302 = ssub.s32 48, 48
      %303 = vsyncadd [#allocation31], %s302
      %s304 = sshll.u32 [#allocation30], 4
      %s305 = int_to_ptr.vmem [resolvable:$true] %s304
      %310 = dma.hbm_to_vmem [thread:$0]  %s41, 48, %s305, [#allocation31], 16, 16, 1
    $region85: #{_lambda_.1} parent=1 // pred_fallthru
      _
    // Predicated region
    $region86: #{_lambda_.1} parent=1 // pred_check
      _
    $region87: #{_lambda_.1} parent=1 // pred_check_branch
      %312 = sbr.rel (0) target = $region89
    $region88: #{_lambda_.1} parent=1 // pred_region
      %s314 = ssub.s32 10240, 10240
      %315 = vsyncadd [#allocation31], %s314
      %s316 = sshll.u32 [#allocation32], 4
      %s317 = int_to_ptr.vmem [resolvable:$true] %s316
      %322 = dma.hbm_to_vmem [thread:$0]  %s43, 10240, %s317, [#allocation31], 128, 128, 8
    $region89: #{_lambda_.1} parent=1 // pred_fallthru
      _
    // Predicated region
    $region90: #{_lambda_.1} parent=1 // pred_check
      _
    $region91: #{_lambda_.1} parent=1 // pred_check_branch
      %324 = sbr.rel (0) target = $region93
    $region92: #{_lambda_.1} parent=1 // pred_region
      %s326 = ssub.s32 48, 48
      %327 = vsyncadd [#allocation34], %s326
      %s328 = sshll.u32 [#allocation33], 4
      %s329 = int_to_ptr.vmem [resolvable:$true] %s328
      %334 = dma.hbm_to_vmem [thread:$0]  %s45, 48, %s329, [#allocation34], 16, 16, 1
    $region93: #{_lambda_.1} parent=1 // pred_fallthru
      _
    // Predicated region
    $region94: #{_lambda_.1} parent=1 // pred_check
      _
    $region95: #{_lambda_.1} parent=1 // pred_check_branch
      %336 = sbr.rel (0) target = $region97
    $region96: #{_lambda_.1} parent=1 // pred_region
      %s338 = ssub.s32 5120, 5120
      %339 = vsyncadd [#allocation34], %s338
      %s340 = sshll.u32 [#allocation35], 4
      %s341 = int_to_ptr.vmem [resolvable:$true] %s340
      %346 = dma.hbm_to_vmem [thread:$0]  %s47, 5120, %s341, [#allocation34], 128, 128, 8
    $region97: #{_lambda_.1} parent=1 // pred_fallthru
      _
    // Predicated region
    $region98: #{_lambda_.1} parent=1 // pred_check
      _
    $region99: #{_lambda_.1} parent=1 // pred_check_branch
      %348 = sbr.rel (0) target = $region101
    $region100: #{_lambda_.1} parent=1 // pred_region
      %s350 = ssub.s32 48, 48
      %351 = vsyncadd [#allocation37], %s350
      %s352 = sshll.u32 [#allocation36], 4
      %s353 = int_to_ptr.vmem [resolvable:$true] %s352
      %358 = dma.hbm_to_vmem [thread:$0]  %s49, 48, %s353, [#allocation37], 16, 16, 1
    $region101: #{_lambda_.1} parent=1 // pred_fallthru
      _
    // Predicated region
    $region102: #{_lambda_.1} parent=1 // pred_check
      _
    $region103: #{_lambda_.1} parent=1 // pred_check_branch
      %360 = sbr.rel (0) target = $region105
    $region104: #{_lambda_.1} parent=1 // pred_region
      _
    $region105: #{_lambda_.1} parent=1 // pred_fallthru
      _
    // Predicated region
    $region106: #{_lambda_.1} parent=1 // pred_check
      _
    $region107: #{_lambda_.1} parent=1 // pred_check_branch
      %362 = sbr.rel (0) target = $region109
    $region108: #{_lambda_.1} parent=1 // pred_region
      %s364 = ssub.s32 1536, 1536
      %365 = vsyncadd [#allocation37], %s364
      %s366 = sshll.u32 [#allocation38], 4
      %s367 = int_to_ptr.vmem [resolvable:$true] %s366
      %372 = dma.hbm_to_vmem [thread:$0]  %s53, 1536, %s367, [#allocation37], 128, 128, 8
    $region109: #{_lambda_.1} parent=1 // pred_fallthru
      _
    // Predicated region
    $region110: #{_lambda_.1} parent=1 // pred_check
      _
    $region111: #{_lambda_.1} parent=1 // pred_check_branch
      %374 = sbr.rel (0) target = $region113
    $region112: #{_lambda_.1} parent=1 // pred_region
      %s376 = ssub.s32 512, 512
      %377 = vsyncadd [#allocation40], %s376
      %s378 = sshll.u32 [#allocation39], 4
      %s379 = int_to_ptr.vmem [resolvable:$true] %s378
      %384 = dma.hbm_to_vmem [thread:$0]  %s55, 512, %s379, [#allocation40], 256, 256, 16
    $region113: #{_lambda_.1} parent=1 // pred_fallthru
      _
    // Predicated region
    $region114: #{_lambda_.1} parent=1 // pred_check
      _
    $region115: #{_lambda_.1} parent=1 // pred_check_branch
      %386 = sbr.rel (0) target = $region117
    $region116: #{_lambda_.1} parent=1 // pred_region
      %s388 = ssub.s32 768, 768
      %389 = vsyncadd [#allocation40], %s388
      %s390 = sshll.u32 [#allocation41], 4
      %s391 = int_to_ptr.vmem [resolvable:$true] %s390
      %396 = dma.hbm_to_vmem [thread:$0]  %s57, 768, %s391, [#allocation40], 128, 128, 8
    $region117: #{_lambda_.1} parent=1 // pred_fallthru
      _
    // Predicated region
    $region118: #{_lambda_.1} parent=1 // pred_check
      _
    $region119: #{_lambda_.1} parent=1 // pred_check_branch
      %398 = sbr.rel (0) target = $region121
    $region120: #{_lambda_.1} parent=1 // pred_region
      _
    $region121: #{_lambda_.1} parent=1 // pred_fallthru
      _
    // Predicated region
    $region122: #{_lambda_.1} parent=1 // pred_check
      _
    $region123: #{_lambda_.1} parent=1 // pred_check_branch
      %400 = sbr.rel (0) target = $region125
    $region124: #{_lambda_.1} parent=1 // pred_region
      %s402 = ssub.s32 384, 384
      %403 = vsyncadd [#allocation43], %s402
      %s404 = sshll.u32 [#allocation42], 4
      %s405 = int_to_ptr.vmem [resolvable:$true] %s404
      %410 = dma.hbm_to_vmem [thread:$0]  %s61, 384, %s405, [#allocation43], 128, 128, 8
    $region125: #{_lambda_.1} parent=1 // pred_fallthru
      _
    // Predicated region
    $region126: #{_lambda_.1} parent=1 // pred_check
      _
    $region127: #{_lambda_.1} parent=1 // pred_check_branch
      %412 = sbr.rel (0) target = $region129
    $region128: #{_lambda_.1} parent=1 // pred_region
      %s414 = ssub.s32 16, 16
      %415 = vsyncadd [#allocation43], %s414
      %s417 = sshll.u32 [#allocation44], 4
      %s418 = int_to_ptr.vmem [resolvable:$true] %s417
      %420 = dma.hbm_to_vmem [thread:$0]  %s63, 16, %s418, [#allocation43]
    $region129: #{_lambda_.1} parent=1 // pred_fallthru
      _
    // Predicated region
    $region130: #{_lambda_.1} parent=1 // pred_check
      _
    $region131: #{_lambda_.1} parent=1 // pred_check_branch
      %422 = sbr.rel (0) target = $region133
    $region132: #{_lambda_.1} parent=1 // pred_region
      _
    $region133: #{_lambda_.1} parent=1 // pred_fallthru
      _
    // Predicated region
    $region134: #{_lambda_.1} parent=1 // pred_check
      _
    $region135: #{_lambda_.1} parent=1 // pred_check_branch
      %424 = sbr.rel (0) target = $region137
    $region136: #{_lambda_.1} parent=1 // pred_region
      %425 = dma.done [#allocation4], 32
    $region137: #{_lambda_.1} parent=1 // pred_fallthru
      _
    // Predicated region
    $region138: #{_lambda_.1} parent=1 // pred_check
      _
    $region139: #{_lambda_.1} parent=1 // pred_check_branch
      %427 = sbr.rel (0) target = $region141
    $region140: #{_lambda_.1} parent=1 // pred_region
      %428 = dma.done [#allocation7], 128
    $region141: #{_lambda_.1} parent=1 // pred_fallthru
      _
    // Predicated region
    $region142: #{_lambda_.1} parent=1 // pred_check
      _
    $region143: #{_lambda_.1} parent=1 // pred_check_branch
      %430 = sbr.rel (0) target = $region145
    $region144: #{_lambda_.1} parent=1 // pred_region
      %431 = dma.done [#allocation7], 384
    $region145: #{_lambda_.1} parent=1 // pred_fallthru
      _
    // Predicated region
    $region146: #{_lambda_.1} parent=1 // pred_check
      _
    $region147: #{_lambda_.1} parent=1 // pred_check_branch
      %433 = sbr.rel (0) target = $region149
    $region148: #{_lambda_.1} parent=1 // pred_region
      %434 = dma.done [#allocation10], 256
    $region149: #{_lambda_.1} parent=1 // pred_fallthru
      _
    // Predicated region
    $region150: #{_lambda_.1} parent=1 // pred_check
      _
    $region151: #{_lambda_.1} parent=1 // pred_check_branch
      %436 = sbr.rel (0) target = $region153
    $region152: #{_lambda_.1} parent=1 // pred_region
      %437 = dma.done [#allocation10], 768
    $region153: #{_lambda_.1} parent=1 // pred_fallthru
      _
    // Predicated region
    $region154: #{_lambda_.1} parent=1 // pred_check
      _
    $region155: #{_lambda_.1} parent=1 // pred_check_branch
      %439 = sbr.rel (0) target = $region157
    $region156: #{_lambda_.1} parent=1 // pred_region
      %440 = dma.done [#allocation13], 512
    $region157: #{_lambda_.1} parent=1 // pred_fallthru
      _
    // Predicated region
    $region158: #{_lambda_.1} parent=1 // pred_check
      _
    $region159: #{_lambda_.1} parent=1 // pred_check_branch
      %442 = sbr.rel (0) target = $region161
    $region160: #{_lambda_.1} parent=1 // pred_region
      %443 = dma.done [#allocation13], 1536
    $region161: #{_lambda_.1} parent=1 // pred_fallthru
      _
    // Predicated region
    $region162: #{_lambda_.1} parent=1 // pred_check
      _
    $region163: #{_lambda_.1} parent=1 // pred_check_branch
      %445 = sbr.rel (0) target = $region165
    $region164: #{_lambda_.1} parent=1 // pred_region
      %446 = dma.done [#allocation16], 2560
    $region165: #{_lambda_.1} parent=1 // pred_fallthru
      _
    // Predicated region
    $region166: #{_lambda_.1} parent=1 // pred_check
      _
    $region167: #{_lambda_.1} parent=1 // pred_check_branch
      %448 = sbr.rel (0) target = $region169
    $region168: #{_lambda_.1} parent=1 // pred_region
      %449 = dma.done [#allocation16], 48
    $region169: #{_lambda_.1} parent=1 // pred_fallthru
      _
    // Predicated region
    $region170: #{_lambda_.1} parent=1 // pred_check
      _
    $region171: #{_lambda_.1} parent=1 // pred_check_branch
      %451 = sbr.rel (0) target = $region173
    $region172: #{_lambda_.1} parent=1 // pred_region
      %452 = dma.done [#allocation19], 5120
    $region173: #{_lambda_.1} parent=1 // pred_fallthru
      _
    // Predicated region
    $region174: #{_lambda_.1} parent=1 // pred_check
      _
    $region175: #{_lambda_.1} parent=1 // pred_check_branch
      %454 = sbr.rel (0) target = $region177
    $region176: #{_lambda_.1} parent=1 // pred_region
      %455 = dma.done [#allocation19], 48
    $region177: #{_lambda_.1} parent=1 // pred_fallthru
      _
    // Predicated region
    $region178: #{_lambda_.1} parent=1 // pred_check
      _
    $region179: #{_lambda_.1} parent=1 // pred_check_branch
      %457 = sbr.rel (0) target = $region181
    $region180: #{_lambda_.1} parent=1 // pred_region
      %458 = dma.done [#allocation22], 5120
    $region181: #{_lambda_.1} parent=1 // pred_fallthru
      _
    // Predicated region
    $region182: #{_lambda_.1} parent=1 // pred_check
      _
    $region183: #{_lambda_.1} parent=1 // pred_check_branch
      %460 = sbr.rel (0) target = $region185
    $region184: #{_lambda_.1} parent=1 // pred_region
      %461 = dma.done [#allocation22], 48
    $region185: #{_lambda_.1} parent=1 // pred_fallthru
      _
    // Predicated region
    $region186: #{_lambda_.1} parent=1 // pred_check
      _
    $region187: #{_lambda_.1} parent=1 // pred_check_branch
      %463 = sbr.rel (0) target = $region189
    $region188: #{_lambda_.1} parent=1 // pred_region
      %464 = dma.done [#allocation25], 10240
    $region189: #{_lambda_.1} parent=1 // pred_fallthru
      _
    // Predicated region
    $region190: #{_lambda_.1} parent=1 // pred_check
      _
    $region191: #{_lambda_.1} parent=1 // pred_check_branch
      %466 = sbr.rel (0) target = $region193
    $region192: #{_lambda_.1} parent=1 // pred_region
      %467 = dma.done [#allocation25], 2048
    $region193: #{_lambda_.1} parent=1 // pred_fallthru
      _
    // Predicated region
    $region194: #{_lambda_.1} parent=1 // pred_check
      _
    $region195: #{_lambda_.1} parent=1 // pred_check_branch
      %469 = sbr.rel (0) target = $region197
    $region196: #{_lambda_.1} parent=1 // pred_region
      %470 = dma.done [#allocation28], 128
    $region197: #{_lambda_.1} parent=1 // pred_fallthru
      _
    // Predicated region
    $region198: #{_lambda_.1} parent=1 // pred_check
      _
    $region199: #{_lambda_.1} parent=1 // pred_check_branch
      %472 = sbr.rel (0) target = $region201
    $region200: #{_lambda_.1} parent=1 // pred_region
      %473 = dma.done [#allocation28], 10240
    $region201: #{_lambda_.1} parent=1 // pred_fallthru
      _
    // Predicated region
    $region202: #{_lambda_.1} parent=1 // pred_check
      _
    $region203: #{_lambda_.1} parent=1 // pred_check_branch
      %475 = sbr.rel (0) target = $region205
    $region204: #{_lambda_.1} parent=1 // pred_region
      %476 = dma.done [#allocation31], 48
    $region205: #{_lambda_.1} parent=1 // pred_fallthru
      _
    // Predicated region
    $region206: #{_lambda_.1} parent=1 // pred_check
      _
    $region207: #{_lambda_.1} parent=1 // pred_check_branch
      %478 = sbr.rel (0) target = $region209
    $region208: #{_lambda_.1} parent=1 // pred_region
      %479 = dma.done [#allocation31], 10240
    $region209: #{_lambda_.1} parent=1 // pred_fallthru
      _
    // Predicated region
    $region210: #{_lambda_.1} parent=1 // pred_check
      _
    $region211: #{_lambda_.1} parent=1 // pred_check_branch
      %481 = sbr.rel (0) target = $region213
    $region212: #{_lambda_.1} parent=1 // pred_region
      %482 = dma.done [#allocation34], 48
    $region213: #{_lambda_.1} parent=1 // pred_fallthru
      _
    // Predicated region
    $region214: #{_lambda_.1} parent=1 // pred_check
      _
    $region215: #{_lambda_.1} parent=1 // pred_check_branch
      %484 = sbr.rel (0) target = $region217
    $region216: #{_lambda_.1} parent=1 // pred_region
      %485 = dma.done [#allocation34], 5120
    $region217: #{_lambda_.1} parent=1 // pred_fallthru
      _
    // Predicated region
    $region218: #{_lambda_.1} parent=1 // pred_check
      _
    $region219: #{_lambda_.1} parent=1 // pred_check_branch
      %487 = sbr.rel (0) target = $region221
    $region220: #{_lambda_.1} parent=1 // pred_region
      %488 = dma.done [#allocation37], 48
    $region221: #{_lambda_.1} parent=1 // pred_fallthru
      _
    // Predicated region
    $region222: #{_lambda_.1} parent=1 // pred_check
      _
    $region223: #{_lambda_.1} parent=1 // pred_check_branch
      %490 = sbr.rel (0) target = $region225
    $region224: #{_lambda_.1} parent=1 // pred_region
      %491 = dma.done [#allocation37], 1536
    $region225: #{_lambda_.1} parent=1 // pred_fallthru
      _
    // Predicated region
    $region226: #{_lambda_.1} parent=1 // pred_check
      _
    $region227: #{_lambda_.1} parent=1 // pred_check_branch
      %493 = sbr.rel (0) target = $region229
    $region228: #{_lambda_.1} parent=1 // pred_region
      %494 = dma.done [#allocation40], 512
    $region229: #{_lambda_.1} parent=1 // pred_fallthru
      _
    // Predicated region
    $region230: #{_lambda_.1} parent=1 // pred_check
      _
    $region231: #{_lambda_.1} parent=1 // pred_check_branch
      %496 = sbr.rel (0) target = $region233
    $region232: #{_lambda_.1} parent=1 // pred_region
      %497 = dma.done [#allocation40], 768
    $region233: #{_lambda_.1} parent=1 // pred_fallthru
      _
    // Predicated region
    $region234: #{_lambda_.1} parent=1 // pred_check
      _
    $region235: #{_lambda_.1} parent=1 // pred_check_branch
      %499 = sbr.rel (0) target = $region237
    $region236: #{_lambda_.1} parent=1 // pred_region
      %500 = dma.done [#allocation43], 384
    $region237: #{_lambda_.1} parent=1 // pred_fallthru
      _
    // Predicated region
    $region238: #{_lambda_.1} parent=1 // pred_check
      _
    $region239: #{_lambda_.1} parent=1 // pred_check_branch
      %502 = sbr.rel (0) target = $region241
    $region240: #{_lambda_.1} parent=1 // pred_region
      %503 = dma.done [#allocation43], 16
    $region241: #{_lambda_.1} parent=1 // pred_fallthru
      _
    %v504 = vld [vmem:[#allocation3] sm:$0x1]
    %s505 = scalar_lea.vmem [#allocation3], 1
    %v506 = vld [vmem:[%s505] sm:$0x1]
    %v507 = vld [vmem:[#allocation6] sm:$0xff]
    %509 = vrot.lane.b32.xlu0 %v504, 2
    %v510 = vpop.permute.xlu0 %509
    %513 = vrot.lane.b32.xlu0 %v506, 6
    %v514 = vpop.permute.xlu0 %513
    %vm516 = vcmask 15360
    %v517 = vsel %vm516, 0.0, %v510
    %v518 = vsel %vm516, %v510, 0.0
    %vm519 = vcmask 31744
    %v520 = vsel %vm519, %v518, 0.0
    %vm521 = vcmask 48128
    %v522 = vsel %vm521, %v520, %v514
    %v523 = vsel %vm521, %v514, 0.0
    %526 = vrot.lane.b32.xlu0 %v522, 124
    %v527 = vpop.permute.xlu0 %526
    %528 = vrot.lane.b32.xlu0 %v523, 124
    %v529 = vpop.permute.xlu0 %528
    %vm530 = vcmask 1014784
    %v531 = vsel %vm530, %v527, %v529
    %534 = vrot.lane.b32.xlu0 %v517, 127
    %v535 = vpop.permute.xlu0 %534
    %536 = vrot.lane.b32.xlu0 %v522, 127
    %v537 = vpop.permute.xlu0 %536
    %vm538 = vcmask 1039360
    %v539 = vsel %vm538, %v535, %v537
    %540 = vrot.lane.b32.xlu0 %v522, 123
    %v541 = vpop.permute.xlu0 %540
    %542 = vrot.lane.b32.xlu0 %v523, 123
    %v543 = vpop.permute.xlu0 %542
    %vm544 = vcmask 1006592
    %v545 = vsel %vm544, %v541, %v543
    %546 = vrot.lane.b32.xlu0 %v517, 126
    %v547 = vpop.permute.xlu0 %546
    %548 = vrot.lane.b32.xlu0 %v522, 126
    %v549 = vpop.permute.xlu0 %548
    %vm550 = vcmask 1031168
    %v551 = vsel %vm550, %v547, %v549
    %552 = vrot.lane.b32.xlu0 %v522, 122
    %v553 = vpop.permute.xlu0 %552
    %554 = vrot.lane.b32.xlu0 %v523, 122
    %v555 = vpop.permute.xlu0 %554
    %vm556 = vcmask 998400
    %v557 = vsel %vm556, %v553, %v555
    %558 = vrot.lane.b32.xlu0 %v517, 125
    %v559 = vpop.permute.xlu0 %558
    %560 = vrot.lane.b32.xlu0 %v522, 125
    %v561 = vpop.permute.xlu0 %560
    %vm562 = vcmask 1022976
    %v563 = vsel %vm562, %v559, %v561
    %564 = vrot.lane.b32.xlu0 %v522, 121
    %v565 = vpop.permute.xlu0 %564
    %566 = vrot.lane.b32.xlu0 %v523, 121
    %v567 = vpop.permute.xlu0 %566
    %vm568 = vcmask 990208
    %v569 = vsel %vm568, %v565, %v567
    %570 = vrot.lane.b32.xlu0 %v517, 124
    %v571 = vpop.permute.xlu0 %570
    %v572 = vsel %vm530, %v571, %v527
    %573 = vrot.lane.b32.xlu0 %v522, 120
    %v574 = vpop.permute.xlu0 %573
    %575 = vrot.lane.b32.xlu0 %v523, 120
    %v576 = vpop.permute.xlu0 %575
    %vm577 = vcmask 982016
    %v578 = vsel %vm577, %v574, %v576
    %v579 = vrot.slane %v539, 7
    %v580 = vrot.slane %v545, 7
    %v583 = vrot.slane %v551, 6
    %v584 = vrot.slane %v557, 6
    %v587 = vrot.slane %v563, 5
    %v588 = vrot.slane %v569, 5
    %v591 = vrot.slane %v572, 4
    %v592 = vrot.slane %v578, 4
    %vm595 = vcmask 1040384
    %v596 = vsel %vm595, %v517, %v579
    %v597 = vsel %vm595, %v531, %v580
    %vm598 = vcmask 1041408
    %v599 = vsel %vm598, %v596, %v583
    %v600 = vsel %vm598, %v597, %v584
    %vm601 = vcmask 1042432
    %v602 = vsel %vm601, %v599, %v587
    %v603 = vsel %vm601, %v600, %v588
    %vm604 = vcmask 1043456
    %v605 = vsel %vm604, %v602, %v591
    %v606 = vsel %vm604, %v603, %v592
    %vm607 = vcmask 39936
    %v609 = vsel %vm607, %v507, 0
    %vm611 = vcmask 1044480
    %v613 = vsel %vm611, %v605, 0
    %v616 = vsel %vm611, %v606, 0
    %618 = vmatprep.subr.mxu0 %v616
    %619 = vmatpush1.msra.mxu0 %v613
    %620 = vmatprep.subr.mxu0 0.0
    %621 = vmatpush1.msra.mxu0 0.0
    %622 = vmatprep.subr.mxu0 0.0
    %623 = vmatpush1.msra.mxu0 0.0
    %624 = vmatprep.subr.mxu0 0.0
    %625 = vmatpush1.msra.mxu0 0.0
    %626 = vmatprep.subr.mxu0 0.0
    %627 = vmatpush1.msra.mxu0 0.0
    %628 = vmatprep.subr.mxu0 0.0
    %629 = vmatpush1.msra.mxu0 0.0
    %630 = vmatprep.subr.mxu0 0.0
    %631 = vmatpush1.msra.mxu0 0.0
    %632 = vmatprep.subr.mxu0 0.0
    %633 = vmatpush1.msra.mxu0 0.0
    %634 = vmatprep.subr.mxu0 0.0
    %635 = vmatpush1.msra.mxu0 0.0
    %636 = vmatprep.subr.mxu0 0.0
    %637 = vmatpush1.msra.mxu0 0.0
    %638 = vmatprep.subr.mxu0 0.0
    %639 = vmatpush1.msra.mxu0 0.0
    %640 = vmatprep.subr.mxu0 0.0
    %641 = vmatpush1.msra.mxu0 0.0
    %642 = vmatprep.subr.mxu0 0.0
    %643 = vmatpush1.msra.mxu0 0.0
    %644 = vmatprep.subr.mxu0 0.0
    %645 = vmatpush1.msra.mxu0 0.0
    %646 = vmatprep.subr.mxu0 0.0
    %647 = vmatpush1.msra.mxu0 0.0
    %648 = vmatprep.subr.mxu0 0.0
    %649 = vmatpush1.msra.mxu0 0.0
    %650 = vmatprep.subr.mxu0 0.0
    %651 = vmatpush1.msra.mxu0 0.0
    %652 = vmatprep.subr.mxu0 0.0
    %653 = vmatpush1.msra.mxu0 0.0
    %654 = vmatprep.subr.mxu0 0.0
    %655 = vmatpush1.msra.mxu0 0.0
    %656 = vmatprep.subr.mxu0 0.0
    %657 = vmatpush1.msra.mxu0 0.0
    %658 = vmatprep.subr.mxu0 0.0
    %659 = vmatpush1.msra.mxu0 0.0
    %660 = vmatprep.subr.mxu0 0.0
    %661 = vmatpush1.msra.mxu0 0.0
    %662 = vmatprep.subr.mxu0 0.0
    %663 = vmatpush1.msra.mxu0 0.0
    %664 = vmatprep.subr.mxu0 0.0
    %665 = vmatpush1.msra.mxu0 0.0
    %666 = vmatprep.subr.mxu0 0.0
    %667 = vmatpush1.msra.mxu0 0.0
    %668 = vmatprep.subr.mxu0 0.0
    %669 = vmatpush1.msra.mxu0 0.0
    %670 = vmatprep.subr.mxu0 0.0
    %671 = vmatpush1.msra.mxu0 0.0
    %672 = vmatprep.subr.mxu0 0.0
    %673 = vmatpush1.msra.mxu0 0.0
    %674 = vmatprep.subr.mxu0 0.0
    %675 = vmatpush1.msra.mxu0 0.0
    %676 = vmatprep.subr.mxu0 0.0
    %677 = vmatpush1.msra.mxu0 0.0
    %678 = vmatprep.subr.mxu0 0.0
    %679 = vmatpush1.msra.mxu0 0.0
    %680 = vmatprep.subr.mxu0 0.0
    %681 = vmatpush1.msra.mxu0 0.0
    %682 = vmatprep.mubr.f32.mxu0 0.0
    %683 = vmatmul.mubr.f32.gmra.mrb[0].mxu0 %v609
    %v684 = vpop.f32.mrb[0].mxu0
    %v685 = vadd.f32 0.0, %v684
    %v686 = vpop.f32.mrb[0].mxu0
    %v687 = vadd.f32 0.0, %v686
    %688 = vdwg.mxu0
    %v689 = vlaneseq
    %v690 = vshrl.u32 %v689, 7
    %v691 = vadd.s32 %v690, 8
    %v692 = vadd.s32 %v690, 16
    %v693 = vadd.s32 %v690, 24
    %v694 = vadd.s32 %v690, 32
    %v695 = vadd.s32 %v690, 40
    %v696 = vadd.s32 %v690, 48
    %v697 = vadd.s32 %v690, 56
    %v698 = vadd.s32 %v690, 64
    %v699 = vadd.s32 %v690, 72
    %v700 = vadd.s32 %v690, 80
    %v701 = vadd.s32 %v690, 88
    %v702 = vadd.s32 %v690, 96
    %v703 = vadd.s32 %v690, 104
    %v704 = vadd.s32 %v690, 112
    %v705 = vadd.s32 %v690, 120
    %v706 = vadd.s32 %v690, 128
    %v707 = vadd.s32 %v690, 136
    %v708 = vadd.s32 %v690, 144
    %v709 = vadd.s32 %v690, 152
    %v710 = vadd.s32 %v690, 160
    %v711 = vadd.s32 %v690, 168
    %v712 = vadd.s32 %v690, 176
    %v713 = vadd.s32 %v690, 184
    %v714 = vadd.s32 %v690, 192
    %v715 = vadd.s32 %v690, 200
    %v716 = vadd.s32 %v690, 208
    %v717 = vadd.s32 %v690, 216
    %v718 = vadd.s32 %v690, 224
    %v719 = vadd.s32 %v690, 232
    %v720 = vadd.s32 %v690, 240
    %v721 = vadd.s32 %v690, 248
    %v722 = vlaneseq
    %v723 = vand.u32 %v722, 127
    %v724 = vadd.s32 %v723, 128
    %vm725 = vcmp.lt.s32.totalorder %v723, 128
    %vm726 = vcmp.lt.s32.totalorder %v724, 128
    %v727 = vmul.u32 %v723, 2
    %v728 = vmul.u32 %v724, 2
    %vm729 = vcmp.eq.s32.totalorder %v690, %v727
    %vm730 = vcmp.eq.s32.totalorder %v690, %v728
    %vm731 = vcmp.eq.s32.totalorder %v691, %v727
    %vm732 = vcmp.eq.s32.totalorder %v691, %v728
    %vm733 = vcmp.eq.s32.totalorder %v692, %v727
    %vm734 = vcmp.eq.s32.totalorder %v692, %v728
    %vm735 = vcmp.eq.s32.totalorder %v693, %v727
    %vm736 = vcmp.eq.s32.totalorder %v693, %v728
    %vm737 = vcmp.eq.s32.totalorder %v694, %v727
    %vm738 = vcmp.eq.s32.totalorder %v694, %v728
    %vm739 = vcmp.eq.s32.totalorder %v695, %v727
    %vm740 = vcmp.eq.s32.totalorder %v695, %v728
    %vm741 = vcmp.eq.s32.totalorder %v696, %v727
    %vm742 = vcmp.eq.s32.totalorder %v696, %v728
    %vm743 = vcmp.eq.s32.totalorder %v697, %v727
    %vm744 = vcmp.eq.s32.totalorder %v697, %v728
    %vm745 = vcmp.eq.s32.totalorder %v698, %v727
    %vm746 = vcmp.eq.s32.totalorder %v698, %v728
    %vm747 = vcmp.eq.s32.totalorder %v699, %v727
    %vm748 = vcmp.eq.s32.totalorder %v699, %v728
    %vm749 = vcmp.eq.s32.totalorder %v700, %v727
    %vm750 = vcmp.eq.s32.totalorder %v700, %v728
    %vm751 = vcmp.eq.s32.totalorder %v701, %v727
    %vm752 = vcmp.eq.s32.totalorder %v701, %v728
    %vm753 = vcmp.eq.s32.totalorder %v702, %v727
    %vm754 = vcmp.eq.s32.totalorder %v702, %v728
    %vm755 = vcmp.eq.s32.totalorder %v703, %v727
    %vm756 = vcmp.eq.s32.totalorder %v703, %v728
    %vm757 = vcmp.eq.s32.totalorder %v704, %v727
    %vm758 = vcmp.eq.s32.totalorder %v704, %v728
    %vm759 = vcmp.eq.s32.totalorder %v705, %v727
    %vm760 = vcmp.eq.s32.totalorder %v705, %v728
    %vm761 = vcmp.eq.s32.totalorder %v706, %v727
    %vm762 = vcmp.eq.s32.totalorder %v706, %v728
    %vm763 = vcmp.eq.s32.totalorder %v707, %v727
    %vm764 = vcmp.eq.s32.totalorder %v707, %v728
    %vm765 = vcmp.eq.s32.totalorder %v708, %v727
    %vm766 = vcmp.eq.s32.totalorder %v708, %v728
    %vm767 = vcmp.eq.s32.totalorder %v709, %v727
    %vm768 = vcmp.eq.s32.totalorder %v709, %v728
    %vm769 = vcmp.eq.s32.totalorder %v710, %v727
    %vm770 = vcmp.eq.s32.totalorder %v710, %v728
    %vm771 = vcmp.eq.s32.totalorder %v711, %v727
    %vm772 = vcmp.eq.s32.totalorder %v711, %v728
    %vm773 = vcmp.eq.s32.totalorder %v712, %v727
    %vm774 = vcmp.eq.s32.totalorder %v712, %v728
    %vm775 = vcmp.eq.s32.totalorder %v713, %v727
    %vm776 = vcmp.eq.s32.totalorder %v713, %v728
    %vm777 = vcmp.eq.s32.totalorder %v714, %v727
    %vm778 = vcmp.eq.s32.totalorder %v714, %v728
    %vm779 = vcmp.eq.s32.totalorder %v715, %v727
    %vm780 = vcmp.eq.s32.totalorder %v715, %v728
    %vm781 = vcmp.eq.s32.totalorder %v716, %v727
    %vm782 = vcmp.eq.s32.totalorder %v716, %v728
    %vm783 = vcmp.eq.s32.totalorder %v717, %v727
    %vm784 = vcmp.eq.s32.totalorder %v717, %v728
    %vm785 = vcmp.eq.s32.totalorder %v718, %v727
    %vm786 = vcmp.eq.s32.totalorder %v718, %v728
    %vm787 = vcmp.eq.s32.totalorder %v719, %v727
    %vm788 = vcmp.eq.s32.totalorder %v719, %v728
    %vm789 = vcmp.eq.s32.totalorder %v720, %v727
    %vm790 = vcmp.eq.s32.totalorder %v720, %v728
    %vm791 = vcmp.eq.s32.totalorder %v721, %v727
    %vm792 = vcmp.eq.s32.totalorder %v721, %v728
    %vm793 = vmand %vm725, %vm729
    %vm794 = vmand %vm726, %vm730
    %vm795 = vmand %vm725, %vm731
    %vm796 = vmand %vm726, %vm732
    %vm797 = vmand %vm725, %vm733
    %vm798 = vmand %vm726, %vm734
    %vm799 = vmand %vm725, %vm735
    %vm800 = vmand %vm726, %vm736
    %vm801 = vmand %vm725, %vm737
    %vm802 = vmand %vm726, %vm738
    %vm803 = vmand %vm725, %vm739
    %vm804 = vmand %vm726, %vm740
    %vm805 = vmand %vm725, %vm741
    %vm806 = vmand %vm726, %vm742
    %vm807 = vmand %vm725, %vm743
    %vm808 = vmand %vm726, %vm744
    %vm809 = vmand %vm725, %vm745
    %vm810 = vmand %vm726, %vm746
    %vm811 = vmand %vm725, %vm747
    %vm812 = vmand %vm726, %vm748
    %vm813 = vmand %vm725, %vm749
    %vm814 = vmand %vm726, %vm750
    %vm815 = vmand %vm725, %vm751
    %vm816 = vmand %vm726, %vm752
    %vm817 = vmand %vm725, %vm753
    %vm818 = vmand %vm726, %vm754
    %vm819 = vmand %vm725, %vm755
    %vm820 = vmand %vm726, %vm756
    %vm821 = vmand %vm725, %vm757
    %vm822 = vmand %vm726, %vm758
    %vm823 = vmand %vm725, %vm759
    %vm824 = vmand %vm726, %vm760
    %vm825 = vmand %vm725, %vm761
    %vm826 = vmand %vm726, %vm762
    %vm827 = vmand %vm725, %vm763
    %vm828 = vmand %vm726, %vm764
    %vm829 = vmand %vm725, %vm765
    %vm830 = vmand %vm726, %vm766
    %vm831 = vmand %vm725, %vm767
    %vm832 = vmand %vm726, %vm768
    %vm833 = vmand %vm725, %vm769
    %vm834 = vmand %vm726, %vm770
    %vm835 = vmand %vm725, %vm771
    %vm836 = vmand %vm726, %vm772
    %vm837 = vmand %vm725, %vm773
    %vm838 = vmand %vm726, %vm774
    %vm839 = vmand %vm725, %vm775
    %vm840 = vmand %vm726, %vm776
    %vm841 = vmand %vm725, %vm777
    %vm842 = vmand %vm726, %vm778
    %vm843 = vmand %vm725, %vm779
    %vm844 = vmand %vm726, %vm780
    %vm845 = vmand %vm725, %vm781
    %vm846 = vmand %vm726, %vm782
    %vm847 = vmand %vm725, %vm783
    %vm848 = vmand %vm726, %vm784
    %vm849 = vmand %vm725, %vm785
    %vm850 = vmand %vm726, %vm786
    %vm851 = vmand %vm725, %vm787
    %vm852 = vmand %vm726, %vm788
    %vm853 = vmand %vm725, %vm789
    %vm854 = vmand %vm726, %vm790
    %vm855 = vmand %vm725, %vm791
    %vm856 = vmand %vm726, %vm792
    %vm857 = vcmp.ge.s32.totalorder %v723, 128
    %vm858 = vcmp.ge.s32.totalorder %v724, 128
    %v859 = vsub.s32 %v723, 128
    %v860 = vmul.u32 %v859, 2
    %v861 = vadd.s32 %v860, 1
    %v862 = vadd.s32 %v727, 1
    %vm863 = vcmp.eq.s32.totalorder %v690, %v861
    %vm864 = vcmp.eq.s32.totalorder %v690, %v862
    %vm865 = vcmp.eq.s32.totalorder %v691, %v861
    %vm866 = vcmp.eq.s32.totalorder %v691, %v862
    %vm867 = vcmp.eq.s32.totalorder %v692, %v861
    %vm868 = vcmp.eq.s32.totalorder %v692, %v862
    %vm869 = vcmp.eq.s32.totalorder %v693, %v861
    %vm870 = vcmp.eq.s32.totalorder %v693, %v862
    %vm871 = vcmp.eq.s32.totalorder %v694, %v861
    %vm872 = vcmp.eq.s32.totalorder %v694, %v862
    %vm873 = vcmp.eq.s32.totalorder %v695, %v861
    %vm874 = vcmp.eq.s32.totalorder %v695, %v862
    %vm875 = vcmp.eq.s32.totalorder %v696, %v861
    %vm876 = vcmp.eq.s32.totalorder %v696, %v862
    %vm877 = vcmp.eq.s32.totalorder %v697, %v861
    %vm878 = vcmp.eq.s32.totalorder %v697, %v862
    %vm879 = vcmp.eq.s32.totalorder %v698, %v861
    %vm880 = vcmp.eq.s32.totalorder %v698, %v862
    %vm881 = vcmp.eq.s32.totalorder %v699, %v861
    %vm882 = vcmp.eq.s32.totalorder %v699, %v862
    %vm883 = vcmp.eq.s32.totalorder %v700, %v861
    %vm884 = vcmp.eq.s32.totalorder %v700, %v862
    %vm885 = vcmp.eq.s32.totalorder %v701, %v861
    %vm886 = vcmp.eq.s32.totalorder %v701, %v862
    %vm887 = vcmp.eq.s32.totalorder %v702, %v861
    %vm888 = vcmp.eq.s32.totalorder %v702, %v862
    %vm889 = vcmp.eq.s32.totalorder %v703, %v861
    %vm890 = vcmp.eq.s32.totalorder %v703, %v862
    %vm891 = vcmp.eq.s32.totalorder %v704, %v861
    %vm892 = vcmp.eq.s32.totalorder %v704, %v862
    %vm893 = vcmp.eq.s32.totalorder %v705, %v861
    %vm894 = vcmp.eq.s32.totalorder %v705, %v862
    %vm895 = vcmp.eq.s32.totalorder %v706, %v861
    %vm896 = vcmp.eq.s32.totalorder %v706, %v862
    %vm897 = vcmp.eq.s32.totalorder %v707, %v861
    %vm898 = vcmp.eq.s32.totalorder %v707, %v862
    %vm899 = vcmp.eq.s32.totalorder %v708, %v861
    %vm900 = vcmp.eq.s32.totalorder %v708, %v862
    %vm901 = vcmp.eq.s32.totalorder %v709, %v861
    %vm902 = vcmp.eq.s32.totalorder %v709, %v862
    %vm903 = vcmp.eq.s32.totalorder %v710, %v861
    %vm904 = vcmp.eq.s32.totalorder %v710, %v862
    %vm905 = vcmp.eq.s32.totalorder %v711, %v861
    %vm906 = vcmp.eq.s32.totalorder %v711, %v862
    %vm907 = vcmp.eq.s32.totalorder %v712, %v861
    %vm908 = vcmp.eq.s32.totalorder %v712, %v862
    %vm909 = vcmp.eq.s32.totalorder %v713, %v861
    %vm910 = vcmp.eq.s32.totalorder %v713, %v862
    %vm911 = vcmp.eq.s32.totalorder %v714, %v861
    %vm912 = vcmp.eq.s32.totalorder %v714, %v862
    %vm913 = vcmp.eq.s32.totalorder %v715, %v861
    %vm914 = vcmp.eq.s32.totalorder %v715, %v862
    %vm915 = vcmp.eq.s32.totalorder %v716, %v861
    %vm916 = vcmp.eq.s32.totalorder %v716, %v862
    %vm917 = vcmp.eq.s32.totalorder %v717, %v861
    %vm918 = vcmp.eq.s32.totalorder %v717, %v862
    %vm919 = vcmp.eq.s32.totalorder %v718, %v861
    %vm920 = vcmp.eq.s32.totalorder %v718, %v862
    %vm921 = vcmp.eq.s32.totalorder %v719, %v861
    %vm922 = vcmp.eq.s32.totalorder %v719, %v862
    %vm923 = vcmp.eq.s32.totalorder %v720, %v861
    %vm924 = vcmp.eq.s32.totalorder %v720, %v862
    %vm925 = vcmp.eq.s32.totalorder %v721, %v861
    %vm926 = vcmp.eq.s32.totalorder %v721, %v862
    %vm927 = vmand %vm857, %vm863
    %vm928 = vmand %vm858, %vm864
    %vm929 = vmand %vm857, %vm865
    %vm930 = vmand %vm858, %vm866
    %vm931 = vmand %vm857, %vm867
    %vm932 = vmand %vm858, %vm868
    %vm933 = vmand %vm857, %vm869
    %vm934 = vmand %vm858, %vm870
    %vm935 = vmand %vm857, %vm871
    %vm936 = vmand %vm858, %vm872
    %vm937 = vmand %vm857, %vm873
    %vm938 = vmand %vm858, %vm874
    %vm939 = vmand %vm857, %vm875
    %vm940 = vmand %vm858, %vm876
    %vm941 = vmand %vm857, %vm877
    %vm942 = vmand %vm858, %vm878
    %vm943 = vmand %vm857, %vm879
    %vm944 = vmand %vm858, %vm880
    %vm945 = vmand %vm857, %vm881
    %vm946 = vmand %vm858, %vm882
    %vm947 = vmand %vm857, %vm883
    %vm948 = vmand %vm858, %vm884
    %vm949 = vmand %vm857, %vm885
    %vm950 = vmand %vm858, %vm886
    %vm951 = vmand %vm857, %vm887
    %vm952 = vmand %vm858, %vm888
    %vm953 = vmand %vm857, %vm889
    %vm954 = vmand %vm858, %vm890
    %vm955 = vmand %vm857, %vm891
    %vm956 = vmand %vm858, %vm892
    %vm957 = vmand %vm857, %vm893
    %vm958 = vmand %vm858, %vm894
    %vm959 = vmand %vm857, %vm895
    %vm960 = vmand %vm858, %vm896
    %vm961 = vmand %vm857, %vm897
    %vm962 = vmand %vm858, %vm898
    %vm963 = vmand %vm857, %vm899
    %vm964 = vmand %vm858, %vm900
    %vm965 = vmand %vm857, %vm901
    %vm966 = vmand %vm858, %vm902
    %vm967 = vmand %vm857, %vm903
    %vm968 = vmand %vm858, %vm904
    %vm969 = vmand %vm857, %vm905
    %vm970 = vmand %vm858, %vm906
    %vm971 = vmand %vm857, %vm907
    %vm972 = vmand %vm858, %vm908
    %vm973 = vmand %vm857, %vm909
    %vm974 = vmand %vm858, %vm910
    %vm975 = vmand %vm857, %vm911
    %vm976 = vmand %vm858, %vm912
    %vm977 = vmand %vm857, %vm913
    %vm978 = vmand %vm858, %vm914
    %vm979 = vmand %vm857, %vm915
    %vm980 = vmand %vm858, %vm916
    %vm981 = vmand %vm857, %vm917
    %vm982 = vmand %vm858, %vm918
    %vm983 = vmand %vm857, %vm919
    %vm984 = vmand %vm858, %vm920
    %vm985 = vmand %vm857, %vm921
    %vm986 = vmand %vm858, %vm922
    %vm987 = vmand %vm857, %vm923
    %vm988 = vmand %vm858, %vm924
    %vm989 = vmand %vm857, %vm925
    %vm990 = vmand %vm858, %vm926
    %vm991 = vmor %vm793, %vm927
    %vm992 = vmor %vm794, %vm928
    %vm993 = vmor %vm795, %vm929
    %vm994 = vmor %vm796, %vm930
    %vm995 = vmor %vm797, %vm931
    %vm996 = vmor %vm798, %vm932
    %vm997 = vmor %vm799, %vm933
    %vm998 = vmor %vm800, %vm934
    %vm999 = vmor %vm801, %vm935
    %vm1000 = vmor %vm802, %vm936
    %vm1001 = vmor %vm803, %vm937
    %vm1002 = vmor %vm804, %vm938
    %vm1003 = vmor %vm805, %vm939
    %vm1004 = vmor %vm806, %vm940
    %vm1005 = vmor %vm807, %vm941
    %vm1006 = vmor %vm808, %vm942
    %vm1007 = vmor %vm809, %vm943
    %vm1008 = vmor %vm810, %vm944
    %vm1009 = vmor %vm811, %vm945
    %vm1010 = vmor %vm812, %vm946
    %vm1011 = vmor %vm813, %vm947
    %vm1012 = vmor %vm814, %vm948
    %vm1013 = vmor %vm815, %vm949
    %vm1014 = vmor %vm816, %vm950
    %vm1015 = vmor %vm817, %vm951
    %vm1016 = vmor %vm818, %vm952
    %vm1017 = vmor %vm819, %vm953
    %vm1018 = vmor %vm820, %vm954
    %vm1019 = vmor %vm821, %vm955
    %vm1020 = vmor %vm822, %vm956
    %vm1021 = vmor %vm823, %vm957
    %vm1022 = vmor %vm824, %vm958
    %vm1023 = vmor %vm825, %vm959
    %vm1024 = vmor %vm826, %vm960
    %vm1025 = vmor %vm827, %vm961
    %vm1026 = vmor %vm828, %vm962
    %vm1027 = vmor %vm829, %vm963
    %vm1028 = vmor %vm830, %vm964
    %vm1029 = vmor %vm831, %vm965
    %vm1030 = vmor %vm832, %vm966
    %vm1031 = vmor %vm833, %vm967
    %vm1032 = vmor %vm834, %vm968
    %vm1033 = vmor %vm835, %vm969
    %vm1034 = vmor %vm836, %vm970
    %vm1035 = vmor %vm837, %vm971
    %vm1036 = vmor %vm838, %vm972
    %vm1037 = vmor %vm839, %vm973
    %vm1038 = vmor %vm840, %vm974
    %vm1039 = vmor %vm841, %vm975
    %vm1040 = vmor %vm842, %vm976
    %vm1041 = vmor %vm843, %vm977
    %vm1042 = vmor %vm844, %vm978
    %vm1043 = vmor %vm845, %vm979
    %vm1044 = vmor %vm846, %vm980
    %vm1045 = vmor %vm847, %vm981
    %vm1046 = vmor %vm848, %vm982
    %vm1047 = vmor %vm849, %vm983
    %vm1048 = vmor %vm850, %vm984
    %vm1049 = vmor %vm851, %vm985
    %vm1050 = vmor %vm852, %vm986
    %vm1051 = vmor %vm853, %vm987
    %vm1052 = vmor %vm854, %vm988
    %vm1053 = vmor %vm855, %vm989
    %vm1054 = vmor %vm856, %vm990
    %v1055 = vsel %vm991, 1, 0
    %v1056 = vsel %vm992, 1, 0
    %v1057 = vsel %vm993, 1, 0
    %v1058 = vsel %vm994, 1, 0
    %v1059 = vsel %vm995, 1, 0
    %v1060 = vsel %vm996, 1, 0
    %v1061 = vsel %vm997, 1, 0
    %v1062 = vsel %vm998, 1, 0
    %v1063 = vsel %vm999, 1, 0
    %v1064 = vsel %vm1000, 1, 0
    %v1065 = vsel %vm1001, 1, 0
    %v1066 = vsel %vm1002, 1, 0
    %v1067 = vsel %vm1003, 1, 0
    %v1068 = vsel %vm1004, 1, 0
    %v1069 = vsel %vm1005, 1, 0
    %v1070 = vsel %vm1006, 1, 0
    %v1071 = vsel %vm1007, 1, 0
    %v1072 = vsel %vm1008, 1, 0
    %v1073 = vsel %vm1009, 1, 0
    %v1074 = vsel %vm1010, 1, 0
    %v1075 = vsel %vm1011, 1, 0
    %v1076 = vsel %vm1012, 1, 0
    %v1077 = vsel %vm1013, 1, 0
    %v1078 = vsel %vm1014, 1, 0
    %v1079 = vsel %vm1015, 1, 0
    %v1080 = vsel %vm1016, 1, 0
    %v1081 = vsel %vm1017, 1, 0
    %v1082 = vsel %vm1018, 1, 0
    %v1083 = vsel %vm1019, 1, 0
    %v1084 = vsel %vm1020, 1, 0
    %v1085 = vsel %vm1021, 1, 0
    %v1086 = vsel %vm1022, 1, 0
    %v1087 = vsel %vm1023, 1, 0
    %v1088 = vsel %vm1024, 1, 0
    %v1089 = vsel %vm1025, 1, 0
    %v1090 = vsel %vm1026, 1, 0
    %v1091 = vsel %vm1027, 1, 0
    %v1092 = vsel %vm1028, 1, 0
    %v1093 = vsel %vm1029, 1, 0
    %v1094 = vsel %vm1030, 1, 0
    %v1095 = vsel %vm1031, 1, 0
    %v1096 = vsel %vm1032, 1, 0
    %v1097 = vsel %vm1033, 1, 0
    %v1098 = vsel %vm1034, 1, 0
    %v1099 = vsel %vm1035, 1, 0
    %v1100 = vsel %vm1036, 1, 0
    %v1101 = vsel %vm1037, 1, 0
    %v1102 = vsel %vm1038, 1, 0
    %v1103 = vsel %vm1039, 1, 0
    %v1104 = vsel %vm1040, 1, 0
    %v1105 = vsel %vm1041, 1, 0
    %v1106 = vsel %vm1042, 1, 0
    %v1107 = vsel %vm1043, 1, 0
    %v1108 = vsel %vm1044, 1, 0
    %v1109 = vsel %vm1045, 1, 0
    %v1110 = vsel %vm1046, 1, 0
    %v1111 = vsel %vm1047, 1, 0
    %v1112 = vsel %vm1048, 1, 0
    %v1113 = vsel %vm1049, 1, 0
    %v1114 = vsel %vm1050, 1, 0
    %v1115 = vsel %vm1051, 1, 0
    %v1116 = vsel %vm1052, 1, 0
    %v1117 = vsel %vm1053, 1, 0
    %v1118 = vsel %vm1054, 1, 0
    %v1119 = vcvt.s32.f32 %v1055
    %v1120 = vcvt.s32.f32 %v1056
    %v1121 = vcvt.s32.f32 %v1057
    %v1122 = vcvt.s32.f32 %v1058
    %v1123 = vcvt.s32.f32 %v1059
    %v1124 = vcvt.s32.f32 %v1060
    %v1125 = vcvt.s32.f32 %v1061
    %v1126 = vcvt.s32.f32 %v1062
    %v1127 = vcvt.s32.f32 %v1063
    %v1128 = vcvt.s32.f32 %v1064
    %v1129 = vcvt.s32.f32 %v1065
    %v1130 = vcvt.s32.f32 %v1066
    %v1131 = vcvt.s32.f32 %v1067
    %v1132 = vcvt.s32.f32 %v1068
    %v1133 = vcvt.s32.f32 %v1069
    %v1134 = vcvt.s32.f32 %v1070
    %v1135 = vcvt.s32.f32 %v1071
    %v1136 = vcvt.s32.f32 %v1072
    %v1137 = vcvt.s32.f32 %v1073
    %v1138 = vcvt.s32.f32 %v1074
    %v1139 = vcvt.s32.f32 %v1075
    %v1140 = vcvt.s32.f32 %v1076
    %v1141 = vcvt.s32.f32 %v1077
    %v1142 = vcvt.s32.f32 %v1078
    %v1143 = vcvt.s32.f32 %v1079
    %v1144 = vcvt.s32.f32 %v1080
    %v1145 = vcvt.s32.f32 %v1081
    %v1146 = vcvt.s32.f32 %v1082
    %v1147 = vcvt.s32.f32 %v1083
    %v1148 = vcvt.s32.f32 %v1084
    %v1149 = vcvt.s32.f32 %v1085
    %v1150 = vcvt.s32.f32 %v1086
    %v1151 = vcvt.s32.f32 %v1087
    %v1152 = vcvt.s32.f32 %v1088
    %v1153 = vcvt.s32.f32 %v1089
    %v1154 = vcvt.s32.f32 %v1090
    %v1155 = vcvt.s32.f32 %v1091
    %v1156 = vcvt.s32.f32 %v1092
    %v1157 = vcvt.s32.f32 %v1093
    %v1158 = vcvt.s32.f32 %v1094
    %v1159 = vcvt.s32.f32 %v1095
    %v1160 = vcvt.s32.f32 %v1096
    %v1161 = vcvt.s32.f32 %v1097
    %v1162 = vcvt.s32.f32 %v1098
    %v1163 = vcvt.s32.f32 %v1099
    %v1164 = vcvt.s32.f32 %v1100
    %v1165 = vcvt.s32.f32 %v1101
    %v1166 = vcvt.s32.f32 %v1102
    %v1167 = vcvt.s32.f32 %v1103
    %v1168 = vcvt.s32.f32 %v1104
    %v1169 = vcvt.s32.f32 %v1105
    %v1170 = vcvt.s32.f32 %v1106
    %v1171 = vcvt.s32.f32 %v1107
    %v1172 = vcvt.s32.f32 %v1108
    %v1173 = vcvt.s32.f32 %v1109
    %v1174 = vcvt.s32.f32 %v1110
    %v1175 = vcvt.s32.f32 %v1111
    %v1176 = vcvt.s32.f32 %v1112
    %v1177 = vcvt.s32.f32 %v1113
    %v1178 = vcvt.s32.f32 %v1114
    %v1179 = vcvt.s32.f32 %v1115
    %v1180 = vcvt.s32.f32 %v1116
    %v1181 = vcvt.s32.f32 %v1117
    %v1182 = vcvt.s32.f32 %v1118
    %1183 = vmatprep.subr.mxu0 %v1120
    %1184 = vmatpush1.msra.mxu0 %v1119
    %1185 = vmatprep.subr.mxu0 %v1122
    %1186 = vmatpush1.msra.mxu0 %v1121
    %1187 = vmatprep.subr.mxu0 %v1124
    %1188 = vmatpush1.msra.mxu0 %v1123
    %1189 = vmatprep.subr.mxu0 %v1126
    %1190 = vmatpush1.msra.mxu0 %v1125
    %1191 = vmatprep.subr.mxu0 %v1128
    %1192 = vmatpush1.msra.mxu0 %v1127
    %1193 = vmatprep.subr.mxu0 %v1130
    %1194 = vmatpush1.msra.mxu0 %v1129
    %1195 = vmatprep.subr.mxu0 %v1132
    %1196 = vmatpush1.msra.mxu0 %v1131
    %1197 = vmatprep.subr.mxu0 %v1134
    %1198 = vmatpush1.msra.mxu0 %v1133
    %1199 = vmatprep.subr.mxu0 %v1136
    %1200 = vmatpush1.msra.mxu0 %v1135
    %1201 = vmatprep.subr.mxu0 %v1138
    %1202 = vmatpush1.msra.mxu0 %v1137
    %1203 = vmatprep.subr.mxu0 %v1140
    %1204 = vmatpush1.msra.mxu0 %v1139
    %1205 = vmatprep.subr.mxu0 %v1142
    %1206 = vmatpush1.msra.mxu0 %v1141
    %1207 = vmatprep.subr.mxu0 %v1144
    %1208 = vmatpush1.msra.mxu0 %v1143
    %1209 = vmatprep.subr.mxu0 %v1146
    %1210 = vmatpush1.msra.mxu0 %v1145
    %1211 = vmatprep.subr.mxu0 %v1148
    %1212 = vmatpush1.msra.mxu0 %v1147
    %1213 = vmatprep.subr.mxu0 %v1150
    %1214 = vmatpush1.msra.mxu0 %v1149
    %1215 = vmatprep.subr.mxu0 %v1152
    %1216 = vmatpush1.msra.mxu0 %v1151
    %1217 = vmatprep.subr.mxu0 %v1154
    %1218 = vmatpush1.msra.mxu0 %v1153
    %1219 = vmatprep.subr.mxu0 %v1156
    %1220 = vmatpush1.msra.mxu0 %v1155
    %1221 = vmatprep.subr.mxu0 %v1158
    %1222 = vmatpush1.msra.mxu0 %v1157
    %1223 = vmatprep.subr.mxu0 %v1160
    %1224 = vmatpush1.msra.mxu0 %v1159
    %1225 = vmatprep.subr.mxu0 %v1162
    %1226 = vmatpush1.msra.mxu0 %v1161
    %1227 = vmatprep.subr.mxu0 %v1164
    %1228 = vmatpush1.msra.mxu0 %v1163
    %1229 = vmatprep.subr.mxu0 %v1166
    %1230 = vmatpush1.msra.mxu0 %v1165
    %1231 = vmatprep.subr.mxu0 %v1168
    %1232 = vmatpush1.msra.mxu0 %v1167
    %1233 = vmatprep.subr.mxu0 %v1170
    %1234 = vmatpush1.msra.mxu0 %v1169
    %1235 = vmatprep.subr.mxu0 %v1172
    %1236 = vmatpush1.msra.mxu0 %v1171
    %1237 = vmatprep.subr.mxu0 %v1174
    %1238 = vmatpush1.msra.mxu0 %v1173
    %1239 = vmatprep.subr.mxu0 %v1176
    %1240 = vmatpush1.msra.mxu0 %v1175
    %1241 = vmatprep.subr.mxu0 %v1178
    %1242 = vmatpush1.msra.mxu0 %v1177
    %1243 = vmatprep.subr.mxu0 %v1180
    %1244 = vmatpush1.msra.mxu0 %v1179
    %1245 = vmatprep.subr.mxu0 %v1182
    %1246 = vmatpush1.msra.mxu0 %v1181
    %1247 = vmatprep.mubr.f32.mxu0 %v687
    %1248 = vmatmul.mubr.f32.gmra.mrb[0].mxu0 %v685
    %v1249 = vpop.f32.mrb[0].mxu0
    %v1250 = vadd.f32 0.0, %v1249
    %v1251 = vpop.f32.mrb[0].mxu0
    %v1252 = vadd.f32 0.0, %v1251
    %1253 = vdwg.mxu0
    %v1254 = vmax.f32 %v1250, %v1252
    %v1255 = vld [vmem:[#allocation8] sm:$0xff]
    %1257 = vset.pattern.permute.xlu0 0
    %1258 = vperm.xlu0 %1257, %v1255
    %v1259 = vpop.permute.xlu0 %1258
    %v1261 = vadd.f32 %v1254, %v1259
    %v1262 = vmax.f32 %v1261, 0.0
    %s1263 = scalar_lea.vmem [#allocation8], 8
    %v1264 = vld [vmem:[%s1263] sm:$0xff]
    %s1265 = scalar_lea.vmem [#allocation8], 16
    %v1266 = vld [vmem:[%s1265] sm:$0xff]
    %1267 = vadd.xlane.f32.xlu0 %v1262
    %v1268 = vpop.xlane.xlu0 %1267
    %v1269 = vmul.f32 %v1268, 0.0078125
    %v1270 = vsub.f32 %v1262, %v1269
    %v1271 = vmul.f32 %v1270, %v1270
    %1272 = vadd.xlane.f32.xlu0 %v1271
    %v1273 = vpop.xlane.xlu0 %1272
    %v1274 = vmul.f32 %v1273, 0.0078125
    %v1275 = vadd.f32 %v1274, 1e-05
    %v1276 = vrsqrt.pop %v1275
    %v1277 = vmul.f32 %v1270, %v1276
    %1279 = vset.pattern.permute.xlu0 0
    %1280 = vperm.xlu0 %1279, %v1264
    %v1281 = vpop.permute.xlu0 %1280
    %v1283 = vmul.f32 %v1277, %v1281
    %1285 = vset.pattern.permute.xlu0 0
    %1286 = vperm.xlu0 %1285, %v1266
    %v1287 = vpop.permute.xlu0 %1286
    %v1289 = vadd.f32 %v1283, %v1287
    %v1290 = vld [vmem:[#allocation9] sm:$0xff]
    %v1291 = vld [vmem:[#allocation9 + $0x8] sm:$0xff]
    %1293 = vrot.lane.b32.xlu0 %v1289, 2
    %v1294 = vpop.permute.xlu0 %1293
    %1296 = vrot.lane.b32.xlu0 %v1289, 6
    %v1297 = vpop.permute.xlu0 %1296
    %v1299 = vsel %vm516, 0.0, %v1294
    %vm1300 = vcmask 539648
    %v1301 = vsel %vm1300, %v1299, 0.0
    %vm1302 = vcmask 556032
    %v1303 = vsel %vm1302, %v1301, 0.0
    %vm1304 = vcmask 572416
    %v1305 = vsel %vm1304, %v1303, %v1297
    %v1306 = vsel %vm521, %v1297, 0.0
    %1309 = vrot.lane.b32.xlu0 %v1305, 124
    %v1310 = vpop.permute.xlu0 %1309
    %1311 = vrot.lane.b32.xlu0 %v1306, 124
    %v1312 = vpop.permute.xlu0 %1311
    %v1313 = vsel %vm530, %v1310, %v1312
    %vm1315 = vcmask 523264
    %v1316 = vsel %vm1315, %v1305, %v1313
    %1317 = vrot.lane.b32.xlu0 %v1305, 127
    %v1318 = vpop.permute.xlu0 %1317
    %1320 = vrot.lane.b32.xlu0 %v1305, 123
    %v1321 = vpop.permute.xlu0 %1320
    %1322 = vrot.lane.b32.xlu0 %v1306, 123
    %v1323 = vpop.permute.xlu0 %1322
    %v1324 = vsel %vm544, %v1321, %v1323
    %v1326 = vsel %vm1315, %v1318, %v1324
    %1327 = vrot.lane.b32.xlu0 %v1305, 126
    %v1328 = vpop.permute.xlu0 %1327
    %1330 = vrot.lane.b32.xlu0 %v1305, 122
    %v1331 = vpop.permute.xlu0 %1330
    %1332 = vrot.lane.b32.xlu0 %v1306, 122
    %v1333 = vpop.permute.xlu0 %1332
    %v1334 = vsel %vm556, %v1331, %v1333
    %v1336 = vsel %vm1315, %v1328, %v1334
    %1337 = vrot.lane.b32.xlu0 %v1305, 125
    %v1338 = vpop.permute.xlu0 %1337
    %1340 = vrot.lane.b32.xlu0 %v1305, 121
    %v1341 = vpop.permute.xlu0 %1340
    %1342 = vrot.lane.b32.xlu0 %v1306, 121
    %v1343 = vpop.permute.xlu0 %1342
    %v1344 = vsel %vm568, %v1341, %v1343
    %v1346 = vsel %vm1315, %v1338, %v1344
    %1348 = vrot.lane.b32.xlu0 %v1305, 120
    %v1349 = vpop.permute.xlu0 %1348
    %1350 = vrot.lane.b32.xlu0 %v1306, 120
    %v1351 = vpop.permute.xlu0 %1350
    %v1352 = vsel %vm577, %v1349, %v1351
    %v1354 = vsel %vm1315, %v1310, %v1352
    %vm1355 = vcmask 326656
    %v1357 = vsel %vm1355, %v1290, 0
    %v1360 = vsel %vm1355, %v1291, 0
    %1362 = vmatprep.subr.mxu0 0.0
    %1363 = vmatpush1.msra.mxu0 %v1316
    %1364 = vmatprep.subr.mxu0 0.0
    %1365 = vmatpush1.msra.mxu0 %v1326
    %1366 = vmatprep.subr.mxu0 0.0
    %1367 = vmatpush1.msra.mxu0 %v1336
    %1368 = vmatprep.subr.mxu0 0.0
    %1369 = vmatpush1.msra.mxu0 %v1346
    %1370 = vmatprep.subr.mxu0 0.0
    %1371 = vmatpush1.msra.mxu0 %v1354
    %1372 = vmatprep.subr.mxu0 0.0
    %1373 = vmatpush1.msra.mxu0 0.0
    %1374 = vmatprep.subr.mxu0 0.0
    %1375 = vmatpush1.msra.mxu0 0.0
    %1376 = vmatprep.subr.mxu0 0.0
    %1377 = vmatpush1.msra.mxu0 0.0
    %1378 = vmatprep.subr.mxu0 0.0
    %1379 = vmatpush1.msra.mxu0 0.0
    %1380 = vmatprep.subr.mxu0 0.0
    %1381 = vmatpush1.msra.mxu0 0.0
    %1382 = vmatprep.subr.mxu0 0.0
    %1383 = vmatpush1.msra.mxu0 0.0
    %1384 = vmatprep.subr.mxu0 0.0
    %1385 = vmatpush1.msra.mxu0 0.0
    %1386 = vmatprep.subr.mxu0 0.0
    %1387 = vmatpush1.msra.mxu0 0.0
    %1388 = vmatprep.subr.mxu0 0.0
    %1389 = vmatpush1.msra.mxu0 0.0
    %1390 = vmatprep.subr.mxu0 0.0
    %1391 = vmatpush1.msra.mxu0 0.0
    %1392 = vmatprep.subr.mxu0 0.0
    %1393 = vmatpush1.msra.mxu0 0.0
    %1394 = vmatprep.subr.mxu0 0.0
    %1395 = vmatpush1.msra.mxu0 0.0
    %1396 = vmatprep.subr.mxu0 0.0
    %1397 = vmatpush1.msra.mxu0 0.0
    %1398 = vmatprep.subr.mxu0 0.0
    %1399 = vmatpush1.msra.mxu0 0.0
    %1400 = vmatprep.subr.mxu0 0.0
    %1401 = vmatpush1.msra.mxu0 0.0
    %1402 = vmatprep.subr.mxu0 0.0
    %1403 = vmatpush1.msra.mxu0 0.0
    %1404 = vmatprep.subr.mxu0 0.0
    %1405 = vmatpush1.msra.mxu0 0.0
    %1406 = vmatprep.subr.mxu0 0.0
    %1407 = vmatpush1.msra.mxu0 0.0
    %1408 = vmatprep.subr.mxu0 0.0
    %1409 = vmatpush1.msra.mxu0 0.0
    %1410 = vmatprep.subr.mxu0 0.0
    %1411 = vmatpush1.msra.mxu0 0.0
    %1412 = vmatprep.subr.mxu0 0.0
    %1413 = vmatpush1.msra.mxu0 0.0
    %1414 = vmatprep.subr.mxu0 0.0
    %1415 = vmatpush1.msra.mxu0 0.0
    %1416 = vmatprep.subr.mxu0 0.0
    %1417 = vmatpush1.msra.mxu0 0.0
    %1418 = vmatprep.subr.mxu0 0.0
    %1419 = vmatpush1.msra.mxu0 0.0
    %1420 = vmatprep.subr.mxu0 0.0
    %1421 = vmatpush1.msra.mxu0 0.0
    %1422 = vmatprep.subr.mxu0 0.0
    %1423 = vmatpush1.msra.mxu0 0.0
    %1424 = vmatprep.subr.mxu0 0.0
    %1425 = vmatpush1.msra.mxu0 0.0
    %1426 = vmatprep.mubr.f32.mxu0 0.0
    %1427 = vmatmul.mubr.f32.gmra.mrb[0].mxu0 %v1357
    %v1428 = vpop.f32.mrb[0].mxu0
    %v1429 = vadd.f32 0.0, %v1428
    %v1430 = vpop.f32.mrb[0].mxu0
    %1431 = vmatprep.mubr.f32.mxu0 0.0
    %1432 = vmatmul.mubr.f32.gmra.mrb[0].mxu0 %v1360
    %v1433 = vpop.f32.mrb[0].mxu0
    %v1434 = vadd.f32 0.0, %v1433
    %v1435 = vpop.f32.mrb[0].mxu0
    %1436 = vdwg.mxu0
    %vm1437 = vcmp.lt.s32.totalorder %v723, 64
    %vm1438 = vmand %vm1437, %vm729
    %vm1439 = vmand %vm1437, %vm731
    %vm1440 = vmand %vm1437, %vm733
    %vm1441 = vmand %vm1437, %vm735
    %vm1442 = vmand %vm1437, %vm737
    %vm1443 = vmand %vm1437, %vm739
    %vm1444 = vmand %vm1437, %vm741
    %vm1445 = vmand %vm1437, %vm743
    %vm1446 = vmand %vm1437, %vm745
    %vm1447 = vmand %vm1437, %vm747
    %vm1448 = vmand %vm1437, %vm749
    %vm1449 = vmand %vm1437, %vm751
    %vm1450 = vmand %vm1437, %vm753
    %vm1451 = vmand %vm1437, %vm755
    %vm1452 = vmand %vm1437, %vm757
    %vm1453 = vmand %vm1437, %vm759
    %vm1454 = vcmp.ge.s32.totalorder %v723, 64
    %v1455 = vsub.s32 %v723, 64
    %v1456 = vmul.u32 %v1455, 2
    %v1457 = vadd.s32 %v1456, 1
    %vm1458 = vcmp.eq.s32.totalorder %v690, %v1457
    %vm1459 = vcmp.eq.s32.totalorder %v691, %v1457
    %vm1460 = vcmp.eq.s32.totalorder %v692, %v1457
    %vm1461 = vcmp.eq.s32.totalorder %v693, %v1457
    %vm1462 = vcmp.eq.s32.totalorder %v694, %v1457
    %vm1463 = vcmp.eq.s32.totalorder %v695, %v1457
    %vm1464 = vcmp.eq.s32.totalorder %v696, %v1457
    %vm1465 = vcmp.eq.s32.totalorder %v697, %v1457
    %vm1466 = vcmp.eq.s32.totalorder %v698, %v1457
    %vm1467 = vcmp.eq.s32.totalorder %v699, %v1457
    %vm1468 = vcmp.eq.s32.totalorder %v700, %v1457
    %vm1469 = vcmp.eq.s32.totalorder %v701, %v1457
    %vm1470 = vcmp.eq.s32.totalorder %v702, %v1457
    %vm1471 = vcmp.eq.s32.totalorder %v703, %v1457
    %vm1472 = vcmp.eq.s32.totalorder %v704, %v1457
    %vm1473 = vcmp.eq.s32.totalorder %v705, %v1457
    %vm1474 = vmand %vm1454, %vm1458
    %vm1475 = vmand %vm1454, %vm1459
    %vm1476 = vmand %vm1454, %vm1460
    %vm1477 = vmand %vm1454, %vm1461
    %vm1478 = vmand %vm1454, %vm1462
    %vm1479 = vmand %vm1454, %vm1463
    %vm1480 = vmand %vm1454, %vm1464
    %vm1481 = vmand %vm1454, %vm1465
    %vm1482 = vmand %vm1454, %vm1466
    %vm1483 = vmand %vm1454, %vm1467
    %vm1484 = vmand %vm1454, %vm1468
    %vm1485 = vmand %vm1454, %vm1469
    %vm1486 = vmand %vm1454, %vm1470
    %vm1487 = vmand %vm1454, %vm1471
    %vm1488 = vmand %vm1454, %vm1472
    %vm1489 = vmand %vm1454, %vm1473
    %vm1490 = vmor %vm1438, %vm1474
    %vm1491 = vmor %vm1439, %vm1475
    %vm1492 = vmor %vm1440, %vm1476
    %vm1493 = vmor %vm1441, %vm1477
    %vm1494 = vmor %vm1442, %vm1478
    %vm1495 = vmor %vm1443, %vm1479
    %vm1496 = vmor %vm1444, %vm1480
    %vm1497 = vmor %vm1445, %vm1481
    %vm1498 = vmor %vm1446, %vm1482
    %vm1499 = vmor %vm1447, %vm1483
    %vm1500 = vmor %vm1448, %vm1484
    %vm1501 = vmor %vm1449, %vm1485
    %vm1502 = vmor %vm1450, %vm1486
    %vm1503 = vmor %vm1451, %vm1487
    %vm1504 = vmor %vm1452, %vm1488
    %vm1505 = vmor %vm1453, %vm1489
    %v1506 = vsel %vm1490, 1, 0
    %v1507 = vsel %vm1491, 1, 0
    %v1508 = vsel %vm1492, 1, 0
    %v1509 = vsel %vm1493, 1, 0
    %v1510 = vsel %vm1494, 1, 0
    %v1511 = vsel %vm1495, 1, 0
    %v1512 = vsel %vm1496, 1, 0
    %v1513 = vsel %vm1497, 1, 0
    %v1514 = vsel %vm1498, 1, 0
    %v1515 = vsel %vm1499, 1, 0
    %v1516 = vsel %vm1500, 1, 0
    %v1517 = vsel %vm1501, 1, 0
    %v1518 = vsel %vm1502, 1, 0
    %v1519 = vsel %vm1503, 1, 0
    %v1520 = vsel %vm1504, 1, 0
    %v1521 = vsel %vm1505, 1, 0
    %v1522 = vcvt.s32.f32 %v1506
    %v1523 = vcvt.s32.f32 %v1507
    %v1524 = vcvt.s32.f32 %v1508
    %v1525 = vcvt.s32.f32 %v1509
    %v1526 = vcvt.s32.f32 %v1510
    %v1527 = vcvt.s32.f32 %v1511
    %v1528 = vcvt.s32.f32 %v1512
    %v1529 = vcvt.s32.f32 %v1513
    %v1530 = vcvt.s32.f32 %v1514
    %v1531 = vcvt.s32.f32 %v1515
    %v1532 = vcvt.s32.f32 %v1516
    %v1533 = vcvt.s32.f32 %v1517
    %v1534 = vcvt.s32.f32 %v1518
    %v1535 = vcvt.s32.f32 %v1519
    %v1536 = vcvt.s32.f32 %v1520
    %v1537 = vcvt.s32.f32 %v1521
    %1538 = vmatprep.subr.mxu0 0.0
    %1539 = vmatpush1.msra.mxu0 %v1522
    %1540 = vmatprep.subr.mxu0 0.0
    %1541 = vmatpush1.msra.mxu0 %v1523
    %1542 = vmatprep.subr.mxu0 0.0
    %1543 = vmatpush1.msra.mxu0 %v1524
    %1544 = vmatprep.subr.mxu0 0.0
    %1545 = vmatpush1.msra.mxu0 %v1525
    %1546 = vmatprep.subr.mxu0 0.0
    %1547 = vmatpush1.msra.mxu0 %v1526
    %1548 = vmatprep.subr.mxu0 0.0
    %1549 = vmatpush1.msra.mxu0 %v1527
    %1550 = vmatprep.subr.mxu0 0.0
    %1551 = vmatpush1.msra.mxu0 %v1528
    %1552 = vmatprep.subr.mxu0 0.0
    %1553 = vmatpush1.msra.mxu0 %v1529
    %1554 = vmatprep.subr.mxu0 0.0
    %1555 = vmatpush1.msra.mxu0 %v1530
    %1556 = vmatprep.subr.mxu0 0.0
    %1557 = vmatpush1.msra.mxu0 %v1531
    %1558 = vmatprep.subr.mxu0 0.0
    %1559 = vmatpush1.msra.mxu0 %v1532
    %1560 = vmatprep.subr.mxu0 0.0
    %1561 = vmatpush1.msra.mxu0 %v1533
    %1562 = vmatprep.subr.mxu0 0.0
    %1563 = vmatpush1.msra.mxu0 %v1534
    %1564 = vmatprep.subr.mxu0 0.0
    %1565 = vmatpush1.msra.mxu0 %v1535
    %1566 = vmatprep.subr.mxu0 0.0
    %1567 = vmatpush1.msra.mxu0 %v1536
    %1568 = vmatprep.subr.mxu0 0.0
    %1569 = vmatpush1.msra.mxu0 %v1537
    %1570 = vmatprep.subr.mxu0 0.0
    %1571 = vmatpush1.msra.mxu0 0.0
    %1572 = vmatprep.subr.mxu0 0.0
    %1573 = vmatpush1.msra.mxu0 0.0
    %1574 = vmatprep.subr.mxu0 0.0
    %1575 = vmatpush1.msra.mxu0 0.0
    %1576 = vmatprep.subr.mxu0 0.0
    %1577 = vmatpush1.msra.mxu0 0.0
    %1578 = vmatprep.subr.mxu0 0.0
    %1579 = vmatpush1.msra.mxu0 0.0
    %1580 = vmatprep.subr.mxu0 0.0
    %1581 = vmatpush1.msra.mxu0 0.0
    %1582 = vmatprep.subr.mxu0 0.0
    %1583 = vmatpush1.msra.mxu0 0.0
    %1584 = vmatprep.subr.mxu0 0.0
    %1585 = vmatpush1.msra.mxu0 0.0
    %1586 = vmatprep.subr.mxu0 0.0
    %1587 = vmatpush1.msra.mxu0 0.0
    %1588 = vmatprep.subr.mxu0 0.0
    %1589 = vmatpush1.msra.mxu0 0.0
    %1590 = vmatprep.subr.mxu0 0.0
    %1591 = vmatpush1.msra.mxu0 0.0
    %1592 = vmatprep.subr.mxu0 0.0
    %1593 = vmatpush1.msra.mxu0 0.0
    %1594 = vmatprep.subr.mxu0 0.0
    %1595 = vmatpush1.msra.mxu0 0.0
    %1596 = vmatprep.subr.mxu0 0.0
    %1597 = vmatpush1.msra.mxu0 0.0
    %1598 = vmatprep.subr.mxu0 0.0
    %1599 = vmatpush1.msra.mxu0 0.0
    %1600 = vmatprep.subr.mxu0 0.0
    %1601 = vmatpush1.msra.mxu0 0.0
    %1602 = vmatprep.mubr.f32.mxu0 0.0
    %1603 = vmatmul.mubr.f32.gmra.mrb[0].mxu0 %v1429
    %v1604 = vpop.f32.mrb[0].mxu0
    %v1605 = vadd.f32 0.0, %v1604
    %v1606 = vpop.f32.mrb[0].mxu0
    %1607 = vmatprep.mubr.f32.mxu0 0.0
    %1608 = vmatmul.mubr.f32.gmra.mrb[0].mxu0 %v1434
    %v1609 = vpop.f32.mrb[0].mxu0
    %v1610 = vadd.f32 0.0, %v1609
    %v1611 = vpop.f32.mrb[0].mxu0
    %1612 = vdwg.mxu0
    %1615 = vrot.lane.b32.xlu0 %v1605, 64
    %v1616 = vpop.permute.xlu0 %1615
    %1617 = vrot.lane.b32.xlu0 %v1610, 64
    %v1618 = vpop.permute.xlu0 %1617
    %v1621 = vmax.f32 %v1605, %v1616
    %v1622 = vmax.f32 %v1610, %v1618
    %v1623 = vld [vmem:[#allocation11] sm:$0xff]
    %v1624 = vld [vmem:[#allocation11 + $0x8] sm:$0xff]
    %1626 = vset.pattern.permute.xlu0 0
    %1627 = vperm.xlu0 %1626, %v1623
    %v1628 = vpop.permute.xlu0 %1627
    %1631 = vset.pattern.permute.xlu0 0
    %1632 = vperm.xlu0 %1631, %v1624
    %v1633 = vpop.permute.xlu0 %1632
    %v1635 = vadd.f32 %v1621, %v1628
    %v1636 = vadd.f32 %v1622, %v1633
    %v1637 = vmax.f32 %v1635, 0.0
    %v1638 = vmax.f32 %v1636, 0.0
    %s1639 = scalar_lea.vmem [#allocation11], 16
    %v1640 = vld [vmem:[%s1639] sm:$0xff]
    %v1641 = vld [vmem:[%s1639 + $0x8] sm:$0xff]
    %s1642 = scalar_lea.vmem [#allocation11], 32
    %v1643 = vld [vmem:[%s1642] sm:$0xff]
    %v1644 = vld [vmem:[%s1642 + $0x8] sm:$0xff]
    %v1645 = vsel %vm1315, %v1637, 0.0
    %1646 = vadd.xlane.f32.xlu0 %v1645
    %v1647 = vpop.xlane.xlu0 %1646
    %v1648 = vsel %vm1315, %v1638, 0.0
    %1649 = vadd.xlane.f32.xlu0 %v1648
    %v1650 = vpop.xlane.xlu0 %1649
    %v1651 = vmul.f32 %v1647, 0.015625
    %v1652 = vmul.f32 %v1650, 0.015625
    %v1653 = vsub.f32 %v1637, %v1651
    %v1654 = vsub.f32 %v1638, %v1652
    %v1655 = vmul.f32 %v1653, %v1653
    %v1656 = vmul.f32 %v1654, %v1654
    %v1657 = vsel %vm1315, %v1655, 0.0
    %1658 = vadd.xlane.f32.xlu0 %v1657
    %v1659 = vpop.xlane.xlu0 %1658
    %v1660 = vsel %vm1315, %v1656, 0.0
    %1661 = vadd.xlane.f32.xlu0 %v1660
    %v1662 = vpop.xlane.xlu0 %1661
    %v1663 = vmul.f32 %v1659, 0.015625
    %v1664 = vmul.f32 %v1662, 0.015625
    %v1665 = vadd.f32 %v1663, 1e-05
    %v1666 = vadd.f32 %v1664, 1e-05
    %v1667 = vrsqrt.pop %v1665
    %v1668 = vrsqrt.pop %v1666
    %v1669 = vmul.f32 %v1653, %v1667
    %v1670 = vmul.f32 %v1654, %v1668
    %1672 = vset.pattern.permute.xlu0 0
    %1673 = vperm.xlu0 %1672, %v1640
    %v1674 = vpop.permute.xlu0 %1673
    %1677 = vset.pattern.permute.xlu0 0
    %1678 = vperm.xlu0 %1677, %v1641
    %v1679 = vpop.permute.xlu0 %1678
    %v1681 = vmul.f32 %v1669, %v1674
    %v1682 = vmul.f32 %v1670, %v1679
    %1684 = vset.pattern.permute.xlu0 0
    %1685 = vperm.xlu0 %1684, %v1643
    %v1686 = vpop.permute.xlu0 %1685
    %1689 = vset.pattern.permute.xlu0 0
    %1690 = vperm.xlu0 %1689, %v1644
    %v1691 = vpop.permute.xlu0 %1690
    %v1693 = vadd.f32 %v1681, %v1686
    %v1694 = vadd.f32 %v1682, %v1691
    %v1695 = vld [vmem:[#allocation12] sm:$0xff]
    %v1696 = vld [vmem:[#allocation12 + $0x8] sm:$0xff]
    %v1697 = vld [vmem:[#allocation12 + $0x10] sm:$0xff]
    %v1698 = vld [vmem:[#allocation12 + $0x18] sm:$0xff]
    %1701 = vrot.lane.b32.xlu0 %v1693, 2
    %v1702 = vpop.permute.xlu0 %1701
    %1703 = vrot.lane.b32.xlu0 %v1694, 2
    %v1704 = vpop.permute.xlu0 %1703
    %1707 = vrot.lane.b32.xlu0 %v1693, 6
    %v1708 = vpop.permute.xlu0 %1707
    %1709 = vrot.lane.b32.xlu0 %v1694, 6
    %v1710 = vpop.permute.xlu0 %1709
    %v1713 = vsel %vm516, 0.0, %v1702
    %v1714 = vsel %vm516, 0.0, %v1704
    %vm1715 = vcmask 277504
    %v1716 = vsel %vm1715, %v1713, 0.0
    %v1717 = vsel %vm1715, %v1714, 0.0
    %vm1718 = vcmask 293888
    %v1719 = vsel %vm1718, %v1716, 0.0
    %v1720 = vsel %vm1718, %v1717, 0.0
    %vm1721 = vcmask 310272
    %v1722 = vsel %vm1721, %v1719, %v1708
    %v1723 = vsel %vm1721, %v1720, %v1710
    %v1724 = vsel %vm1304, %v1722, 0.0
    %v1725 = vsel %vm1304, %v1723, 0.0
    %1728 = vrot.lane.b32.xlu0 %v1724, 124
    %v1729 = vpop.permute.xlu0 %1728
    %1730 = vrot.lane.b32.xlu0 %v1725, 124
    %v1731 = vpop.permute.xlu0 %1730
    %vm1734 = vcmask 261120
    %v1735 = vsel %vm1734, %v1724, %v1729
    %v1736 = vsel %vm1734, %v1725, %v1731
    %1737 = vrot.lane.b32.xlu0 %v1724, 127
    %v1738 = vpop.permute.xlu0 %1737
    %1739 = vrot.lane.b32.xlu0 %v1725, 127
    %v1740 = vpop.permute.xlu0 %1739
    %1743 = vrot.lane.b32.xlu0 %v1724, 123
    %v1744 = vpop.permute.xlu0 %1743
    %1745 = vrot.lane.b32.xlu0 %v1725, 123
    %v1746 = vpop.permute.xlu0 %1745
    %v1749 = vsel %vm1734, %v1738, %v1744
    %v1750 = vsel %vm1734, %v1740, %v1746
    %1751 = vrot.lane.b32.xlu0 %v1724, 126
    %v1752 = vpop.permute.xlu0 %1751
    %1753 = vrot.lane.b32.xlu0 %v1725, 126
    %v1754 = vpop.permute.xlu0 %1753
    %1757 = vrot.lane.b32.xlu0 %v1724, 122
    %v1758 = vpop.permute.xlu0 %1757
    %1759 = vrot.lane.b32.xlu0 %v1725, 122
    %v1760 = vpop.permute.xlu0 %1759
    %v1763 = vsel %vm1734, %v1752, %v1758
    %v1764 = vsel %vm1734, %v1754, %v1760
    %1765 = vrot.lane.b32.xlu0 %v1724, 125
    %v1766 = vpop.permute.xlu0 %1765
    %1767 = vrot.lane.b32.xlu0 %v1725, 125
    %v1768 = vpop.permute.xlu0 %1767
    %1771 = vrot.lane.b32.xlu0 %v1724, 121
    %v1772 = vpop.permute.xlu0 %1771
    %1773 = vrot.lane.b32.xlu0 %v1725, 121
    %v1774 = vpop.permute.xlu0 %1773
    %v1777 = vsel %vm1734, %v1766, %v1772
    %v1778 = vsel %vm1734, %v1768, %v1774
    %1779 = vrot.lane.b32.xlu0 %v1724, 120
    %v1780 = vpop.permute.xlu0 %1779
    %1781 = vrot.lane.b32.xlu0 %v1725, 120
    %v1782 = vpop.permute.xlu0 %1781
    %v1785 = vsel %vm1734, %v1729, %v1780
    %v1786 = vsel %vm1734, %v1731, %v1782
    %vm1787 = vcmask 654336
    %v1789 = vsel %vm1787, %v1695, 0
    %v1792 = vsel %vm1787, %v1696, 0
    %v1795 = vsel %vm1787, %v1697, 0
    %v1798 = vsel %vm1787, %v1698, 0
    %1800 = vmatprep.subr.mxu0 0.0
    %1801 = vmatpush1.msra.mxu0 %v1735
    %1802 = vmatprep.subr.mxu0 0.0
    %1803 = vmatpush1.msra.mxu0 %v1736
    %1804 = vmatprep.subr.mxu0 0.0
    %1805 = vmatpush1.msra.mxu0 %v1749
    %1806 = vmatprep.subr.mxu0 0.0
    %1807 = vmatpush1.msra.mxu0 %v1750
    %1808 = vmatprep.subr.mxu0 0.0
    %1809 = vmatpush1.msra.mxu0 %v1763
    %1810 = vmatprep.subr.mxu0 0.0
    %1811 = vmatpush1.msra.mxu0 %v1764
    %1812 = vmatprep.subr.mxu0 0.0
    %1813 = vmatpush1.msra.mxu0 %v1777
    %1814 = vmatprep.subr.mxu0 0.0
    %1815 = vmatpush1.msra.mxu0 %v1778
    %1816 = vmatprep.subr.mxu0 0.0
    %1817 = vmatpush1.msra.mxu0 %v1785
    %1818 = vmatprep.subr.mxu0 0.0
    %1819 = vmatpush1.msra.mxu0 %v1786
    %1820 = vmatprep.subr.mxu0 0.0
    %1821 = vmatpush1.msra.mxu0 0.0
    %1822 = vmatprep.subr.mxu0 0.0
    %1823 = vmatpush1.msra.mxu0 0.0
    %1824 = vmatprep.subr.mxu0 0.0
    %1825 = vmatpush1.msra.mxu0 0.0
    %1826 = vmatprep.subr.mxu0 0.0
    %1827 = vmatpush1.msra.mxu0 0.0
    %1828 = vmatprep.subr.mxu0 0.0
    %1829 = vmatpush1.msra.mxu0 0.0
    %1830 = vmatprep.subr.mxu0 0.0
    %1831 = vmatpush1.msra.mxu0 0.0
    %1832 = vmatprep.subr.mxu0 0.0
    %1833 = vmatpush1.msra.mxu0 0.0
    %1834 = vmatprep.subr.mxu0 0.0
    %1835 = vmatpush1.msra.mxu0 0.0
    %1836 = vmatprep.subr.mxu0 0.0
    %1837 = vmatpush1.msra.mxu0 0.0
    %1838 = vmatprep.subr.mxu0 0.0
    %1839 = vmatpush1.msra.mxu0 0.0
    %1840 = vmatprep.subr.mxu0 0.0
    %1841 = vmatpush1.msra.mxu0 0.0
    %1842 = vmatprep.subr.mxu0 0.0
    %1843 = vmatpush1.msra.mxu0 0.0
    %1844 = vmatprep.subr.mxu0 0.0
    %1845 = vmatpush1.msra.mxu0 0.0
    %1846 = vmatprep.subr.mxu0 0.0
    %1847 = vmatpush1.msra.mxu0 0.0
    %1848 = vmatprep.subr.mxu0 0.0
    %1849 = vmatpush1.msra.mxu0 0.0
    %1850 = vmatprep.subr.mxu0 0.0
    %1851 = vmatpush1.msra.mxu0 0.0
    %1852 = vmatprep.subr.mxu0 0.0
    %1853 = vmatpush1.msra.mxu0 0.0
    %1854 = vmatprep.subr.mxu0 0.0
    %1855 = vmatpush1.msra.mxu0 0.0
    %1856 = vmatprep.subr.mxu0 0.0
    %1857 = vmatpush1.msra.mxu0 0.0
    %1858 = vmatprep.subr.mxu0 0.0
    %1859 = vmatpush1.msra.mxu0 0.0
    %1860 = vmatprep.subr.mxu0 0.0
    %1861 = vmatpush1.msra.mxu0 0.0
    %1862 = vmatprep.subr.mxu0 0.0
    %1863 = vmatpush1.msra.mxu0 0.0
    %1864 = vmatprep.mubr.f32.mxu0 0.0
    %1865 = vmatmul.mubr.f32.gmra.mrb[0].mxu0 %v1789
    %v1866 = vpop.f32.mrb[0].mxu0
    %v1867 = vadd.f32 0.0, %v1866
    %v1868 = vpop.f32.mrb[0].mxu0
    %1869 = vmatprep.mubr.f32.mxu0 0.0
    %1870 = vmatmul.mubr.f32.gmra.mrb[0].mxu0 %v1792
    %v1871 = vpop.f32.mrb[0].mxu0
    %v1872 = vadd.f32 0.0, %v1871
    %v1873 = vpop.f32.mrb[0].mxu0
    %1874 = vmatprep.mubr.f32.mxu0 0.0
    %1875 = vmatmul.mubr.f32.gmra.mrb[0].mxu0 %v1795
    %v1876 = vpop.f32.mrb[0].mxu0
    %v1877 = vadd.f32 0.0, %v1876
    %v1878 = vpop.f32.mrb[0].mxu0
    %1879 = vmatprep.mubr.f32.mxu0 0.0
    %1880 = vmatmul.mubr.f32.gmra.mrb[0].mxu0 %v1798
    %v1881 = vpop.f32.mrb[0].mxu0
    %v1882 = vadd.f32 0.0, %v1881
    %v1883 = vpop.f32.mrb[0].mxu0
    %1884 = vdwg.mxu0
    %vm1885 = vcmp.lt.s32.totalorder %v723, 32
    %vm1886 = vmand %vm1885, %vm729
    %vm1887 = vmand %vm1885, %vm731
    %vm1888 = vmand %vm1885, %vm733
    %vm1889 = vmand %vm1885, %vm735
    %vm1890 = vmand %vm1885, %vm737
    %vm1891 = vmand %vm1885, %vm739
    %vm1892 = vmand %vm1885, %vm741
    %vm1893 = vmand %vm1885, %vm743
    %vm1894 = vcmp.ge.s32.totalorder %v723, 32
    %v1895 = vsub.s32 %v723, 32
    %v1896 = vmul.u32 %v1895, 2
    %v1897 = vadd.s32 %v1896, 1
    %vm1898 = vcmp.eq.s32.totalorder %v690, %v1897
    %vm1899 = vcmp.eq.s32.totalorder %v691, %v1897
    %vm1900 = vcmp.eq.s32.totalorder %v692, %v1897
    %vm1901 = vcmp.eq.s32.totalorder %v693, %v1897
    %vm1902 = vcmp.eq.s32.totalorder %v694, %v1897
    %vm1903 = vcmp.eq.s32.totalorder %v695, %v1897
    %vm1904 = vcmp.eq.s32.totalorder %v696, %v1897
    %vm1905 = vcmp.eq.s32.totalorder %v697, %v1897
    %vm1906 = vmand %vm1894, %vm1898
    %vm1907 = vmand %vm1894, %vm1899
    %vm1908 = vmand %vm1894, %vm1900
    %vm1909 = vmand %vm1894, %vm1901
    %vm1910 = vmand %vm1894, %vm1902
    %vm1911 = vmand %vm1894, %vm1903
    %vm1912 = vmand %vm1894, %vm1904
    %vm1913 = vmand %vm1894, %vm1905
    %vm1914 = vmor %vm1886, %vm1906
    %vm1915 = vmor %vm1887, %vm1907
    %vm1916 = vmor %vm1888, %vm1908
    %vm1917 = vmor %vm1889, %vm1909
    %vm1918 = vmor %vm1890, %vm1910
    %vm1919 = vmor %vm1891, %vm1911
    %vm1920 = vmor %vm1892, %vm1912
    %vm1921 = vmor %vm1893, %vm1913
    %v1922 = vsel %vm1914, 1, 0
    %v1923 = vsel %vm1915, 1, 0
    %v1924 = vsel %vm1916, 1, 0
    %v1925 = vsel %vm1917, 1, 0
    %v1926 = vsel %vm1918, 1, 0
    %v1927 = vsel %vm1919, 1, 0
    %v1928 = vsel %vm1920, 1, 0
    %v1929 = vsel %vm1921, 1, 0
    %v1930 = vcvt.s32.f32 %v1922
    %v1931 = vcvt.s32.f32 %v1923
    %v1932 = vcvt.s32.f32 %v1924
    %v1933 = vcvt.s32.f32 %v1925
    %v1934 = vcvt.s32.f32 %v1926
    %v1935 = vcvt.s32.f32 %v1927
    %v1936 = vcvt.s32.f32 %v1928
    %v1937 = vcvt.s32.f32 %v1929
    %v1939 = vsel %vm1315, %v1867, 0
    %v1942 = vsel %vm1315, %v1872, 0
    %v1945 = vsel %vm1315, %v1877, 0
    %v1948 = vsel %vm1315, %v1882, 0
    %1950 = vmatprep.subr.mxu0 0.0
    %1951 = vmatpush1.msra.mxu0 %v1930
    %1952 = vmatprep.subr.mxu0 0.0
    %1953 = vmatpush1.msra.mxu0 %v1931
    %1954 = vmatprep.subr.mxu0 0.0
    %1955 = vmatpush1.msra.mxu0 %v1932
    %1956 = vmatprep.subr.mxu0 0.0
    %1957 = vmatpush1.msra.mxu0 %v1933
    %1958 = vmatprep.subr.mxu0 0.0
    %1959 = vmatpush1.msra.mxu0 %v1934
    %1960 = vmatprep.subr.mxu0 0.0
    %1961 = vmatpush1.msra.mxu0 %v1935
    %1962 = vmatprep.subr.mxu0 0.0
    %1963 = vmatpush1.msra.mxu0 %v1936
    %1964 = vmatprep.subr.mxu0 0.0
    %1965 = vmatpush1.msra.mxu0 %v1937
    %1966 = vmatprep.subr.mxu0 0.0
    %1967 = vmatpush1.msra.mxu0 0.0
    %1968 = vmatprep.subr.mxu0 0.0
    %1969 = vmatpush1.msra.mxu0 0.0
    %1970 = vmatprep.subr.mxu0 0.0
    %1971 = vmatpush1.msra.mxu0 0.0
    %1972 = vmatprep.subr.mxu0 0.0
    %1973 = vmatpush1.msra.mxu0 0.0
    %1974 = vmatprep.subr.mxu0 0.0
    %1975 = vmatpush1.msra.mxu0 0.0
    %1976 = vmatprep.subr.mxu0 0.0
    %1977 = vmatpush1.msra.mxu0 0.0
    %1978 = vmatprep.subr.mxu0 0.0
    %1979 = vmatpush1.msra.mxu0 0.0
    %1980 = vmatprep.subr.mxu0 0.0
    %1981 = vmatpush1.msra.mxu0 0.0
    %1982 = vmatprep.subr.mxu0 0.0
    %1983 = vmatpush1.msra.mxu0 0.0
    %1984 = vmatprep.subr.mxu0 0.0
    %1985 = vmatpush1.msra.mxu0 0.0
    %1986 = vmatprep.subr.mxu0 0.0
    %1987 = vmatpush1.msra.mxu0 0.0
    %1988 = vmatprep.subr.mxu0 0.0
    %1989 = vmatpush1.msra.mxu0 0.0
    %1990 = vmatprep.subr.mxu0 0.0
    %1991 = vmatpush1.msra.mxu0 0.0
    %1992 = vmatprep.subr.mxu0 0.0
    %1993 = vmatpush1.msra.mxu0 0.0
    %1994 = vmatprep.subr.mxu0 0.0
    %1995 = vmatpush1.msra.mxu0 0.0
    %1996 = vmatprep.subr.mxu0 0.0
    %1997 = vmatpush1.msra.mxu0 0.0
    %1998 = vmatprep.subr.mxu0 0.0
    %1999 = vmatpush1.msra.mxu0 0.0
    %2000 = vmatprep.subr.mxu0 0.0
    %2001 = vmatpush1.msra.mxu0 0.0
    %2002 = vmatprep.subr.mxu0 0.0
    %2003 = vmatpush1.msra.mxu0 0.0
    %2004 = vmatprep.subr.mxu0 0.0
    %2005 = vmatpush1.msra.mxu0 0.0
    %2006 = vmatprep.subr.mxu0 0.0
    %2007 = vmatpush1.msra.mxu0 0.0
    %2008 = vmatprep.subr.mxu0 0.0
    %2009 = vmatpush1.msra.mxu0 0.0
    %2010 = vmatprep.subr.mxu0 0.0
    %2011 = vmatpush1.msra.mxu0 0.0
    %2012 = vmatprep.subr.mxu0 0.0
    %2013 = vmatpush1.msra.mxu0 0.0
    %2014 = vmatprep.mubr.f32.mxu0 0.0
    %2015 = vmatmul.mubr.f32.gmra.mrb[0].mxu0 %v1939
    %v2016 = vpop.f32.mrb[0].mxu0
    %v2017 = vadd.f32 0.0, %v2016
    %v2018 = vpop.f32.mrb[0].mxu0
    %2019 = vmatprep.mubr.f32.mxu0 0.0
    %2020 = vmatmul.mubr.f32.gmra.mrb[0].mxu0 %v1942
    %v2021 = vpop.f32.mrb[0].mxu0
    %v2022 = vadd.f32 0.0, %v2021
    %v2023 = vpop.f32.mrb[0].mxu0
    %2024 = vmatprep.mubr.f32.mxu0 0.0
    %2025 = vmatmul.mubr.f32.gmra.mrb[0].mxu0 %v1945
    %v2026 = vpop.f32.mrb[0].mxu0
    %v2027 = vadd.f32 0.0, %v2026
    %v2028 = vpop.f32.mrb[0].mxu0
    %2029 = vmatprep.mubr.f32.mxu0 0.0
    %2030 = vmatmul.mubr.f32.gmra.mrb[0].mxu0 %v1948
    %v2031 = vpop.f32.mrb[0].mxu0
    %v2032 = vadd.f32 0.0, %v2031
    %v2033 = vpop.f32.mrb[0].mxu0
    %2034 = vdwg.mxu0
    %2039 = vrot.lane.b32.xlu0 %v2017, 96
    %v2040 = vpop.permute.xlu0 %2039
    %2041 = vrot.lane.b32.xlu0 %v2022, 96
    %v2042 = vpop.permute.xlu0 %2041
    %2043 = vrot.lane.b32.xlu0 %v2027, 96
    %v2044 = vpop.permute.xlu0 %2043
    %2045 = vrot.lane.b32.xlu0 %v2032, 96
    %v2046 = vpop.permute.xlu0 %2045
    %v2051 = vmax.f32 %v2017, %v2040
    %v2052 = vmax.f32 %v2022, %v2042
    %v2053 = vmax.f32 %v2027, %v2044
    %v2054 = vmax.f32 %v2032, %v2046
    %v2055 = vld [vmem:[#allocation14] sm:$0xff]
    %v2056 = vld [vmem:[#allocation14 + $0x8] sm:$0xff]
    %v2057 = vld [vmem:[#allocation14 + $0x10] sm:$0xff]
    %v2058 = vld [vmem:[#allocation14 + $0x18] sm:$0xff]
    %2060 = vset.pattern.permute.xlu0 0
    %2061 = vperm.xlu0 %2060, %v2055
    %v2062 = vpop.permute.xlu0 %2061
    %2065 = vset.pattern.permute.xlu0 0
    %2066 = vperm.xlu0 %2065, %v2056
    %v2067 = vpop.permute.xlu0 %2066
    %2070 = vset.pattern.permute.xlu0 0
    %2071 = vperm.xlu0 %2070, %v2057
    %v2072 = vpop.permute.xlu0 %2071
    %2075 = vset.pattern.permute.xlu0 0
    %2076 = vperm.xlu0 %2075, %v2058
    %v2077 = vpop.permute.xlu0 %2076
    %v2079 = vadd.f32 %v2051, %v2062
    %v2080 = vadd.f32 %v2052, %v2067
    %v2081 = vadd.f32 %v2053, %v2072
    %v2082 = vadd.f32 %v2054, %v2077
    %v2083 = vmax.f32 %v2079, 0.0
    %v2084 = vmax.f32 %v2080, 0.0
    %v2085 = vmax.f32 %v2081, 0.0
    %v2086 = vmax.f32 %v2082, 0.0
    %s2087 = scalar_lea.vmem [#allocation14], 32
    %v2088 = vld [vmem:[%s2087] sm:$0xff]
    %v2089 = vld [vmem:[%s2087 + $0x8] sm:$0xff]
    %v2090 = vld [vmem:[%s2087 + $0x10] sm:$0xff]
    %v2091 = vld [vmem:[%s2087 + $0x18] sm:$0xff]
    %s2092 = scalar_lea.vmem [#allocation14], 64
    %v2093 = vld [vmem:[%s2092] sm:$0xff]
    %v2094 = vld [vmem:[%s2092 + $0x8] sm:$0xff]
    %v2095 = vld [vmem:[%s2092 + $0x10] sm:$0xff]
    %v2096 = vld [vmem:[%s2092 + $0x18] sm:$0xff]
    %v2097 = vsel %vm1734, %v2083, 0.0
    %2098 = vadd.xlane.f32.xlu0 %v2097
    %v2099 = vpop.xlane.xlu0 %2098
    %v2100 = vsel %vm1734, %v2084, 0.0
    %2101 = vadd.xlane.f32.xlu0 %v2100
    %v2102 = vpop.xlane.xlu0 %2101
    %v2103 = vsel %vm1734, %v2085, 0.0
    %2104 = vadd.xlane.f32.xlu0 %v2103
    %v2105 = vpop.xlane.xlu0 %2104
    %v2106 = vsel %vm1734, %v2086, 0.0
    %2107 = vadd.xlane.f32.xlu0 %v2106
    %v2108 = vpop.xlane.xlu0 %2107
    %v2109 = vmul.f32 %v2099, 0.03125
    %v2110 = vmul.f32 %v2102, 0.03125
    %v2111 = vmul.f32 %v2105, 0.03125
    %v2112 = vmul.f32 %v2108, 0.03125
    %v2113 = vsub.f32 %v2083, %v2109
    %v2114 = vsub.f32 %v2084, %v2110
    %v2115 = vsub.f32 %v2085, %v2111
    %v2116 = vsub.f32 %v2086, %v2112
    %v2117 = vmul.f32 %v2113, %v2113
    %v2118 = vmul.f32 %v2114, %v2114
    %v2119 = vmul.f32 %v2115, %v2115
    %v2120 = vmul.f32 %v2116, %v2116
    %v2121 = vsel %vm1734, %v2117, 0.0
    %2122 = vadd.xlane.f32.xlu0 %v2121
    %v2123 = vpop.xlane.xlu0 %2122
    %v2124 = vsel %vm1734, %v2118, 0.0
    %2125 = vadd.xlane.f32.xlu0 %v2124
    %v2126 = vpop.xlane.xlu0 %2125
    %v2127 = vsel %vm1734, %v2119, 0.0
    %2128 = vadd.xlane.f32.xlu0 %v2127
    %v2129 = vpop.xlane.xlu0 %2128
    %v2130 = vsel %vm1734, %v2120, 0.0
    %2131 = vadd.xlane.f32.xlu0 %v2130
    %v2132 = vpop.xlane.xlu0 %2131
    %v2133 = vmul.f32 %v2123, 0.03125
    %v2134 = vmul.f32 %v2126, 0.03125
    %v2135 = vmul.f32 %v2129, 0.03125
    %v2136 = vmul.f32 %v2132, 0.03125
    %v2137 = vadd.f32 %v2133, 1e-05
    %v2138 = vadd.f32 %v2134, 1e-05
    %v2139 = vadd.f32 %v2135, 1e-05
    %v2140 = vadd.f32 %v2136, 1e-05
    %v2141 = vrsqrt.pop %v2137
    %v2142 = vrsqrt.pop %v2138
    %v2143 = vrsqrt.pop %v2139
    %v2144 = vrsqrt.pop %v2140
    %v2145 = vmul.f32 %v2113, %v2141
    %v2146 = vmul.f32 %v2114, %v2142
    %v2147 = vmul.f32 %v2115, %v2143
    %v2148 = vmul.f32 %v2116, %v2144
    %2150 = vset.pattern.permute.xlu0 0
    %2151 = vperm.xlu0 %2150, %v2088
    %v2152 = vpop.permute.xlu0 %2151
    %2155 = vset.pattern.permute.xlu0 0
    %2156 = vperm.xlu0 %2155, %v2089
    %v2157 = vpop.permute.xlu0 %2156
    %2160 = vset.pattern.permute.xlu0 0
    %2161 = vperm.xlu0 %2160, %v2090
    %v2162 = vpop.permute.xlu0 %2161
    %2165 = vset.pattern.permute.xlu0 0
    %2166 = vperm.xlu0 %2165, %v2091
    %v2167 = vpop.permute.xlu0 %2166
    %v2169 = vmul.f32 %v2145, %v2152
    %v2170 = vmul.f32 %v2146, %v2157
    %v2171 = vmul.f32 %v2147, %v2162
    %v2172 = vmul.f32 %v2148, %v2167
    %2174 = vset.pattern.permute.xlu0 0
    %2175 = vperm.xlu0 %2174, %v2093
    %v2176 = vpop.permute.xlu0 %2175
    %2179 = vset.pattern.permute.xlu0 0
    %2180 = vperm.xlu0 %2179, %v2094
    %v2181 = vpop.permute.xlu0 %2180
    %2184 = vset.pattern.permute.xlu0 0
    %2185 = vperm.xlu0 %2184, %v2095
    %v2186 = vpop.permute.xlu0 %2185
    %2189 = vset.pattern.permute.xlu0 0
    %2190 = vperm.xlu0 %2189, %v2096
    %v2191 = vpop.permute.xlu0 %2190
    %v2193 = vadd.f32 %v2169, %v2176
    %v2194 = vadd.f32 %v2170, %v2181
    %v2195 = vadd.f32 %v2171, %v2186
    %v2196 = vadd.f32 %v2172, %v2191
    %2197 = vxpose.xlu0.b32.start [1/16] %v2193, 128
    %2198 = vxpose.xlu0.b32.cont [2/16] %v2194, 128
    %2199 = vxpose.xlu0.b32.cont [3/16] %v2195, 128
    %2200 = vxpose.xlu0.b32.cont [4/16] %v2196, 128
    %2201 = vxpose.xlu0.b32.cont [5/16] 0.0, 128
    %2202 = vxpose.xlu0.b32.cont [6/16] 0.0, 128
    %2203 = vxpose.xlu0.b32.cont [7/16] 0.0, 128
    %2204 = vxpose.xlu0.b32.cont [8/16] 0.0, 128
    %2205 = vxpose.xlu0.b32.cont [9/16] 0.0, 128
    %2206 = vxpose.xlu0.b32.cont [10/16] 0.0, 128
    %2207 = vxpose.xlu0.b32.cont [11/16] 0.0, 128
    %2208 = vxpose.xlu0.b32.cont [12/16] 0.0, 128
    %2209 = vxpose.xlu0.b32.cont [13/16] 0.0, 128
    %2210 = vxpose.xlu0.b32.cont [14/16] 0.0, 128
    %2211 = vxpose.xlu0.b32.cont [15/16] 0.0, 128
    %2212 = vxpose.xlu0.b32.end [16/16] 0.0, 128
    %v2213 = vpop.trf.xlu0
    %v2214 = vpop.trf.xlu0
    %v2215 = vpop.trf.xlu0
    %v2216 = vpop.trf.xlu0
    %v2217 = vpop.trf.xlu0
    %v2218 = vpop.trf.xlu0
    %v2219 = vpop.trf.xlu0
    %v2220 = vpop.trf.xlu0
    %v2221 = vpop.trf.xlu0
    %v2222 = vpop.trf.xlu0
    %v2223 = vpop.trf.xlu0
    %v2224 = vpop.trf.xlu0
    %v2225 = vpop.trf.xlu0
    %v2226 = vpop.trf.xlu0
    %v2227 = vpop.trf.xlu0
    %v2228 = vpop.trf.xlu0
    %v2229 = vld [vmem:[#allocation15] sm:$0xff]
    %v2230 = vld [vmem:[#allocation15 + $0x8] sm:$0xff]
    %v2231 = vld [vmem:[#allocation15 + $0x10] sm:$0xff]
    %v2232 = vld [vmem:[#allocation15 + $0x18] sm:$0xff]
    %v2233 = vld [vmem:[#allocation15 + $0x20] sm:$0xff]
    %v2234 = vld [vmem:[#allocation15 + $0x28] sm:$0xff]
    %v2235 = vld [vmem:[#allocation15 + $0x30] sm:$0xff]
    %v2236 = vld [vmem:[#allocation15 + $0x38] sm:$0xff]
    %v2237 = vld [vmem:[#allocation15 + $0x40] sm:$0xff]
    %v2238 = vld [vmem:[#allocation15 + $0x48] sm:$0xff]
    %v2239 = vld [vmem:[#allocation15 + $0x50] sm:$0xff]
    %v2240 = vld [vmem:[#allocation15 + $0x58] sm:$0xff]
    %v2241 = vld [vmem:[#allocation15 + $0x60] sm:$0xff]
    %v2242 = vld [vmem:[#allocation15 + $0x68] sm:$0xff]
    %v2243 = vld [vmem:[#allocation15 + $0x70] sm:$0xff]
    %v2244 = vld [vmem:[#allocation15 + $0x78] sm:$0xff]
    %v2245 = vld [vmem:[#allocation15 + $0x80] sm:$0xff]
    %v2246 = vld [vmem:[#allocation15 + $0x88] sm:$0xff]
    %v2247 = vld [vmem:[#allocation15 + $0x90] sm:$0xff]
    %v2248 = vld [vmem:[#allocation15 + $0x98] sm:$0xff]
    %v2251 = vrot.slane %v2213, 6
    %v2252 = vrot.slane %v2214, 6
    %v2253 = vsel %vm598, %v2251, %v2252
    %vm2259 = vcmask 1045504
    %v2260 = vrot.slane %v2215, 2
    %v2261 = vrot.slane %v2216, 2
    %v2262 = vsel %vm2259, %v2260, %v2261
    %v2265 = vsel %vm598, 0.0, %v2251
    %v2266 = vsel %vm598, %v2252, 0.0
    %v2267 = vsel %vm604, %v2266, 0.0
    %v2268 = vsel %vm2259, %v2267, %v2260
    %v2269 = vsel %vm2259, %v2261, 0.0
    %v2272 = vrot.slane %v2268, 4
    %v2273 = vrot.slane %v2262, 4
    %v2274 = vsel %vm604, %v2272, %v2273
    %v2275 = vrot.slane %v2269, 4
    %v2276 = vsel %vm604, %v2273, %v2275
    %vm2280 = vcmask 1046528
    %v2281 = vrot.slane %v2265, 1
    %v2282 = vrot.slane %v2253, 1
    %v2283 = vsel %vm2280, %v2281, %v2282
    %v2284 = vrot.slane %v2268, 1
    %v2285 = vsel %vm2280, %v2282, %v2284
    %v2286 = vrot.slane %v2268, 5
    %v2287 = vrot.slane %v2262, 5
    %v2288 = vsel %vm601, %v2286, %v2287
    %v2289 = vrot.slane %v2269, 5
    %v2290 = vsel %vm601, %v2287, %v2289
    %v2291 = vrot.slane %v2265, 2
    %v2292 = vrot.slane %v2253, 2
    %v2293 = vsel %vm2259, %v2291, %v2292
    %v2294 = vrot.slane %v2268, 2
    %v2295 = vsel %vm2259, %v2292, %v2294
    %v2296 = vrot.slane %v2268, 6
    %v2297 = vrot.slane %v2262, 6
    %v2298 = vsel %vm598, %v2296, %v2297
    %v2299 = vrot.slane %v2269, 6
    %v2300 = vsel %vm598, %v2297, %v2299
    %v2301 = vrot.slane %v2265, 3
    %v2302 = vrot.slane %v2253, 3
    %v2303 = vsel %vm611, %v2301, %v2302
    %v2304 = vrot.slane %v2268, 3
    %v2305 = vsel %vm611, %v2302, %v2304
    %v2306 = vrot.slane %v2268, 7
    %v2307 = vrot.slane %v2262, 7
    %v2308 = vsel %vm595, %v2306, %v2307
    %v2309 = vrot.slane %v2269, 7
    %v2310 = vsel %vm595, %v2307, %v2309
    %v2311 = vrot.slane %v2265, 4
    %v2312 = vrot.slane %v2253, 4
    %v2313 = vsel %vm604, %v2311, %v2312
    %v2314 = vsel %vm604, %v2312, %v2272
    %2315 = vrot.lane.b32.xlu0 %v2283, 32
    %v2316 = vpop.permute.xlu0 %2315
    %2317 = vrot.lane.b32.xlu0 %v2285, 32
    %v2318 = vpop.permute.xlu0 %2317
    %2319 = vrot.lane.b32.xlu0 %v2288, 32
    %v2320 = vpop.permute.xlu0 %2319
    %2321 = vrot.lane.b32.xlu0 %v2290, 32
    %v2322 = vpop.permute.xlu0 %2321
    %2327 = vrot.lane.b32.xlu0 %v2293, 64
    %v2328 = vpop.permute.xlu0 %2327
    %2329 = vrot.lane.b32.xlu0 %v2295, 64
    %v2330 = vpop.permute.xlu0 %2329
    %2331 = vrot.lane.b32.xlu0 %v2298, 64
    %v2332 = vpop.permute.xlu0 %2331
    %2333 = vrot.lane.b32.xlu0 %v2300, 64
    %v2334 = vpop.permute.xlu0 %2333
    %2339 = vrot.lane.b32.xlu0 %v2303, 96
    %v2340 = vpop.permute.xlu0 %2339
    %2341 = vrot.lane.b32.xlu0 %v2305, 96
    %v2342 = vpop.permute.xlu0 %2341
    %2343 = vrot.lane.b32.xlu0 %v2308, 96
    %v2344 = vpop.permute.xlu0 %2343
    %2345 = vrot.lane.b32.xlu0 %v2310, 96
    %v2346 = vpop.permute.xlu0 %2345
    %v2351 = vsel %vm1734, %v2265, %v2316
    %v2352 = vsel %vm1734, %v2253, %v2318
    %v2353 = vsel %vm1734, %v2274, %v2320
    %v2354 = vsel %vm1734, %v2276, %v2322
    %v2355 = vsel %vm1315, %v2351, %v2328
    %v2356 = vsel %vm1315, %v2352, %v2330
    %v2357 = vsel %vm1315, %v2353, %v2332
    %v2358 = vsel %vm1315, %v2354, %v2334
    %vm2359 = vcmask 785408
    %v2360 = vsel %vm2359, %v2355, %v2340
    %v2361 = vsel %vm2359, %v2356, %v2342
    %v2362 = vsel %vm2359, %v2357, %v2344
    %v2363 = vsel %vm2359, %v2358, %v2346
    %v2364 = vsel %vm1734, %v2313, 0
    %v2366 = vsel %vm1734, %v2314, 0
    %v2368 = vsel %vm1734, %v2262, 0
    %v2370 = vsel %vm1734, %v2269, 0
    %2372 = vmatprep.subr.mxu0 0.0
    %2373 = vmatpush1.msra.mxu0 %v2229
    %2374 = vmatprep.subr.mxu0 0.0
    %2375 = vmatpush1.msra.mxu0 %v2230
    %2376 = vmatprep.subr.mxu0 0.0
    %2377 = vmatpush1.msra.mxu0 %v2231
    %2378 = vmatprep.subr.mxu0 0.0
    %2379 = vmatpush1.msra.mxu0 %v2232
    %2380 = vmatprep.subr.mxu0 0.0
    %2381 = vmatpush1.msra.mxu0 %v2233
    %2382 = vmatprep.subr.mxu0 0.0
    %2383 = vmatpush1.msra.mxu0 %v2234
    %2384 = vmatprep.subr.mxu0 0.0
    %2385 = vmatpush1.msra.mxu0 %v2235
    %2386 = vmatprep.subr.mxu0 0.0
    %2387 = vmatpush1.msra.mxu0 %v2236
    %2388 = vmatprep.subr.mxu0 0.0
    %2389 = vmatpush1.msra.mxu0 %v2237
    %2390 = vmatprep.subr.mxu0 0.0
    %2391 = vmatpush1.msra.mxu0 %v2238
    %2392 = vmatprep.subr.mxu0 0.0
    %2393 = vmatpush1.msra.mxu0 %v2239
    %2394 = vmatprep.subr.mxu0 0.0
    %2395 = vmatpush1.msra.mxu0 %v2240
    %2396 = vmatprep.subr.mxu0 0.0
    %2397 = vmatpush1.msra.mxu0 %v2241
    %2398 = vmatprep.subr.mxu0 0.0
    %2399 = vmatpush1.msra.mxu0 %v2242
    %2400 = vmatprep.subr.mxu0 0.0
    %2401 = vmatpush1.msra.mxu0 %v2243
    %2402 = vmatprep.subr.mxu0 0.0
    %2403 = vmatpush1.msra.mxu0 %v2244
    %2404 = vmatprep.subr.mxu0 0.0
    %2405 = vmatpush1.msra.mxu0 %v2245
    %2406 = vmatprep.subr.mxu0 0.0
    %2407 = vmatpush1.msra.mxu0 %v2246
    %2408 = vmatprep.subr.mxu0 0.0
    %2409 = vmatpush1.msra.mxu0 %v2247
    %2410 = vmatprep.subr.mxu0 0.0
    %2411 = vmatpush1.msra.mxu0 %v2248
    %2412 = vmatprep.subr.mxu0 0.0
    %2413 = vmatpush1.msra.mxu0 0.0
    %2414 = vmatprep.subr.mxu0 0.0
    %2415 = vmatpush1.msra.mxu0 0.0
    %2416 = vmatprep.subr.mxu0 0.0
    %2417 = vmatpush1.msra.mxu0 0.0
    %2418 = vmatprep.subr.mxu0 0.0
    %2419 = vmatpush1.msra.mxu0 0.0
    %2420 = vmatprep.subr.mxu0 0.0
    %2421 = vmatpush1.msra.mxu0 0.0
    %2422 = vmatprep.subr.mxu0 0.0
    %2423 = vmatpush1.msra.mxu0 0.0
    %2424 = vmatprep.subr.mxu0 0.0
    %2425 = vmatpush1.msra.mxu0 0.0
    %2426 = vmatprep.subr.mxu0 0.0
    %2427 = vmatpush1.msra.mxu0 0.0
    %2428 = vmatprep.subr.mxu0 0.0
    %2429 = vmatpush1.msra.mxu0 0.0
    %2430 = vmatprep.subr.mxu0 0.0
    %2431 = vmatpush1.msra.mxu0 0.0
    %2432 = vmatprep.subr.mxu0 0.0
    %2433 = vmatpush1.msra.mxu0 0.0
    %2434 = vmatprep.subr.mxu0 0.0
    %2435 = vmatpush1.msra.mxu0 0.0
    %2436 = vmatprep.mubr.f32.mxu0 %v2364
    %2437 = vmatmul.mubr.f32.gmra.mrb[0].mxu0 %v2360
    %v2438 = vpop.f32.mrb[0].mxu0
    %v2439 = vadd.f32 0.0, %v2438
    %v2440 = vpop.f32.mrb[0].mxu0
    %2441 = vmatprep.mubr.f32.mxu0 %v2366
    %2442 = vmatmul.mubr.f32.gmra.mrb[0].mxu0 %v2361
    %v2443 = vpop.f32.mrb[0].mxu0
    %v2444 = vadd.f32 0.0, %v2443
    %v2445 = vpop.f32.mrb[0].mxu0
    %2446 = vmatprep.mubr.f32.mxu0 %v2368
    %2447 = vmatmul.mubr.f32.gmra.mrb[0].mxu0 %v2362
    %v2448 = vpop.f32.mrb[0].mxu0
    %v2449 = vadd.f32 0.0, %v2448
    %v2450 = vpop.f32.mrb[0].mxu0
    %2451 = vmatprep.mubr.f32.mxu0 %v2370
    %2452 = vmatmul.mubr.f32.gmra.mrb[0].mxu0 %v2363
    %v2453 = vpop.f32.mrb[0].mxu0
    %v2454 = vadd.f32 0.0, %v2453
    %v2455 = vpop.f32.mrb[0].mxu0
    %2456 = vdwg.mxu0
    %vm2457 = vcmp.lt.s32.totalorder %v690, 16
    %vm2458 = vcmp.lt.s32.totalorder %v691, 16
    %vm2459 = vcmp.lt.s32.totalorder %v692, 16
    %vm2460 = vcmp.lt.s32.totalorder %v693, 16
    %v2461 = vmul.u32 %v690, 2
    %v2462 = vmul.u32 %v691, 2
    %v2463 = vmul.u32 %v692, 2
    %v2464 = vmul.u32 %v693, 2
    %vm2465 = vcmp.eq.s32.totalorder %v723, %v2461
    %vm2466 = vcmp.eq.s32.totalorder %v723, %v2462
    %vm2467 = vcmp.eq.s32.totalorder %v723, %v2463
    %vm2468 = vcmp.eq.s32.totalorder %v723, %v2464
    %vm2469 = vmand %vm2457, %vm2465
    %vm2470 = vmand %vm2458, %vm2466
    %vm2471 = vmand %vm2459, %vm2467
    %vm2472 = vmand %vm2460, %vm2468
    %vm2473 = vcmp.ge.s32.totalorder %v690, 16
    %vm2474 = vcmp.ge.s32.totalorder %v691, 16
    %vm2475 = vcmp.ge.s32.totalorder %v692, 16
    %vm2476 = vcmp.ge.s32.totalorder %v693, 16
    %v2477 = vsub.s32 %v690, 16
    %v2478 = vsub.s32 %v691, 16
    %v2479 = vsub.s32 %v693, 16
    %v2480 = vmul.u32 %v2477, 2
    %v2481 = vmul.u32 %v2478, 2
    %v2482 = vmul.u32 %v2479, 2
    %v2483 = vadd.s32 %v2480, 1
    %v2484 = vadd.s32 %v2481, 1
    %v2485 = vadd.s32 %v2461, 1
    %v2486 = vadd.s32 %v2482, 1
    %vm2487 = vcmp.eq.s32.totalorder %v723, %v2483
    %vm2488 = vcmp.eq.s32.totalorder %v723, %v2484
    %vm2489 = vcmp.eq.s32.totalorder %v723, %v2485
    %vm2490 = vcmp.eq.s32.totalorder %v723, %v2486
    %vm2491 = vmand %vm2473, %vm2487
    %vm2492 = vmand %vm2474, %vm2488
    %vm2493 = vmand %vm2475, %vm2489
    %vm2494 = vmand %vm2476, %vm2490
    %vm2495 = vmor %vm2469, %vm2491
    %vm2496 = vmor %vm2470, %vm2492
    %vm2497 = vmor %vm2471, %vm2493
    %vm2498 = vmor %vm2472, %vm2494
    %v2499 = vsel %vm2495, 1, 0
    %v2500 = vsel %vm2496, 1, 0
    %v2501 = vsel %vm2497, 1, 0
    %v2502 = vsel %vm2498, 1, 0
    %v2503 = vcvt.s32.f32 %v2499
    %v2504 = vcvt.s32.f32 %v2500
    %v2505 = vcvt.s32.f32 %v2501
    %v2506 = vcvt.s32.f32 %v2502
    %v2508 = vsel %vm1734, %v2503, 0
    %v2511 = vsel %vm1734, %v2504, 0
    %v2514 = vsel %vm1734, %v2505, 0
    %v2517 = vsel %vm1734, %v2506, 0
    %2519 = vmatprep.subr.mxu0 0.0
    %2520 = vmatpush1.msra.mxu0 %v2439
    %2521 = vmatprep.subr.mxu0 0.0
    %2522 = vmatpush1.msra.mxu0 %v2444
    %2523 = vmatprep.subr.mxu0 0.0
    %2524 = vmatpush1.msra.mxu0 %v2449
    %2525 = vmatprep.subr.mxu0 0.0
    %2526 = vmatpush1.msra.mxu0 %v2454
    %2527 = vmatprep.subr.mxu0 0.0
    %2528 = vmatpush1.msra.mxu0 0.0
    %2529 = vmatprep.subr.mxu0 0.0
    %2530 = vmatpush1.msra.mxu0 0.0
    %2531 = vmatprep.subr.mxu0 0.0
    %2532 = vmatpush1.msra.mxu0 0.0
    %2533 = vmatprep.subr.mxu0 0.0
    %2534 = vmatpush1.msra.mxu0 0.0
    %2535 = vmatprep.subr.mxu0 0.0
    %2536 = vmatpush1.msra.mxu0 0.0
    %2537 = vmatprep.subr.mxu0 0.0
    %2538 = vmatpush1.msra.mxu0 0.0
    %2539 = vmatprep.subr.mxu0 0.0
    %2540 = vmatpush1.msra.mxu0 0.0
    %2541 = vmatprep.subr.mxu0 0.0
    %2542 = vmatpush1.msra.mxu0 0.0
    %2543 = vmatprep.subr.mxu0 0.0
    %2544 = vmatpush1.msra.mxu0 0.0
    %2545 = vmatprep.subr.mxu0 0.0
    %2546 = vmatpush1.msra.mxu0 0.0
    %2547 = vmatprep.subr.mxu0 0.0
    %2548 = vmatpush1.msra.mxu0 0.0
    %2549 = vmatprep.subr.mxu0 0.0
    %2550 = vmatpush1.msra.mxu0 0.0
    %2551 = vmatprep.subr.mxu0 0.0
    %2552 = vmatpush1.msra.mxu0 0.0
    %2553 = vmatprep.subr.mxu0 0.0
    %2554 = vmatpush1.msra.mxu0 0.0
    %2555 = vmatprep.subr.mxu0 0.0
    %2556 = vmatpush1.msra.mxu0 0.0
    %2557 = vmatprep.subr.mxu0 0.0
    %2558 = vmatpush1.msra.mxu0 0.0
    %2559 = vmatprep.subr.mxu0 0.0
    %2560 = vmatpush1.msra.mxu0 0.0
    %2561 = vmatprep.subr.mxu0 0.0
    %2562 = vmatpush1.msra.mxu0 0.0
    %2563 = vmatprep.subr.mxu0 0.0
    %2564 = vmatpush1.msra.mxu0 0.0
    %2565 = vmatprep.subr.mxu0 0.0
    %2566 = vmatpush1.msra.mxu0 0.0
    %2567 = vmatprep.subr.mxu0 0.0
    %2568 = vmatpush1.msra.mxu0 0.0
    %2569 = vmatprep.subr.mxu0 0.0
    %2570 = vmatpush1.msra.mxu0 0.0
    %2571 = vmatprep.subr.mxu0 0.0
    %2572 = vmatpush1.msra.mxu0 0.0
    %2573 = vmatprep.subr.mxu0 0.0
    %2574 = vmatpush1.msra.mxu0 0.0
    %2575 = vmatprep.subr.mxu0 0.0
    %2576 = vmatpush1.msra.mxu0 0.0
    %2577 = vmatprep.subr.mxu0 0.0
    %2578 = vmatpush1.msra.mxu0 0.0
    %2579 = vmatprep.subr.mxu0 0.0
    %2580 = vmatpush1.msra.mxu0 0.0
    %2581 = vmatprep.subr.mxu0 0.0
    %2582 = vmatpush1.msra.mxu0 0.0
    %2583 = vmatprep.mubr.f32.mxu0 0.0
    %2584 = vmatmul.mubr.f32.gmra.mrb[0].mxu0 %v2508
    %v2585 = vpop.f32.mrb[0].mxu0
    %v2586 = vadd.f32 0.0, %v2585
    %v2587 = vpop.f32.mrb[0].mxu0
    %2588 = vmatprep.mubr.f32.mxu0 0.0
    %2589 = vmatmul.mubr.f32.gmra.mrb[0].mxu0 %v2511
    %v2590 = vpop.f32.mrb[0].mxu0
    %v2591 = vadd.f32 0.0, %v2590
    %v2592 = vpop.f32.mrb[0].mxu0
    %2593 = vmatprep.mubr.f32.mxu0 0.0
    %2594 = vmatmul.mubr.f32.gmra.mrb[0].mxu0 %v2514
    %v2595 = vpop.f32.mrb[0].mxu0
    %v2596 = vadd.f32 0.0, %v2595
    %v2597 = vpop.f32.mrb[0].mxu0
    %2598 = vmatprep.mubr.f32.mxu0 0.0
    %2599 = vmatmul.mubr.f32.gmra.mrb[0].mxu0 %v2517
    %v2600 = vpop.f32.mrb[0].mxu0
    %v2601 = vadd.f32 0.0, %v2600
    %v2602 = vpop.f32.mrb[0].mxu0
    %2603 = vdwg.mxu0
    %v2604 = vmax.f32 %v2586, %v2596
    %v2605 = vmax.f32 %v2591, %v2601
    %v2606 = vld [vmem:[#allocation17] sm:$0x1]
    %v2608 = vlaneseq
    %v2609 = vshrl.u32 %v2608, 7
    %v2610 = vsub.s32 0, %v2609
    %v2611 = vrot.slane %v2606, %v2610
    %v2613 = vadd.f32 %v2604, %v2611
    %v2614 = vadd.f32 %v2605, %v2611
    %v2615 = vmax.f32 %v2613, 0.0
    %v2616 = vmax.f32 %v2614, 0.0
    %s2617 = scalar_lea.vmem [#allocation17], 1
    %v2618 = vld [vmem:[%s2617] sm:$0x1]
    %s2619 = scalar_lea.vmem [#allocation17], 2
    %v2620 = vld [vmem:[%s2619] sm:$0x1]
    %v2621 = vsel %vm1315, %v2615, 0.0
    %v2622 = vsel %vm1315, %v2616, 0.0
    %v2623 = vadd.f32 %v2621, %v2622
    %v2624 = vrot.slane %v2623, 4
    %v2625 = vadd.f32 %v2623, %v2624
    %v2626 = vrot.slane %v2625, 2
    %v2627 = vadd.f32 %v2625, %v2626
    %v2628 = vrot.slane %v2627, 1
    %v2629 = vadd.f32 %v2627, %v2628
    %v2630 = vmul.f32 %v2629, 0.0625
    %v2631 = vsub.f32 %v2615, %v2630
    %v2632 = vsub.f32 %v2616, %v2630
    %v2633 = vmul.f32 %v2631, %v2631
    %v2634 = vmul.f32 %v2632, %v2632
    %v2635 = vsel %vm1315, %v2633, 0.0
    %v2636 = vsel %vm1315, %v2634, 0.0
    %v2637 = vadd.f32 %v2635, %v2636
    %v2638 = vrot.slane %v2637, 4
    %v2639 = vadd.f32 %v2637, %v2638
    %v2640 = vrot.slane %v2639, 2
    %v2641 = vadd.f32 %v2639, %v2640
    %v2642 = vrot.slane %v2641, 1
    %v2643 = vadd.f32 %v2641, %v2642
    %v2644 = vmul.f32 %v2643, 0.0625
    %v2645 = vadd.f32 %v2644, 1e-05
    %v2646 = vrsqrt.pop %v2645
    %v2647 = vmul.f32 %v2631, %v2646
    %v2648 = vmul.f32 %v2632, %v2646
    %v2650 = vlaneseq
    %v2651 = vshrl.u32 %v2650, 7
    %v2652 = vsub.s32 0, %v2651
    %v2653 = vrot.slane %v2618, %v2652
    %v2655 = vmul.f32 %v2647, %v2653
    %v2656 = vmul.f32 %v2648, %v2653
    %v2658 = vlaneseq
    %v2659 = vshrl.u32 %v2658, 7
    %v2660 = vsub.s32 0, %v2659
    %v2661 = vrot.slane %v2620, %v2660
    %v2663 = vadd.f32 %v2655, %v2661
    %v2664 = vadd.f32 %v2656, %v2661
    %v2665 = vld [vmem:[#allocation18] sm:$0xff]
    %v2666 = vld [vmem:[#allocation18 + $0x8] sm:$0xff]
    %v2667 = vld [vmem:[#allocation18 + $0x10] sm:$0xff]
    %v2668 = vld [vmem:[#allocation18 + $0x18] sm:$0xff]
    %v2669 = vld [vmem:[#allocation18 + $0x20] sm:$0xff]
    %v2670 = vld [vmem:[#allocation18 + $0x28] sm:$0xff]
    %v2671 = vld [vmem:[#allocation18 + $0x30] sm:$0xff]
    %v2672 = vld [vmem:[#allocation18 + $0x38] sm:$0xff]
    %v2673 = vld [vmem:[#allocation18 + $0x40] sm:$0xff]
    %v2674 = vld [vmem:[#allocation18 + $0x48] sm:$0xff]
    %v2675 = vld [vmem:[#allocation18 + $0x50] sm:$0xff]
    %v2676 = vld [vmem:[#allocation18 + $0x58] sm:$0xff]
    %v2677 = vld [vmem:[#allocation18 + $0x60] sm:$0xff]
    %v2678 = vld [vmem:[#allocation18 + $0x68] sm:$0xff]
    %v2679 = vld [vmem:[#allocation18 + $0x70] sm:$0xff]
    %v2680 = vld [vmem:[#allocation18 + $0x78] sm:$0xff]
    %v2681 = vld [vmem:[#allocation18 + $0x80] sm:$0xff]
    %v2682 = vld [vmem:[#allocation18 + $0x88] sm:$0xff]
    %v2683 = vld [vmem:[#allocation18 + $0x90] sm:$0xff]
    %v2684 = vld [vmem:[#allocation18 + $0x98] sm:$0xff]
    %v2685 = vld [vmem:[#allocation18 + $0xa0] sm:$0xff]
    %v2686 = vld [vmem:[#allocation18 + $0xa8] sm:$0xff]
    %v2687 = vld [vmem:[#allocation18 + $0xb0] sm:$0xff]
    %v2688 = vld [vmem:[#allocation18 + $0xb8] sm:$0xff]
    %v2689 = vld [vmem:[#allocation18 + $0xc0] sm:$0xff]
    %v2690 = vld [vmem:[#allocation18 + $0xc8] sm:$0xff]
    %v2691 = vld [vmem:[#allocation18 + $0xd0] sm:$0xff]
    %v2692 = vld [vmem:[#allocation18 + $0xd8] sm:$0xff]
    %v2693 = vld [vmem:[#allocation18 + $0xe0] sm:$0xff]
    %v2694 = vld [vmem:[#allocation18 + $0xe8] sm:$0xff]
    %v2695 = vld [vmem:[#allocation18 + $0xf0] sm:$0xff]
    %v2696 = vld [vmem:[#allocation18 + $0xf8] sm:$0xff]
    %v2697 = vld [vmem:[#allocation18 + $0x100] sm:$0xff]
    %v2698 = vld [vmem:[#allocation18 + $0x108] sm:$0xff]
    %v2699 = vld [vmem:[#allocation18 + $0x110] sm:$0xff]
    %v2700 = vld [vmem:[#allocation18 + $0x118] sm:$0xff]
    %v2701 = vld [vmem:[#allocation18 + $0x120] sm:$0xff]
    %v2702 = vld [vmem:[#allocation18 + $0x128] sm:$0xff]
    %v2703 = vld [vmem:[#allocation18 + $0x130] sm:$0xff]
    %v2704 = vld [vmem:[#allocation18 + $0x138] sm:$0xff]
    %v2706 = vrot.slane %v2663, 6
    %v2709 = vrot.slane %v2664, 2
    %v2711 = vsel %vm598, 0.0, %v2706
    %v2712 = vsel %vm598, %v2706, 0.0
    %v2713 = vsel %vm604, %v2712, 0.0
    %v2714 = vsel %vm2259, %v2713, %v2709
    %v2715 = vsel %vm2259, %v2709, 0.0
    %v2718 = vrot.slane %v2714, 4
    %v2719 = vrot.slane %v2715, 4
    %v2720 = vsel %vm604, %v2718, %v2719
    %v2723 = vrot.slane %v2711, 1
    %v2724 = vrot.slane %v2714, 1
    %v2725 = vsel %vm2280, %v2723, %v2724
    %v2726 = vrot.slane %v2714, 5
    %v2727 = vrot.slane %v2715, 5
    %v2728 = vsel %vm601, %v2726, %v2727
    %v2729 = vrot.slane %v2711, 2
    %v2730 = vrot.slane %v2714, 2
    %v2731 = vsel %vm2259, %v2729, %v2730
    %v2733 = vrot.slane %v2714, 6
    %v2734 = vrot.slane %v2715, 6
    %v2735 = vsel %vm598, %v2733, %v2734
    %v2737 = vrot.slane %v2711, 3
    %v2738 = vrot.slane %v2714, 3
    %v2739 = vsel %vm611, %v2737, %v2738
    %v2740 = vrot.slane %v2714, 7
    %v2741 = vrot.slane %v2715, 7
    %v2742 = vsel %vm595, %v2740, %v2741
    %v2743 = vrot.slane %v2711, 4
    %v2744 = vsel %vm604, %v2743, %v2718
    %2745 = vrot.lane.b32.xlu0 %v2725, 64
    %v2746 = vpop.permute.xlu0 %2745
    %2747 = vrot.lane.b32.xlu0 %v2728, 64
    %v2748 = vpop.permute.xlu0 %2747
    %2751 = vrot.lane.b32.xlu0 %v2739, 64
    %v2752 = vpop.permute.xlu0 %2751
    %2753 = vrot.lane.b32.xlu0 %v2742, 64
    %v2754 = vpop.permute.xlu0 %2753
    %v2757 = vsel %vm1315, %v2711, %v2746
    %v2758 = vsel %vm1315, %v2720, %v2748
    %v2759 = vsel %vm1315, %v2731, %v2752
    %v2760 = vsel %vm1315, %v2735, %v2754
    %v2761 = vsel %vm1315, %v2744, 0
    %v2763 = vsel %vm1315, %v2715, 0
    %2765 = vmatprep.subr.mxu0 0.0
    %2766 = vmatpush1.msra.mxu0 %v2665
    %2767 = vmatprep.subr.mxu0 0.0
    %2768 = vmatpush1.msra.mxu0 %v2666
    %2769 = vmatprep.subr.mxu0 0.0
    %2770 = vmatpush1.msra.mxu0 %v2667
    %2771 = vmatprep.subr.mxu0 0.0
    %2772 = vmatpush1.msra.mxu0 %v2668
    %2773 = vmatprep.subr.mxu0 0.0
    %2774 = vmatpush1.msra.mxu0 %v2669
    %2775 = vmatprep.subr.mxu0 0.0
    %2776 = vmatpush1.msra.mxu0 %v2670
    %2777 = vmatprep.subr.mxu0 0.0
    %2778 = vmatpush1.msra.mxu0 %v2671
    %2779 = vmatprep.subr.mxu0 0.0
    %2780 = vmatpush1.msra.mxu0 %v2672
    %2781 = vmatprep.subr.mxu0 0.0
    %2782 = vmatpush1.msra.mxu0 %v2673
    %2783 = vmatprep.subr.mxu0 0.0
    %2784 = vmatpush1.msra.mxu0 %v2674
    %2785 = vmatprep.subr.mxu0 0.0
    %2786 = vmatpush1.msra.mxu0 %v2675
    %2787 = vmatprep.subr.mxu0 0.0
    %2788 = vmatpush1.msra.mxu0 %v2676
    %2789 = vmatprep.subr.mxu0 0.0
    %2790 = vmatpush1.msra.mxu0 %v2677
    %2791 = vmatprep.subr.mxu0 0.0
    %2792 = vmatpush1.msra.mxu0 %v2678
    %2793 = vmatprep.subr.mxu0 0.0
    %2794 = vmatpush1.msra.mxu0 %v2679
    %2795 = vmatprep.subr.mxu0 0.0
    %2796 = vmatpush1.msra.mxu0 %v2680
    %2797 = vmatprep.subr.mxu0 0.0
    %2798 = vmatpush1.msra.mxu0 %v2681
    %2799 = vmatprep.subr.mxu0 0.0
    %2800 = vmatpush1.msra.mxu0 %v2682
    %2801 = vmatprep.subr.mxu0 0.0
    %2802 = vmatpush1.msra.mxu0 %v2683
    %2803 = vmatprep.subr.mxu0 0.0
    %2804 = vmatpush1.msra.mxu0 %v2684
    %2805 = vmatprep.subr.mxu0 0.0
    %2806 = vmatpush1.msra.mxu0 %v2685
    %2807 = vmatprep.subr.mxu0 0.0
    %2808 = vmatpush1.msra.mxu0 %v2686
    %2809 = vmatprep.subr.mxu0 0.0
    %2810 = vmatpush1.msra.mxu0 %v2687
    %2811 = vmatprep.subr.mxu0 0.0
    %2812 = vmatpush1.msra.mxu0 %v2688
    %2813 = vmatprep.subr.mxu0 0.0
    %2814 = vmatpush1.msra.mxu0 %v2689
    %2815 = vmatprep.subr.mxu0 0.0
    %2816 = vmatpush1.msra.mxu0 %v2690
    %2817 = vmatprep.subr.mxu0 0.0
    %2818 = vmatpush1.msra.mxu0 %v2691
    %2819 = vmatprep.subr.mxu0 0.0
    %2820 = vmatpush1.msra.mxu0 %v2692
    %2821 = vmatprep.subr.mxu0 0.0
    %2822 = vmatpush1.msra.mxu0 %v2693
    %2823 = vmatprep.subr.mxu0 0.0
    %2824 = vmatpush1.msra.mxu0 %v2694
    %2825 = vmatprep.subr.mxu0 0.0
    %2826 = vmatpush1.msra.mxu0 %v2695
    %2827 = vmatprep.subr.mxu0 0.0
    %2828 = vmatpush1.msra.mxu0 %v2696
    %2829 = vmatprep.mubr.f32.mxu0 %v2759
    %2830 = vmatmul.mubr.f32.gmra.mrb[0].mxu0 %v2757
    %v2831 = vpop.f32.mrb[0].mxu0
    %v2832 = vadd.f32 0.0, %v2831
    %v2833 = vpop.f32.mrb[0].mxu0
    %2834 = vmatprep.mubr.f32.mxu0 %v2760
    %2835 = vmatmul.mubr.f32.gmra.mrb[0].mxu0 %v2758
    %v2836 = vpop.f32.mrb[0].mxu0
    %v2837 = vadd.f32 0.0, %v2836
    %v2838 = vpop.f32.mrb[0].mxu0
    %2839 = vdwg.mxu0
    %2840 = vmatprep.subr.mxu0 0.0
    %2841 = vmatpush1.msra.mxu0 %v2697
    %2842 = vmatprep.subr.mxu0 0.0
    %2843 = vmatpush1.msra.mxu0 %v2698
    %2844 = vmatprep.subr.mxu0 0.0
    %2845 = vmatpush1.msra.mxu0 %v2699
    %2846 = vmatprep.subr.mxu0 0.0
    %2847 = vmatpush1.msra.mxu0 %v2700
    %2848 = vmatprep.subr.mxu0 0.0
    %2849 = vmatpush1.msra.mxu0 %v2701
    %2850 = vmatprep.subr.mxu0 0.0
    %2851 = vmatpush1.msra.mxu0 %v2702
    %2852 = vmatprep.subr.mxu0 0.0
    %2853 = vmatpush1.msra.mxu0 %v2703
    %2854 = vmatprep.subr.mxu0 0.0
    %2855 = vmatpush1.msra.mxu0 %v2704
    %2856 = vmatprep.subr.mxu0 0.0
    %2857 = vmatpush1.msra.mxu0 0.0
    %2858 = vmatprep.subr.mxu0 0.0
    %2859 = vmatpush1.msra.mxu0 0.0
    %2860 = vmatprep.subr.mxu0 0.0
    %2861 = vmatpush1.msra.mxu0 0.0
    %2862 = vmatprep.subr.mxu0 0.0
    %2863 = vmatpush1.msra.mxu0 0.0
    %2864 = vmatprep.subr.mxu0 0.0
    %2865 = vmatpush1.msra.mxu0 0.0
    %2866 = vmatprep.subr.mxu0 0.0
    %2867 = vmatpush1.msra.mxu0 0.0
    %2868 = vmatprep.subr.mxu0 0.0
    %2869 = vmatpush1.msra.mxu0 0.0
    %2870 = vmatprep.subr.mxu0 0.0
    %2871 = vmatpush1.msra.mxu0 0.0
    %2872 = vmatprep.subr.mxu0 0.0
    %2873 = vmatpush1.msra.mxu0 0.0
    %2874 = vmatprep.subr.mxu0 0.0
    %2875 = vmatpush1.msra.mxu0 0.0
    %2876 = vmatprep.subr.mxu0 0.0
    %2877 = vmatpush1.msra.mxu0 0.0
    %2878 = vmatprep.subr.mxu0 0.0
    %2879 = vmatpush1.msra.mxu0 0.0
    %2880 = vmatprep.subr.mxu0 0.0
    %2881 = vmatpush1.msra.mxu0 0.0
    %2882 = vmatprep.subr.mxu0 0.0
    %2883 = vmatpush1.msra.mxu0 0.0
    %2884 = vmatprep.subr.mxu0 0.0
    %2885 = vmatpush1.msra.mxu0 0.0
    %2886 = vmatprep.subr.mxu0 0.0
    %2887 = vmatpush1.msra.mxu0 0.0
    %2888 = vmatprep.subr.mxu0 0.0
    %2889 = vmatpush1.msra.mxu0 0.0
    %2890 = vmatprep.subr.mxu0 0.0
    %2891 = vmatpush1.msra.mxu0 0.0
    %2892 = vmatprep.subr.mxu0 0.0
    %2893 = vmatpush1.msra.mxu0 0.0
    %2894 = vmatprep.subr.mxu0 0.0
    %2895 = vmatpush1.msra.mxu0 0.0
    %2896 = vmatprep.subr.mxu0 0.0
    %2897 = vmatpush1.msra.mxu0 0.0
    %2898 = vmatprep.subr.mxu0 0.0
    %2899 = vmatpush1.msra.mxu0 0.0
    %2900 = vmatprep.subr.mxu0 0.0
    %2901 = vmatpush1.msra.mxu0 0.0
    %2902 = vmatprep.subr.mxu0 0.0
    %2903 = vmatpush1.msra.mxu0 0.0
    %2904 = vmatprep.mubr.f32.mxu0 0.0
    %2905 = vmatmul.mubr.f32.gmra.mrb[0].mxu0 %v2761
    %v2906 = vpop.f32.mrb[0].mxu0
    %v2907 = vadd.f32 %v2832, %v2906
    %v2908 = vpop.f32.mrb[0].mxu0
    %2909 = vmatprep.mubr.f32.mxu0 0.0
    %2910 = vmatmul.mubr.f32.gmra.mrb[0].mxu0 %v2763
    %v2911 = vpop.f32.mrb[0].mxu0
    %v2912 = vadd.f32 %v2837, %v2911
    %v2913 = vpop.f32.mrb[0].mxu0
    %2914 = vdwg.mxu0
    %vm2915 = vcmp.lt.s32.totalorder %v690, 8
    %vm2916 = vcmp.lt.s32.totalorder %v691, 8
    %vm2917 = vmand %vm2915, %vm2465
    %vm2918 = vmand %vm2916, %vm2466
    %vm2919 = vcmp.ge.s32.totalorder %v690, 8
    %vm2920 = vcmp.ge.s32.totalorder %v691, 8
    %v2921 = vsub.s32 %v690, 8
    %v2922 = vmul.u32 %v2921, 2
    %v2923 = vadd.s32 %v2922, 1
    %vm2924 = vcmp.eq.s32.totalorder %v723, %v2923
    %vm2925 = vmand %vm2919, %vm2924
    %vm2926 = vmand %vm2920, %vm2489
    %vm2927 = vmor %vm2917, %vm2925
    %vm2928 = vmor %vm2918, %vm2926
    %v2929 = vsel %vm2927, 1, 0
    %v2930 = vsel %vm2928, 1, 0
    %v2931 = vcvt.s32.f32 %v2929
    %v2932 = vcvt.s32.f32 %v2930
    %vm2933 = vcmask 130048
    %v2935 = vsel %vm2933, %v2931, 0
    %v2938 = vsel %vm2933, %v2932, 0
    %2940 = vmatprep.subr.mxu0 0.0
    %2941 = vmatpush1.msra.mxu0 %v2907
    %2942 = vmatprep.subr.mxu0 0.0
    %2943 = vmatpush1.msra.mxu0 %v2912
    %2944 = vmatprep.subr.mxu0 0.0
    %2945 = vmatpush1.msra.mxu0 0.0
    %2946 = vmatprep.subr.mxu0 0.0
    %2947 = vmatpush1.msra.mxu0 0.0
    %2948 = vmatprep.subr.mxu0 0.0
    %2949 = vmatpush1.msra.mxu0 0.0
    %2950 = vmatprep.subr.mxu0 0.0
    %2951 = vmatpush1.msra.mxu0 0.0
    %2952 = vmatprep.subr.mxu0 0.0
    %2953 = vmatpush1.msra.mxu0 0.0
    %2954 = vmatprep.subr.mxu0 0.0
    %2955 = vmatpush1.msra.mxu0 0.0
    %2956 = vmatprep.subr.mxu0 0.0
    %2957 = vmatpush1.msra.mxu0 0.0
    %2958 = vmatprep.subr.mxu0 0.0
    %2959 = vmatpush1.msra.mxu0 0.0
    %2960 = vmatprep.subr.mxu0 0.0
    %2961 = vmatpush1.msra.mxu0 0.0
    %2962 = vmatprep.subr.mxu0 0.0
    %2963 = vmatpush1.msra.mxu0 0.0
    %2964 = vmatprep.subr.mxu0 0.0
    %2965 = vmatpush1.msra.mxu0 0.0
    %2966 = vmatprep.subr.mxu0 0.0
    %2967 = vmatpush1.msra.mxu0 0.0
    %2968 = vmatprep.subr.mxu0 0.0
    %2969 = vmatpush1.msra.mxu0 0.0
    %2970 = vmatprep.subr.mxu0 0.0
    %2971 = vmatpush1.msra.mxu0 0.0
    %2972 = vmatprep.subr.mxu0 0.0
    %2973 = vmatpush1.msra.mxu0 0.0
    %2974 = vmatprep.subr.mxu0 0.0
    %2975 = vmatpush1.msra.mxu0 0.0
    %2976 = vmatprep.subr.mxu0 0.0
    %2977 = vmatpush1.msra.mxu0 0.0
    %2978 = vmatprep.subr.mxu0 0.0
    %2979 = vmatpush1.msra.mxu0 0.0
    %2980 = vmatprep.subr.mxu0 0.0
    %2981 = vmatpush1.msra.mxu0 0.0
    %2982 = vmatprep.subr.mxu0 0.0
    %2983 = vmatpush1.msra.mxu0 0.0
    %2984 = vmatprep.subr.mxu0 0.0
    %2985 = vmatpush1.msra.mxu0 0.0
    %2986 = vmatprep.subr.mxu0 0.0
    %2987 = vmatpush1.msra.mxu0 0.0
    %2988 = vmatprep.subr.mxu0 0.0
    %2989 = vmatpush1.msra.mxu0 0.0
    %2990 = vmatprep.subr.mxu0 0.0
    %2991 = vmatpush1.msra.mxu0 0.0
    %2992 = vmatprep.subr.mxu0 0.0
    %2993 = vmatpush1.msra.mxu0 0.0
    %2994 = vmatprep.subr.mxu0 0.0
    %2995 = vmatpush1.msra.mxu0 0.0
    %2996 = vmatprep.subr.mxu0 0.0
    %2997 = vmatpush1.msra.mxu0 0.0
    %2998 = vmatprep.subr.mxu0 0.0
    %2999 = vmatpush1.msra.mxu0 0.0
    %3000 = vmatprep.subr.mxu0 0.0
    %3001 = vmatpush1.msra.mxu0 0.0
    %3002 = vmatprep.subr.mxu0 0.0
    %3003 = vmatpush1.msra.mxu0 0.0
    %3004 = vmatprep.mubr.f32.mxu0 0.0
    %3005 = vmatmul.mubr.f32.gmra.mrb[0].mxu0 %v2935
    %v3006 = vpop.f32.mrb[0].mxu0
    %v3007 = vadd.f32 0.0, %v3006
    %v3008 = vpop.f32.mrb[0].mxu0
    %3009 = vmatprep.mubr.f32.mxu0 0.0
    %3010 = vmatmul.mubr.f32.gmra.mrb[0].mxu0 %v2938
    %v3011 = vpop.f32.mrb[0].mxu0
    %v3012 = vadd.f32 0.0, %v3011
    %v3013 = vpop.f32.mrb[0].mxu0
    %3014 = vdwg.mxu0
    %v3015 = vmax.f32 %v3007, %v3012
    %v3016 = vld [vmem:[#allocation20] sm:$0x1]
    %v3018 = vlaneseq
    %v3019 = vshrl.u32 %v3018, 7
    %v3020 = vsub.s32 0, %v3019
    %v3021 = vrot.slane %v3016, %v3020
    %v3023 = vadd.f32 %v3015, %v3021
    %v3024 = vmax.f32 %v3023, 0.0
    %s3025 = scalar_lea.vmem [#allocation20], 1
    %v3026 = vld [vmem:[%s3025] sm:$0x1]
    %s3027 = scalar_lea.vmem [#allocation20], 2
    %v3028 = vld [vmem:[%s3027] sm:$0x1]
    %v3029 = vsel %vm1315, %v3024, 0.0
    %v3030 = vrot.slane %v3029, 4
    %v3031 = vadd.f32 %v3029, %v3030
    %v3032 = vrot.slane %v3031, 2
    %v3033 = vadd.f32 %v3031, %v3032
    %v3034 = vrot.slane %v3033, 1
    %v3035 = vadd.f32 %v3033, %v3034
    %v3036 = vmul.f32 %v3035, 0.125
    %v3037 = vsub.f32 %v3024, %v3036
    %v3038 = vmul.f32 %v3037, %v3037
    %v3039 = vsel %vm1315, %v3038, 0.0
    %v3040 = vrot.slane %v3039, 4
    %v3041 = vadd.f32 %v3039, %v3040
    %v3042 = vrot.slane %v3041, 2
    %v3043 = vadd.f32 %v3041, %v3042
    %v3044 = vrot.slane %v3043, 1
    %v3045 = vadd.f32 %v3043, %v3044
    %v3046 = vmul.f32 %v3045, 0.125
    %v3047 = vadd.f32 %v3046, 1e-05
    %v3048 = vrsqrt.pop %v3047
    %v3049 = vmul.f32 %v3037, %v3048
    %v3051 = vlaneseq
    %v3052 = vshrl.u32 %v3051, 7
    %v3053 = vsub.s32 0, %v3052
    %v3054 = vrot.slane %v3026, %v3053
    %v3056 = vmul.f32 %v3049, %v3054
    %v3058 = vlaneseq
    %v3059 = vshrl.u32 %v3058, 7
    %v3060 = vsub.s32 0, %v3059
    %v3061 = vrot.slane %v3028, %v3060
    %v3063 = vadd.f32 %v3056, %v3061
    %v3064 = vld [vmem:[#allocation21] sm:$0xff]
    %v3065 = vld [vmem:[#allocation21 + $0x8] sm:$0xff]
    %v3066 = vld [vmem:[#allocation21 + $0x10] sm:$0xff]
    %v3067 = vld [vmem:[#allocation21 + $0x18] sm:$0xff]
    %v3068 = vld [vmem:[#allocation21 + $0x20] sm:$0xff]
    %v3069 = vld [vmem:[#allocation21 + $0x28] sm:$0xff]
    %v3070 = vld [vmem:[#allocation21 + $0x30] sm:$0xff]
    %v3071 = vld [vmem:[#allocation21 + $0x38] sm:$0xff]
    %v3072 = vld [vmem:[#allocation21 + $0x40] sm:$0xff]
    %v3073 = vld [vmem:[#allocation21 + $0x48] sm:$0xff]
    %v3074 = vld [vmem:[#allocation21 + $0x50] sm:$0xff]
    %v3075 = vld [vmem:[#allocation21 + $0x58] sm:$0xff]
    %v3076 = vld [vmem:[#allocation21 + $0x60] sm:$0xff]
    %v3077 = vld [vmem:[#allocation21 + $0x68] sm:$0xff]
    %v3078 = vld [vmem:[#allocation21 + $0x70] sm:$0xff]
    %v3079 = vld [vmem:[#allocation21 + $0x78] sm:$0xff]
    %v3080 = vld [vmem:[#allocation21 + $0x80] sm:$0xff]
    %v3081 = vld [vmem:[#allocation21 + $0x88] sm:$0xff]
    %v3082 = vld [vmem:[#allocation21 + $0x90] sm:$0xff]
    %v3083 = vld [vmem:[#allocation21 + $0x98] sm:$0xff]
    %v3084 = vld [vmem:[#allocation21 + $0xa0] sm:$0xff]
    %v3085 = vld [vmem:[#allocation21 + $0xa8] sm:$0xff]
    %v3086 = vld [vmem:[#allocation21 + $0xb0] sm:$0xff]
    %v3087 = vld [vmem:[#allocation21 + $0xb8] sm:$0xff]
    %v3088 = vld [vmem:[#allocation21 + $0xc0] sm:$0xff]
    %v3089 = vld [vmem:[#allocation21 + $0xc8] sm:$0xff]
    %v3090 = vld [vmem:[#allocation21 + $0xd0] sm:$0xff]
    %v3091 = vld [vmem:[#allocation21 + $0xd8] sm:$0xff]
    %v3092 = vld [vmem:[#allocation21 + $0xe0] sm:$0xff]
    %v3093 = vld [vmem:[#allocation21 + $0xe8] sm:$0xff]
    %v3094 = vld [vmem:[#allocation21 + $0xf0] sm:$0xff]
    %v3095 = vld [vmem:[#allocation21 + $0xf8] sm:$0xff]
    %v3096 = vld [vmem:[#allocation21 + $0x100] sm:$0xff]
    %v3097 = vld [vmem:[#allocation21 + $0x108] sm:$0xff]
    %v3098 = vld [vmem:[#allocation21 + $0x110] sm:$0xff]
    %v3099 = vld [vmem:[#allocation21 + $0x118] sm:$0xff]
    %v3100 = vld [vmem:[#allocation21 + $0x120] sm:$0xff]
    %v3101 = vld [vmem:[#allocation21 + $0x128] sm:$0xff]
    %v3102 = vld [vmem:[#allocation21 + $0x130] sm:$0xff]
    %v3103 = vld [vmem:[#allocation21 + $0x138] sm:$0xff]
    %v3105 = vrot.slane %v3063, 6
    %v3107 = vrot.slane %v3063, 2
    %v3109 = vsel %vm598, 0.0, %v3105
    %v3110 = vsel %vm2259, %v3109, 0.0
    %v3111 = vsel %vm598, 0.0, %v3107
    %v3112 = vsel %vm2259, %v3111, 0.0
    %v3114 = vrot.slane %v3112, 4
    %v3116 = vsel %vm604, %v3110, %v3114
    %v3118 = vrot.slane %v3110, 1
    %v3120 = vrot.slane %v3112, 5
    %v3122 = vsel %vm604, %v3118, %v3120
    %v3123 = vrot.slane %v3110, 2
    %v3125 = vrot.slane %v3112, 6
    %v3127 = vsel %vm604, %v3123, %v3125
    %v3128 = vrot.slane %v3110, 3
    %v3130 = vrot.slane %v3112, 7
    %v3132 = vsel %vm604, %v3128, %v3130
    %v3133 = vrot.slane %v3110, 4
    %v3135 = vsel %vm604, %v3133, %v3112
    %3137 = vrot.lane.b32.xlu0 %v3122, 64
    %v3138 = vpop.permute.xlu0 %3137
    %3141 = vrot.lane.b32.xlu0 %v3132, 64
    %v3142 = vpop.permute.xlu0 %3141
    %v3144 = vsel %vm1315, %v3116, %v3138
    %v3145 = vsel %vm1315, %v3127, %v3142
    %v3147 = vsel %vm1315, %v3135, 0
    %3149 = vmatprep.subr.mxu0 0.0
    %3150 = vmatpush1.msra.mxu0 %v3064
    %3151 = vmatprep.subr.mxu0 0.0
    %3152 = vmatpush1.msra.mxu0 %v3065
    %3153 = vmatprep.subr.mxu0 0.0
    %3154 = vmatpush1.msra.mxu0 %v3066
    %3155 = vmatprep.subr.mxu0 0.0
    %3156 = vmatpush1.msra.mxu0 %v3067
    %3157 = vmatprep.subr.mxu0 0.0
    %3158 = vmatpush1.msra.mxu0 %v3068
    %3159 = vmatprep.subr.mxu0 0.0
    %3160 = vmatpush1.msra.mxu0 %v3069
    %3161 = vmatprep.subr.mxu0 0.0
    %3162 = vmatpush1.msra.mxu0 %v3070
    %3163 = vmatprep.subr.mxu0 0.0
    %3164 = vmatpush1.msra.mxu0 %v3071
    %3165 = vmatprep.subr.mxu0 0.0
    %3166 = vmatpush1.msra.mxu0 %v3072
    %3167 = vmatprep.subr.mxu0 0.0
    %3168 = vmatpush1.msra.mxu0 %v3073
    %3169 = vmatprep.subr.mxu0 0.0
    %3170 = vmatpush1.msra.mxu0 %v3074
    %3171 = vmatprep.subr.mxu0 0.0
    %3172 = vmatpush1.msra.mxu0 %v3075
    %3173 = vmatprep.subr.mxu0 0.0
    %3174 = vmatpush1.msra.mxu0 %v3076
    %3175 = vmatprep.subr.mxu0 0.0
    %3176 = vmatpush1.msra.mxu0 %v3077
    %3177 = vmatprep.subr.mxu0 0.0
    %3178 = vmatpush1.msra.mxu0 %v3078
    %3179 = vmatprep.subr.mxu0 0.0
    %3180 = vmatpush1.msra.mxu0 %v3079
    %3181 = vmatprep.subr.mxu0 0.0
    %3182 = vmatpush1.msra.mxu0 %v3080
    %3183 = vmatprep.subr.mxu0 0.0
    %3184 = vmatpush1.msra.mxu0 %v3081
    %3185 = vmatprep.subr.mxu0 0.0
    %3186 = vmatpush1.msra.mxu0 %v3082
    %3187 = vmatprep.subr.mxu0 0.0
    %3188 = vmatpush1.msra.mxu0 %v3083
    %3189 = vmatprep.subr.mxu0 0.0
    %3190 = vmatpush1.msra.mxu0 %v3084
    %3191 = vmatprep.subr.mxu0 0.0
    %3192 = vmatpush1.msra.mxu0 %v3085
    %3193 = vmatprep.subr.mxu0 0.0
    %3194 = vmatpush1.msra.mxu0 %v3086
    %3195 = vmatprep.subr.mxu0 0.0
    %3196 = vmatpush1.msra.mxu0 %v3087
    %3197 = vmatprep.subr.mxu0 0.0
    %3198 = vmatpush1.msra.mxu0 %v3088
    %3199 = vmatprep.subr.mxu0 0.0
    %3200 = vmatpush1.msra.mxu0 %v3089
    %3201 = vmatprep.subr.mxu0 0.0
    %3202 = vmatpush1.msra.mxu0 %v3090
    %3203 = vmatprep.subr.mxu0 0.0
    %3204 = vmatpush1.msra.mxu0 %v3091
    %3205 = vmatprep.subr.mxu0 0.0
    %3206 = vmatpush1.msra.mxu0 %v3092
    %3207 = vmatprep.subr.mxu0 0.0
    %3208 = vmatpush1.msra.mxu0 %v3093
    %3209 = vmatprep.subr.mxu0 0.0
    %3210 = vmatpush1.msra.mxu0 %v3094
    %3211 = vmatprep.subr.mxu0 0.0
    %3212 = vmatpush1.msra.mxu0 %v3095
    %3213 = vmatprep.mubr.f32.mxu0 %v3145
    %3214 = vmatmul.mubr.f32.gmra.mrb[0].mxu0 %v3144
    %v3215 = vpop.f32.mrb[0].mxu0
    %v3216 = vadd.f32 0.0, %v3215
    %v3217 = vpop.f32.mrb[0].mxu0
    %3218 = vdwg.mxu0
    %3219 = vmatprep.subr.mxu0 0.0
    %3220 = vmatpush1.msra.mxu0 %v3096
    %3221 = vmatprep.subr.mxu0 0.0
    %3222 = vmatpush1.msra.mxu0 %v3097
    %3223 = vmatprep.subr.mxu0 0.0
    %3224 = vmatpush1.msra.mxu0 %v3098
    %3225 = vmatprep.subr.mxu0 0.0
    %3226 = vmatpush1.msra.mxu0 %v3099
    %3227 = vmatprep.subr.mxu0 0.0
    %3228 = vmatpush1.msra.mxu0 %v3100
    %3229 = vmatprep.subr.mxu0 0.0
    %3230 = vmatpush1.msra.mxu0 %v3101
    %3231 = vmatprep.subr.mxu0 0.0
    %3232 = vmatpush1.msra.mxu0 %v3102
    %3233 = vmatprep.subr.mxu0 0.0
    %3234 = vmatpush1.msra.mxu0 %v3103
    %3235 = vmatprep.subr.mxu0 0.0
    %3236 = vmatpush1.msra.mxu0 0.0
    %3237 = vmatprep.subr.mxu0 0.0
    %3238 = vmatpush1.msra.mxu0 0.0
    %3239 = vmatprep.subr.mxu0 0.0
    %3240 = vmatpush1.msra.mxu0 0.0
    %3241 = vmatprep.subr.mxu0 0.0
    %3242 = vmatpush1.msra.mxu0 0.0
    %3243 = vmatprep.subr.mxu0 0.0
    %3244 = vmatpush1.msra.mxu0 0.0
    %3245 = vmatprep.subr.mxu0 0.0
    %3246 = vmatpush1.msra.mxu0 0.0
    %3247 = vmatprep.subr.mxu0 0.0
    %3248 = vmatpush1.msra.mxu0 0.0
    %3249 = vmatprep.subr.mxu0 0.0
    %3250 = vmatpush1.msra.mxu0 0.0
    %3251 = vmatprep.subr.mxu0 0.0
    %3252 = vmatpush1.msra.mxu0 0.0
    %3253 = vmatprep.subr.mxu0 0.0
    %3254 = vmatpush1.msra.mxu0 0.0
    %3255 = vmatprep.subr.mxu0 0.0
    %3256 = vmatpush1.msra.mxu0 0.0
    %3257 = vmatprep.subr.mxu0 0.0
    %3258 = vmatpush1.msra.mxu0 0.0
    %3259 = vmatprep.subr.mxu0 0.0
    %3260 = vmatpush1.msra.mxu0 0.0
    %3261 = vmatprep.subr.mxu0 0.0
    %3262 = vmatpush1.msra.mxu0 0.0
    %3263 = vmatprep.subr.mxu0 0.0
    %3264 = vmatpush1.msra.mxu0 0.0
    %3265 = vmatprep.subr.mxu0 0.0
    %3266 = vmatpush1.msra.mxu0 0.0
    %3267 = vmatprep.subr.mxu0 0.0
    %3268 = vmatpush1.msra.mxu0 0.0
    %3269 = vmatprep.subr.mxu0 0.0
    %3270 = vmatpush1.msra.mxu0 0.0
    %3271 = vmatprep.subr.mxu0 0.0
    %3272 = vmatpush1.msra.mxu0 0.0
    %3273 = vmatprep.subr.mxu0 0.0
    %3274 = vmatpush1.msra.mxu0 0.0
    %3275 = vmatprep.subr.mxu0 0.0
    %3276 = vmatpush1.msra.mxu0 0.0
    %3277 = vmatprep.subr.mxu0 0.0
    %3278 = vmatpush1.msra.mxu0 0.0
    %3279 = vmatprep.subr.mxu0 0.0
    %3280 = vmatpush1.msra.mxu0 0.0
    %3281 = vmatprep.subr.mxu0 0.0
    %3282 = vmatpush1.msra.mxu0 0.0
    %3283 = vmatprep.mubr.f32.mxu0 0.0
    %3284 = vmatmul.mubr.f32.gmra.mrb[0].mxu0 %v3147
    %v3285 = vpop.f32.mrb[0].mxu0
    %v3286 = vadd.f32 %v3216, %v3285
    %v3287 = vpop.f32.mrb[0].mxu0
    %3288 = vdwg.mxu0
    %vm3289 = vcmp.lt.s32.totalorder %v690, 4
    %vm3290 = vmand %vm3289, %vm2465
    %vm3291 = vcmp.ge.s32.totalorder %v690, 4
    %v3292 = vsub.s32 %v690, 4
    %v3293 = vmul.u32 %v3292, 2
    %v3294 = vadd.s32 %v3293, 1
    %vm3295 = vcmp.eq.s32.totalorder %v723, %v3294
    %vm3296 = vmand %vm3291, %vm3295
    %vm3297 = vmor %vm3290, %vm3296
    %v3298 = vsel %vm3297, 1, 0
    %v3299 = vcvt.s32.f32 %v3298
    %vm3300 = vcmask 64512
    %v3302 = vsel %vm3300, %v3299, 0
    %3304 = vmatprep.subr.mxu0 0.0
    %3305 = vmatpush1.msra.mxu0 %v3286
    %3306 = vmatprep.subr.mxu0 0.0
    %3307 = vmatpush1.msra.mxu0 0.0
    %3308 = vmatprep.subr.mxu0 0.0
    %3309 = vmatpush1.msra.mxu0 0.0
    %3310 = vmatprep.subr.mxu0 0.0
    %3311 = vmatpush1.msra.mxu0 0.0
    %3312 = vmatprep.subr.mxu0 0.0
    %3313 = vmatpush1.msra.mxu0 0.0
    %3314 = vmatprep.subr.mxu0 0.0
    %3315 = vmatpush1.msra.mxu0 0.0
    %3316 = vmatprep.subr.mxu0 0.0
    %3317 = vmatpush1.msra.mxu0 0.0
    %3318 = vmatprep.subr.mxu0 0.0
    %3319 = vmatpush1.msra.mxu0 0.0
    %3320 = vmatprep.subr.mxu0 0.0
    %3321 = vmatpush1.msra.mxu0 0.0
    %3322 = vmatprep.subr.mxu0 0.0
    %3323 = vmatpush1.msra.mxu0 0.0
    %3324 = vmatprep.subr.mxu0 0.0
    %3325 = vmatpush1.msra.mxu0 0.0
    %3326 = vmatprep.subr.mxu0 0.0
    %3327 = vmatpush1.msra.mxu0 0.0
    %3328 = vmatprep.subr.mxu0 0.0
    %3329 = vmatpush1.msra.mxu0 0.0
    %3330 = vmatprep.subr.mxu0 0.0
    %3331 = vmatpush1.msra.mxu0 0.0
    %3332 = vmatprep.subr.mxu0 0.0
    %3333 = vmatpush1.msra.mxu0 0.0
    %3334 = vmatprep.subr.mxu0 0.0
    %3335 = vmatpush1.msra.mxu0 0.0
    %3336 = vmatprep.subr.mxu0 0.0
    %3337 = vmatpush1.msra.mxu0 0.0
    %3338 = vmatprep.subr.mxu0 0.0
    %3339 = vmatpush1.msra.mxu0 0.0
    %3340 = vmatprep.subr.mxu0 0.0
    %3341 = vmatpush1.msra.mxu0 0.0
    %3342 = vmatprep.subr.mxu0 0.0
    %3343 = vmatpush1.msra.mxu0 0.0
    %3344 = vmatprep.subr.mxu0 0.0
    %3345 = vmatpush1.msra.mxu0 0.0
    %3346 = vmatprep.subr.mxu0 0.0
    %3347 = vmatpush1.msra.mxu0 0.0
    %3348 = vmatprep.subr.mxu0 0.0
    %3349 = vmatpush1.msra.mxu0 0.0
    %3350 = vmatprep.subr.mxu0 0.0
    %3351 = vmatpush1.msra.mxu0 0.0
    %3352 = vmatprep.subr.mxu0 0.0
    %3353 = vmatpush1.msra.mxu0 0.0
    %3354 = vmatprep.subr.mxu0 0.0
    %3355 = vmatpush1.msra.mxu0 0.0
    %3356 = vmatprep.subr.mxu0 0.0
    %3357 = vmatpush1.msra.mxu0 0.0
    %3358 = vmatprep.subr.mxu0 0.0
    %3359 = vmatpush1.msra.mxu0 0.0
    %3360 = vmatprep.subr.mxu0 0.0
    %3361 = vmatpush1.msra.mxu0 0.0
    %3362 = vmatprep.subr.mxu0 0.0
    %3363 = vmatpush1.msra.mxu0 0.0
    %3364 = vmatprep.subr.mxu0 0.0
    %3365 = vmatpush1.msra.mxu0 0.0
    %3366 = vmatprep.subr.mxu0 0.0
    %3367 = vmatpush1.msra.mxu0 0.0
    %3368 = vmatprep.mubr.f32.mxu0 0.0
    %3369 = vmatmul.mubr.f32.gmra.mrb[0].mxu0 %v3302
    %v3370 = vpop.f32.mrb[0].mxu0
    %v3371 = vadd.f32 0.0, %v3370
    %v3372 = vpop.f32.mrb[0].mxu0
    %3373 = vdwg.mxu0
    %v3375 = vrot.slane %v3371, 4
    %v3377 = vmax.f32 %v3371, %v3375
    %v3378 = vld [vmem:[#allocation23] sm:$0x1]
    %v3380 = vlaneseq
    %v3381 = vshrl.u32 %v3380, 7
    %v3382 = vsub.s32 0, %v3381
    %v3383 = vrot.slane %v3378, %v3382
    %v3385 = vadd.f32 %v3377, %v3383
    %v3386 = vmax.f32 %v3385, 0.0
    %s3387 = scalar_lea.vmem [#allocation23], 1
    %v3388 = vld [vmem:[%s3387] sm:$0x1]
    %s3389 = scalar_lea.vmem [#allocation23], 2
    %v3390 = vld [vmem:[%s3389] sm:$0x1]
    %v3391 = vsel %vm604, %v3386, 0.0
    %v3392 = vrot.slane %v3391, 4
    %v3393 = vadd.f32 %v3391, %v3392
    %v3394 = vrot.slane %v3393, 2
    %v3395 = vadd.f32 %v3393, %v3394
    %v3396 = vrot.slane %v3395, 1
    %v3397 = vadd.f32 %v3395, %v3396
    %v3398 = vmul.f32 %v3397, 0.25
    %v3399 = vsub.f32 %v3386, %v3398
    %v3400 = vmul.f32 %v3399, %v3399
    %v3401 = vsel %vm604, %v3400, 0.0
    %v3402 = vrot.slane %v3401, 4
    %v3403 = vadd.f32 %v3401, %v3402
    %v3404 = vrot.slane %v3403, 2
    %v3405 = vadd.f32 %v3403, %v3404
    %v3406 = vrot.slane %v3405, 1
    %v3407 = vadd.f32 %v3405, %v3406
    %v3408 = vmul.f32 %v3407, 0.25
    %v3409 = vadd.f32 %v3408, 1e-05
    %v3410 = vrsqrt.pop %v3409
    %v3411 = vmul.f32 %v3399, %v3410
    %v3413 = vlaneseq
    %v3414 = vshrl.u32 %v3413, 7
    %v3415 = vsub.s32 0, %v3414
    %v3416 = vrot.slane %v3388, %v3415
    %v3418 = vmul.f32 %v3411, %v3416
    %v3420 = vlaneseq
    %v3421 = vshrl.u32 %v3420, 7
    %v3422 = vsub.s32 0, %v3421
    %v3423 = vrot.slane %v3390, %v3422
    %v3425 = vadd.f32 %v3418, %v3423
    %v3426 = vld [vmem:[#allocation24] sm:$0xff]
    %v3427 = vld [vmem:[#allocation24 + $0x8] sm:$0xff]
    %v3428 = vld [vmem:[#allocation24 + $0x10] sm:$0xff]
    %v3429 = vld [vmem:[#allocation24 + $0x18] sm:$0xff]
    %v3430 = vld [vmem:[#allocation24 + $0x20] sm:$0xff]
    %v3431 = vld [vmem:[#allocation24 + $0x28] sm:$0xff]
    %v3432 = vld [vmem:[#allocation24 + $0x30] sm:$0xff]
    %v3433 = vld [vmem:[#allocation24 + $0x38] sm:$0xff]
    %v3434 = vld [vmem:[#allocation24 + $0x40] sm:$0xff]
    %v3435 = vld [vmem:[#allocation24 + $0x48] sm:$0xff]
    %v3436 = vld [vmem:[#allocation24 + $0x50] sm:$0xff]
    %v3437 = vld [vmem:[#allocation24 + $0x58] sm:$0xff]
    %v3438 = vld [vmem:[#allocation24 + $0x60] sm:$0xff]
    %v3439 = vld [vmem:[#allocation24 + $0x68] sm:$0xff]
    %v3440 = vld [vmem:[#allocation24 + $0x70] sm:$0xff]
    %v3441 = vld [vmem:[#allocation24 + $0x78] sm:$0xff]
    %v3442 = vld [vmem:[#allocation24 + $0x80] sm:$0xff]
    %v3443 = vld [vmem:[#allocation24 + $0x88] sm:$0xff]
    %v3444 = vld [vmem:[#allocation24 + $0x90] sm:$0xff]
    %v3445 = vld [vmem:[#allocation24 + $0x98] sm:$0xff]
    %v3446 = vld [vmem:[#allocation24 + $0xa0] sm:$0xff]
    %v3447 = vld [vmem:[#allocation24 + $0xa8] sm:$0xff]
    %v3448 = vld [vmem:[#allocation24 + $0xb0] sm:$0xff]
    %v3449 = vld [vmem:[#allocation24 + $0xb8] sm:$0xff]
    %v3450 = vld [vmem:[#allocation24 + $0xc0] sm:$0xff]
    %v3451 = vld [vmem:[#allocation24 + $0xc8] sm:$0xff]
    %v3452 = vld [vmem:[#allocation24 + $0xd0] sm:$0xff]
    %v3453 = vld [vmem:[#allocation24 + $0xd8] sm:$0xff]
    %v3454 = vld [vmem:[#allocation24 + $0xe0] sm:$0xff]
    %v3455 = vld [vmem:[#allocation24 + $0xe8] sm:$0xff]
    %v3456 = vld [vmem:[#allocation24 + $0xf0] sm:$0xff]
    %v3457 = vld [vmem:[#allocation24 + $0xf8] sm:$0xff]
    %v3458 = vld [vmem:[#allocation24 + $0x100] sm:$0xff]
    %v3459 = vld [vmem:[#allocation24 + $0x108] sm:$0xff]
    %v3460 = vld [vmem:[#allocation24 + $0x110] sm:$0xff]
    %v3461 = vld [vmem:[#allocation24 + $0x118] sm:$0xff]
    %v3462 = vld [vmem:[#allocation24 + $0x120] sm:$0xff]
    %v3463 = vld [vmem:[#allocation24 + $0x128] sm:$0xff]
    %v3464 = vld [vmem:[#allocation24 + $0x130] sm:$0xff]
    %v3465 = vld [vmem:[#allocation24 + $0x138] sm:$0xff]
    %v3466 = vld [vmem:[#allocation24 + $0x140] sm:$0xff]
    %v3467 = vld [vmem:[#allocation24 + $0x148] sm:$0xff]
    %v3468 = vld [vmem:[#allocation24 + $0x150] sm:$0xff]
    %v3469 = vld [vmem:[#allocation24 + $0x158] sm:$0xff]
    %v3470 = vld [vmem:[#allocation24 + $0x160] sm:$0xff]
    %v3471 = vld [vmem:[#allocation24 + $0x168] sm:$0xff]
    %v3472 = vld [vmem:[#allocation24 + $0x170] sm:$0xff]
    %v3473 = vld [vmem:[#allocation24 + $0x178] sm:$0xff]
    %v3474 = vld [vmem:[#allocation24 + $0x180] sm:$0xff]
    %v3475 = vld [vmem:[#allocation24 + $0x188] sm:$0xff]
    %v3476 = vld [vmem:[#allocation24 + $0x190] sm:$0xff]
    %v3477 = vld [vmem:[#allocation24 + $0x198] sm:$0xff]
    %v3478 = vld [vmem:[#allocation24 + $0x1a0] sm:$0xff]
    %v3479 = vld [vmem:[#allocation24 + $0x1a8] sm:$0xff]
    %v3480 = vld [vmem:[#allocation24 + $0x1b0] sm:$0xff]
    %v3481 = vld [vmem:[#allocation24 + $0x1b8] sm:$0xff]
    %v3482 = vld [vmem:[#allocation24 + $0x1c0] sm:$0xff]
    %v3483 = vld [vmem:[#allocation24 + $0x1c8] sm:$0xff]
    %v3484 = vld [vmem:[#allocation24 + $0x1d0] sm:$0xff]
    %v3485 = vld [vmem:[#allocation24 + $0x1d8] sm:$0xff]
    %v3486 = vld [vmem:[#allocation24 + $0x1e0] sm:$0xff]
    %v3487 = vld [vmem:[#allocation24 + $0x1e8] sm:$0xff]
    %v3488 = vld [vmem:[#allocation24 + $0x1f0] sm:$0xff]
    %v3489 = vld [vmem:[#allocation24 + $0x1f8] sm:$0xff]
    %v3490 = vld [vmem:[#allocation24 + $0x200] sm:$0xff]
    %v3491 = vld [vmem:[#allocation24 + $0x208] sm:$0xff]
    %v3492 = vld [vmem:[#allocation24 + $0x210] sm:$0xff]
    %v3493 = vld [vmem:[#allocation24 + $0x218] sm:$0xff]
    %v3494 = vld [vmem:[#allocation24 + $0x220] sm:$0xff]
    %v3495 = vld [vmem:[#allocation24 + $0x228] sm:$0xff]
    %v3496 = vld [vmem:[#allocation24 + $0x230] sm:$0xff]
    %v3497 = vld [vmem:[#allocation24 + $0x238] sm:$0xff]
    %v3498 = vld [vmem:[#allocation24 + $0x240] sm:$0xff]
    %v3499 = vld [vmem:[#allocation24 + $0x248] sm:$0xff]
    %v3500 = vld [vmem:[#allocation24 + $0x250] sm:$0xff]
    %v3501 = vld [vmem:[#allocation24 + $0x258] sm:$0xff]
    %v3502 = vld [vmem:[#allocation24 + $0x260] sm:$0xff]
    %v3503 = vld [vmem:[#allocation24 + $0x268] sm:$0xff]
    %v3504 = vld [vmem:[#allocation24 + $0x270] sm:$0xff]
    %v3505 = vld [vmem:[#allocation24 + $0x278] sm:$0xff]
    %v3507 = vrot.slane %v3425, 6
    %v3509 = vrot.slane %v3425, 2
    %v3511 = vsel %vm598, 0.0, %v3507
    %v3512 = vsel %vm604, %v3511, 0.0
    %v3513 = vsel %vm2259, %v3512, 0.0
    %v3514 = vsel %vm598, %v3509, 0.0
    %v3516 = vrot.slane %v3513, 4
    %v3518 = vsel %vm598, %v3513, %v3516
    %v3519 = vrot.slane %v3513, 1
    %v3522 = vrot.slane %v3513, 5
    %v3523 = vrot.slane %v3514, 5
    %v3524 = vsel %vm601, %v3522, %v3523
    %v3526 = vsel %vm598, %v3519, %v3524
    %v3527 = vrot.slane %v3513, 2
    %v3529 = vrot.slane %v3514, 6
    %v3531 = vsel %vm598, %v3527, %v3529
    %v3532 = vrot.slane %v3513, 3
    %v3534 = vrot.slane %v3514, 7
    %v3536 = vsel %vm598, %v3532, %v3534
    %v3537 = vsel %vm598, %v3516, %v3514
    %3538 = vmatprep.subr.mxu0 0.0
    %3539 = vmatpush1.msra.mxu0 %v3426
    %3540 = vmatprep.subr.mxu0 0.0
    %3541 = vmatpush1.msra.mxu0 %v3427
    %3542 = vmatprep.subr.mxu0 0.0
    %3543 = vmatpush1.msra.mxu0 %v3428
    %3544 = vmatprep.subr.mxu0 0.0
    %3545 = vmatpush1.msra.mxu0 %v3429
    %3546 = vmatprep.subr.mxu0 0.0
    %3547 = vmatpush1.msra.mxu0 %v3430
    %3548 = vmatprep.subr.mxu0 0.0
    %3549 = vmatpush1.msra.mxu0 %v3431
    %3550 = vmatprep.subr.mxu0 0.0
    %3551 = vmatpush1.msra.mxu0 %v3432
    %3552 = vmatprep.subr.mxu0 0.0
    %3553 = vmatpush1.msra.mxu0 %v3433
    %3554 = vmatprep.subr.mxu0 0.0
    %3555 = vmatpush1.msra.mxu0 %v3434
    %3556 = vmatprep.subr.mxu0 0.0
    %3557 = vmatpush1.msra.mxu0 %v3435
    %3558 = vmatprep.subr.mxu0 0.0
    %3559 = vmatpush1.msra.mxu0 %v3436
    %3560 = vmatprep.subr.mxu0 0.0
    %3561 = vmatpush1.msra.mxu0 %v3437
    %3562 = vmatprep.subr.mxu0 0.0
    %3563 = vmatpush1.msra.mxu0 %v3438
    %3564 = vmatprep.subr.mxu0 0.0
    %3565 = vmatpush1.msra.mxu0 %v3439
    %3566 = vmatprep.subr.mxu0 0.0
    %3567 = vmatpush1.msra.mxu0 %v3440
    %3568 = vmatprep.subr.mxu0 0.0
    %3569 = vmatpush1.msra.mxu0 %v3441
    %3570 = vmatprep.subr.mxu0 0.0
    %3571 = vmatpush1.msra.mxu0 %v3442
    %3572 = vmatprep.subr.mxu0 0.0
    %3573 = vmatpush1.msra.mxu0 %v3443
    %3574 = vmatprep.subr.mxu0 0.0
    %3575 = vmatpush1.msra.mxu0 %v3444
    %3576 = vmatprep.subr.mxu0 0.0
    %3577 = vmatpush1.msra.mxu0 %v3445
    %3578 = vmatprep.subr.mxu0 0.0
    %3579 = vmatpush1.msra.mxu0 %v3446
    %3580 = vmatprep.subr.mxu0 0.0
    %3581 = vmatpush1.msra.mxu0 %v3447
    %3582 = vmatprep.subr.mxu0 0.0
    %3583 = vmatpush1.msra.mxu0 %v3448
    %3584 = vmatprep.subr.mxu0 0.0
    %3585 = vmatpush1.msra.mxu0 %v3449
    %3586 = vmatprep.subr.mxu0 0.0
    %3587 = vmatpush1.msra.mxu0 %v3450
    %3588 = vmatprep.subr.mxu0 0.0
    %3589 = vmatpush1.msra.mxu0 %v3451
    %3590 = vmatprep.subr.mxu0 0.0
    %3591 = vmatpush1.msra.mxu0 %v3452
    %3592 = vmatprep.subr.mxu0 0.0
    %3593 = vmatpush1.msra.mxu0 %v3453
    %3594 = vmatprep.subr.mxu0 0.0
    %3595 = vmatpush1.msra.mxu0 %v3454
    %3596 = vmatprep.subr.mxu0 0.0
    %3597 = vmatpush1.msra.mxu0 %v3455
    %3598 = vmatprep.subr.mxu0 0.0
    %3599 = vmatpush1.msra.mxu0 %v3456
    %3600 = vmatprep.subr.mxu0 0.0
    %3601 = vmatpush1.msra.mxu0 %v3457
    %3602 = vmatprep.mubr.f32.mxu0 %v3526
    %3603 = vmatmul.mubr.f32.gmra.mrb[0].mxu0 %v3518
    %v3604 = vpop.f32.mrb[0].mxu0
    %v3605 = vadd.f32 0.0, %v3604
    %v3606 = vpop.f32.mrb[0].mxu0
    %3607 = vdwg.mxu0
    %3608 = vmatprep.subr.mxu0 0.0
    %3609 = vmatpush1.msra.mxu0 %v3458
    %3610 = vmatprep.subr.mxu0 0.0
    %3611 = vmatpush1.msra.mxu0 %v3459
    %3612 = vmatprep.subr.mxu0 0.0
    %3613 = vmatpush1.msra.mxu0 %v3460
    %3614 = vmatprep.subr.mxu0 0.0
    %3615 = vmatpush1.msra.mxu0 %v3461
    %3616 = vmatprep.subr.mxu0 0.0
    %3617 = vmatpush1.msra.mxu0 %v3462
    %3618 = vmatprep.subr.mxu0 0.0
    %3619 = vmatpush1.msra.mxu0 %v3463
    %3620 = vmatprep.subr.mxu0 0.0
    %3621 = vmatpush1.msra.mxu0 %v3464
    %3622 = vmatprep.subr.mxu0 0.0
    %3623 = vmatpush1.msra.mxu0 %v3465
    %3624 = vmatprep.subr.mxu0 0.0
    %3625 = vmatpush1.msra.mxu0 %v3466
    %3626 = vmatprep.subr.mxu0 0.0
    %3627 = vmatpush1.msra.mxu0 %v3467
    %3628 = vmatprep.subr.mxu0 0.0
    %3629 = vmatpush1.msra.mxu0 %v3468
    %3630 = vmatprep.subr.mxu0 0.0
    %3631 = vmatpush1.msra.mxu0 %v3469
    %3632 = vmatprep.subr.mxu0 0.0
    %3633 = vmatpush1.msra.mxu0 %v3470
    %3634 = vmatprep.subr.mxu0 0.0
    %3635 = vmatpush1.msra.mxu0 %v3471
    %3636 = vmatprep.subr.mxu0 0.0
    %3637 = vmatpush1.msra.mxu0 %v3472
    %3638 = vmatprep.subr.mxu0 0.0
    %3639 = vmatpush1.msra.mxu0 %v3473
    %3640 = vmatprep.subr.mxu0 0.0
    %3641 = vmatpush1.msra.mxu0 %v3474
    %3642 = vmatprep.subr.mxu0 0.0
    %3643 = vmatpush1.msra.mxu0 %v3475
    %3644 = vmatprep.subr.mxu0 0.0
    %3645 = vmatpush1.msra.mxu0 %v3476
    %3646 = vmatprep.subr.mxu0 0.0
    %3647 = vmatpush1.msra.mxu0 %v3477
    %3648 = vmatprep.subr.mxu0 0.0
    %3649 = vmatpush1.msra.mxu0 %v3478
    %3650 = vmatprep.subr.mxu0 0.0
    %3651 = vmatpush1.msra.mxu0 %v3479
    %3652 = vmatprep.subr.mxu0 0.0
    %3653 = vmatpush1.msra.mxu0 %v3480
    %3654 = vmatprep.subr.mxu0 0.0
    %3655 = vmatpush1.msra.mxu0 %v3481
    %3656 = vmatprep.subr.mxu0 0.0
    %3657 = vmatpush1.msra.mxu0 %v3482
    %3658 = vmatprep.subr.mxu0 0.0
    %3659 = vmatpush1.msra.mxu0 %v3483
    %3660 = vmatprep.subr.mxu0 0.0
    %3661 = vmatpush1.msra.mxu0 %v3484
    %3662 = vmatprep.subr.mxu0 0.0
    %3663 = vmatpush1.msra.mxu0 %v3485
    %3664 = vmatprep.subr.mxu0 0.0
    %3665 = vmatpush1.msra.mxu0 %v3486
    %3666 = vmatprep.subr.mxu0 0.0
    %3667 = vmatpush1.msra.mxu0 %v3487
    %3668 = vmatprep.subr.mxu0 0.0
    %3669 = vmatpush1.msra.mxu0 %v3488
    %3670 = vmatprep.subr.mxu0 0.0
    %3671 = vmatpush1.msra.mxu0 %v3489
    %3672 = vmatprep.mubr.f32.mxu0 %v3536
    %3673 = vmatmul.mubr.f32.gmra.mrb[0].mxu0 %v3531
    %v3674 = vpop.f32.mrb[0].mxu0
    %v3675 = vadd.f32 %v3605, %v3674
    %v3676 = vpop.f32.mrb[0].mxu0
    %3677 = vdwg.mxu0
    %3678 = vmatprep.subr.mxu0 0.0
    %3679 = vmatpush1.msra.mxu0 %v3490
    %3680 = vmatprep.subr.mxu0 0.0
    %3681 = vmatpush1.msra.mxu0 %v3491
    %3682 = vmatprep.subr.mxu0 0.0
    %3683 = vmatpush1.msra.mxu0 %v3492
    %3684 = vmatprep.subr.mxu0 0.0
    %3685 = vmatpush1.msra.mxu0 %v3493
    %3686 = vmatprep.subr.mxu0 0.0
    %3687 = vmatpush1.msra.mxu0 %v3494
    %3688 = vmatprep.subr.mxu0 0.0
    %3689 = vmatpush1.msra.mxu0 %v3495
    %3690 = vmatprep.subr.mxu0 0.0
    %3691 = vmatpush1.msra.mxu0 %v3496
    %3692 = vmatprep.subr.mxu0 0.0
    %3693 = vmatpush1.msra.mxu0 %v3497
    %3694 = vmatprep.subr.mxu0 0.0
    %3695 = vmatpush1.msra.mxu0 %v3498
    %3696 = vmatprep.subr.mxu0 0.0
    %3697 = vmatpush1.msra.mxu0 %v3499
    %3698 = vmatprep.subr.mxu0 0.0
    %3699 = vmatpush1.msra.mxu0 %v3500
    %3700 = vmatprep.subr.mxu0 0.0
    %3701 = vmatpush1.msra.mxu0 %v3501
    %3702 = vmatprep.subr.mxu0 0.0
    %3703 = vmatpush1.msra.mxu0 %v3502
    %3704 = vmatprep.subr.mxu0 0.0
    %3705 = vmatpush1.msra.mxu0 %v3503
    %3706 = vmatprep.subr.mxu0 0.0
    %3707 = vmatpush1.msra.mxu0 %v3504
    %3708 = vmatprep.subr.mxu0 0.0
    %3709 = vmatpush1.msra.mxu0 %v3505
    %3710 = vmatprep.subr.mxu0 0.0
    %3711 = vmatpush1.msra.mxu0 0.0
    %3712 = vmatprep.subr.mxu0 0.0
    %3713 = vmatpush1.msra.mxu0 0.0
    %3714 = vmatprep.subr.mxu0 0.0
    %3715 = vmatpush1.msra.mxu0 0.0
    %3716 = vmatprep.subr.mxu0 0.0
    %3717 = vmatpush1.msra.mxu0 0.0
    %3718 = vmatprep.subr.mxu0 0.0
    %3719 = vmatpush1.msra.mxu0 0.0
    %3720 = vmatprep.subr.mxu0 0.0
    %3721 = vmatpush1.msra.mxu0 0.0
    %3722 = vmatprep.subr.mxu0 0.0
    %3723 = vmatpush1.msra.mxu0 0.0
    %3724 = vmatprep.subr.mxu0 0.0
    %3725 = vmatpush1.msra.mxu0 0.0
    %3726 = vmatprep.subr.mxu0 0.0
    %3727 = vmatpush1.msra.mxu0 0.0
    %3728 = vmatprep.subr.mxu0 0.0
    %3729 = vmatpush1.msra.mxu0 0.0
    %3730 = vmatprep.subr.mxu0 0.0
    %3731 = vmatpush1.msra.mxu0 0.0
    %3732 = vmatprep.subr.mxu0 0.0
    %3733 = vmatpush1.msra.mxu0 0.0
    %3734 = vmatprep.subr.mxu0 0.0
    %3735 = vmatpush1.msra.mxu0 0.0
    %3736 = vmatprep.subr.mxu0 0.0
    %3737 = vmatpush1.msra.mxu0 0.0
    %3738 = vmatprep.subr.mxu0 0.0
    %3739 = vmatpush1.msra.mxu0 0.0
    %3740 = vmatprep.subr.mxu0 0.0
    %3741 = vmatpush1.msra.mxu0 0.0
    %3742 = vmatprep.mubr.f32.mxu0 0.0
    %3743 = vmatmul.mubr.f32.gmra.mrb[0].mxu0 %v3537
    %v3744 = vpop.f32.mrb[0].mxu0
    %v3745 = vadd.f32 %v3675, %v3744
    %v3746 = vpop.f32.mrb[0].mxu0
    %3747 = vdwg.mxu0
    %vm3748 = vcmp.lt.s32.totalorder %v690, 2
    %vm3749 = vmand %vm3748, %vm2465
    %vm3750 = vcmp.ge.s32.totalorder %v690, 2
    %v3751 = vsub.s32 %v690, 2
    %v3752 = vmul.u32 %v3751, 2
    %v3753 = vadd.s32 %v3752, 1
    %vm3754 = vcmp.eq.s32.totalorder %v723, %v3753
    %vm3755 = vmand %vm3750, %vm3754
    %vm3756 = vmor %vm3749, %vm3755
    %v3757 = vsel %vm3756, 1, 0
    %v3758 = vcvt.s32.f32 %v3757
    %v3760 = vsel %vm519, %v3758, 0
    %v3763 = vsel %vm604, %v3745, 0
    %3765 = vmatprep.subr.mxu0 0.0
    %3766 = vmatpush1.msra.mxu0 %v3763
    %3767 = vmatprep.subr.mxu0 0.0
    %3768 = vmatpush1.msra.mxu0 0.0
    %3769 = vmatprep.subr.mxu0 0.0
    %3770 = vmatpush1.msra.mxu0 0.0
    %3771 = vmatprep.subr.mxu0 0.0
    %3772 = vmatpush1.msra.mxu0 0.0
    %3773 = vmatprep.subr.mxu0 0.0
    %3774 = vmatpush1.msra.mxu0 0.0
    %3775 = vmatprep.subr.mxu0 0.0
    %3776 = vmatpush1.msra.mxu0 0.0
    %3777 = vmatprep.subr.mxu0 0.0
    %3778 = vmatpush1.msra.mxu0 0.0
    %3779 = vmatprep.subr.mxu0 0.0
    %3780 = vmatpush1.msra.mxu0 0.0
    %3781 = vmatprep.subr.mxu0 0.0
    %3782 = vmatpush1.msra.mxu0 0.0
    %3783 = vmatprep.subr.mxu0 0.0
    %3784 = vmatpush1.msra.mxu0 0.0
    %3785 = vmatprep.subr.mxu0 0.0
    %3786 = vmatpush1.msra.mxu0 0.0
    %3787 = vmatprep.subr.mxu0 0.0
    %3788 = vmatpush1.msra.mxu0 0.0
    %3789 = vmatprep.subr.mxu0 0.0
    %3790 = vmatpush1.msra.mxu0 0.0
    %3791 = vmatprep.subr.mxu0 0.0
    %3792 = vmatpush1.msra.mxu0 0.0
    %3793 = vmatprep.subr.mxu0 0.0
    %3794 = vmatpush1.msra.mxu0 0.0
    %3795 = vmatprep.subr.mxu0 0.0
    %3796 = vmatpush1.msra.mxu0 0.0
    %3797 = vmatprep.subr.mxu0 0.0
    %3798 = vmatpush1.msra.mxu0 0.0
    %3799 = vmatprep.subr.mxu0 0.0
    %3800 = vmatpush1.msra.mxu0 0.0
    %3801 = vmatprep.subr.mxu0 0.0
    %3802 = vmatpush1.msra.mxu0 0.0
    %3803 = vmatprep.subr.mxu0 0.0
    %3804 = vmatpush1.msra.mxu0 0.0
    %3805 = vmatprep.subr.mxu0 0.0
    %3806 = vmatpush1.msra.mxu0 0.0
    %3807 = vmatprep.subr.mxu0 0.0
    %3808 = vmatpush1.msra.mxu0 0.0
    %3809 = vmatprep.subr.mxu0 0.0
    %3810 = vmatpush1.msra.mxu0 0.0
    %3811 = vmatprep.subr.mxu0 0.0
    %3812 = vmatpush1.msra.mxu0 0.0
    %3813 = vmatprep.subr.mxu0 0.0
    %3814 = vmatpush1.msra.mxu0 0.0
    %3815 = vmatprep.subr.mxu0 0.0
    %3816 = vmatpush1.msra.mxu0 0.0
    %3817 = vmatprep.subr.mxu0 0.0
    %3818 = vmatpush1.msra.mxu0 0.0
    %3819 = vmatprep.subr.mxu0 0.0
    %3820 = vmatpush1.msra.mxu0 0.0
    %3821 = vmatprep.subr.mxu0 0.0
    %3822 = vmatpush1.msra.mxu0 0.0
    %3823 = vmatprep.subr.mxu0 0.0
    %3824 = vmatpush1.msra.mxu0 0.0
    %3825 = vmatprep.subr.mxu0 0.0
    %3826 = vmatpush1.msra.mxu0 0.0
    %3827 = vmatprep.subr.mxu0 0.0
    %3828 = vmatpush1.msra.mxu0 0.0
    %3829 = vmatprep.mubr.f32.mxu0 0.0
    %3830 = vmatmul.mubr.f32.gmra.mrb[0].mxu0 %v3760
    %v3831 = vpop.f32.mrb[0].mxu0
    %v3832 = vadd.f32 0.0, %v3831
    %v3833 = vpop.f32.mrb[0].mxu0
    %3834 = vdwg.mxu0
    %v3836 = vrot.slane %v3832, 2
    %v3838 = vmax.f32 %v3832, %v3836
    %v3839 = vld [vmem:[%s29] sm:$0x1]
    %v3841 = vlaneseq
    %v3842 = vshrl.u32 %v3841, 7
    %v3843 = vsub.s32 0, %v3842
    %v3844 = vrot.slane %v3839, %v3843
    %v3846 = vadd.f32 %v3838, %v3844
    %v3847 = vmax.f32 %v3846, 0.0
    %s3848 = scalar_lea.vmem %s29, 1
    %v3849 = vld [vmem:[%s3848] sm:$0x1]
    %s3850 = scalar_lea.vmem %s29, 2
    %v3851 = vld [vmem:[%s3850] sm:$0x1]
    %v3852 = vsel %vm598, %v3847, 0.0
    %v3853 = vrot.slane %v3852, 4
    %v3854 = vadd.f32 %v3852, %v3853
    %v3855 = vrot.slane %v3854, 2
    %v3856 = vadd.f32 %v3854, %v3855
    %v3857 = vrot.slane %v3856, 1
    %v3858 = vadd.f32 %v3856, %v3857
    %v3859 = vmul.f32 %v3858, 0.5
    %v3860 = vsub.f32 %v3847, %v3859
    %v3861 = vmul.f32 %v3860, %v3860
    %v3862 = vsel %vm598, %v3861, 0.0
    %v3863 = vrot.slane %v3862, 4
    %v3864 = vadd.f32 %v3862, %v3863
    %v3865 = vrot.slane %v3864, 2
    %v3866 = vadd.f32 %v3864, %v3865
    %v3867 = vrot.slane %v3866, 1
    %v3868 = vadd.f32 %v3866, %v3867
    %v3869 = vmul.f32 %v3868, 0.5
    %v3870 = vadd.f32 %v3869, 1e-05
    %v3871 = vrsqrt.pop %v3870
    %v3872 = vmul.f32 %v3860, %v3871
    %v3874 = vlaneseq
    %v3875 = vshrl.u32 %v3874, 7
    %v3876 = vsub.s32 0, %v3875
    %v3877 = vrot.slane %v3849, %v3876
    %v3879 = vmul.f32 %v3872, %v3877
    %v3881 = vlaneseq
    %v3882 = vshrl.u32 %v3881, 7
    %v3883 = vsub.s32 0, %v3882
    %v3884 = vrot.slane %v3851, %v3883
    %v3886 = vadd.f32 %v3879, %v3884
    %v3887 = vld [vmem:[#allocation26] sm:$0xff]
    %v3888 = vld [vmem:[#allocation26 + $0x8] sm:$0xff]
    %v3889 = vld [vmem:[#allocation26 + $0x10] sm:$0xff]
    %v3890 = vld [vmem:[#allocation26 + $0x18] sm:$0xff]
    %v3891 = vld [vmem:[#allocation26 + $0x20] sm:$0xff]
    %v3892 = vld [vmem:[#allocation26 + $0x28] sm:$0xff]
    %v3893 = vld [vmem:[#allocation26 + $0x30] sm:$0xff]
    %v3894 = vld [vmem:[#allocation26 + $0x38] sm:$0xff]
    %v3895 = vld [vmem:[#allocation26 + $0x40] sm:$0xff]
    %v3896 = vld [vmem:[#allocation26 + $0x48] sm:$0xff]
    %v3897 = vld [vmem:[#allocation26 + $0x50] sm:$0xff]
    %v3898 = vld [vmem:[#allocation26 + $0x58] sm:$0xff]
    %v3899 = vld [vmem:[#allocation26 + $0x60] sm:$0xff]
    %v3900 = vld [vmem:[#allocation26 + $0x68] sm:$0xff]
    %v3901 = vld [vmem:[#allocation26 + $0x70] sm:$0xff]
    %v3902 = vld [vmem:[#allocation26 + $0x78] sm:$0xff]
    %v3903 = vld [vmem:[%s33] sm:$0x1]
    %v3905 = vlaneseq
    %v3906 = vshrl.u32 %v3905, 7
    %v3907 = vsub.s32 0, %v3906
    %v3908 = vrot.slane %v3903, %v3907
    %3910 = vmatprep.subr.mxu0 0.0
    %3911 = vmatpush1.msra.mxu0 %v3887
    %3912 = vmatprep.subr.mxu0 0.0
    %3913 = vmatpush1.msra.mxu0 %v3888
    %3914 = vmatprep.subr.mxu0 0.0
    %3915 = vmatpush1.msra.mxu0 %v3889
    %3916 = vmatprep.subr.mxu0 0.0
    %3917 = vmatpush1.msra.mxu0 %v3890
    %3918 = vmatprep.subr.mxu0 0.0
    %3919 = vmatpush1.msra.mxu0 %v3891
    %3920 = vmatprep.subr.mxu0 0.0
    %3921 = vmatpush1.msra.mxu0 %v3892
    %3922 = vmatprep.subr.mxu0 0.0
    %3923 = vmatpush1.msra.mxu0 %v3893
    %3924 = vmatprep.subr.mxu0 0.0
    %3925 = vmatpush1.msra.mxu0 %v3894
    %3926 = vmatprep.subr.mxu0 0.0
    %3927 = vmatpush1.msra.mxu0 %v3895
    %3928 = vmatprep.subr.mxu0 0.0
    %3929 = vmatpush1.msra.mxu0 %v3896
    %3930 = vmatprep.subr.mxu0 0.0
    %3931 = vmatpush1.msra.mxu0 %v3897
    %3932 = vmatprep.subr.mxu0 0.0
    %3933 = vmatpush1.msra.mxu0 %v3898
    %3934 = vmatprep.subr.mxu0 0.0
    %3935 = vmatpush1.msra.mxu0 %v3899
    %3936 = vmatprep.subr.mxu0 0.0
    %3937 = vmatpush1.msra.mxu0 %v3900
    %3938 = vmatprep.subr.mxu0 0.0
    %3939 = vmatpush1.msra.mxu0 %v3901
    %3940 = vmatprep.subr.mxu0 0.0
    %3941 = vmatpush1.msra.mxu0 %v3902
    %3942 = vmatprep.subr.mxu0 0.0
    %3943 = vmatpush1.msra.mxu0 0.0
    %3944 = vmatprep.subr.mxu0 0.0
    %3945 = vmatpush1.msra.mxu0 0.0
    %3946 = vmatprep.subr.mxu0 0.0
    %3947 = vmatpush1.msra.mxu0 0.0
    %3948 = vmatprep.subr.mxu0 0.0
    %3949 = vmatpush1.msra.mxu0 0.0
    %3950 = vmatprep.subr.mxu0 0.0
    %3951 = vmatpush1.msra.mxu0 0.0
    %3952 = vmatprep.subr.mxu0 0.0
    %3953 = vmatpush1.msra.mxu0 0.0
    %3954 = vmatprep.subr.mxu0 0.0
    %3955 = vmatpush1.msra.mxu0 0.0
    %3956 = vmatprep.subr.mxu0 0.0
    %3957 = vmatpush1.msra.mxu0 0.0
    %3958 = vmatprep.subr.mxu0 0.0
    %3959 = vmatpush1.msra.mxu0 0.0
    %3960 = vmatprep.subr.mxu0 0.0
    %3961 = vmatpush1.msra.mxu0 0.0
    %3962 = vmatprep.subr.mxu0 0.0
    %3963 = vmatpush1.msra.mxu0 0.0
    %3964 = vmatprep.subr.mxu0 0.0
    %3965 = vmatpush1.msra.mxu0 0.0
    %3966 = vmatprep.subr.mxu0 0.0
    %3967 = vmatpush1.msra.mxu0 0.0
    %3968 = vmatprep.subr.mxu0 0.0
    %3969 = vmatpush1.msra.mxu0 0.0
    %3970 = vmatprep.subr.mxu0 0.0
    %3971 = vmatpush1.msra.mxu0 0.0
    %3972 = vmatprep.subr.mxu0 0.0
    %3973 = vmatpush1.msra.mxu0 0.0
    %3974 = vmatprep.mubr.f32.mxu0 0.0
    %3975 = vmatmul.mubr.f32.gmra.mrb[0].mxu0 %v3886
    %v3976 = vpop.f32.mrb[0].mxu0
    %v3977 = vadd.f32 %v3908, %v3976
    %v3978 = vpop.f32.mrb[0].mxu0
    %3979 = vdwg.mxu0
    %vm3980 = vcmask 58368
    %3981 = vst.msk [vmem:[#allocation46] sm:$0x3] %vm3980, %v3977
    %v3982 = vld [vmem:[#allocation27] sm:$0xff]
    %v3983 = vld [vmem:[%s37] sm:$0x1]
    %v3985 = vlaneseq
    %v3986 = vshrl.u32 %v3985, 7
    %v3987 = vsub.s32 0, %v3986
    %v3988 = vrot.slane %v3983, %v3987
    %v3991 = vsel %vm3300, %v3977, 0
    %3993 = vmatprep.subr.mxu0 0.0
    %3994 = vmatpush1.msra.mxu0 %v3982
    %3995 = vmatprep.subr.mxu0 0.0
    %3996 = vmatpush1.msra.mxu0 0.0
    %3997 = vmatprep.subr.mxu0 0.0
    %3998 = vmatpush1.msra.mxu0 0.0
    %3999 = vmatprep.subr.mxu0 0.0
    %4000 = vmatpush1.msra.mxu0 0.0
    %4001 = vmatprep.subr.mxu0 0.0
    %4002 = vmatpush1.msra.mxu0 0.0
    %4003 = vmatprep.subr.mxu0 0.0
    %4004 = vmatpush1.msra.mxu0 0.0
    %4005 = vmatprep.subr.mxu0 0.0
    %4006 = vmatpush1.msra.mxu0 0.0
    %4007 = vmatprep.subr.mxu0 0.0
    %4008 = vmatpush1.msra.mxu0 0.0
    %4009 = vmatprep.subr.mxu0 0.0
    %4010 = vmatpush1.msra.mxu0 0.0
    %4011 = vmatprep.subr.mxu0 0.0
    %4012 = vmatpush1.msra.mxu0 0.0
    %4013 = vmatprep.subr.mxu0 0.0
    %4014 = vmatpush1.msra.mxu0 0.0
    %4015 = vmatprep.subr.mxu0 0.0
    %4016 = vmatpush1.msra.mxu0 0.0
    %4017 = vmatprep.subr.mxu0 0.0
    %4018 = vmatpush1.msra.mxu0 0.0
    %4019 = vmatprep.subr.mxu0 0.0
    %4020 = vmatpush1.msra.mxu0 0.0
    %4021 = vmatprep.subr.mxu0 0.0
    %4022 = vmatpush1.msra.mxu0 0.0
    %4023 = vmatprep.subr.mxu0 0.0
    %4024 = vmatpush1.msra.mxu0 0.0
    %4025 = vmatprep.subr.mxu0 0.0
    %4026 = vmatpush1.msra.mxu0 0.0
    %4027 = vmatprep.subr.mxu0 0.0
    %4028 = vmatpush1.msra.mxu0 0.0
    %4029 = vmatprep.subr.mxu0 0.0
    %4030 = vmatpush1.msra.mxu0 0.0
    %4031 = vmatprep.subr.mxu0 0.0
    %4032 = vmatpush1.msra.mxu0 0.0
    %4033 = vmatprep.subr.mxu0 0.0
    %4034 = vmatpush1.msra.mxu0 0.0
    %4035 = vmatprep.subr.mxu0 0.0
    %4036 = vmatpush1.msra.mxu0 0.0
    %4037 = vmatprep.subr.mxu0 0.0
    %4038 = vmatpush1.msra.mxu0 0.0
    %4039 = vmatprep.subr.mxu0 0.0
    %4040 = vmatpush1.msra.mxu0 0.0
    %4041 = vmatprep.subr.mxu0 0.0
    %4042 = vmatpush1.msra.mxu0 0.0
    %4043 = vmatprep.subr.mxu0 0.0
    %4044 = vmatpush1.msra.mxu0 0.0
    %4045 = vmatprep.subr.mxu0 0.0
    %4046 = vmatpush1.msra.mxu0 0.0
    %4047 = vmatprep.subr.mxu0 0.0
    %4048 = vmatpush1.msra.mxu0 0.0
    %4049 = vmatprep.subr.mxu0 0.0
    %4050 = vmatpush1.msra.mxu0 0.0
    %4051 = vmatprep.subr.mxu0 0.0
    %4052 = vmatpush1.msra.mxu0 0.0
    %4053 = vmatprep.subr.mxu0 0.0
    %4054 = vmatpush1.msra.mxu0 0.0
    %4055 = vmatprep.subr.mxu0 0.0
    %4056 = vmatpush1.msra.mxu0 0.0
    %4057 = vmatprep.mubr.f32.mxu0 0.0
    %4058 = vmatmul.mubr.f32.gmra.mrb[0].mxu0 %v3991
    %v4059 = vpop.f32.mrb[0].mxu0
    %v4060 = vadd.f32 %v3988, %v4059
    %v4061 = vpop.f32.mrb[0].mxu0
    %4062 = vdwg.mxu0
    %v4063 = vmax.f32 %v4060, 0.0
    %vm4064 = vmor %vm729, %vm864
    %v4065 = vsel %vm4064, 1, 0
    %v4066 = vcvt.s32.f32 %v4065
    %v4068 = vsel %vm516, %v4066, 0
    %v4071 = vsel %vm598, %v4063, 0
    %4073 = vmatprep.subr.mxu0 0.0
    %4074 = vmatpush1.msra.mxu0 %v4071
    %4075 = vmatprep.subr.mxu0 0.0
    %4076 = vmatpush1.msra.mxu0 0.0
    %4077 = vmatprep.subr.mxu0 0.0
    %4078 = vmatpush1.msra.mxu0 0.0
    %4079 = vmatprep.subr.mxu0 0.0
    %4080 = vmatpush1.msra.mxu0 0.0
    %4081 = vmatprep.subr.mxu0 0.0
    %4082 = vmatpush1.msra.mxu0 0.0
    %4083 = vmatprep.subr.mxu0 0.0
    %4084 = vmatpush1.msra.mxu0 0.0
    %4085 = vmatprep.subr.mxu0 0.0
    %4086 = vmatpush1.msra.mxu0 0.0
    %4087 = vmatprep.subr.mxu0 0.0
    %4088 = vmatpush1.msra.mxu0 0.0
    %4089 = vmatprep.subr.mxu0 0.0
    %4090 = vmatpush1.msra.mxu0 0.0
    %4091 = vmatprep.subr.mxu0 0.0
    %4092 = vmatpush1.msra.mxu0 0.0
    %4093 = vmatprep.subr.mxu0 0.0
    %4094 = vmatpush1.msra.mxu0 0.0
    %4095 = vmatprep.subr.mxu0 0.0
    %4096 = vmatpush1.msra.mxu0 0.0
    %4097 = vmatprep.subr.mxu0 0.0
    %4098 = vmatpush1.msra.mxu0 0.0
    %4099 = vmatprep.subr.mxu0 0.0
    %4100 = vmatpush1.msra.mxu0 0.0
    %4101 = vmatprep.subr.mxu0 0.0
    %4102 = vmatpush1.msra.mxu0 0.0
    %4103 = vmatprep.subr.mxu0 0.0
    %4104 = vmatpush1.msra.mxu0 0.0
    %4105 = vmatprep.subr.mxu0 0.0
    %4106 = vmatpush1.msra.mxu0 0.0
    %4107 = vmatprep.subr.mxu0 0.0
    %4108 = vmatpush1.msra.mxu0 0.0
    %4109 = vmatprep.subr.mxu0 0.0
    %4110 = vmatpush1.msra.mxu0 0.0
    %4111 = vmatprep.subr.mxu0 0.0
    %4112 = vmatpush1.msra.mxu0 0.0
    %4113 = vmatprep.subr.mxu0 0.0
    %4114 = vmatpush1.msra.mxu0 0.0
    %4115 = vmatprep.subr.mxu0 0.0
    %4116 = vmatpush1.msra.mxu0 0.0
    %4117 = vmatprep.subr.mxu0 0.0
    %4118 = vmatpush1.msra.mxu0 0.0
    %4119 = vmatprep.subr.mxu0 0.0
    %4120 = vmatpush1.msra.mxu0 0.0
    %4121 = vmatprep.subr.mxu0 0.0
    %4122 = vmatpush1.msra.mxu0 0.0
    %4123 = vmatprep.subr.mxu0 0.0
    %4124 = vmatpush1.msra.mxu0 0.0
    %4125 = vmatprep.subr.mxu0 0.0
    %4126 = vmatpush1.msra.mxu0 0.0
    %4127 = vmatprep.subr.mxu0 0.0
    %4128 = vmatpush1.msra.mxu0 0.0
    %4129 = vmatprep.subr.mxu0 0.0
    %4130 = vmatpush1.msra.mxu0 0.0
    %4131 = vmatprep.subr.mxu0 0.0
    %4132 = vmatpush1.msra.mxu0 0.0
    %4133 = vmatprep.subr.mxu0 0.0
    %4134 = vmatpush1.msra.mxu0 0.0
    %4135 = vmatprep.subr.mxu0 0.0
    %4136 = vmatpush1.msra.mxu0 0.0
    %4137 = vmatprep.mubr.f32.mxu0 0.0
    %4138 = vmatmul.mubr.f32.gmra.mrb[0].mxu0 %v4068
    %v4139 = vpop.f32.mrb[0].mxu0
    %v4140 = vadd.f32 0.0, %v4139
    %v4141 = vpop.f32.mrb[0].mxu0
    %4142 = vdwg.mxu0
    %v4143 = vld [vmem:[#allocation29] sm:$0xff]
    %v4144 = vld [vmem:[#allocation29 + $0x8] sm:$0xff]
    %v4145 = vld [vmem:[#allocation29 + $0x10] sm:$0xff]
    %v4146 = vld [vmem:[#allocation29 + $0x18] sm:$0xff]
    %v4147 = vld [vmem:[#allocation29 + $0x20] sm:$0xff]
    %v4148 = vld [vmem:[#allocation29 + $0x28] sm:$0xff]
    %v4149 = vld [vmem:[#allocation29 + $0x30] sm:$0xff]
    %v4150 = vld [vmem:[#allocation29 + $0x38] sm:$0xff]
    %v4151 = vld [vmem:[#allocation29 + $0x40] sm:$0xff]
    %v4152 = vld [vmem:[#allocation29 + $0x48] sm:$0xff]
    %v4153 = vld [vmem:[#allocation29 + $0x50] sm:$0xff]
    %v4154 = vld [vmem:[#allocation29 + $0x58] sm:$0xff]
    %v4155 = vld [vmem:[#allocation29 + $0x60] sm:$0xff]
    %v4156 = vld [vmem:[#allocation29 + $0x68] sm:$0xff]
    %v4157 = vld [vmem:[#allocation29 + $0x70] sm:$0xff]
    %v4158 = vld [vmem:[#allocation29 + $0x78] sm:$0xff]
    %v4159 = vld [vmem:[#allocation29 + $0x80] sm:$0xff]
    %v4160 = vld [vmem:[#allocation29 + $0x88] sm:$0xff]
    %v4161 = vld [vmem:[#allocation29 + $0x90] sm:$0xff]
    %v4162 = vld [vmem:[#allocation29 + $0x98] sm:$0xff]
    %v4163 = vld [vmem:[#allocation29 + $0xa0] sm:$0xff]
    %v4164 = vld [vmem:[#allocation29 + $0xa8] sm:$0xff]
    %v4165 = vld [vmem:[#allocation29 + $0xb0] sm:$0xff]
    %v4166 = vld [vmem:[#allocation29 + $0xb8] sm:$0xff]
    %v4167 = vld [vmem:[#allocation29 + $0xc0] sm:$0xff]
    %v4168 = vld [vmem:[#allocation29 + $0xc8] sm:$0xff]
    %v4169 = vld [vmem:[#allocation29 + $0xd0] sm:$0xff]
    %v4170 = vld [vmem:[#allocation29 + $0xd8] sm:$0xff]
    %v4171 = vld [vmem:[#allocation29 + $0xe0] sm:$0xff]
    %v4172 = vld [vmem:[#allocation29 + $0xe8] sm:$0xff]
    %v4173 = vld [vmem:[#allocation29 + $0xf0] sm:$0xff]
    %v4174 = vld [vmem:[#allocation29 + $0xf8] sm:$0xff]
    %v4175 = vld [vmem:[#allocation29 + $0x100] sm:$0xff]
    %v4176 = vld [vmem:[#allocation29 + $0x108] sm:$0xff]
    %v4177 = vld [vmem:[#allocation29 + $0x110] sm:$0xff]
    %v4178 = vld [vmem:[#allocation29 + $0x118] sm:$0xff]
    %v4179 = vld [vmem:[#allocation29 + $0x120] sm:$0xff]
    %v4180 = vld [vmem:[#allocation29 + $0x128] sm:$0xff]
    %v4181 = vld [vmem:[#allocation29 + $0x130] sm:$0xff]
    %v4182 = vld [vmem:[#allocation29 + $0x138] sm:$0xff]
    %v4183 = vld [vmem:[#allocation29 + $0x140] sm:$0xff]
    %v4184 = vld [vmem:[#allocation29 + $0x148] sm:$0xff]
    %v4185 = vld [vmem:[#allocation29 + $0x150] sm:$0xff]
    %v4186 = vld [vmem:[#allocation29 + $0x158] sm:$0xff]
    %v4187 = vld [vmem:[#allocation29 + $0x160] sm:$0xff]
    %v4188 = vld [vmem:[#allocation29 + $0x168] sm:$0xff]
    %v4189 = vld [vmem:[#allocation29 + $0x170] sm:$0xff]
    %v4190 = vld [vmem:[#allocation29 + $0x178] sm:$0xff]
    %v4191 = vld [vmem:[#allocation29 + $0x180] sm:$0xff]
    %v4192 = vld [vmem:[#allocation29 + $0x188] sm:$0xff]
    %v4193 = vld [vmem:[#allocation29 + $0x190] sm:$0xff]
    %v4194 = vld [vmem:[#allocation29 + $0x198] sm:$0xff]
    %v4195 = vld [vmem:[#allocation29 + $0x1a0] sm:$0xff]
    %v4196 = vld [vmem:[#allocation29 + $0x1a8] sm:$0xff]
    %v4197 = vld [vmem:[#allocation29 + $0x1b0] sm:$0xff]
    %v4198 = vld [vmem:[#allocation29 + $0x1b8] sm:$0xff]
    %v4199 = vld [vmem:[#allocation29 + $0x1c0] sm:$0xff]
    %v4200 = vld [vmem:[#allocation29 + $0x1c8] sm:$0xff]
    %v4201 = vld [vmem:[#allocation29 + $0x1d0] sm:$0xff]
    %v4202 = vld [vmem:[#allocation29 + $0x1d8] sm:$0xff]
    %v4203 = vld [vmem:[#allocation29 + $0x1e0] sm:$0xff]
    %v4204 = vld [vmem:[#allocation29 + $0x1e8] sm:$0xff]
    %v4205 = vld [vmem:[#allocation29 + $0x1f0] sm:$0xff]
    %v4206 = vld [vmem:[#allocation29 + $0x1f8] sm:$0xff]
    %v4207 = vld [vmem:[#allocation29 + $0x200] sm:$0xff]
    %v4208 = vld [vmem:[#allocation29 + $0x208] sm:$0xff]
    %v4209 = vld [vmem:[#allocation29 + $0x210] sm:$0xff]
    %v4210 = vld [vmem:[#allocation29 + $0x218] sm:$0xff]
    %v4211 = vld [vmem:[#allocation29 + $0x220] sm:$0xff]
    %v4212 = vld [vmem:[#allocation29 + $0x228] sm:$0xff]
    %v4213 = vld [vmem:[#allocation29 + $0x230] sm:$0xff]
    %v4214 = vld [vmem:[#allocation29 + $0x238] sm:$0xff]
    %v4215 = vld [vmem:[#allocation29 + $0x240] sm:$0xff]
    %v4216 = vld [vmem:[#allocation29 + $0x248] sm:$0xff]
    %v4217 = vld [vmem:[#allocation29 + $0x250] sm:$0xff]
    %v4218 = vld [vmem:[#allocation29 + $0x258] sm:$0xff]
    %v4219 = vld [vmem:[#allocation29 + $0x260] sm:$0xff]
    %v4220 = vld [vmem:[#allocation29 + $0x268] sm:$0xff]
    %v4221 = vld [vmem:[#allocation29 + $0x270] sm:$0xff]
    %v4222 = vld [vmem:[#allocation29 + $0x278] sm:$0xff]
    %v4224 = vrot.slane %v4140, 6
    %v4226 = vrot.slane %v4140, 2
    %v4228 = vsel %vm598, 0.0, %v4224
    %v4229 = vsel %vm604, %v4228, 0.0
    %v4230 = vsel %vm2259, %v4229, 0.0
    %v4231 = vsel %vm598, %v4226, 0.0
    %v4233 = vrot.slane %v4230, 4
    %v4235 = vsel %vm598, %v4230, %v4233
    %v4236 = vrot.slane %v4230, 1
    %v4239 = vrot.slane %v4230, 5
    %v4240 = vrot.slane %v4231, 5
    %v4241 = vsel %vm601, %v4239, %v4240
    %v4243 = vsel %vm598, %v4236, %v4241
    %v4244 = vrot.slane %v4230, 2
    %v4246 = vrot.slane %v4231, 6
    %v4248 = vsel %vm598, %v4244, %v4246
    %v4249 = vrot.slane %v4230, 3
    %v4251 = vrot.slane %v4231, 7
    %v4253 = vsel %vm598, %v4249, %v4251
    %v4254 = vsel %vm598, %v4233, %v4231
    %v4255 = vld [vmem:[#allocation30] sm:$0x1]
    %v4257 = vlaneseq
    %v4258 = vshrl.u32 %v4257, 7
    %v4259 = vsub.s32 0, %v4258
    %v4260 = vrot.slane %v4255, %v4259
    %4262 = vmatprep.subr.mxu0 0.0
    %4263 = vmatpush1.msra.mxu0 %v4143
    %4264 = vmatprep.subr.mxu0 0.0
    %4265 = vmatpush1.msra.mxu0 %v4144
    %4266 = vmatprep.subr.mxu0 0.0
    %4267 = vmatpush1.msra.mxu0 %v4145
    %4268 = vmatprep.subr.mxu0 0.0
    %4269 = vmatpush1.msra.mxu0 %v4146
    %4270 = vmatprep.subr.mxu0 0.0
    %4271 = vmatpush1.msra.mxu0 %v4147
    %4272 = vmatprep.subr.mxu0 0.0
    %4273 = vmatpush1.msra.mxu0 %v4148
    %4274 = vmatprep.subr.mxu0 0.0
    %4275 = vmatpush1.msra.mxu0 %v4149
    %4276 = vmatprep.subr.mxu0 0.0
    %4277 = vmatpush1.msra.mxu0 %v4150
    %4278 = vmatprep.subr.mxu0 0.0
    %4279 = vmatpush1.msra.mxu0 %v4151
    %4280 = vmatprep.subr.mxu0 0.0
    %4281 = vmatpush1.msra.mxu0 %v4152
    %4282 = vmatprep.subr.mxu0 0.0
    %4283 = vmatpush1.msra.mxu0 %v4153
    %4284 = vmatprep.subr.mxu0 0.0
    %4285 = vmatpush1.msra.mxu0 %v4154
    %4286 = vmatprep.subr.mxu0 0.0
    %4287 = vmatpush1.msra.mxu0 %v4155
    %4288 = vmatprep.subr.mxu0 0.0
    %4289 = vmatpush1.msra.mxu0 %v4156
    %4290 = vmatprep.subr.mxu0 0.0
    %4291 = vmatpush1.msra.mxu0 %v4157
    %4292 = vmatprep.subr.mxu0 0.0
    %4293 = vmatpush1.msra.mxu0 %v4158
    %4294 = vmatprep.subr.mxu0 0.0
    %4295 = vmatpush1.msra.mxu0 %v4159
    %4296 = vmatprep.subr.mxu0 0.0
    %4297 = vmatpush1.msra.mxu0 %v4160
    %4298 = vmatprep.subr.mxu0 0.0
    %4299 = vmatpush1.msra.mxu0 %v4161
    %4300 = vmatprep.subr.mxu0 0.0
    %4301 = vmatpush1.msra.mxu0 %v4162
    %4302 = vmatprep.subr.mxu0 0.0
    %4303 = vmatpush1.msra.mxu0 %v4163
    %4304 = vmatprep.subr.mxu0 0.0
    %4305 = vmatpush1.msra.mxu0 %v4164
    %4306 = vmatprep.subr.mxu0 0.0
    %4307 = vmatpush1.msra.mxu0 %v4165
    %4308 = vmatprep.subr.mxu0 0.0
    %4309 = vmatpush1.msra.mxu0 %v4166
    %4310 = vmatprep.subr.mxu0 0.0
    %4311 = vmatpush1.msra.mxu0 %v4167
    %4312 = vmatprep.subr.mxu0 0.0
    %4313 = vmatpush1.msra.mxu0 %v4168
    %4314 = vmatprep.subr.mxu0 0.0
    %4315 = vmatpush1.msra.mxu0 %v4169
    %4316 = vmatprep.subr.mxu0 0.0
    %4317 = vmatpush1.msra.mxu0 %v4170
    %4318 = vmatprep.subr.mxu0 0.0
    %4319 = vmatpush1.msra.mxu0 %v4171
    %4320 = vmatprep.subr.mxu0 0.0
    %4321 = vmatpush1.msra.mxu0 %v4172
    %4322 = vmatprep.subr.mxu0 0.0
    %4323 = vmatpush1.msra.mxu0 %v4173
    %4324 = vmatprep.subr.mxu0 0.0
    %4325 = vmatpush1.msra.mxu0 %v4174
    %4326 = vmatprep.mubr.f32.mxu0 %v4243
    %4327 = vmatmul.mubr.f32.gmra.mrb[0].mxu0 %v4235
    %v4328 = vpop.f32.mrb[0].mxu0
    %v4329 = vadd.f32 %v4260, %v4328
    %v4330 = vpop.f32.mrb[0].mxu0
    %4331 = vdwg.mxu0
    %4332 = vmatprep.subr.mxu0 0.0
    %4333 = vmatpush1.msra.mxu0 %v4175
    %4334 = vmatprep.subr.mxu0 0.0
    %4335 = vmatpush1.msra.mxu0 %v4176
    %4336 = vmatprep.subr.mxu0 0.0
    %4337 = vmatpush1.msra.mxu0 %v4177
    %4338 = vmatprep.subr.mxu0 0.0
    %4339 = vmatpush1.msra.mxu0 %v4178
    %4340 = vmatprep.subr.mxu0 0.0
    %4341 = vmatpush1.msra.mxu0 %v4179
    %4342 = vmatprep.subr.mxu0 0.0
    %4343 = vmatpush1.msra.mxu0 %v4180
    %4344 = vmatprep.subr.mxu0 0.0
    %4345 = vmatpush1.msra.mxu0 %v4181
    %4346 = vmatprep.subr.mxu0 0.0
    %4347 = vmatpush1.msra.mxu0 %v4182
    %4348 = vmatprep.subr.mxu0 0.0
    %4349 = vmatpush1.msra.mxu0 %v4183
    %4350 = vmatprep.subr.mxu0 0.0
    %4351 = vmatpush1.msra.mxu0 %v4184
    %4352 = vmatprep.subr.mxu0 0.0
    %4353 = vmatpush1.msra.mxu0 %v4185
    %4354 = vmatprep.subr.mxu0 0.0
    %4355 = vmatpush1.msra.mxu0 %v4186
    %4356 = vmatprep.subr.mxu0 0.0
    %4357 = vmatpush1.msra.mxu0 %v4187
    %4358 = vmatprep.subr.mxu0 0.0
    %4359 = vmatpush1.msra.mxu0 %v4188
    %4360 = vmatprep.subr.mxu0 0.0
    %4361 = vmatpush1.msra.mxu0 %v4189
    %4362 = vmatprep.subr.mxu0 0.0
    %4363 = vmatpush1.msra.mxu0 %v4190
    %4364 = vmatprep.subr.mxu0 0.0
    %4365 = vmatpush1.msra.mxu0 %v4191
    %4366 = vmatprep.subr.mxu0 0.0
    %4367 = vmatpush1.msra.mxu0 %v4192
    %4368 = vmatprep.subr.mxu0 0.0
    %4369 = vmatpush1.msra.mxu0 %v4193
    %4370 = vmatprep.subr.mxu0 0.0
    %4371 = vmatpush1.msra.mxu0 %v4194
    %4372 = vmatprep.subr.mxu0 0.0
    %4373 = vmatpush1.msra.mxu0 %v4195
    %4374 = vmatprep.subr.mxu0 0.0
    %4375 = vmatpush1.msra.mxu0 %v4196
    %4376 = vmatprep.subr.mxu0 0.0
    %4377 = vmatpush1.msra.mxu0 %v4197
    %4378 = vmatprep.subr.mxu0 0.0
    %4379 = vmatpush1.msra.mxu0 %v4198
    %4380 = vmatprep.subr.mxu0 0.0
    %4381 = vmatpush1.msra.mxu0 %v4199
    %4382 = vmatprep.subr.mxu0 0.0
    %4383 = vmatpush1.msra.mxu0 %v4200
    %4384 = vmatprep.subr.mxu0 0.0
    %4385 = vmatpush1.msra.mxu0 %v4201
    %4386 = vmatprep.subr.mxu0 0.0
    %4387 = vmatpush1.msra.mxu0 %v4202
    %4388 = vmatprep.subr.mxu0 0.0
    %4389 = vmatpush1.msra.mxu0 %v4203
    %4390 = vmatprep.subr.mxu0 0.0
    %4391 = vmatpush1.msra.mxu0 %v4204
    %4392 = vmatprep.subr.mxu0 0.0
    %4393 = vmatpush1.msra.mxu0 %v4205
    %4394 = vmatprep.subr.mxu0 0.0
    %4395 = vmatpush1.msra.mxu0 %v4206
    %4396 = vmatprep.mubr.f32.mxu0 %v4253
    %4397 = vmatmul.mubr.f32.gmra.mrb[0].mxu0 %v4248
    %v4398 = vpop.f32.mrb[0].mxu0
    %v4399 = vadd.f32 %v4329, %v4398
    %v4400 = vpop.f32.mrb[0].mxu0
    %4401 = vdwg.mxu0
    %4402 = vmatprep.subr.mxu0 0.0
    %4403 = vmatpush1.msra.mxu0 %v4207
    %4404 = vmatprep.subr.mxu0 0.0
    %4405 = vmatpush1.msra.mxu0 %v4208
    %4406 = vmatprep.subr.mxu0 0.0
    %4407 = vmatpush1.msra.mxu0 %v4209
    %4408 = vmatprep.subr.mxu0 0.0
    %4409 = vmatpush1.msra.mxu0 %v4210
    %4410 = vmatprep.subr.mxu0 0.0
    %4411 = vmatpush1.msra.mxu0 %v4211
    %4412 = vmatprep.subr.mxu0 0.0
    %4413 = vmatpush1.msra.mxu0 %v4212
    %4414 = vmatprep.subr.mxu0 0.0
    %4415 = vmatpush1.msra.mxu0 %v4213
    %4416 = vmatprep.subr.mxu0 0.0
    %4417 = vmatpush1.msra.mxu0 %v4214
    %4418 = vmatprep.subr.mxu0 0.0
    %4419 = vmatpush1.msra.mxu0 %v4215
    %4420 = vmatprep.subr.mxu0 0.0
    %4421 = vmatpush1.msra.mxu0 %v4216
    %4422 = vmatprep.subr.mxu0 0.0
    %4423 = vmatpush1.msra.mxu0 %v4217
    %4424 = vmatprep.subr.mxu0 0.0
    %4425 = vmatpush1.msra.mxu0 %v4218
    %4426 = vmatprep.subr.mxu0 0.0
    %4427 = vmatpush1.msra.mxu0 %v4219
    %4428 = vmatprep.subr.mxu0 0.0
    %4429 = vmatpush1.msra.mxu0 %v4220
    %4430 = vmatprep.subr.mxu0 0.0
    %4431 = vmatpush1.msra.mxu0 %v4221
    %4432 = vmatprep.subr.mxu0 0.0
    %4433 = vmatpush1.msra.mxu0 %v4222
    %4434 = vmatprep.subr.mxu0 0.0
    %4435 = vmatpush1.msra.mxu0 0.0
    %4436 = vmatprep.subr.mxu0 0.0
    %4437 = vmatpush1.msra.mxu0 0.0
    %4438 = vmatprep.subr.mxu0 0.0
    %4439 = vmatpush1.msra.mxu0 0.0
    %4440 = vmatprep.subr.mxu0 0.0
    %4441 = vmatpush1.msra.mxu0 0.0
    %4442 = vmatprep.subr.mxu0 0.0
    %4443 = vmatpush1.msra.mxu0 0.0
    %4444 = vmatprep.subr.mxu0 0.0
    %4445 = vmatpush1.msra.mxu0 0.0
    %4446 = vmatprep.subr.mxu0 0.0
    %4447 = vmatpush1.msra.mxu0 0.0
    %4448 = vmatprep.subr.mxu0 0.0
    %4449 = vmatpush1.msra.mxu0 0.0
    %4450 = vmatprep.subr.mxu0 0.0
    %4451 = vmatpush1.msra.mxu0 0.0
    %4452 = vmatprep.subr.mxu0 0.0
    %4453 = vmatpush1.msra.mxu0 0.0
    %4454 = vmatprep.subr.mxu0 0.0
    %4455 = vmatpush1.msra.mxu0 0.0
    %4456 = vmatprep.subr.mxu0 0.0
    %4457 = vmatpush1.msra.mxu0 0.0
    %4458 = vmatprep.subr.mxu0 0.0
    %4459 = vmatpush1.msra.mxu0 0.0
    %4460 = vmatprep.subr.mxu0 0.0
    %4461 = vmatpush1.msra.mxu0 0.0
    %4462 = vmatprep.subr.mxu0 0.0
    %4463 = vmatpush1.msra.mxu0 0.0
    %4464 = vmatprep.subr.mxu0 0.0
    %4465 = vmatpush1.msra.mxu0 0.0
    %4466 = vmatprep.mubr.f32.mxu0 0.0
    %4467 = vmatmul.mubr.f32.gmra.mrb[0].mxu0 %v4254
    %v4468 = vpop.f32.mrb[0].mxu0
    %v4469 = vadd.f32 %v4399, %v4468
    %v4470 = vpop.f32.mrb[0].mxu0
    %4471 = vdwg.mxu0
    %v4472 = vmax.f32 %v4469, 0.0
    %s4473 = scalar_lea.vmem [#allocation30], 1
    %v4474 = vld [vmem:[%s4473] sm:$0x1]
    %s4475 = scalar_lea.vmem [#allocation30], 2
    %v4476 = vld [vmem:[%s4475] sm:$0x1]
    %v4477 = vsel %vm604, %v4472, 0.0
    %v4478 = vrot.slane %v4477, 4
    %v4479 = vadd.f32 %v4477, %v4478
    %v4480 = vrot.slane %v4479, 2
    %v4481 = vadd.f32 %v4479, %v4480
    %v4482 = vrot.slane %v4481, 1
    %v4483 = vadd.f32 %v4481, %v4482
    %v4484 = vmul.f32 %v4483, 0.25
    %v4485 = vsub.f32 %v4472, %v4484
    %v4486 = vmul.f32 %v4485, %v4485
    %v4487 = vsel %vm604, %v4486, 0.0
    %v4488 = vrot.slane %v4487, 4
    %v4489 = vadd.f32 %v4487, %v4488
    %v4490 = vrot.slane %v4489, 2
    %v4491 = vadd.f32 %v4489, %v4490
    %v4492 = vrot.slane %v4491, 1
    %v4493 = vadd.f32 %v4491, %v4492
    %v4494 = vmul.f32 %v4493, 0.25
    %v4495 = vadd.f32 %v4494, 1e-05
    %v4496 = vrsqrt.pop %v4495
    %v4497 = vmul.f32 %v4485, %v4496
    %v4499 = vlaneseq
    %v4500 = vshrl.u32 %v4499, 7
    %v4501 = vsub.s32 0, %v4500
    %v4502 = vrot.slane %v4474, %v4501
    %v4504 = vmul.f32 %v4497, %v4502
    %v4506 = vlaneseq
    %v4507 = vshrl.u32 %v4506, 7
    %v4508 = vsub.s32 0, %v4507
    %v4509 = vrot.slane %v4476, %v4508
    %v4511 = vadd.f32 %v4504, %v4509
    %v4512 = vsel %vm519, %v4066, 0
    %v4515 = vsel %vm604, %v4511, 0
    %4517 = vmatprep.subr.mxu0 0.0
    %4518 = vmatpush1.msra.mxu0 %v4515
    %4519 = vmatprep.subr.mxu0 0.0
    %4520 = vmatpush1.msra.mxu0 0.0
    %4521 = vmatprep.subr.mxu0 0.0
    %4522 = vmatpush1.msra.mxu0 0.0
    %4523 = vmatprep.subr.mxu0 0.0
    %4524 = vmatpush1.msra.mxu0 0.0
    %4525 = vmatprep.subr.mxu0 0.0
    %4526 = vmatpush1.msra.mxu0 0.0
    %4527 = vmatprep.subr.mxu0 0.0
    %4528 = vmatpush1.msra.mxu0 0.0
    %4529 = vmatprep.subr.mxu0 0.0
    %4530 = vmatpush1.msra.mxu0 0.0
    %4531 = vmatprep.subr.mxu0 0.0
    %4532 = vmatpush1.msra.mxu0 0.0
    %4533 = vmatprep.subr.mxu0 0.0
    %4534 = vmatpush1.msra.mxu0 0.0
    %4535 = vmatprep.subr.mxu0 0.0
    %4536 = vmatpush1.msra.mxu0 0.0
    %4537 = vmatprep.subr.mxu0 0.0
    %4538 = vmatpush1.msra.mxu0 0.0
    %4539 = vmatprep.subr.mxu0 0.0
    %4540 = vmatpush1.msra.mxu0 0.0
    %4541 = vmatprep.subr.mxu0 0.0
    %4542 = vmatpush1.msra.mxu0 0.0
    %4543 = vmatprep.subr.mxu0 0.0
    %4544 = vmatpush1.msra.mxu0 0.0
    %4545 = vmatprep.subr.mxu0 0.0
    %4546 = vmatpush1.msra.mxu0 0.0
    %4547 = vmatprep.subr.mxu0 0.0
    %4548 = vmatpush1.msra.mxu0 0.0
    %4549 = vmatprep.subr.mxu0 0.0
    %4550 = vmatpush1.msra.mxu0 0.0
    %4551 = vmatprep.subr.mxu0 0.0
    %4552 = vmatpush1.msra.mxu0 0.0
    %4553 = vmatprep.subr.mxu0 0.0
    %4554 = vmatpush1.msra.mxu0 0.0
    %4555 = vmatprep.subr.mxu0 0.0
    %4556 = vmatpush1.msra.mxu0 0.0
    %4557 = vmatprep.subr.mxu0 0.0
    %4558 = vmatpush1.msra.mxu0 0.0
    %4559 = vmatprep.subr.mxu0 0.0
    %4560 = vmatpush1.msra.mxu0 0.0
    %4561 = vmatprep.subr.mxu0 0.0
    %4562 = vmatpush1.msra.mxu0 0.0
    %4563 = vmatprep.subr.mxu0 0.0
    %4564 = vmatpush1.msra.mxu0 0.0
    %4565 = vmatprep.subr.mxu0 0.0
    %4566 = vmatpush1.msra.mxu0 0.0
    %4567 = vmatprep.subr.mxu0 0.0
    %4568 = vmatpush1.msra.mxu0 0.0
    %4569 = vmatprep.subr.mxu0 0.0
    %4570 = vmatpush1.msra.mxu0 0.0
    %4571 = vmatprep.subr.mxu0 0.0
    %4572 = vmatpush1.msra.mxu0 0.0
    %4573 = vmatprep.subr.mxu0 0.0
    %4574 = vmatpush1.msra.mxu0 0.0
    %4575 = vmatprep.subr.mxu0 0.0
    %4576 = vmatpush1.msra.mxu0 0.0
    %4577 = vmatprep.subr.mxu0 0.0
    %4578 = vmatpush1.msra.mxu0 0.0
    %4579 = vmatprep.subr.mxu0 0.0
    %4580 = vmatpush1.msra.mxu0 0.0
    %4581 = vmatprep.mubr.f32.mxu0 0.0
    %4582 = vmatmul.mubr.f32.gmra.mrb[0].mxu0 %v4512
    %v4583 = vpop.f32.mrb[0].mxu0
    %v4584 = vadd.f32 0.0, %v4583
    %v4585 = vpop.f32.mrb[0].mxu0
    %4586 = vdwg.mxu0
    %v4587 = vld [vmem:[#allocation32] sm:$0xff]
    %v4588 = vld [vmem:[#allocation32 + $0x8] sm:$0xff]
    %v4589 = vld [vmem:[#allocation32 + $0x10] sm:$0xff]
    %v4590 = vld [vmem:[#allocation32 + $0x18] sm:$0xff]
    %v4591 = vld [vmem:[#allocation32 + $0x20] sm:$0xff]
    %v4592 = vld [vmem:[#allocation32 + $0x28] sm:$0xff]
    %v4593 = vld [vmem:[#allocation32 + $0x30] sm:$0xff]
    %v4594 = vld [vmem:[#allocation32 + $0x38] sm:$0xff]
    %v4595 = vld [vmem:[#allocation32 + $0x40] sm:$0xff]
    %v4596 = vld [vmem:[#allocation32 + $0x48] sm:$0xff]
    %v4597 = vld [vmem:[#allocation32 + $0x50] sm:$0xff]
    %v4598 = vld [vmem:[#allocation32 + $0x58] sm:$0xff]
    %v4599 = vld [vmem:[#allocation32 + $0x60] sm:$0xff]
    %v4600 = vld [vmem:[#allocation32 + $0x68] sm:$0xff]
    %v4601 = vld [vmem:[#allocation32 + $0x70] sm:$0xff]
    %v4602 = vld [vmem:[#allocation32 + $0x78] sm:$0xff]
    %v4603 = vld [vmem:[#allocation32 + $0x80] sm:$0xff]
    %v4604 = vld [vmem:[#allocation32 + $0x88] sm:$0xff]
    %v4605 = vld [vmem:[#allocation32 + $0x90] sm:$0xff]
    %v4606 = vld [vmem:[#allocation32 + $0x98] sm:$0xff]
    %v4607 = vld [vmem:[#allocation32 + $0xa0] sm:$0xff]
    %v4608 = vld [vmem:[#allocation32 + $0xa8] sm:$0xff]
    %v4609 = vld [vmem:[#allocation32 + $0xb0] sm:$0xff]
    %v4610 = vld [vmem:[#allocation32 + $0xb8] sm:$0xff]
    %v4611 = vld [vmem:[#allocation32 + $0xc0] sm:$0xff]
    %v4612 = vld [vmem:[#allocation32 + $0xc8] sm:$0xff]
    %v4613 = vld [vmem:[#allocation32 + $0xd0] sm:$0xff]
    %v4614 = vld [vmem:[#allocation32 + $0xd8] sm:$0xff]
    %v4615 = vld [vmem:[#allocation32 + $0xe0] sm:$0xff]
    %v4616 = vld [vmem:[#allocation32 + $0xe8] sm:$0xff]
    %v4617 = vld [vmem:[#allocation32 + $0xf0] sm:$0xff]
    %v4618 = vld [vmem:[#allocation32 + $0xf8] sm:$0xff]
    %v4619 = vld [vmem:[#allocation32 + $0x100] sm:$0xff]
    %v4620 = vld [vmem:[#allocation32 + $0x108] sm:$0xff]
    %v4621 = vld [vmem:[#allocation32 + $0x110] sm:$0xff]
    %v4622 = vld [vmem:[#allocation32 + $0x118] sm:$0xff]
    %v4623 = vld [vmem:[#allocation32 + $0x120] sm:$0xff]
    %v4624 = vld [vmem:[#allocation32 + $0x128] sm:$0xff]
    %v4625 = vld [vmem:[#allocation32 + $0x130] sm:$0xff]
    %v4626 = vld [vmem:[#allocation32 + $0x138] sm:$0xff]
    %v4627 = vld [vmem:[#allocation32 + $0x140] sm:$0xff]
    %v4628 = vld [vmem:[#allocation32 + $0x148] sm:$0xff]
    %v4629 = vld [vmem:[#allocation32 + $0x150] sm:$0xff]
    %v4630 = vld [vmem:[#allocation32 + $0x158] sm:$0xff]
    %v4631 = vld [vmem:[#allocation32 + $0x160] sm:$0xff]
    %v4632 = vld [vmem:[#allocation32 + $0x168] sm:$0xff]
    %v4633 = vld [vmem:[#allocation32 + $0x170] sm:$0xff]
    %v4634 = vld [vmem:[#allocation32 + $0x178] sm:$0xff]
    %v4635 = vld [vmem:[#allocation32 + $0x180] sm:$0xff]
    %v4636 = vld [vmem:[#allocation32 + $0x188] sm:$0xff]
    %v4637 = vld [vmem:[#allocation32 + $0x190] sm:$0xff]
    %v4638 = vld [vmem:[#allocation32 + $0x198] sm:$0xff]
    %v4639 = vld [vmem:[#allocation32 + $0x1a0] sm:$0xff]
    %v4640 = vld [vmem:[#allocation32 + $0x1a8] sm:$0xff]
    %v4641 = vld [vmem:[#allocation32 + $0x1b0] sm:$0xff]
    %v4642 = vld [vmem:[#allocation32 + $0x1b8] sm:$0xff]
    %v4643 = vld [vmem:[#allocation32 + $0x1c0] sm:$0xff]
    %v4644 = vld [vmem:[#allocation32 + $0x1c8] sm:$0xff]
    %v4645 = vld [vmem:[#allocation32 + $0x1d0] sm:$0xff]
    %v4646 = vld [vmem:[#allocation32 + $0x1d8] sm:$0xff]
    %v4647 = vld [vmem:[#allocation32 + $0x1e0] sm:$0xff]
    %v4648 = vld [vmem:[#allocation32 + $0x1e8] sm:$0xff]
    %v4649 = vld [vmem:[#allocation32 + $0x1f0] sm:$0xff]
    %v4650 = vld [vmem:[#allocation32 + $0x1f8] sm:$0xff]
    %v4651 = vld [vmem:[#allocation32 + $0x200] sm:$0xff]
    %v4652 = vld [vmem:[#allocation32 + $0x208] sm:$0xff]
    %v4653 = vld [vmem:[#allocation32 + $0x210] sm:$0xff]
    %v4654 = vld [vmem:[#allocation32 + $0x218] sm:$0xff]
    %v4655 = vld [vmem:[#allocation32 + $0x220] sm:$0xff]
    %v4656 = vld [vmem:[#allocation32 + $0x228] sm:$0xff]
    %v4657 = vld [vmem:[#allocation32 + $0x230] sm:$0xff]
    %v4658 = vld [vmem:[#allocation32 + $0x238] sm:$0xff]
    %v4659 = vld [vmem:[#allocation32 + $0x240] sm:$0xff]
    %v4660 = vld [vmem:[#allocation32 + $0x248] sm:$0xff]
    %v4661 = vld [vmem:[#allocation32 + $0x250] sm:$0xff]
    %v4662 = vld [vmem:[#allocation32 + $0x258] sm:$0xff]
    %v4663 = vld [vmem:[#allocation32 + $0x260] sm:$0xff]
    %v4664 = vld [vmem:[#allocation32 + $0x268] sm:$0xff]
    %v4665 = vld [vmem:[#allocation32 + $0x270] sm:$0xff]
    %v4666 = vld [vmem:[#allocation32 + $0x278] sm:$0xff]
    %v4668 = vrot.slane %v4584, 5
    %v4670 = vrot.slane %v4584, 7
    %v4672 = vsel %vm601, 0.0, %v4668
    %v4673 = vsel %vm2280, %v4672, 0.0
    %v4674 = vsel %vm611, 0.0, %v4670
    %v4675 = vsel %vm595, %v4670, 0.0
    %v4677 = vrot.slane %v4674, 4
    %v4679 = vsel %vm2259, %v4673, %v4677
    %v4681 = vrot.slane %v4673, 1
    %v4684 = vrot.slane %v4674, 5
    %v4685 = vrot.slane %v4675, 5
    %v4686 = vsel %vm601, %v4684, %v4685
    %v4689 = vsel %vm2259, %v4681, %v4684
    %v4690 = vrot.slane %v4673, 2
    %v4692 = vrot.slane %v4674, 6
    %v4693 = vrot.slane %v4675, 6
    %v4694 = vsel %vm598, %v4692, %v4693
    %v4697 = vsel %vm2259, %v4690, %v4692
    %v4698 = vrot.slane %v4673, 3
    %v4699 = vrot.slane %v4674, 3
    %v4700 = vsel %vm611, %v4698, %v4699
    %v4702 = vrot.slane %v4674, 7
    %v4703 = vrot.slane %v4675, 7
    %v4704 = vsel %vm595, %v4702, %v4703
    %v4707 = vsel %vm2259, %v4700, %v4702
    %v4708 = vrot.slane %v4673, 4
    %v4709 = vsel %vm604, %v4708, %v4677
    %v4711 = vsel %vm2259, %v4709, %v4674
    %v4712 = vld [vmem:[#allocation33] sm:$0x1]
    %v4714 = vlaneseq
    %v4715 = vshrl.u32 %v4714, 7
    %v4716 = vsub.s32 0, %v4715
    %v4717 = vrot.slane %v4712, %v4716
    %4719 = vmatprep.subr.mxu0 0.0
    %4720 = vmatpush1.msra.mxu0 %v4587
    %4721 = vmatprep.subr.mxu0 0.0
    %4722 = vmatpush1.msra.mxu0 %v4588
    %4723 = vmatprep.subr.mxu0 0.0
    %4724 = vmatpush1.msra.mxu0 %v4589
    %4725 = vmatprep.subr.mxu0 0.0
    %4726 = vmatpush1.msra.mxu0 %v4590
    %4727 = vmatprep.subr.mxu0 0.0
    %4728 = vmatpush1.msra.mxu0 %v4591
    %4729 = vmatprep.subr.mxu0 0.0
    %4730 = vmatpush1.msra.mxu0 %v4592
    %4731 = vmatprep.subr.mxu0 0.0
    %4732 = vmatpush1.msra.mxu0 %v4593
    %4733 = vmatprep.subr.mxu0 0.0
    %4734 = vmatpush1.msra.mxu0 %v4594
    %4735 = vmatprep.subr.mxu0 0.0
    %4736 = vmatpush1.msra.mxu0 %v4595
    %4737 = vmatprep.subr.mxu0 0.0
    %4738 = vmatpush1.msra.mxu0 %v4596
    %4739 = vmatprep.subr.mxu0 0.0
    %4740 = vmatpush1.msra.mxu0 %v4597
    %4741 = vmatprep.subr.mxu0 0.0
    %4742 = vmatpush1.msra.mxu0 %v4598
    %4743 = vmatprep.subr.mxu0 0.0
    %4744 = vmatpush1.msra.mxu0 %v4599
    %4745 = vmatprep.subr.mxu0 0.0
    %4746 = vmatpush1.msra.mxu0 %v4600
    %4747 = vmatprep.subr.mxu0 0.0
    %4748 = vmatpush1.msra.mxu0 %v4601
    %4749 = vmatprep.subr.mxu0 0.0
    %4750 = vmatpush1.msra.mxu0 %v4602
    %4751 = vmatprep.subr.mxu0 0.0
    %4752 = vmatpush1.msra.mxu0 %v4603
    %4753 = vmatprep.subr.mxu0 0.0
    %4754 = vmatpush1.msra.mxu0 %v4604
    %4755 = vmatprep.subr.mxu0 0.0
    %4756 = vmatpush1.msra.mxu0 %v4605
    %4757 = vmatprep.subr.mxu0 0.0
    %4758 = vmatpush1.msra.mxu0 %v4606
    %4759 = vmatprep.subr.mxu0 0.0
    %4760 = vmatpush1.msra.mxu0 %v4607
    %4761 = vmatprep.subr.mxu0 0.0
    %4762 = vmatpush1.msra.mxu0 %v4608
    %4763 = vmatprep.subr.mxu0 0.0
    %4764 = vmatpush1.msra.mxu0 %v4609
    %4765 = vmatprep.subr.mxu0 0.0
    %4766 = vmatpush1.msra.mxu0 %v4610
    %4767 = vmatprep.subr.mxu0 0.0
    %4768 = vmatpush1.msra.mxu0 %v4611
    %4769 = vmatprep.subr.mxu0 0.0
    %4770 = vmatpush1.msra.mxu0 %v4612
    %4771 = vmatprep.subr.mxu0 0.0
    %4772 = vmatpush1.msra.mxu0 %v4613
    %4773 = vmatprep.subr.mxu0 0.0
    %4774 = vmatpush1.msra.mxu0 %v4614
    %4775 = vmatprep.subr.mxu0 0.0
    %4776 = vmatpush1.msra.mxu0 %v4615
    %4777 = vmatprep.subr.mxu0 0.0
    %4778 = vmatpush1.msra.mxu0 %v4616
    %4779 = vmatprep.subr.mxu0 0.0
    %4780 = vmatpush1.msra.mxu0 %v4617
    %4781 = vmatprep.subr.mxu0 0.0
    %4782 = vmatpush1.msra.mxu0 %v4618
    %4783 = vmatprep.mubr.f32.mxu0 %v4689
    %4784 = vmatmul.mubr.f32.gmra.mrb[0].mxu0 %v4679
    %v4785 = vpop.f32.mrb[0].mxu0
    %v4786 = vadd.f32 %v4717, %v4785
    %v4787 = vpop.f32.mrb[0].mxu0
    %4788 = vmatprep.mubr.f32.mxu0 %v4686
    %4789 = vmatmul.mubr.f32.gmra.mrb[0].mxu0 %v4677
    %v4790 = vpop.f32.mrb[0].mxu0
    %v4791 = vadd.f32 %v4717, %v4790
    %v4792 = vpop.f32.mrb[0].mxu0
    %4793 = vdwg.mxu0
    %4794 = vmatprep.subr.mxu0 0.0
    %4795 = vmatpush1.msra.mxu0 %v4619
    %4796 = vmatprep.subr.mxu0 0.0
    %4797 = vmatpush1.msra.mxu0 %v4620
    %4798 = vmatprep.subr.mxu0 0.0
    %4799 = vmatpush1.msra.mxu0 %v4621
    %4800 = vmatprep.subr.mxu0 0.0
    %4801 = vmatpush1.msra.mxu0 %v4622
    %4802 = vmatprep.subr.mxu0 0.0
    %4803 = vmatpush1.msra.mxu0 %v4623
    %4804 = vmatprep.subr.mxu0 0.0
    %4805 = vmatpush1.msra.mxu0 %v4624
    %4806 = vmatprep.subr.mxu0 0.0
    %4807 = vmatpush1.msra.mxu0 %v4625
    %4808 = vmatprep.subr.mxu0 0.0
    %4809 = vmatpush1.msra.mxu0 %v4626
    %4810 = vmatprep.subr.mxu0 0.0
    %4811 = vmatpush1.msra.mxu0 %v4627
    %4812 = vmatprep.subr.mxu0 0.0
    %4813 = vmatpush1.msra.mxu0 %v4628
    %4814 = vmatprep.subr.mxu0 0.0
    %4815 = vmatpush1.msra.mxu0 %v4629
    %4816 = vmatprep.subr.mxu0 0.0
    %4817 = vmatpush1.msra.mxu0 %v4630
    %4818 = vmatprep.subr.mxu0 0.0
    %4819 = vmatpush1.msra.mxu0 %v4631
    %4820 = vmatprep.subr.mxu0 0.0
    %4821 = vmatpush1.msra.mxu0 %v4632
    %4822 = vmatprep.subr.mxu0 0.0
    %4823 = vmatpush1.msra.mxu0 %v4633
    %4824 = vmatprep.subr.mxu0 0.0
    %4825 = vmatpush1.msra.mxu0 %v4634
    %4826 = vmatprep.subr.mxu0 0.0
    %4827 = vmatpush1.msra.mxu0 %v4635
    %4828 = vmatprep.subr.mxu0 0.0
    %4829 = vmatpush1.msra.mxu0 %v4636
    %4830 = vmatprep.subr.mxu0 0.0
    %4831 = vmatpush1.msra.mxu0 %v4637
    %4832 = vmatprep.subr.mxu0 0.0
    %4833 = vmatpush1.msra.mxu0 %v4638
    %4834 = vmatprep.subr.mxu0 0.0
    %4835 = vmatpush1.msra.mxu0 %v4639
    %4836 = vmatprep.subr.mxu0 0.0
    %4837 = vmatpush1.msra.mxu0 %v4640
    %4838 = vmatprep.subr.mxu0 0.0
    %4839 = vmatpush1.msra.mxu0 %v4641
    %4840 = vmatprep.subr.mxu0 0.0
    %4841 = vmatpush1.msra.mxu0 %v4642
    %4842 = vmatprep.subr.mxu0 0.0
    %4843 = vmatpush1.msra.mxu0 %v4643
    %4844 = vmatprep.subr.mxu0 0.0
    %4845 = vmatpush1.msra.mxu0 %v4644
    %4846 = vmatprep.subr.mxu0 0.0
    %4847 = vmatpush1.msra.mxu0 %v4645
    %4848 = vmatprep.subr.mxu0 0.0
    %4849 = vmatpush1.msra.mxu0 %v4646
    %4850 = vmatprep.subr.mxu0 0.0
    %4851 = vmatpush1.msra.mxu0 %v4647
    %4852 = vmatprep.subr.mxu0 0.0
    %4853 = vmatpush1.msra.mxu0 %v4648
    %4854 = vmatprep.subr.mxu0 0.0
    %4855 = vmatpush1.msra.mxu0 %v4649
    %4856 = vmatprep.subr.mxu0 0.0
    %4857 = vmatpush1.msra.mxu0 %v4650
    %4858 = vmatprep.mubr.f32.mxu0 %v4707
    %4859 = vmatmul.mubr.f32.gmra.mrb[0].mxu0 %v4697
    %v4860 = vpop.f32.mrb[0].mxu0
    %v4861 = vadd.f32 %v4786, %v4860
    %v4862 = vpop.f32.mrb[0].mxu0
    %4863 = vmatprep.mubr.f32.mxu0 %v4704
    %4864 = vmatmul.mubr.f32.gmra.mrb[0].mxu0 %v4694
    %v4865 = vpop.f32.mrb[0].mxu0
    %v4866 = vadd.f32 %v4791, %v4865
    %v4867 = vpop.f32.mrb[0].mxu0
    %4868 = vdwg.mxu0
    %4869 = vmatprep.subr.mxu0 0.0
    %4870 = vmatpush1.msra.mxu0 %v4651
    %4871 = vmatprep.subr.mxu0 0.0
    %4872 = vmatpush1.msra.mxu0 %v4652
    %4873 = vmatprep.subr.mxu0 0.0
    %4874 = vmatpush1.msra.mxu0 %v4653
    %4875 = vmatprep.subr.mxu0 0.0
    %4876 = vmatpush1.msra.mxu0 %v4654
    %4877 = vmatprep.subr.mxu0 0.0
    %4878 = vmatpush1.msra.mxu0 %v4655
    %4879 = vmatprep.subr.mxu0 0.0
    %4880 = vmatpush1.msra.mxu0 %v4656
    %4881 = vmatprep.subr.mxu0 0.0
    %4882 = vmatpush1.msra.mxu0 %v4657
    %4883 = vmatprep.subr.mxu0 0.0
    %4884 = vmatpush1.msra.mxu0 %v4658
    %4885 = vmatprep.subr.mxu0 0.0
    %4886 = vmatpush1.msra.mxu0 %v4659
    %4887 = vmatprep.subr.mxu0 0.0
    %4888 = vmatpush1.msra.mxu0 %v4660
    %4889 = vmatprep.subr.mxu0 0.0
    %4890 = vmatpush1.msra.mxu0 %v4661
    %4891 = vmatprep.subr.mxu0 0.0
    %4892 = vmatpush1.msra.mxu0 %v4662
    %4893 = vmatprep.subr.mxu0 0.0
    %4894 = vmatpush1.msra.mxu0 %v4663
    %4895 = vmatprep.subr.mxu0 0.0
    %4896 = vmatpush1.msra.mxu0 %v4664
    %4897 = vmatprep.subr.mxu0 0.0
    %4898 = vmatpush1.msra.mxu0 %v4665
    %4899 = vmatprep.subr.mxu0 0.0
    %4900 = vmatpush1.msra.mxu0 %v4666
    %4901 = vmatprep.subr.mxu0 0.0
    %4902 = vmatpush1.msra.mxu0 0.0
    %4903 = vmatprep.subr.mxu0 0.0
    %4904 = vmatpush1.msra.mxu0 0.0
    %4905 = vmatprep.subr.mxu0 0.0
    %4906 = vmatpush1.msra.mxu0 0.0
    %4907 = vmatprep.subr.mxu0 0.0
    %4908 = vmatpush1.msra.mxu0 0.0
    %4909 = vmatprep.subr.mxu0 0.0
    %4910 = vmatpush1.msra.mxu0 0.0
    %4911 = vmatprep.subr.mxu0 0.0
    %4912 = vmatpush1.msra.mxu0 0.0
    %4913 = vmatprep.subr.mxu0 0.0
    %4914 = vmatpush1.msra.mxu0 0.0
    %4915 = vmatprep.subr.mxu0 0.0
    %4916 = vmatpush1.msra.mxu0 0.0
    %4917 = vmatprep.subr.mxu0 0.0
    %4918 = vmatpush1.msra.mxu0 0.0
    %4919 = vmatprep.subr.mxu0 0.0
    %4920 = vmatpush1.msra.mxu0 0.0
    %4921 = vmatprep.subr.mxu0 0.0
    %4922 = vmatpush1.msra.mxu0 0.0
    %4923 = vmatprep.subr.mxu0 0.0
    %4924 = vmatpush1.msra.mxu0 0.0
    %4925 = vmatprep.subr.mxu0 0.0
    %4926 = vmatpush1.msra.mxu0 0.0
    %4927 = vmatprep.subr.mxu0 0.0
    %4928 = vmatpush1.msra.mxu0 0.0
    %4929 = vmatprep.subr.mxu0 0.0
    %4930 = vmatpush1.msra.mxu0 0.0
    %4931 = vmatprep.subr.mxu0 0.0
    %4932 = vmatpush1.msra.mxu0 0.0
    %4933 = vmatprep.mubr.f32.mxu0 0.0
    %4934 = vmatmul.mubr.f32.gmra.mrb[0].mxu0 %v4711
    %v4935 = vpop.f32.mrb[0].mxu0
    %v4936 = vadd.f32 %v4861, %v4935
    %v4937 = vpop.f32.mrb[0].mxu0
    %4938 = vmatprep.mubr.f32.mxu0 0.0
    %4939 = vmatmul.mubr.f32.gmra.mrb[0].mxu0 %v4675
    %v4940 = vpop.f32.mrb[0].mxu0
    %v4941 = vadd.f32 %v4866, %v4940
    %v4942 = vpop.f32.mrb[0].mxu0
    %4943 = vdwg.mxu0
    %v4944 = vmax.f32 %v4936, 0.0
    %v4945 = vmax.f32 %v4941, 0.0
    %s4946 = scalar_lea.vmem [#allocation33], 1
    %v4947 = vld [vmem:[%s4946] sm:$0x1]
    %s4948 = scalar_lea.vmem [#allocation33], 2
    %v4949 = vld [vmem:[%s4948] sm:$0x1]
    %v4950 = vsel %vm1315, %v4944, 0.0
    %vm4951 = vcmask 519168
    %v4952 = vsel %vm4951, %v4945, 0.0
    %v4953 = vadd.f32 %v4950, %v4952
    %v4954 = vrot.slane %v4953, 4
    %v4955 = vadd.f32 %v4953, %v4954
    %v4956 = vrot.slane %v4955, 2
    %v4957 = vadd.f32 %v4955, %v4956
    %v4958 = vrot.slane %v4957, 1
    %v4959 = vadd.f32 %v4957, %v4958
    %v4960 = vmul.f32 %v4959, 0.083333336
    %v4961 = vsub.f32 %v4944, %v4960
    %v4962 = vsub.f32 %v4945, %v4960
    %v4963 = vmul.f32 %v4961, %v4961
    %v4964 = vmul.f32 %v4962, %v4962
    %v4965 = vsel %vm1315, %v4963, 0.0
    %v4966 = vsel %vm4951, %v4964, 0.0
    %v4967 = vadd.f32 %v4965, %v4966
    %v4968 = vrot.slane %v4967, 4
    %v4969 = vadd.f32 %v4967, %v4968
    %v4970 = vrot.slane %v4969, 2
    %v4971 = vadd.f32 %v4969, %v4970
    %v4972 = vrot.slane %v4971, 1
    %v4973 = vadd.f32 %v4971, %v4972
    %v4974 = vmul.f32 %v4973, 0.083333336
    %v4975 = vadd.f32 %v4974, 1e-05
    %v4976 = vrsqrt.pop %v4975
    %v4977 = vmul.f32 %v4961, %v4976
    %v4978 = vmul.f32 %v4962, %v4976
    %v4980 = vlaneseq
    %v4981 = vshrl.u32 %v4980, 7
    %v4982 = vsub.s32 0, %v4981
    %v4983 = vrot.slane %v4947, %v4982
    %v4985 = vmul.f32 %v4977, %v4983
    %v4986 = vmul.f32 %v4978, %v4983
    %v4988 = vlaneseq
    %v4989 = vshrl.u32 %v4988, 7
    %v4990 = vsub.s32 0, %v4989
    %v4991 = vrot.slane %v4949, %v4990
    %v4993 = vadd.f32 %v4985, %v4991
    %v4994 = vadd.f32 %v4986, %v4991
    %vm4995 = vmor %vm731, %vm866
    %vm4996 = vmor %vm733, %vm868
    %v4997 = vsel %vm4995, 1, 0
    %v4998 = vsel %vm4996, 1, 0
    %v4999 = vcvt.s32.f32 %v4997
    %v5000 = vcvt.s32.f32 %v4998
    %vm5001 = vcmask 97280
    %v5002 = vsel %vm5001, %v4066, 0
    %v5005 = vsel %vm5001, %v4999, 0
    %v5008 = vsel %vm5001, %v5000, 0
    %v5011 = vsel %vm604, %v4994, 0
    %5013 = vmatprep.subr.mxu0 0.0
    %5014 = vmatpush1.msra.mxu0 %v4993
    %5015 = vmatprep.subr.mxu0 0.0
    %5016 = vmatpush1.msra.mxu0 %v5011
    %5017 = vmatprep.subr.mxu0 0.0
    %5018 = vmatpush1.msra.mxu0 0.0
    %5019 = vmatprep.subr.mxu0 0.0
    %5020 = vmatpush1.msra.mxu0 0.0
    %5021 = vmatprep.subr.mxu0 0.0
    %5022 = vmatpush1.msra.mxu0 0.0
    %5023 = vmatprep.subr.mxu0 0.0
    %5024 = vmatpush1.msra.mxu0 0.0
    %5025 = vmatprep.subr.mxu0 0.0
    %5026 = vmatpush1.msra.mxu0 0.0
    %5027 = vmatprep.subr.mxu0 0.0
    %5028 = vmatpush1.msra.mxu0 0.0
    %5029 = vmatprep.subr.mxu0 0.0
    %5030 = vmatpush1.msra.mxu0 0.0
    %5031 = vmatprep.subr.mxu0 0.0
    %5032 = vmatpush1.msra.mxu0 0.0
    %5033 = vmatprep.subr.mxu0 0.0
    %5034 = vmatpush1.msra.mxu0 0.0
    %5035 = vmatprep.subr.mxu0 0.0
    %5036 = vmatpush1.msra.mxu0 0.0
    %5037 = vmatprep.subr.mxu0 0.0
    %5038 = vmatpush1.msra.mxu0 0.0
    %5039 = vmatprep.subr.mxu0 0.0
    %5040 = vmatpush1.msra.mxu0 0.0
    %5041 = vmatprep.subr.mxu0 0.0
    %5042 = vmatpush1.msra.mxu0 0.0
    %5043 = vmatprep.subr.mxu0 0.0
    %5044 = vmatpush1.msra.mxu0 0.0
    %5045 = vmatprep.subr.mxu0 0.0
    %5046 = vmatpush1.msra.mxu0 0.0
    %5047 = vmatprep.subr.mxu0 0.0
    %5048 = vmatpush1.msra.mxu0 0.0
    %5049 = vmatprep.subr.mxu0 0.0
    %5050 = vmatpush1.msra.mxu0 0.0
    %5051 = vmatprep.subr.mxu0 0.0
    %5052 = vmatpush1.msra.mxu0 0.0
    %5053 = vmatprep.subr.mxu0 0.0
    %5054 = vmatpush1.msra.mxu0 0.0
    %5055 = vmatprep.subr.mxu0 0.0
    %5056 = vmatpush1.msra.mxu0 0.0
    %5057 = vmatprep.subr.mxu0 0.0
    %5058 = vmatpush1.msra.mxu0 0.0
    %5059 = vmatprep.subr.mxu0 0.0
    %5060 = vmatpush1.msra.mxu0 0.0
    %5061 = vmatprep.subr.mxu0 0.0
    %5062 = vmatpush1.msra.mxu0 0.0
    %5063 = vmatprep.subr.mxu0 0.0
    %5064 = vmatpush1.msra.mxu0 0.0
    %5065 = vmatprep.subr.mxu0 0.0
    %5066 = vmatpush1.msra.mxu0 0.0
    %5067 = vmatprep.subr.mxu0 0.0
    %5068 = vmatpush1.msra.mxu0 0.0
    %5069 = vmatprep.subr.mxu0 0.0
    %5070 = vmatpush1.msra.mxu0 0.0
    %5071 = vmatprep.subr.mxu0 0.0
    %5072 = vmatpush1.msra.mxu0 0.0
    %5073 = vmatprep.subr.mxu0 0.0
    %5074 = vmatpush1.msra.mxu0 0.0
    %5075 = vmatprep.subr.mxu0 0.0
    %5076 = vmatpush1.msra.mxu0 0.0
    %5077 = vmatprep.mubr.f32.mxu0 0.0
    %5078 = vmatmul.mubr.f32.gmra.mrb[0].mxu0 %v5002
    %v5079 = vpop.f32.mrb[0].mxu0
    %v5080 = vadd.f32 0.0, %v5079
    %v5081 = vpop.f32.mrb[0].mxu0
    %5082 = vmatprep.mubr.f32.mxu0 0.0
    %5083 = vmatmul.mubr.f32.gmra.mrb[0].mxu0 %v5005
    %v5084 = vpop.f32.mrb[0].mxu0
    %v5085 = vadd.f32 0.0, %v5084
    %v5086 = vpop.f32.mrb[0].mxu0
    %5087 = vmatprep.mubr.f32.mxu0 0.0
    %5088 = vmatmul.mubr.f32.gmra.mrb[0].mxu0 %v5008
    %v5089 = vpop.f32.mrb[0].mxu0
    %v5090 = vadd.f32 0.0, %v5089
    %v5091 = vpop.f32.mrb[0].mxu0
    %5092 = vdwg.mxu0
    %v5093 = vld [vmem:[#allocation35] sm:$0xff]
    %v5094 = vld [vmem:[#allocation35 + $0x8] sm:$0xff]
    %v5095 = vld [vmem:[#allocation35 + $0x10] sm:$0xff]
    %v5096 = vld [vmem:[#allocation35 + $0x18] sm:$0xff]
    %v5097 = vld [vmem:[#allocation35 + $0x20] sm:$0xff]
    %v5098 = vld [vmem:[#allocation35 + $0x28] sm:$0xff]
    %v5099 = vld [vmem:[#allocation35 + $0x30] sm:$0xff]
    %v5100 = vld [vmem:[#allocation35 + $0x38] sm:$0xff]
    %v5101 = vld [vmem:[#allocation35 + $0x40] sm:$0xff]
    %v5102 = vld [vmem:[#allocation35 + $0x48] sm:$0xff]
    %v5103 = vld [vmem:[#allocation35 + $0x50] sm:$0xff]
    %v5104 = vld [vmem:[#allocation35 + $0x58] sm:$0xff]
    %v5105 = vld [vmem:[#allocation35 + $0x60] sm:$0xff]
    %v5106 = vld [vmem:[#allocation35 + $0x68] sm:$0xff]
    %v5107 = vld [vmem:[#allocation35 + $0x70] sm:$0xff]
    %v5108 = vld [vmem:[#allocation35 + $0x78] sm:$0xff]
    %v5109 = vld [vmem:[#allocation35 + $0x80] sm:$0xff]
    %v5110 = vld [vmem:[#allocation35 + $0x88] sm:$0xff]
    %v5111 = vld [vmem:[#allocation35 + $0x90] sm:$0xff]
    %v5112 = vld [vmem:[#allocation35 + $0x98] sm:$0xff]
    %v5113 = vld [vmem:[#allocation35 + $0xa0] sm:$0xff]
    %v5114 = vld [vmem:[#allocation35 + $0xa8] sm:$0xff]
    %v5115 = vld [vmem:[#allocation35 + $0xb0] sm:$0xff]
    %v5116 = vld [vmem:[#allocation35 + $0xb8] sm:$0xff]
    %v5117 = vld [vmem:[#allocation35 + $0xc0] sm:$0xff]
    %v5118 = vld [vmem:[#allocation35 + $0xc8] sm:$0xff]
    %v5119 = vld [vmem:[#allocation35 + $0xd0] sm:$0xff]
    %v5120 = vld [vmem:[#allocation35 + $0xd8] sm:$0xff]
    %v5121 = vld [vmem:[#allocation35 + $0xe0] sm:$0xff]
    %v5122 = vld [vmem:[#allocation35 + $0xe8] sm:$0xff]
    %v5123 = vld [vmem:[#allocation35 + $0xf0] sm:$0xff]
    %v5124 = vld [vmem:[#allocation35 + $0xf8] sm:$0xff]
    %v5125 = vld [vmem:[#allocation35 + $0x100] sm:$0xff]
    %v5126 = vld [vmem:[#allocation35 + $0x108] sm:$0xff]
    %v5127 = vld [vmem:[#allocation35 + $0x110] sm:$0xff]
    %v5128 = vld [vmem:[#allocation35 + $0x118] sm:$0xff]
    %v5129 = vld [vmem:[#allocation35 + $0x120] sm:$0xff]
    %v5130 = vld [vmem:[#allocation35 + $0x128] sm:$0xff]
    %v5131 = vld [vmem:[#allocation35 + $0x130] sm:$0xff]
    %v5132 = vld [vmem:[#allocation35 + $0x138] sm:$0xff]
    %v5135 = vrot.slane %v5080, 6
    %v5136 = vrot.slane %v5085, 6
    %v5137 = vsel %vm598, %v5135, %v5136
    %v5141 = vrot.slane %v5085, 2
    %v5142 = vrot.slane %v5090, 2
    %v5143 = vsel %vm2259, %v5141, %v5142
    %v5146 = vsel %vm598, 0.0, %v5135
    %v5147 = vsel %vm2259, %v5137, 0.0
    %v5148 = vsel %vm598, 0.0, %v5143
    %v5149 = vsel %vm2259, %v5142, 0.0
    %v5152 = vrot.slane %v5148, 4
    %v5153 = vrot.slane %v5149, 4
    %v5154 = vsel %vm604, %v5152, %v5153
    %v5157 = vsel %vm604, %v5147, %v5152
    %v5160 = vrot.slane %v5146, 1
    %v5161 = vrot.slane %v5147, 1
    %v5162 = vsel %vm2280, %v5160, %v5161
    %v5164 = vrot.slane %v5148, 5
    %v5165 = vrot.slane %v5149, 5
    %v5166 = vsel %vm601, %v5164, %v5165
    %v5168 = vsel %vm604, %v5161, %v5164
    %v5169 = vrot.slane %v5146, 2
    %v5170 = vrot.slane %v5147, 2
    %v5171 = vsel %vm2259, %v5169, %v5170
    %v5174 = vrot.slane %v5148, 6
    %v5175 = vrot.slane %v5149, 6
    %v5176 = vsel %vm598, %v5174, %v5175
    %v5179 = vsel %vm604, %v5170, %v5174
    %v5180 = vrot.slane %v5146, 3
    %v5181 = vrot.slane %v5147, 3
    %v5182 = vsel %vm611, %v5180, %v5181
    %v5184 = vrot.slane %v5148, 7
    %v5185 = vrot.slane %v5149, 7
    %v5186 = vsel %vm595, %v5184, %v5185
    %v5188 = vsel %vm604, %v5181, %v5184
    %v5189 = vrot.slane %v5146, 4
    %v5190 = vrot.slane %v5147, 4
    %v5191 = vsel %vm604, %v5189, %v5190
    %v5193 = vsel %vm604, %v5190, %v5148
    %5195 = vrot.lane.b32.xlu0 %v5162, 64
    %v5196 = vpop.permute.xlu0 %5195
    %5197 = vrot.lane.b32.xlu0 %v5168, 64
    %v5198 = vpop.permute.xlu0 %5197
    %5199 = vrot.lane.b32.xlu0 %v5166, 64
    %v5200 = vpop.permute.xlu0 %5199
    %5205 = vrot.lane.b32.xlu0 %v5182, 64
    %v5206 = vpop.permute.xlu0 %5205
    %5207 = vrot.lane.b32.xlu0 %v5188, 64
    %v5208 = vpop.permute.xlu0 %5207
    %5209 = vrot.lane.b32.xlu0 %v5186, 64
    %v5210 = vpop.permute.xlu0 %5209
    %v5214 = vsel %vm1315, %v5146, %v5196
    %v5215 = vsel %vm1315, %v5157, %v5198
    %v5216 = vsel %vm1315, %v5154, %v5200
    %v5217 = vsel %vm1315, %v5171, %v5206
    %v5218 = vsel %vm1315, %v5179, %v5208
    %v5219 = vsel %vm1315, %v5176, %v5210
    %v5220 = vld [vmem:[#allocation36] sm:$0x1]
    %v5222 = vlaneseq
    %v5223 = vshrl.u32 %v5222, 7
    %v5224 = vsub.s32 0, %v5223
    %v5225 = vrot.slane %v5220, %v5224
    %v5227 = vsel %vm1315, %v5191, 0
    %v5230 = vsel %vm1315, %v5193, 0
    %v5232 = vsel %vm1315, %v5149, 0
    %5234 = vmatprep.subr.mxu0 0.0
    %5235 = vmatpush1.msra.mxu0 %v5093
    %5236 = vmatprep.subr.mxu0 0.0
    %5237 = vmatpush1.msra.mxu0 %v5094
    %5238 = vmatprep.subr.mxu0 0.0
    %5239 = vmatpush1.msra.mxu0 %v5095
    %5240 = vmatprep.subr.mxu0 0.0
    %5241 = vmatpush1.msra.mxu0 %v5096
    %5242 = vmatprep.subr.mxu0 0.0
    %5243 = vmatpush1.msra.mxu0 %v5097
    %5244 = vmatprep.subr.mxu0 0.0
    %5245 = vmatpush1.msra.mxu0 %v5098
    %5246 = vmatprep.subr.mxu0 0.0
    %5247 = vmatpush1.msra.mxu0 %v5099
    %5248 = vmatprep.subr.mxu0 0.0
    %5249 = vmatpush1.msra.mxu0 %v5100
    %5250 = vmatprep.subr.mxu0 0.0
    %5251 = vmatpush1.msra.mxu0 %v5101
    %5252 = vmatprep.subr.mxu0 0.0
    %5253 = vmatpush1.msra.mxu0 %v5102
    %5254 = vmatprep.subr.mxu0 0.0
    %5255 = vmatpush1.msra.mxu0 %v5103
    %5256 = vmatprep.subr.mxu0 0.0
    %5257 = vmatpush1.msra.mxu0 %v5104
    %5258 = vmatprep.subr.mxu0 0.0
    %5259 = vmatpush1.msra.mxu0 %v5105
    %5260 = vmatprep.subr.mxu0 0.0
    %5261 = vmatpush1.msra.mxu0 %v5106
    %5262 = vmatprep.subr.mxu0 0.0
    %5263 = vmatpush1.msra.mxu0 %v5107
    %5264 = vmatprep.subr.mxu0 0.0
    %5265 = vmatpush1.msra.mxu0 %v5108
    %5266 = vmatprep.subr.mxu0 0.0
    %5267 = vmatpush1.msra.mxu0 %v5109
    %5268 = vmatprep.subr.mxu0 0.0
    %5269 = vmatpush1.msra.mxu0 %v5110
    %5270 = vmatprep.subr.mxu0 0.0
    %5271 = vmatpush1.msra.mxu0 %v5111
    %5272 = vmatprep.subr.mxu0 0.0
    %5273 = vmatpush1.msra.mxu0 %v5112
    %5274 = vmatprep.subr.mxu0 0.0
    %5275 = vmatpush1.msra.mxu0 %v5113
    %5276 = vmatprep.subr.mxu0 0.0
    %5277 = vmatpush1.msra.mxu0 %v5114
    %5278 = vmatprep.subr.mxu0 0.0
    %5279 = vmatpush1.msra.mxu0 %v5115
    %5280 = vmatprep.subr.mxu0 0.0
    %5281 = vmatpush1.msra.mxu0 %v5116
    %5282 = vmatprep.subr.mxu0 0.0
    %5283 = vmatpush1.msra.mxu0 %v5117
    %5284 = vmatprep.subr.mxu0 0.0
    %5285 = vmatpush1.msra.mxu0 %v5118
    %5286 = vmatprep.subr.mxu0 0.0
    %5287 = vmatpush1.msra.mxu0 %v5119
    %5288 = vmatprep.subr.mxu0 0.0
    %5289 = vmatpush1.msra.mxu0 %v5120
    %5290 = vmatprep.subr.mxu0 0.0
    %5291 = vmatpush1.msra.mxu0 %v5121
    %5292 = vmatprep.subr.mxu0 0.0
    %5293 = vmatpush1.msra.mxu0 %v5122
    %5294 = vmatprep.subr.mxu0 0.0
    %5295 = vmatpush1.msra.mxu0 %v5123
    %5296 = vmatprep.subr.mxu0 0.0
    %5297 = vmatpush1.msra.mxu0 %v5124
    %5298 = vmatprep.mubr.f32.mxu0 %v5217
    %5299 = vmatmul.mubr.f32.gmra.mrb[0].mxu0 %v5214
    %v5300 = vpop.f32.mrb[0].mxu0
    %v5301 = vadd.f32 %v5225, %v5300
    %v5302 = vpop.f32.mrb[0].mxu0
    %5303 = vmatprep.mubr.f32.mxu0 %v5218
    %5304 = vmatmul.mubr.f32.gmra.mrb[0].mxu0 %v5215
    %v5305 = vpop.f32.mrb[0].mxu0
    %v5306 = vadd.f32 %v5225, %v5305
    %v5307 = vpop.f32.mrb[0].mxu0
    %5308 = vmatprep.mubr.f32.mxu0 %v5219
    %5309 = vmatmul.mubr.f32.gmra.mrb[0].mxu0 %v5216
    %v5310 = vpop.f32.mrb[0].mxu0
    %v5311 = vadd.f32 %v5225, %v5310
    %v5312 = vpop.f32.mrb[0].mxu0
    %5313 = vdwg.mxu0
    %5314 = vmatprep.subr.mxu0 0.0
    %5315 = vmatpush1.msra.mxu0 %v5125
    %5316 = vmatprep.subr.mxu0 0.0
    %5317 = vmatpush1.msra.mxu0 %v5126
    %5318 = vmatprep.subr.mxu0 0.0
    %5319 = vmatpush1.msra.mxu0 %v5127
    %5320 = vmatprep.subr.mxu0 0.0
    %5321 = vmatpush1.msra.mxu0 %v5128
    %5322 = vmatprep.subr.mxu0 0.0
    %5323 = vmatpush1.msra.mxu0 %v5129
    %5324 = vmatprep.subr.mxu0 0.0
    %5325 = vmatpush1.msra.mxu0 %v5130
    %5326 = vmatprep.subr.mxu0 0.0
    %5327 = vmatpush1.msra.mxu0 %v5131
    %5328 = vmatprep.subr.mxu0 0.0
    %5329 = vmatpush1.msra.mxu0 %v5132
    %5330 = vmatprep.subr.mxu0 0.0
    %5331 = vmatpush1.msra.mxu0 0.0
    %5332 = vmatprep.subr.mxu0 0.0
    %5333 = vmatpush1.msra.mxu0 0.0
    %5334 = vmatprep.subr.mxu0 0.0
    %5335 = vmatpush1.msra.mxu0 0.0
    %5336 = vmatprep.subr.mxu0 0.0
    %5337 = vmatpush1.msra.mxu0 0.0
    %5338 = vmatprep.subr.mxu0 0.0
    %5339 = vmatpush1.msra.mxu0 0.0
    %5340 = vmatprep.subr.mxu0 0.0
    %5341 = vmatpush1.msra.mxu0 0.0
    %5342 = vmatprep.subr.mxu0 0.0
    %5343 = vmatpush1.msra.mxu0 0.0
    %5344 = vmatprep.subr.mxu0 0.0
    %5345 = vmatpush1.msra.mxu0 0.0
    %5346 = vmatprep.subr.mxu0 0.0
    %5347 = vmatpush1.msra.mxu0 0.0
    %5348 = vmatprep.subr.mxu0 0.0
    %5349 = vmatpush1.msra.mxu0 0.0
    %5350 = vmatprep.subr.mxu0 0.0
    %5351 = vmatpush1.msra.mxu0 0.0
    %5352 = vmatprep.subr.mxu0 0.0
    %5353 = vmatpush1.msra.mxu0 0.0
    %5354 = vmatprep.subr.mxu0 0.0
    %5355 = vmatpush1.msra.mxu0 0.0
    %5356 = vmatprep.subr.mxu0 0.0
    %5357 = vmatpush1.msra.mxu0 0.0
    %5358 = vmatprep.subr.mxu0 0.0
    %5359 = vmatpush1.msra.mxu0 0.0
    %5360 = vmatprep.subr.mxu0 0.0
    %5361 = vmatpush1.msra.mxu0 0.0
    %5362 = vmatprep.subr.mxu0 0.0
    %5363 = vmatpush1.msra.mxu0 0.0
    %5364 = vmatprep.subr.mxu0 0.0
    %5365 = vmatpush1.msra.mxu0 0.0
    %5366 = vmatprep.subr.mxu0 0.0
    %5367 = vmatpush1.msra.mxu0 0.0
    %5368 = vmatprep.subr.mxu0 0.0
    %5369 = vmatpush1.msra.mxu0 0.0
    %5370 = vmatprep.subr.mxu0 0.0
    %5371 = vmatpush1.msra.mxu0 0.0
    %5372 = vmatprep.subr.mxu0 0.0
    %5373 = vmatpush1.msra.mxu0 0.0
    %5374 = vmatprep.subr.mxu0 0.0
    %5375 = vmatpush1.msra.mxu0 0.0
    %5376 = vmatprep.subr.mxu0 0.0
    %5377 = vmatpush1.msra.mxu0 0.0
    %5378 = vmatprep.mubr.f32.mxu0 0.0
    %5379 = vmatmul.mubr.f32.gmra.mrb[0].mxu0 %v5227
    %v5380 = vpop.f32.mrb[0].mxu0
    %v5381 = vadd.f32 %v5301, %v5380
    %v5382 = vpop.f32.mrb[0].mxu0
    %5383 = vmatprep.mubr.f32.mxu0 0.0
    %5384 = vmatmul.mubr.f32.gmra.mrb[0].mxu0 %v5230
    %v5385 = vpop.f32.mrb[0].mxu0
    %v5386 = vadd.f32 %v5306, %v5385
    %v5387 = vpop.f32.mrb[0].mxu0
    %5388 = vmatprep.mubr.f32.mxu0 0.0
    %5389 = vmatmul.mubr.f32.gmra.mrb[0].mxu0 %v5232
    %v5390 = vpop.f32.mrb[0].mxu0
    %v5391 = vadd.f32 %v5311, %v5390
    %v5392 = vpop.f32.mrb[0].mxu0
    %5393 = vdwg.mxu0
    %v5394 = vmax.f32 %v5381, 0.0
    %v5395 = vmax.f32 %v5386, 0.0
    %v5396 = vmax.f32 %v5391, 0.0
    %s5397 = scalar_lea.vmem [#allocation36], 1
    %v5398 = vld [vmem:[%s5397] sm:$0x1]
    %s5399 = scalar_lea.vmem [#allocation36], 2
    %v5400 = vld [vmem:[%s5399] sm:$0x1]
    %v5401 = vsel %vm1315, %v5394, 0.0
    %v5402 = vsel %vm1315, %v5395, 0.0
    %v5403 = vadd.f32 %v5401, %v5402
    %v5404 = vsel %vm1315, %v5396, 0.0
    %v5405 = vadd.f32 %v5403, %v5404
    %v5406 = vrot.slane %v5405, 4
    %v5407 = vadd.f32 %v5405, %v5406
    %v5408 = vrot.slane %v5407, 2
    %v5409 = vadd.f32 %v5407, %v5408
    %v5410 = vrot.slane %v5409, 1
    %v5411 = vadd.f32 %v5409, %v5410
    %v5412 = vmul.f32 %v5411, 0.041666668
    %v5413 = vsub.f32 %v5394, %v5412
    %v5414 = vsub.f32 %v5395, %v5412
    %v5415 = vsub.f32 %v5396, %v5412
    %v5416 = vmul.f32 %v5413, %v5413
    %v5417 = vmul.f32 %v5414, %v5414
    %v5418 = vmul.f32 %v5415, %v5415
    %v5419 = vsel %vm1315, %v5416, 0.0
    %v5420 = vsel %vm1315, %v5417, 0.0
    %v5421 = vadd.f32 %v5419, %v5420
    %v5422 = vsel %vm1315, %v5418, 0.0
    %v5423 = vadd.f32 %v5421, %v5422
    %v5424 = vrot.slane %v5423, 4
    %v5425 = vadd.f32 %v5423, %v5424
    %v5426 = vrot.slane %v5425, 2
    %v5427 = vadd.f32 %v5425, %v5426
    %v5428 = vrot.slane %v5427, 1
    %v5429 = vadd.f32 %v5427, %v5428
    %v5430 = vmul.f32 %v5429, 0.041666668
    %v5431 = vadd.f32 %v5430, 1e-05
    %v5432 = vrsqrt.pop %v5431
    %v5433 = vmul.f32 %v5413, %v5432
    %v5434 = vmul.f32 %v5414, %v5432
    %v5435 = vmul.f32 %v5415, %v5432
    %v5437 = vlaneseq
    %v5438 = vshrl.u32 %v5437, 7
    %v5439 = vsub.s32 0, %v5438
    %v5440 = vrot.slane %v5398, %v5439
    %v5442 = vmul.f32 %v5433, %v5440
    %v5443 = vmul.f32 %v5434, %v5440
    %v5444 = vmul.f32 %v5435, %v5440
    %v5446 = vlaneseq
    %v5447 = vshrl.u32 %v5446, 7
    %v5448 = vsub.s32 0, %v5447
    %v5449 = vrot.slane %v5400, %v5448
    %v5451 = vadd.f32 %v5442, %v5449
    %v5452 = vadd.f32 %v5443, %v5449
    %v5453 = vadd.f32 %v5444, %v5449
    %5454 = vxpose.xlu0.b32.start [1/16] %v5451, 128
    %5455 = vxpose.xlu0.b32.cont [2/16] %v5452, 128
    %5456 = vxpose.xlu0.b32.cont [3/16] %v5453, 128
    %5457 = vxpose.xlu0.b32.cont [4/16] 0.0, 128
    %5458 = vxpose.xlu0.b32.cont [5/16] 0.0, 128
    %5459 = vxpose.xlu0.b32.cont [6/16] 0.0, 128
    %5460 = vxpose.xlu0.b32.cont [7/16] 0.0, 128
    %5461 = vxpose.xlu0.b32.cont [8/16] 0.0, 128
    %5462 = vxpose.xlu0.b32.cont [9/16] 0.0, 128
    %5463 = vxpose.xlu0.b32.cont [10/16] 0.0, 128
    %5464 = vxpose.xlu0.b32.cont [11/16] 0.0, 128
    %5465 = vxpose.xlu0.b32.cont [12/16] 0.0, 128
    %5466 = vxpose.xlu0.b32.cont [13/16] 0.0, 128
    %5467 = vxpose.xlu0.b32.cont [14/16] 0.0, 128
    %5468 = vxpose.xlu0.b32.cont [15/16] 0.0, 128
    %5469 = vxpose.xlu0.b32.end [16/16] 0.0, 128
    %v5470 = vpop.trf.xlu0
    %v5471 = vpop.trf.xlu0
    %v5472 = vpop.trf.xlu0
    %v5473 = vpop.trf.xlu0
    %v5474 = vpop.trf.xlu0
    %v5475 = vpop.trf.xlu0
    %v5476 = vpop.trf.xlu0
    %v5477 = vpop.trf.xlu0
    %v5478 = vpop.trf.xlu0
    %v5479 = vpop.trf.xlu0
    %v5480 = vpop.trf.xlu0
    %v5481 = vpop.trf.xlu0
    %v5482 = vpop.trf.xlu0
    %v5483 = vpop.trf.xlu0
    %v5484 = vpop.trf.xlu0
    %v5485 = vpop.trf.xlu0
    %v5486 = vadd.s32 %v2462, 1
    %v5487 = vadd.s32 %v2463, 1
    %vm5488 = vcmp.eq.s32.totalorder %v723, %v5486
    %vm5489 = vcmp.eq.s32.totalorder %v723, %v5487
    %vm5490 = vmor %vm2465, %vm2489
    %vm5491 = vmor %vm2466, %vm5488
    %vm5492 = vmor %vm2467, %vm5489
    %v5493 = vsel %vm5490, 1, 0
    %v5494 = vsel %vm5491, 1, 0
    %v5495 = vsel %vm5492, 1, 0
    %v5496 = vcvt.s32.f32 %v5493
    %v5497 = vcvt.s32.f32 %v5494
    %v5498 = vcvt.s32.f32 %v5495
    %vm5499 = vcmask 195584
    %v5501 = vsel %vm5499, %v5470, 0
    %v5504 = vsel %vm5499, %v5471, 0
    %v5507 = vsel %vm5499, %v5472, 0
    %v5510 = vsel %vm5499, %v5473, 0
    %v5513 = vsel %vm5499, %v5474, 0
    %v5516 = vsel %vm5499, %v5475, 0
    %v5519 = vsel %vm5499, %v5476, 0
    %v5522 = vsel %vm5499, %v5477, 0
    %5524 = vmatprep.subr.mxu0 0.0
    %5525 = vmatpush1.msra.mxu0 %v5496
    %5526 = vmatprep.subr.mxu0 0.0
    %5527 = vmatpush1.msra.mxu0 %v5497
    %5528 = vmatprep.subr.mxu0 0.0
    %5529 = vmatpush1.msra.mxu0 %v5498
    %5530 = vmatprep.subr.mxu0 0.0
    %5531 = vmatpush1.msra.mxu0 0.0
    %5532 = vmatprep.subr.mxu0 0.0
    %5533 = vmatpush1.msra.mxu0 0.0
    %5534 = vmatprep.subr.mxu0 0.0
    %5535 = vmatpush1.msra.mxu0 0.0
    %5536 = vmatprep.subr.mxu0 0.0
    %5537 = vmatpush1.msra.mxu0 0.0
    %5538 = vmatprep.subr.mxu0 0.0
    %5539 = vmatpush1.msra.mxu0 0.0
    %5540 = vmatprep.subr.mxu0 0.0
    %5541 = vmatpush1.msra.mxu0 0.0
    %5542 = vmatprep.subr.mxu0 0.0
    %5543 = vmatpush1.msra.mxu0 0.0
    %5544 = vmatprep.subr.mxu0 0.0
    %5545 = vmatpush1.msra.mxu0 0.0
    %5546 = vmatprep.subr.mxu0 0.0
    %5547 = vmatpush1.msra.mxu0 0.0
    %5548 = vmatprep.subr.mxu0 0.0
    %5549 = vmatpush1.msra.mxu0 0.0
    %5550 = vmatprep.subr.mxu0 0.0
    %5551 = vmatpush1.msra.mxu0 0.0
    %5552 = vmatprep.subr.mxu0 0.0
    %5553 = vmatpush1.msra.mxu0 0.0
    %5554 = vmatprep.subr.mxu0 0.0
    %5555 = vmatpush1.msra.mxu0 0.0
    %5556 = vmatprep.subr.mxu0 0.0
    %5557 = vmatpush1.msra.mxu0 0.0
    %5558 = vmatprep.subr.mxu0 0.0
    %5559 = vmatpush1.msra.mxu0 0.0
    %5560 = vmatprep.subr.mxu0 0.0
    %5561 = vmatpush1.msra.mxu0 0.0
    %5562 = vmatprep.subr.mxu0 0.0
    %5563 = vmatpush1.msra.mxu0 0.0
    %5564 = vmatprep.subr.mxu0 0.0
    %5565 = vmatpush1.msra.mxu0 0.0
    %5566 = vmatprep.subr.mxu0 0.0
    %5567 = vmatpush1.msra.mxu0 0.0
    %5568 = vmatprep.subr.mxu0 0.0
    %5569 = vmatpush1.msra.mxu0 0.0
    %5570 = vmatprep.subr.mxu0 0.0
    %5571 = vmatpush1.msra.mxu0 0.0
    %5572 = vmatprep.subr.mxu0 0.0
    %5573 = vmatpush1.msra.mxu0 0.0
    %5574 = vmatprep.subr.mxu0 0.0
    %5575 = vmatpush1.msra.mxu0 0.0
    %5576 = vmatprep.subr.mxu0 0.0
    %5577 = vmatpush1.msra.mxu0 0.0
    %5578 = vmatprep.subr.mxu0 0.0
    %5579 = vmatpush1.msra.mxu0 0.0
    %5580 = vmatprep.subr.mxu0 0.0
    %5581 = vmatpush1.msra.mxu0 0.0
    %5582 = vmatprep.subr.mxu0 0.0
    %5583 = vmatpush1.msra.mxu0 0.0
    %5584 = vmatprep.subr.mxu0 0.0
    %5585 = vmatpush1.msra.mxu0 0.0
    %5586 = vmatprep.subr.mxu0 0.0
    %5587 = vmatpush1.msra.mxu0 0.0
    %5588 = vmatprep.mubr.f32.mxu0 0.0
    %5589 = vmatmul.mubr.f32.gmra.mrb[0].mxu0 %v5501
    %v5590 = vpop.f32.mrb[0].mxu0
    %v5591 = vadd.f32 0.0, %v5590
    %v5592 = vpop.f32.mrb[0].mxu0
    %5593 = vmatprep.mubr.f32.mxu0 0.0
    %5594 = vmatmul.mubr.f32.gmra.mrb[0].mxu0 %v5504
    %v5595 = vpop.f32.mrb[0].mxu0
    %v5596 = vadd.f32 0.0, %v5595
    %v5597 = vpop.f32.mrb[0].mxu0
    %5598 = vmatprep.mubr.f32.mxu0 0.0
    %5599 = vmatmul.mubr.f32.gmra.mrb[0].mxu0 %v5507
    %v5600 = vpop.f32.mrb[0].mxu0
    %v5601 = vadd.f32 0.0, %v5600
    %v5602 = vpop.f32.mrb[0].mxu0
    %5603 = vmatprep.mubr.f32.mxu0 0.0
    %5604 = vmatmul.mubr.f32.gmra.mrb[0].mxu0 %v5510
    %v5605 = vpop.f32.mrb[0].mxu0
    %v5606 = vadd.f32 0.0, %v5605
    %v5607 = vpop.f32.mrb[0].mxu0
    %5608 = vmatprep.mubr.f32.mxu0 0.0
    %5609 = vmatmul.mubr.f32.gmra.mrb[0].mxu0 %v5513
    %v5610 = vpop.f32.mrb[0].mxu0
    %v5611 = vadd.f32 0.0, %v5610
    %v5612 = vpop.f32.mrb[0].mxu0
    %5613 = vmatprep.mubr.f32.mxu0 0.0
    %5614 = vmatmul.mubr.f32.gmra.mrb[0].mxu0 %v5516
    %v5615 = vpop.f32.mrb[0].mxu0
    %v5616 = vadd.f32 0.0, %v5615
    %v5617 = vpop.f32.mrb[0].mxu0
    %5618 = vmatprep.mubr.f32.mxu0 0.0
    %5619 = vmatmul.mubr.f32.gmra.mrb[0].mxu0 %v5519
    %v5620 = vpop.f32.mrb[0].mxu0
    %v5621 = vadd.f32 0.0, %v5620
    %v5622 = vpop.f32.mrb[0].mxu0
    %5623 = vmatprep.mubr.f32.mxu0 0.0
    %5624 = vmatmul.mubr.f32.gmra.mrb[0].mxu0 %v5522
    %v5625 = vpop.f32.mrb[0].mxu0
    %v5626 = vadd.f32 0.0, %v5625
    %v5627 = vpop.f32.mrb[0].mxu0
    %5628 = vdwg.mxu0
    %v5629 = vld [vmem:[%s51] sm:$0xff]
    %v5630 = vld [vmem:[%s51 + $0x8] sm:$0xff]
    %v5631 = vld [vmem:[%s51 + $0x10] sm:$0xff]
    %v5632 = vld [vmem:[%s51 + $0x18] sm:$0xff]
    %v5633 = vld [vmem:[%s51 + $0x20] sm:$0xff]
    %v5634 = vld [vmem:[%s51 + $0x28] sm:$0xff]
    %v5635 = vld [vmem:[%s51 + $0x30] sm:$0xff]
    %v5636 = vld [vmem:[%s51 + $0x38] sm:$0xff]
    %v5637 = vld [vmem:[%s51 + $0x40] sm:$0xff]
    %v5638 = vld [vmem:[%s51 + $0x48] sm:$0xff]
    %v5639 = vld [vmem:[%s51 + $0x50] sm:$0xff]
    %v5640 = vld [vmem:[%s51 + $0x58] sm:$0xff]
    %5649 = vrot.lane.b32.xlu0 %v5591, 2
    %v5650 = vpop.permute.xlu0 %5649
    %5651 = vrot.lane.b32.xlu0 %v5596, 2
    %v5652 = vpop.permute.xlu0 %5651
    %5653 = vrot.lane.b32.xlu0 %v5601, 2
    %v5654 = vpop.permute.xlu0 %5653
    %5655 = vrot.lane.b32.xlu0 %v5606, 2
    %v5656 = vpop.permute.xlu0 %5655
    %5657 = vrot.lane.b32.xlu0 %v5611, 2
    %v5658 = vpop.permute.xlu0 %5657
    %5659 = vrot.lane.b32.xlu0 %v5616, 2
    %v5660 = vpop.permute.xlu0 %5659
    %5661 = vrot.lane.b32.xlu0 %v5621, 2
    %v5662 = vpop.permute.xlu0 %5661
    %5663 = vrot.lane.b32.xlu0 %v5626, 2
    %v5664 = vpop.permute.xlu0 %5663
    %5673 = vrot.lane.b32.xlu0 %v5591, 6
    %v5674 = vpop.permute.xlu0 %5673
    %5675 = vrot.lane.b32.xlu0 %v5596, 6
    %v5676 = vpop.permute.xlu0 %5675
    %5677 = vrot.lane.b32.xlu0 %v5601, 6
    %v5678 = vpop.permute.xlu0 %5677
    %5679 = vrot.lane.b32.xlu0 %v5606, 6
    %v5680 = vpop.permute.xlu0 %5679
    %5681 = vrot.lane.b32.xlu0 %v5611, 6
    %v5682 = vpop.permute.xlu0 %5681
    %5683 = vrot.lane.b32.xlu0 %v5616, 6
    %v5684 = vpop.permute.xlu0 %5683
    %5685 = vrot.lane.b32.xlu0 %v5621, 6
    %v5686 = vpop.permute.xlu0 %5685
    %5687 = vrot.lane.b32.xlu0 %v5626, 6
    %v5688 = vpop.permute.xlu0 %5687
    %v5697 = vsel %vm516, 0.0, %v5650
    %v5698 = vsel %vm516, 0.0, %v5652
    %v5699 = vsel %vm516, 0.0, %v5654
    %v5700 = vsel %vm516, 0.0, %v5656
    %v5701 = vsel %vm516, 0.0, %v5658
    %v5702 = vsel %vm516, 0.0, %v5660
    %v5703 = vsel %vm516, 0.0, %v5662
    %v5704 = vsel %vm516, 0.0, %v5664
    %vm5705 = vcmask 211968
    %v5706 = vsel %vm5705, %v5697, 0.0
    %v5707 = vsel %vm5705, %v5698, 0.0
    %v5708 = vsel %vm5705, %v5699, 0.0
    %v5709 = vsel %vm5705, %v5700, 0.0
    %v5710 = vsel %vm5705, %v5701, 0.0
    %v5711 = vsel %vm5705, %v5702, 0.0
    %v5712 = vsel %vm5705, %v5703, 0.0
    %v5713 = vsel %vm5705, %v5704, 0.0
    %vm5714 = vcmask 228352
    %v5715 = vsel %vm5714, %v5706, 0.0
    %v5716 = vsel %vm5714, %v5707, 0.0
    %v5717 = vsel %vm5714, %v5708, 0.0
    %v5718 = vsel %vm5714, %v5709, 0.0
    %v5719 = vsel %vm5714, %v5710, 0.0
    %v5720 = vsel %vm5714, %v5711, 0.0
    %v5721 = vsel %vm5714, %v5712, 0.0
    %v5722 = vsel %vm5714, %v5713, 0.0
    %vm5723 = vcmask 244736
    %v5724 = vsel %vm5723, %v5715, %v5674
    %v5725 = vsel %vm5723, %v5716, %v5676
    %v5726 = vsel %vm5723, %v5717, %v5678
    %v5727 = vsel %vm5723, %v5718, %v5680
    %v5728 = vsel %vm5723, %v5719, %v5682
    %v5729 = vsel %vm5723, %v5720, %v5684
    %v5730 = vsel %vm5723, %v5721, %v5686
    %v5731 = vsel %vm5723, %v5722, %v5688
    %vm5732 = vcmask 441344
    %v5733 = vsel %vm5732, %v5724, 0.0
    %v5734 = vsel %vm5732, %v5725, 0.0
    %v5735 = vsel %vm5732, %v5726, 0.0
    %v5736 = vsel %vm5732, %v5727, 0.0
    %v5737 = vsel %vm5732, %v5728, 0.0
    %v5738 = vsel %vm5732, %v5729, 0.0
    %v5739 = vsel %vm5732, %v5730, 0.0
    %v5740 = vsel %vm5732, %v5731, 0.0
    %5749 = vrot.lane.b32.xlu0 %v5733, 124
    %v5750 = vpop.permute.xlu0 %5749
    %5751 = vrot.lane.b32.xlu0 %v5734, 124
    %v5752 = vpop.permute.xlu0 %5751
    %5753 = vrot.lane.b32.xlu0 %v5735, 124
    %v5754 = vpop.permute.xlu0 %5753
    %5755 = vrot.lane.b32.xlu0 %v5736, 124
    %v5756 = vpop.permute.xlu0 %5755
    %5757 = vrot.lane.b32.xlu0 %v5737, 124
    %v5758 = vpop.permute.xlu0 %5757
    %5759 = vrot.lane.b32.xlu0 %v5738, 124
    %v5760 = vpop.permute.xlu0 %5759
    %5761 = vrot.lane.b32.xlu0 %v5739, 124
    %v5762 = vpop.permute.xlu0 %5761
    %5763 = vrot.lane.b32.xlu0 %v5740, 124
    %v5764 = vpop.permute.xlu0 %5763
    %v5773 = vsel %vm5499, %v5733, %v5750
    %v5774 = vsel %vm5499, %v5734, %v5752
    %v5775 = vsel %vm5499, %v5735, %v5754
    %v5776 = vsel %vm5499, %v5736, %v5756
    %v5777 = vsel %vm5499, %v5737, %v5758
    %v5778 = vsel %vm5499, %v5738, %v5760
    %v5779 = vsel %vm5499, %v5739, %v5762
    %v5780 = vsel %vm5499, %v5740, %v5764
    %5781 = vrot.lane.b32.xlu0 %v5733, 127
    %v5782 = vpop.permute.xlu0 %5781
    %5783 = vrot.lane.b32.xlu0 %v5734, 127
    %v5784 = vpop.permute.xlu0 %5783
    %5785 = vrot.lane.b32.xlu0 %v5735, 127
    %v5786 = vpop.permute.xlu0 %5785
    %5787 = vrot.lane.b32.xlu0 %v5736, 127
    %v5788 = vpop.permute.xlu0 %5787
    %5789 = vrot.lane.b32.xlu0 %v5737, 127
    %v5790 = vpop.permute.xlu0 %5789
    %5791 = vrot.lane.b32.xlu0 %v5738, 127
    %v5792 = vpop.permute.xlu0 %5791
    %5793 = vrot.lane.b32.xlu0 %v5739, 127
    %v5794 = vpop.permute.xlu0 %5793
    %5795 = vrot.lane.b32.xlu0 %v5740, 127
    %v5796 = vpop.permute.xlu0 %5795
    %5805 = vrot.lane.b32.xlu0 %v5733, 123
    %v5806 = vpop.permute.xlu0 %5805
    %5807 = vrot.lane.b32.xlu0 %v5734, 123
    %v5808 = vpop.permute.xlu0 %5807
    %5809 = vrot.lane.b32.xlu0 %v5735, 123
    %v5810 = vpop.permute.xlu0 %5809
    %5811 = vrot.lane.b32.xlu0 %v5736, 123
    %v5812 = vpop.permute.xlu0 %5811
    %5813 = vrot.lane.b32.xlu0 %v5737, 123
    %v5814 = vpop.permute.xlu0 %5813
    %5815 = vrot.lane.b32.xlu0 %v5738, 123
    %v5816 = vpop.permute.xlu0 %5815
    %5817 = vrot.lane.b32.xlu0 %v5739, 123
    %v5818 = vpop.permute.xlu0 %5817
    %5819 = vrot.lane.b32.xlu0 %v5740, 123
    %v5820 = vpop.permute.xlu0 %5819
    %v5829 = vsel %vm5499, %v5782, %v5806
    %v5830 = vsel %vm5499, %v5784, %v5808
    %v5831 = vsel %vm5499, %v5786, %v5810
    %v5832 = vsel %vm5499, %v5788, %v5812
    %v5833 = vsel %vm5499, %v5790, %v5814
    %v5834 = vsel %vm5499, %v5792, %v5816
    %v5835 = vsel %vm5499, %v5794, %v5818
    %v5836 = vsel %vm5499, %v5796, %v5820
    %5837 = vrot.lane.b32.xlu0 %v5733, 126
    %v5838 = vpop.permute.xlu0 %5837
    %5839 = vrot.lane.b32.xlu0 %v5734, 126
    %v5840 = vpop.permute.xlu0 %5839
    %5841 = vrot.lane.b32.xlu0 %v5735, 126
    %v5842 = vpop.permute.xlu0 %5841
    %5843 = vrot.lane.b32.xlu0 %v5736, 126
    %v5844 = vpop.permute.xlu0 %5843
    %5845 = vrot.lane.b32.xlu0 %v5737, 126
    %v5846 = vpop.permute.xlu0 %5845
    %5847 = vrot.lane.b32.xlu0 %v5738, 126
    %v5848 = vpop.permute.xlu0 %5847
    %5849 = vrot.lane.b32.xlu0 %v5739, 126
    %v5850 = vpop.permute.xlu0 %5849
    %5851 = vrot.lane.b32.xlu0 %v5740, 126
    %v5852 = vpop.permute.xlu0 %5851
    %5861 = vrot.lane.b32.xlu0 %v5733, 122
    %v5862 = vpop.permute.xlu0 %5861
    %5863 = vrot.lane.b32.xlu0 %v5734, 122
    %v5864 = vpop.permute.xlu0 %5863
    %5865 = vrot.lane.b32.xlu0 %v5735, 122
    %v5866 = vpop.permute.xlu0 %5865
    %5867 = vrot.lane.b32.xlu0 %v5736, 122
    %v5868 = vpop.permute.xlu0 %5867
    %5869 = vrot.lane.b32.xlu0 %v5737, 122
    %v5870 = vpop.permute.xlu0 %5869
    %5871 = vrot.lane.b32.xlu0 %v5738, 122
    %v5872 = vpop.permute.xlu0 %5871
    %5873 = vrot.lane.b32.xlu0 %v5739, 122
    %v5874 = vpop.permute.xlu0 %5873
    %5875 = vrot.lane.b32.xlu0 %v5740, 122
    %v5876 = vpop.permute.xlu0 %5875
    %v5885 = vsel %vm5499, %v5838, %v5862
    %v5886 = vsel %vm5499, %v5840, %v5864
    %v5887 = vsel %vm5499, %v5842, %v5866
    %v5888 = vsel %vm5499, %v5844, %v5868
    %v5889 = vsel %vm5499, %v5846, %v5870
    %v5890 = vsel %vm5499, %v5848, %v5872
    %v5891 = vsel %vm5499, %v5850, %v5874
    %v5892 = vsel %vm5499, %v5852, %v5876
    %5893 = vrot.lane.b32.xlu0 %v5733, 125
    %v5894 = vpop.permute.xlu0 %5893
    %5895 = vrot.lane.b32.xlu0 %v5734, 125
    %v5896 = vpop.permute.xlu0 %5895
    %5897 = vrot.lane.b32.xlu0 %v5735, 125
    %v5898 = vpop.permute.xlu0 %5897
    %5899 = vrot.lane.b32.xlu0 %v5736, 125
    %v5900 = vpop.permute.xlu0 %5899
    %5901 = vrot.lane.b32.xlu0 %v5737, 125
    %v5902 = vpop.permute.xlu0 %5901
    %5903 = vrot.lane.b32.xlu0 %v5738, 125
    %v5904 = vpop.permute.xlu0 %5903
    %5905 = vrot.lane.b32.xlu0 %v5739, 125
    %v5906 = vpop.permute.xlu0 %5905
    %5907 = vrot.lane.b32.xlu0 %v5740, 125
    %v5908 = vpop.permute.xlu0 %5907
    %5917 = vrot.lane.b32.xlu0 %v5733, 121
    %v5918 = vpop.permute.xlu0 %5917
    %5919 = vrot.lane.b32.xlu0 %v5734, 121
    %v5920 = vpop.permute.xlu0 %5919
    %5921 = vrot.lane.b32.xlu0 %v5735, 121
    %v5922 = vpop.permute.xlu0 %5921
    %5923 = vrot.lane.b32.xlu0 %v5736, 121
    %v5924 = vpop.permute.xlu0 %5923
    %5925 = vrot.lane.b32.xlu0 %v5737, 121
    %v5926 = vpop.permute.xlu0 %5925
    %5927 = vrot.lane.b32.xlu0 %v5738, 121
    %v5928 = vpop.permute.xlu0 %5927
    %5929 = vrot.lane.b32.xlu0 %v5739, 121
    %v5930 = vpop.permute.xlu0 %5929
    %5931 = vrot.lane.b32.xlu0 %v5740, 121
    %v5932 = vpop.permute.xlu0 %5931
    %v5941 = vsel %vm5499, %v5894, %v5918
    %v5942 = vsel %vm5499, %v5896, %v5920
    %v5943 = vsel %vm5499, %v5898, %v5922
    %v5944 = vsel %vm5499, %v5900, %v5924
    %v5945 = vsel %vm5499, %v5902, %v5926
    %v5946 = vsel %vm5499, %v5904, %v5928
    %v5947 = vsel %vm5499, %v5906, %v5930
    %v5948 = vsel %vm5499, %v5908, %v5932
    %5949 = vrot.lane.b32.xlu0 %v5733, 120
    %v5950 = vpop.permute.xlu0 %5949
    %5951 = vrot.lane.b32.xlu0 %v5734, 120
    %v5952 = vpop.permute.xlu0 %5951
    %5953 = vrot.lane.b32.xlu0 %v5735, 120
    %v5954 = vpop.permute.xlu0 %5953
    %5955 = vrot.lane.b32.xlu0 %v5736, 120
    %v5956 = vpop.permute.xlu0 %5955
    %5957 = vrot.lane.b32.xlu0 %v5737, 120
    %v5958 = vpop.permute.xlu0 %5957
    %5959 = vrot.lane.b32.xlu0 %v5738, 120
    %v5960 = vpop.permute.xlu0 %5959
    %5961 = vrot.lane.b32.xlu0 %v5739, 120
    %v5962 = vpop.permute.xlu0 %5961
    %5963 = vrot.lane.b32.xlu0 %v5740, 120
    %v5964 = vpop.permute.xlu0 %5963
    %v5973 = vsel %vm5499, %v5750, %v5950
    %v5974 = vsel %vm5499, %v5752, %v5952
    %v5975 = vsel %vm5499, %v5754, %v5954
    %v5976 = vsel %vm5499, %v5756, %v5956
    %v5977 = vsel %vm5499, %v5758, %v5958
    %v5978 = vsel %vm5499, %v5760, %v5960
    %v5979 = vsel %vm5499, %v5762, %v5962
    %v5980 = vsel %vm5499, %v5764, %v5964
    %v5981 = vld [vmem:[#allocation38] sm:$0xff]
    %v5982 = vld [vmem:[#allocation38 + $0x8] sm:$0xff]
    %v5983 = vld [vmem:[#allocation38 + $0x10] sm:$0xff]
    %v5984 = vld [vmem:[#allocation38 + $0x18] sm:$0xff]
    %5986 = vset.pattern.permute.xlu0 0
    %5987 = vperm.xlu0 %5986, %v5981
    %v5988 = vpop.permute.xlu0 %5987
    %5991 = vset.pattern.permute.xlu0 0
    %5992 = vperm.xlu0 %5991, %v5982
    %v5993 = vpop.permute.xlu0 %5992
    %5996 = vset.pattern.permute.xlu0 0
    %5997 = vperm.xlu0 %5996, %v5983
    %v5998 = vpop.permute.xlu0 %5997
    %6001 = vset.pattern.permute.xlu0 0
    %6002 = vperm.xlu0 %6001, %v5984
    %v6003 = vpop.permute.xlu0 %6002
    %v6006 = vsel %vm1315, %v5631, 0
    %v6009 = vsel %vm1315, %v5634, 0
    %v6012 = vsel %vm1315, %v5637, 0
    %v6015 = vsel %vm1315, %v5640, 0
    %6017 = vmatprep.subr.mxu0 0.0
    %6018 = vmatpush1.msra.mxu0 %v5773
    %6019 = vmatprep.subr.mxu0 0.0
    %6020 = vmatpush1.msra.mxu0 %v5774
    %6021 = vmatprep.subr.mxu0 0.0
    %6022 = vmatpush1.msra.mxu0 %v5775
    %6023 = vmatprep.subr.mxu0 0.0
    %6024 = vmatpush1.msra.mxu0 %v5776
    %6025 = vmatprep.subr.mxu0 0.0
    %6026 = vmatpush1.msra.mxu0 %v5777
    %6027 = vmatprep.subr.mxu0 0.0
    %6028 = vmatpush1.msra.mxu0 %v5778
    %6029 = vmatprep.subr.mxu0 0.0
    %6030 = vmatpush1.msra.mxu0 %v5779
    %6031 = vmatprep.subr.mxu0 0.0
    %6032 = vmatpush1.msra.mxu0 %v5780
    %6033 = vmatprep.subr.mxu0 0.0
    %6034 = vmatpush1.msra.mxu0 %v5829
    %6035 = vmatprep.subr.mxu0 0.0
    %6036 = vmatpush1.msra.mxu0 %v5830
    %6037 = vmatprep.subr.mxu0 0.0
    %6038 = vmatpush1.msra.mxu0 %v5831
    %6039 = vmatprep.subr.mxu0 0.0
    %6040 = vmatpush1.msra.mxu0 %v5832
    %6041 = vmatprep.subr.mxu0 0.0
    %6042 = vmatpush1.msra.mxu0 %v5833
    %6043 = vmatprep.subr.mxu0 0.0
    %6044 = vmatpush1.msra.mxu0 %v5834
    %6045 = vmatprep.subr.mxu0 0.0
    %6046 = vmatpush1.msra.mxu0 %v5835
    %6047 = vmatprep.subr.mxu0 0.0
    %6048 = vmatpush1.msra.mxu0 %v5836
    %6049 = vmatprep.subr.mxu0 0.0
    %6050 = vmatpush1.msra.mxu0 %v5885
    %6051 = vmatprep.subr.mxu0 0.0
    %6052 = vmatpush1.msra.mxu0 %v5886
    %6053 = vmatprep.subr.mxu0 0.0
    %6054 = vmatpush1.msra.mxu0 %v5887
    %6055 = vmatprep.subr.mxu0 0.0
    %6056 = vmatpush1.msra.mxu0 %v5888
    %6057 = vmatprep.subr.mxu0 0.0
    %6058 = vmatpush1.msra.mxu0 %v5889
    %6059 = vmatprep.subr.mxu0 0.0
    %6060 = vmatpush1.msra.mxu0 %v5890
    %6061 = vmatprep.subr.mxu0 0.0
    %6062 = vmatpush1.msra.mxu0 %v5891
    %6063 = vmatprep.subr.mxu0 0.0
    %6064 = vmatpush1.msra.mxu0 %v5892
    %6065 = vmatprep.subr.mxu0 0.0
    %6066 = vmatpush1.msra.mxu0 %v5941
    %6067 = vmatprep.subr.mxu0 0.0
    %6068 = vmatpush1.msra.mxu0 %v5942
    %6069 = vmatprep.subr.mxu0 0.0
    %6070 = vmatpush1.msra.mxu0 %v5943
    %6071 = vmatprep.subr.mxu0 0.0
    %6072 = vmatpush1.msra.mxu0 %v5944
    %6073 = vmatprep.subr.mxu0 0.0
    %6074 = vmatpush1.msra.mxu0 %v5945
    %6075 = vmatprep.subr.mxu0 0.0
    %6076 = vmatpush1.msra.mxu0 %v5946
    %6077 = vmatprep.subr.mxu0 0.0
    %6078 = vmatpush1.msra.mxu0 %v5947
    %6079 = vmatprep.subr.mxu0 0.0
    %6080 = vmatpush1.msra.mxu0 %v5948
    %6081 = vmatprep.mubr.f32.mxu0 %v5630
    %6082 = vmatmul.mubr.f32.gmra.mrb[0].mxu0 %v5629
    %v6083 = vpop.f32.mrb[0].mxu0
    %v6084 = vadd.f32 %v5988, %v6083
    %v6085 = vpop.f32.mrb[0].mxu0
    %6086 = vmatprep.mubr.f32.mxu0 %v5633
    %6087 = vmatmul.mubr.f32.gmra.mrb[0].mxu0 %v5632
    %v6088 = vpop.f32.mrb[0].mxu0
    %v6089 = vadd.f32 %v5993, %v6088
    %v6090 = vpop.f32.mrb[0].mxu0
    %6091 = vmatprep.mubr.f32.mxu0 %v5636
    %6092 = vmatmul.mubr.f32.gmra.mrb[0].mxu0 %v5635
    %v6093 = vpop.f32.mrb[0].mxu0
    %v6094 = vadd.f32 %v5998, %v6093
    %v6095 = vpop.f32.mrb[0].mxu0
    %6096 = vmatprep.mubr.f32.mxu0 %v5639
    %6097 = vmatmul.mubr.f32.gmra.mrb[0].mxu0 %v5638
    %v6098 = vpop.f32.mrb[0].mxu0
    %v6099 = vadd.f32 %v6003, %v6098
    %v6100 = vpop.f32.mrb[0].mxu0
    %6101 = vdwg.mxu0
    %6102 = vmatprep.subr.mxu0 0.0
    %6103 = vmatpush1.msra.mxu0 %v5973
    %6104 = vmatprep.subr.mxu0 0.0
    %6105 = vmatpush1.msra.mxu0 %v5974
    %6106 = vmatprep.subr.mxu0 0.0
    %6107 = vmatpush1.msra.mxu0 %v5975
    %6108 = vmatprep.subr.mxu0 0.0
    %6109 = vmatpush1.msra.mxu0 %v5976
    %6110 = vmatprep.subr.mxu0 0.0
    %6111 = vmatpush1.msra.mxu0 %v5977
    %6112 = vmatprep.subr.mxu0 0.0
    %6113 = vmatpush1.msra.mxu0 %v5978
    %6114 = vmatprep.subr.mxu0 0.0
    %6115 = vmatpush1.msra.mxu0 %v5979
    %6116 = vmatprep.subr.mxu0 0.0
    %6117 = vmatpush1.msra.mxu0 %v5980
    %6118 = vmatprep.subr.mxu0 0.0
    %6119 = vmatpush1.msra.mxu0 0.0
    %6120 = vmatprep.subr.mxu0 0.0
    %6121 = vmatpush1.msra.mxu0 0.0
    %6122 = vmatprep.subr.mxu0 0.0
    %6123 = vmatpush1.msra.mxu0 0.0
    %6124 = vmatprep.subr.mxu0 0.0
    %6125 = vmatpush1.msra.mxu0 0.0
    %6126 = vmatprep.subr.mxu0 0.0
    %6127 = vmatpush1.msra.mxu0 0.0
    %6128 = vmatprep.subr.mxu0 0.0
    %6129 = vmatpush1.msra.mxu0 0.0
    %6130 = vmatprep.subr.mxu0 0.0
    %6131 = vmatpush1.msra.mxu0 0.0
    %6132 = vmatprep.subr.mxu0 0.0
    %6133 = vmatpush1.msra.mxu0 0.0
    %6134 = vmatprep.subr.mxu0 0.0
    %6135 = vmatpush1.msra.mxu0 0.0
    %6136 = vmatprep.subr.mxu0 0.0
    %6137 = vmatpush1.msra.mxu0 0.0
    %6138 = vmatprep.subr.mxu0 0.0
    %6139 = vmatpush1.msra.mxu0 0.0
    %6140 = vmatprep.subr.mxu0 0.0
    %6141 = vmatpush1.msra.mxu0 0.0
    %6142 = vmatprep.subr.mxu0 0.0
    %6143 = vmatpush1.msra.mxu0 0.0
    %6144 = vmatprep.subr.mxu0 0.0
    %6145 = vmatpush1.msra.mxu0 0.0
    %6146 = vmatprep.subr.mxu0 0.0
    %6147 = vmatpush1.msra.mxu0 0.0
    %6148 = vmatprep.subr.mxu0 0.0
    %6149 = vmatpush1.msra.mxu0 0.0
    %6150 = vmatprep.subr.mxu0 0.0
    %6151 = vmatpush1.msra.mxu0 0.0
    %6152 = vmatprep.subr.mxu0 0.0
    %6153 = vmatpush1.msra.mxu0 0.0
    %6154 = vmatprep.subr.mxu0 0.0
    %6155 = vmatpush1.msra.mxu0 0.0
    %6156 = vmatprep.subr.mxu0 0.0
    %6157 = vmatpush1.msra.mxu0 0.0
    %6158 = vmatprep.subr.mxu0 0.0
    %6159 = vmatpush1.msra.mxu0 0.0
    %6160 = vmatprep.subr.mxu0 0.0
    %6161 = vmatpush1.msra.mxu0 0.0
    %6162 = vmatprep.subr.mxu0 0.0
    %6163 = vmatpush1.msra.mxu0 0.0
    %6164 = vmatprep.subr.mxu0 0.0
    %6165 = vmatpush1.msra.mxu0 0.0
    %6166 = vmatprep.mubr.f32.mxu0 0.0
    %6167 = vmatmul.mubr.f32.gmra.mrb[0].mxu0 %v6006
    %v6168 = vpop.f32.mrb[0].mxu0
    %v6169 = vadd.f32 %v6084, %v6168
    %v6170 = vpop.f32.mrb[0].mxu0
    %6171 = vmatprep.mubr.f32.mxu0 0.0
    %6172 = vmatmul.mubr.f32.gmra.mrb[0].mxu0 %v6009
    %v6173 = vpop.f32.mrb[0].mxu0
    %v6174 = vadd.f32 %v6089, %v6173
    %v6175 = vpop.f32.mrb[0].mxu0
    %6176 = vmatprep.mubr.f32.mxu0 0.0
    %6177 = vmatmul.mubr.f32.gmra.mrb[0].mxu0 %v6012
    %v6178 = vpop.f32.mrb[0].mxu0
    %v6179 = vadd.f32 %v6094, %v6178
    %v6180 = vpop.f32.mrb[0].mxu0
    %6181 = vmatprep.mubr.f32.mxu0 0.0
    %6182 = vmatmul.mubr.f32.gmra.mrb[0].mxu0 %v6015
    %v6183 = vpop.f32.mrb[0].mxu0
    %v6184 = vadd.f32 %v6099, %v6183
    %v6185 = vpop.f32.mrb[0].mxu0
    %6186 = vdwg.mxu0
    %v6187 = vmax.f32 %v6169, 0.0
    %v6188 = vmax.f32 %v6174, 0.0
    %v6189 = vmax.f32 %v6179, 0.0
    %v6190 = vmax.f32 %v6184, 0.0
    %s6191 = scalar_lea.vmem [#allocation38], 32
    %v6192 = vld [vmem:[%s6191] sm:$0xff]
    %v6193 = vld [vmem:[%s6191 + $0x8] sm:$0xff]
    %v6194 = vld [vmem:[%s6191 + $0x10] sm:$0xff]
    %v6195 = vld [vmem:[%s6191 + $0x18] sm:$0xff]
    %s6196 = scalar_lea.vmem [#allocation38], 64
    %v6197 = vld [vmem:[%s6196] sm:$0xff]
    %v6198 = vld [vmem:[%s6196 + $0x8] sm:$0xff]
    %v6199 = vld [vmem:[%s6196 + $0x10] sm:$0xff]
    %v6200 = vld [vmem:[%s6196 + $0x18] sm:$0xff]
    %vm6201 = vcmask 392192
    %v6202 = vsel %vm6201, %v6187, 0.0
    %6203 = vadd.xlane.f32.xlu0 %v6202
    %v6204 = vpop.xlane.xlu0 %6203
    %v6205 = vsel %vm6201, %v6188, 0.0
    %6206 = vadd.xlane.f32.xlu0 %v6205
    %v6207 = vpop.xlane.xlu0 %6206
    %v6208 = vsel %vm6201, %v6189, 0.0
    %6209 = vadd.xlane.f32.xlu0 %v6208
    %v6210 = vpop.xlane.xlu0 %6209
    %v6211 = vsel %vm6201, %v6190, 0.0
    %6212 = vadd.xlane.f32.xlu0 %v6211
    %v6213 = vpop.xlane.xlu0 %6212
    %v6214 = vmul.f32 %v6204, 0.020833334
    %v6215 = vmul.f32 %v6207, 0.020833334
    %v6216 = vmul.f32 %v6210, 0.020833334
    %v6217 = vmul.f32 %v6213, 0.020833334
    %v6218 = vsub.f32 %v6187, %v6214
    %v6219 = vsub.f32 %v6188, %v6215
    %v6220 = vsub.f32 %v6189, %v6216
    %v6221 = vsub.f32 %v6190, %v6217
    %v6222 = vmul.f32 %v6218, %v6218
    %v6223 = vmul.f32 %v6219, %v6219
    %v6224 = vmul.f32 %v6220, %v6220
    %v6225 = vmul.f32 %v6221, %v6221
    %v6226 = vsel %vm6201, %v6222, 0.0
    %6227 = vadd.xlane.f32.xlu0 %v6226
    %v6228 = vpop.xlane.xlu0 %6227
    %v6229 = vsel %vm6201, %v6223, 0.0
    %6230 = vadd.xlane.f32.xlu0 %v6229
    %v6231 = vpop.xlane.xlu0 %6230
    %v6232 = vsel %vm6201, %v6224, 0.0
    %6233 = vadd.xlane.f32.xlu0 %v6232
    %v6234 = vpop.xlane.xlu0 %6233
    %v6235 = vsel %vm6201, %v6225, 0.0
    %6236 = vadd.xlane.f32.xlu0 %v6235
    %v6237 = vpop.xlane.xlu0 %6236
    %v6238 = vmul.f32 %v6228, 0.020833334
    %v6239 = vmul.f32 %v6231, 0.020833334
    %v6240 = vmul.f32 %v6234, 0.020833334
    %v6241 = vmul.f32 %v6237, 0.020833334
    %v6242 = vadd.f32 %v6238, 1e-05
    %v6243 = vadd.f32 %v6239, 1e-05
    %v6244 = vadd.f32 %v6240, 1e-05
    %v6245 = vadd.f32 %v6241, 1e-05
    %v6246 = vrsqrt.pop %v6242
    %v6247 = vrsqrt.pop %v6243
    %v6248 = vrsqrt.pop %v6244
    %v6249 = vrsqrt.pop %v6245
    %v6250 = vmul.f32 %v6218, %v6246
    %v6251 = vmul.f32 %v6219, %v6247
    %v6252 = vmul.f32 %v6220, %v6248
    %v6253 = vmul.f32 %v6221, %v6249
    %6255 = vset.pattern.permute.xlu0 0
    %6256 = vperm.xlu0 %6255, %v6192
    %v6257 = vpop.permute.xlu0 %6256
    %6260 = vset.pattern.permute.xlu0 0
    %6261 = vperm.xlu0 %6260, %v6193
    %v6262 = vpop.permute.xlu0 %6261
    %6265 = vset.pattern.permute.xlu0 0
    %6266 = vperm.xlu0 %6265, %v6194
    %v6267 = vpop.permute.xlu0 %6266
    %6270 = vset.pattern.permute.xlu0 0
    %6271 = vperm.xlu0 %6270, %v6195
    %v6272 = vpop.permute.xlu0 %6271
    %v6274 = vmul.f32 %v6250, %v6257
    %v6275 = vmul.f32 %v6251, %v6262
    %v6276 = vmul.f32 %v6252, %v6267
    %v6277 = vmul.f32 %v6253, %v6272
    %6279 = vset.pattern.permute.xlu0 0
    %6280 = vperm.xlu0 %6279, %v6197
    %v6281 = vpop.permute.xlu0 %6280
    %6284 = vset.pattern.permute.xlu0 0
    %6285 = vperm.xlu0 %6284, %v6198
    %v6286 = vpop.permute.xlu0 %6285
    %6289 = vset.pattern.permute.xlu0 0
    %6290 = vperm.xlu0 %6289, %v6199
    %v6291 = vpop.permute.xlu0 %6290
    %6294 = vset.pattern.permute.xlu0 0
    %6295 = vperm.xlu0 %6294, %v6200
    %v6296 = vpop.permute.xlu0 %6295
    %v6298 = vadd.f32 %v6274, %v6281
    %v6299 = vadd.f32 %v6275, %v6286
    %v6300 = vadd.f32 %v6276, %v6291
    %v6301 = vadd.f32 %v6277, %v6296
    %v6302 = vmul.u32 %v694, 2
    %v6303 = vmul.u32 %v695, 2
    %vm6304 = vcmp.eq.s32.totalorder %v723, %v6302
    %vm6305 = vcmp.eq.s32.totalorder %v723, %v6303
    %v6306 = vadd.s32 %v2464, 1
    %v6307 = vadd.s32 %v6302, 1
    %v6308 = vadd.s32 %v6303, 1
    %vm6309 = vcmp.eq.s32.totalorder %v723, %v6306
    %vm6310 = vcmp.eq.s32.totalorder %v723, %v6307
    %vm6311 = vcmp.eq.s32.totalorder %v723, %v6308
    %vm6312 = vmor %vm2468, %vm6309
    %vm6313 = vmor %vm6304, %vm6310
    %vm6314 = vmor %vm6305, %vm6311
    %v6315 = vsel %vm6312, 1, 0
    %v6316 = vsel %vm6313, 1, 0
    %v6317 = vsel %vm6314, 1, 0
    %v6318 = vcvt.s32.f32 %v6315
    %v6319 = vcvt.s32.f32 %v6316
    %v6320 = vcvt.s32.f32 %v6317
    %v6322 = vsel %vm6201, %v6298, 0
    %v6325 = vsel %vm6201, %v6299, 0
    %v6328 = vsel %vm6201, %v6300, 0
    %v6331 = vsel %vm6201, %v6301, 0
    %6333 = vmatprep.subr.mxu0 0.0
    %6334 = vmatpush1.msra.mxu0 %v5496
    %6335 = vmatprep.subr.mxu0 0.0
    %6336 = vmatpush1.msra.mxu0 %v5497
    %6337 = vmatprep.subr.mxu0 0.0
    %6338 = vmatpush1.msra.mxu0 %v5498
    %6339 = vmatprep.subr.mxu0 0.0
    %6340 = vmatpush1.msra.mxu0 %v6318
    %6341 = vmatprep.subr.mxu0 0.0
    %6342 = vmatpush1.msra.mxu0 %v6319
    %6343 = vmatprep.subr.mxu0 0.0
    %6344 = vmatpush1.msra.mxu0 %v6320
    %6345 = vmatprep.subr.mxu0 0.0
    %6346 = vmatpush1.msra.mxu0 0.0
    %6347 = vmatprep.subr.mxu0 0.0
    %6348 = vmatpush1.msra.mxu0 0.0
    %6349 = vmatprep.subr.mxu0 0.0
    %6350 = vmatpush1.msra.mxu0 0.0
    %6351 = vmatprep.subr.mxu0 0.0
    %6352 = vmatpush1.msra.mxu0 0.0
    %6353 = vmatprep.subr.mxu0 0.0
    %6354 = vmatpush1.msra.mxu0 0.0
    %6355 = vmatprep.subr.mxu0 0.0
    %6356 = vmatpush1.msra.mxu0 0.0
    %6357 = vmatprep.subr.mxu0 0.0
    %6358 = vmatpush1.msra.mxu0 0.0
    %6359 = vmatprep.subr.mxu0 0.0
    %6360 = vmatpush1.msra.mxu0 0.0
    %6361 = vmatprep.subr.mxu0 0.0
    %6362 = vmatpush1.msra.mxu0 0.0
    %6363 = vmatprep.subr.mxu0 0.0
    %6364 = vmatpush1.msra.mxu0 0.0
    %6365 = vmatprep.subr.mxu0 0.0
    %6366 = vmatpush1.msra.mxu0 0.0
    %6367 = vmatprep.subr.mxu0 0.0
    %6368 = vmatpush1.msra.mxu0 0.0
    %6369 = vmatprep.subr.mxu0 0.0
    %6370 = vmatpush1.msra.mxu0 0.0
    %6371 = vmatprep.subr.mxu0 0.0
    %6372 = vmatpush1.msra.mxu0 0.0
    %6373 = vmatprep.subr.mxu0 0.0
    %6374 = vmatpush1.msra.mxu0 0.0
    %6375 = vmatprep.subr.mxu0 0.0
    %6376 = vmatpush1.msra.mxu0 0.0
    %6377 = vmatprep.subr.mxu0 0.0
    %6378 = vmatpush1.msra.mxu0 0.0
    %6379 = vmatprep.subr.mxu0 0.0
    %6380 = vmatpush1.msra.mxu0 0.0
    %6381 = vmatprep.subr.mxu0 0.0
    %6382 = vmatpush1.msra.mxu0 0.0
    %6383 = vmatprep.subr.mxu0 0.0
    %6384 = vmatpush1.msra.mxu0 0.0
    %6385 = vmatprep.subr.mxu0 0.0
    %6386 = vmatpush1.msra.mxu0 0.0
    %6387 = vmatprep.subr.mxu0 0.0
    %6388 = vmatpush1.msra.mxu0 0.0
    %6389 = vmatprep.subr.mxu0 0.0
    %6390 = vmatpush1.msra.mxu0 0.0
    %6391 = vmatprep.subr.mxu0 0.0
    %6392 = vmatpush1.msra.mxu0 0.0
    %6393 = vmatprep.subr.mxu0 0.0
    %6394 = vmatpush1.msra.mxu0 0.0
    %6395 = vmatprep.subr.mxu0 0.0
    %6396 = vmatpush1.msra.mxu0 0.0
    %6397 = vmatprep.mubr.f32.mxu0 0.0
    %6398 = vmatmul.mubr.f32.gmra.mrb[0].mxu0 %v6322
    %v6399 = vpop.f32.mrb[0].mxu0
    %v6400 = vadd.f32 0.0, %v6399
    %v6401 = vpop.f32.mrb[0].mxu0
    %6402 = vmatprep.mubr.f32.mxu0 0.0
    %6403 = vmatmul.mubr.f32.gmra.mrb[0].mxu0 %v6325
    %v6404 = vpop.f32.mrb[0].mxu0
    %v6405 = vadd.f32 0.0, %v6404
    %v6406 = vpop.f32.mrb[0].mxu0
    %6407 = vmatprep.mubr.f32.mxu0 0.0
    %6408 = vmatmul.mubr.f32.gmra.mrb[0].mxu0 %v6328
    %v6409 = vpop.f32.mrb[0].mxu0
    %v6410 = vadd.f32 0.0, %v6409
    %v6411 = vpop.f32.mrb[0].mxu0
    %6412 = vmatprep.mubr.f32.mxu0 0.0
    %6413 = vmatmul.mubr.f32.gmra.mrb[0].mxu0 %v6331
    %v6414 = vpop.f32.mrb[0].mxu0
    %v6415 = vadd.f32 0.0, %v6414
    %v6416 = vpop.f32.mrb[0].mxu0
    %6417 = vdwg.mxu0
    %v6418 = vld [vmem:[#allocation39] sm:$0xff]
    %v6419 = vld [vmem:[#allocation39 + $0x8] sm:$0xff]
    %v6420 = vld [vmem:[#allocation39 + $0x10] sm:$0xff]
    %v6421 = vld [vmem:[#allocation39 + $0x18] sm:$0xff]
    %6426 = vrot.lane.b32.xlu0 %v6400, 3
    %v6427 = vpop.permute.xlu0 %6426
    %6428 = vrot.lane.b32.xlu0 %v6405, 3
    %v6429 = vpop.permute.xlu0 %6428
    %6430 = vrot.lane.b32.xlu0 %v6410, 3
    %v6431 = vpop.permute.xlu0 %6430
    %6432 = vrot.lane.b32.xlu0 %v6415, 3
    %v6433 = vpop.permute.xlu0 %6432
    %6438 = vrot.lane.b32.xlu0 %v6400, 9
    %v6439 = vpop.permute.xlu0 %6438
    %6440 = vrot.lane.b32.xlu0 %v6405, 9
    %v6441 = vpop.permute.xlu0 %6440
    %6442 = vrot.lane.b32.xlu0 %v6410, 9
    %v6443 = vpop.permute.xlu0 %6442
    %6444 = vrot.lane.b32.xlu0 %v6415, 9
    %v6445 = vpop.permute.xlu0 %6444
    %vm6450 = vcmask 23552
    %v6451 = vsel %vm6450, 0.0, %v6427
    %v6452 = vsel %vm6450, 0.0, %v6429
    %v6453 = vsel %vm6450, 0.0, %v6431
    %v6454 = vsel %vm6450, 0.0, %v6433
    %vm6455 = vcmask 416768
    %v6456 = vsel %vm6455, %v6451, 0.0
    %v6457 = vsel %vm6455, %v6452, 0.0
    %v6458 = vsel %vm6455, %v6453, 0.0
    %v6459 = vsel %vm6455, %v6454, 0.0
    %v6460 = vsel %vm5732, %v6456, 0.0
    %v6461 = vsel %vm5732, %v6457, 0.0
    %v6462 = vsel %vm5732, %v6458, 0.0
    %v6463 = vsel %vm5732, %v6459, 0.0
    %vm6464 = vcmask 465920
    %v6465 = vsel %vm6464, %v6460, %v6439
    %v6466 = vsel %vm6464, %v6461, %v6441
    %v6467 = vsel %vm6464, %v6462, %v6443
    %v6468 = vsel %vm6464, %v6463, %v6445
    %vm6469 = vcmask 859136
    %v6470 = vsel %vm6469, %v6465, 0.0
    %v6471 = vsel %vm6469, %v6466, 0.0
    %v6472 = vsel %vm6469, %v6467, 0.0
    %v6473 = vsel %vm6469, %v6468, 0.0
    %6478 = vrot.lane.b32.xlu0 %v6470, 124
    %v6479 = vpop.permute.xlu0 %6478
    %6480 = vrot.lane.b32.xlu0 %v6471, 124
    %v6481 = vpop.permute.xlu0 %6480
    %6482 = vrot.lane.b32.xlu0 %v6472, 124
    %v6483 = vpop.permute.xlu0 %6482
    %6484 = vrot.lane.b32.xlu0 %v6473, 124
    %v6485 = vpop.permute.xlu0 %6484
    %vm6490 = vcmask 408576
    %v6491 = vsel %vm6490, %v6470, %v6479
    %v6492 = vsel %vm6490, %v6471, %v6481
    %v6493 = vsel %vm6490, %v6472, %v6483
    %v6494 = vsel %vm6490, %v6473, %v6485
    %6495 = vrot.lane.b32.xlu0 %v6470, 127
    %v6496 = vpop.permute.xlu0 %6495
    %6497 = vrot.lane.b32.xlu0 %v6471, 127
    %v6498 = vpop.permute.xlu0 %6497
    %6499 = vrot.lane.b32.xlu0 %v6472, 127
    %v6500 = vpop.permute.xlu0 %6499
    %6501 = vrot.lane.b32.xlu0 %v6473, 127
    %v6502 = vpop.permute.xlu0 %6501
    %6507 = vrot.lane.b32.xlu0 %v6470, 123
    %v6508 = vpop.permute.xlu0 %6507
    %6509 = vrot.lane.b32.xlu0 %v6471, 123
    %v6510 = vpop.permute.xlu0 %6509
    %6511 = vrot.lane.b32.xlu0 %v6472, 123
    %v6512 = vpop.permute.xlu0 %6511
    %6513 = vrot.lane.b32.xlu0 %v6473, 123
    %v6514 = vpop.permute.xlu0 %6513
    %v6519 = vsel %vm6490, %v6496, %v6508
    %v6520 = vsel %vm6490, %v6498, %v6510
    %v6521 = vsel %vm6490, %v6500, %v6512
    %v6522 = vsel %vm6490, %v6502, %v6514
    %6523 = vrot.lane.b32.xlu0 %v6470, 126
    %v6524 = vpop.permute.xlu0 %6523
    %6525 = vrot.lane.b32.xlu0 %v6471, 126
    %v6526 = vpop.permute.xlu0 %6525
    %6527 = vrot.lane.b32.xlu0 %v6472, 126
    %v6528 = vpop.permute.xlu0 %6527
    %6529 = vrot.lane.b32.xlu0 %v6473, 126
    %v6530 = vpop.permute.xlu0 %6529
    %6535 = vrot.lane.b32.xlu0 %v6470, 122
    %v6536 = vpop.permute.xlu0 %6535
    %6537 = vrot.lane.b32.xlu0 %v6471, 122
    %v6538 = vpop.permute.xlu0 %6537
    %6539 = vrot.lane.b32.xlu0 %v6472, 122
    %v6540 = vpop.permute.xlu0 %6539
    %6541 = vrot.lane.b32.xlu0 %v6473, 122
    %v6542 = vpop.permute.xlu0 %6541
    %v6547 = vsel %vm6490, %v6524, %v6536
    %v6548 = vsel %vm6490, %v6526, %v6538
    %v6549 = vsel %vm6490, %v6528, %v6540
    %v6550 = vsel %vm6490, %v6530, %v6542
    %6551 = vrot.lane.b32.xlu0 %v6470, 125
    %v6552 = vpop.permute.xlu0 %6551
    %6553 = vrot.lane.b32.xlu0 %v6471, 125
    %v6554 = vpop.permute.xlu0 %6553
    %6555 = vrot.lane.b32.xlu0 %v6472, 125
    %v6556 = vpop.permute.xlu0 %6555
    %6557 = vrot.lane.b32.xlu0 %v6473, 125
    %v6558 = vpop.permute.xlu0 %6557
    %6563 = vrot.lane.b32.xlu0 %v6470, 121
    %v6564 = vpop.permute.xlu0 %6563
    %6565 = vrot.lane.b32.xlu0 %v6471, 121
    %v6566 = vpop.permute.xlu0 %6565
    %6567 = vrot.lane.b32.xlu0 %v6472, 121
    %v6568 = vpop.permute.xlu0 %6567
    %6569 = vrot.lane.b32.xlu0 %v6473, 121
    %v6570 = vpop.permute.xlu0 %6569
    %v6575 = vsel %vm6490, %v6552, %v6564
    %v6576 = vsel %vm6490, %v6554, %v6566
    %v6577 = vsel %vm6490, %v6556, %v6568
    %v6578 = vsel %vm6490, %v6558, %v6570
    %6579 = vrot.lane.b32.xlu0 %v6470, 120
    %v6580 = vpop.permute.xlu0 %6579
    %6581 = vrot.lane.b32.xlu0 %v6471, 120
    %v6582 = vpop.permute.xlu0 %6581
    %6583 = vrot.lane.b32.xlu0 %v6472, 120
    %v6584 = vpop.permute.xlu0 %6583
    %6585 = vrot.lane.b32.xlu0 %v6473, 120
    %v6586 = vpop.permute.xlu0 %6585
    %v6591 = vsel %vm6490, %v6479, %v6580
    %v6592 = vsel %vm6490, %v6481, %v6582
    %v6593 = vsel %vm6490, %v6483, %v6584
    %v6594 = vsel %vm6490, %v6485, %v6586
    %v6595 = vld [vmem:[#allocation41] sm:$0xff]
    %v6596 = vld [vmem:[#allocation41 + $0x8] sm:$0xff]
    %6598 = vset.pattern.permute.xlu0 0
    %6599 = vperm.xlu0 %6598, %v6595
    %v6600 = vpop.permute.xlu0 %6599
    %6603 = vset.pattern.permute.xlu0 0
    %6604 = vperm.xlu0 %6603, %v6596
    %v6605 = vpop.permute.xlu0 %6604
    %v6608 = vsel %vm1734, %v6419, 0
    %v6611 = vsel %vm1734, %v6421, 0
    %6613 = vmatprep.subr.mxu0 0.0
    %6614 = vmatpush1.msra.mxu0 %v6491
    %6615 = vmatprep.subr.mxu0 0.0
    %6616 = vmatpush1.msra.mxu0 %v6492
    %6617 = vmatprep.subr.mxu0 0.0
    %6618 = vmatpush1.msra.mxu0 %v6493
    %6619 = vmatprep.subr.mxu0 0.0
    %6620 = vmatpush1.msra.mxu0 %v6494
    %6621 = vmatprep.subr.mxu0 0.0
    %6622 = vmatpush1.msra.mxu0 %v6519
    %6623 = vmatprep.subr.mxu0 0.0
    %6624 = vmatpush1.msra.mxu0 %v6520
    %6625 = vmatprep.subr.mxu0 0.0
    %6626 = vmatpush1.msra.mxu0 %v6521
    %6627 = vmatprep.subr.mxu0 0.0
    %6628 = vmatpush1.msra.mxu0 %v6522
    %6629 = vmatprep.subr.mxu0 0.0
    %6630 = vmatpush1.msra.mxu0 %v6547
    %6631 = vmatprep.subr.mxu0 0.0
    %6632 = vmatpush1.msra.mxu0 %v6548
    %6633 = vmatprep.subr.mxu0 0.0
    %6634 = vmatpush1.msra.mxu0 %v6549
    %6635 = vmatprep.subr.mxu0 0.0
    %6636 = vmatpush1.msra.mxu0 %v6550
    %6637 = vmatprep.subr.mxu0 0.0
    %6638 = vmatpush1.msra.mxu0 %v6575
    %6639 = vmatprep.subr.mxu0 0.0
    %6640 = vmatpush1.msra.mxu0 %v6576
    %6641 = vmatprep.subr.mxu0 0.0
    %6642 = vmatpush1.msra.mxu0 %v6577
    %6643 = vmatprep.subr.mxu0 0.0
    %6644 = vmatpush1.msra.mxu0 %v6578
    %6645 = vmatprep.subr.mxu0 0.0
    %6646 = vmatpush1.msra.mxu0 %v6591
    %6647 = vmatprep.subr.mxu0 0.0
    %6648 = vmatpush1.msra.mxu0 %v6592
    %6649 = vmatprep.subr.mxu0 0.0
    %6650 = vmatpush1.msra.mxu0 %v6593
    %6651 = vmatprep.subr.mxu0 0.0
    %6652 = vmatpush1.msra.mxu0 %v6594
    %6653 = vmatprep.subr.mxu0 0.0
    %6654 = vmatpush1.msra.mxu0 0.0
    %6655 = vmatprep.subr.mxu0 0.0
    %6656 = vmatpush1.msra.mxu0 0.0
    %6657 = vmatprep.subr.mxu0 0.0
    %6658 = vmatpush1.msra.mxu0 0.0
    %6659 = vmatprep.subr.mxu0 0.0
    %6660 = vmatpush1.msra.mxu0 0.0
    %6661 = vmatprep.subr.mxu0 0.0
    %6662 = vmatpush1.msra.mxu0 0.0
    %6663 = vmatprep.subr.mxu0 0.0
    %6664 = vmatpush1.msra.mxu0 0.0
    %6665 = vmatprep.subr.mxu0 0.0
    %6666 = vmatpush1.msra.mxu0 0.0
    %6667 = vmatprep.subr.mxu0 0.0
    %6668 = vmatpush1.msra.mxu0 0.0
    %6669 = vmatprep.subr.mxu0 0.0
    %6670 = vmatpush1.msra.mxu0 0.0
    %6671 = vmatprep.subr.mxu0 0.0
    %6672 = vmatpush1.msra.mxu0 0.0
    %6673 = vmatprep.subr.mxu0 0.0
    %6674 = vmatpush1.msra.mxu0 0.0
    %6675 = vmatprep.subr.mxu0 0.0
    %6676 = vmatpush1.msra.mxu0 0.0
    %6677 = vmatprep.mubr.f32.mxu0 %v6608
    %6678 = vmatmul.mubr.f32.gmra.mrb[0].mxu0 %v6418
    %v6679 = vpop.f32.mrb[0].mxu0
    %v6680 = vadd.f32 %v6600, %v6679
    %v6681 = vpop.f32.mrb[0].mxu0
    %6682 = vmatprep.mubr.f32.mxu0 %v6611
    %6683 = vmatmul.mubr.f32.gmra.mrb[0].mxu0 %v6420
    %v6684 = vpop.f32.mrb[0].mxu0
    %v6685 = vadd.f32 %v6605, %v6684
    %v6686 = vpop.f32.mrb[0].mxu0
    %6687 = vdwg.mxu0
    %v6688 = vmax.f32 %v6680, 0.0
    %v6689 = vmax.f32 %v6685, 0.0
    %s6690 = scalar_lea.vmem [#allocation41], 16
    %v6691 = vld [vmem:[%s6690] sm:$0xff]
    %v6692 = vld [vmem:[%s6690 + $0x8] sm:$0xff]
    %s6693 = scalar_lea.vmem [#allocation41], 32
    %v6694 = vld [vmem:[%s6693] sm:$0xff]
    %v6695 = vld [vmem:[%s6693 + $0x8] sm:$0xff]
    %vm6696 = vcmask 818176
    %v6697 = vsel %vm6696, %v6688, 0.0
    %6698 = vadd.xlane.f32.xlu0 %v6697
    %v6699 = vpop.xlane.xlu0 %6698
    %v6700 = vsel %vm6696, %v6689, 0.0
    %6701 = vadd.xlane.f32.xlu0 %v6700
    %v6702 = vpop.xlane.xlu0 %6701
    %v6703 = vmul.f32 %v6699, 0.01
    %v6704 = vmul.f32 %v6702, 0.01
    %v6705 = vsub.f32 %v6688, %v6703
    %v6706 = vsub.f32 %v6689, %v6704
    %v6707 = vmul.f32 %v6705, %v6705
    %v6708 = vmul.f32 %v6706, %v6706
    %v6709 = vsel %vm6696, %v6707, 0.0
    %6710 = vadd.xlane.f32.xlu0 %v6709
    %v6711 = vpop.xlane.xlu0 %6710
    %v6712 = vsel %vm6696, %v6708, 0.0
    %6713 = vadd.xlane.f32.xlu0 %v6712
    %v6714 = vpop.xlane.xlu0 %6713
    %v6715 = vmul.f32 %v6711, 0.01
    %v6716 = vmul.f32 %v6714, 0.01
    %v6717 = vadd.f32 %v6715, 1e-05
    %v6718 = vadd.f32 %v6716, 1e-05
    %v6719 = vrsqrt.pop %v6717
    %v6720 = vrsqrt.pop %v6718
    %v6721 = vmul.f32 %v6705, %v6719
    %v6722 = vmul.f32 %v6706, %v6720
    %6724 = vset.pattern.permute.xlu0 0
    %6725 = vperm.xlu0 %6724, %v6691
    %v6726 = vpop.permute.xlu0 %6725
    %6729 = vset.pattern.permute.xlu0 0
    %6730 = vperm.xlu0 %6729, %v6692
    %v6731 = vpop.permute.xlu0 %6730
    %v6733 = vmul.f32 %v6721, %v6726
    %v6734 = vmul.f32 %v6722, %v6731
    %6736 = vset.pattern.permute.xlu0 0
    %6737 = vperm.xlu0 %6736, %v6694
    %v6738 = vpop.permute.xlu0 %6737
    %6741 = vset.pattern.permute.xlu0 0
    %6742 = vperm.xlu0 %6741, %v6695
    %v6743 = vpop.permute.xlu0 %6742
    %v6745 = vadd.f32 %v6733, %v6738
    %v6746 = vadd.f32 %v6734, %v6743
    %v6747 = vmul.u32 %v696, 2
    %v6748 = vmul.u32 %v697, 2
    %v6749 = vmul.u32 %v698, 2
    %v6750 = vmul.u32 %v699, 2
    %v6751 = vmul.u32 %v700, 2
    %v6752 = vmul.u32 %v701, 2
    %v6753 = vmul.u32 %v702, 2
    %vm6754 = vcmp.eq.s32.totalorder %v724, %v2461
    %vm6755 = vcmp.eq.s32.totalorder %v724, %v2462
    %vm6756 = vcmp.eq.s32.totalorder %v724, %v2463
    %vm6757 = vcmp.eq.s32.totalorder %v724, %v2464
    %vm6758 = vcmp.eq.s32.totalorder %v724, %v6302
    %vm6759 = vcmp.eq.s32.totalorder %v724, %v6303
    %vm6760 = vcmp.eq.s32.totalorder %v723, %v6747
    %vm6761 = vcmp.eq.s32.totalorder %v724, %v6747
    %vm6762 = vcmp.eq.s32.totalorder %v723, %v6748
    %vm6763 = vcmp.eq.s32.totalorder %v724, %v6748
    %vm6764 = vcmp.eq.s32.totalorder %v723, %v6749
    %vm6765 = vcmp.eq.s32.totalorder %v724, %v6749
    %vm6766 = vcmp.eq.s32.totalorder %v723, %v6750
    %vm6767 = vcmp.eq.s32.totalorder %v724, %v6750
    %vm6768 = vcmp.eq.s32.totalorder %v723, %v6751
    %vm6769 = vcmp.eq.s32.totalorder %v724, %v6751
    %vm6770 = vcmp.eq.s32.totalorder %v723, %v6752
    %vm6771 = vcmp.eq.s32.totalorder %v724, %v6752
    %vm6772 = vcmp.eq.s32.totalorder %v723, %v6753
    %vm6773 = vcmp.eq.s32.totalorder %v724, %v6753
    %v6774 = vadd.s32 %v6747, 1
    %v6775 = vadd.s32 %v6748, 1
    %v6776 = vadd.s32 %v6749, 1
    %v6777 = vadd.s32 %v6750, 1
    %v6778 = vadd.s32 %v6751, 1
    %v6779 = vadd.s32 %v6752, 1
    %v6780 = vadd.s32 %v6753, 1
    %vm6781 = vcmp.eq.s32.totalorder %v724, %v2485
    %vm6782 = vcmp.eq.s32.totalorder %v724, %v5486
    %vm6783 = vcmp.eq.s32.totalorder %v724, %v5487
    %vm6784 = vcmp.eq.s32.totalorder %v724, %v6306
    %vm6785 = vcmp.eq.s32.totalorder %v724, %v6307
    %vm6786 = vcmp.eq.s32.totalorder %v724, %v6308
    %vm6787 = vcmp.eq.s32.totalorder %v723, %v6774
    %vm6788 = vcmp.eq.s32.totalorder %v724, %v6774
    %vm6789 = vcmp.eq.s32.totalorder %v723, %v6775
    %vm6790 = vcmp.eq.s32.totalorder %v724, %v6775
    %vm6791 = vcmp.eq.s32.totalorder %v723, %v6776
    %vm6792 = vcmp.eq.s32.totalorder %v724, %v6776
    %vm6793 = vcmp.eq.s32.totalorder %v723, %v6777
    %vm6794 = vcmp.eq.s32.totalorder %v724, %v6777
    %vm6795 = vcmp.eq.s32.totalorder %v723, %v6778
    %vm6796 = vcmp.eq.s32.totalorder %v724, %v6778
    %vm6797 = vcmp.eq.s32.totalorder %v723, %v6779
    %vm6798 = vcmp.eq.s32.totalorder %v724, %v6779
    %vm6799 = vcmp.eq.s32.totalorder %v723, %v6780
    %vm6800 = vcmp.eq.s32.totalorder %v724, %v6780
    %vm6801 = vmor %vm6754, %vm6781
    %vm6802 = vmor %vm6755, %vm6782
    %vm6803 = vmor %vm6756, %vm6783
    %vm6804 = vmor %vm6757, %vm6784
    %vm6805 = vmor %vm6758, %vm6785
    %vm6806 = vmor %vm6759, %vm6786
    %vm6807 = vmor %vm6760, %vm6787
    %vm6808 = vmor %vm6761, %vm6788
    %vm6809 = vmor %vm6762, %vm6789
    %vm6810 = vmor %vm6763, %vm6790
    %vm6811 = vmor %vm6764, %vm6791
    %vm6812 = vmor %vm6765, %vm6792
    %vm6813 = vmor %vm6766, %vm6793
    %vm6814 = vmor %vm6767, %vm6794
    %vm6815 = vmor %vm6768, %vm6795
    %vm6816 = vmor %vm6769, %vm6796
    %vm6817 = vmor %vm6770, %vm6797
    %vm6818 = vmor %vm6771, %vm6798
    %vm6819 = vmor %vm6772, %vm6799
    %vm6820 = vmor %vm6773, %vm6800
    %v6821 = vsel %vm6801, 1, 0
    %v6822 = vsel %vm6802, 1, 0
    %v6823 = vsel %vm6803, 1, 0
    %v6824 = vsel %vm6804, 1, 0
    %v6825 = vsel %vm6805, 1, 0
    %v6826 = vsel %vm6806, 1, 0
    %v6827 = vsel %vm6807, 1, 0
    %v6828 = vsel %vm6808, 1, 0
    %v6829 = vsel %vm6809, 1, 0
    %v6830 = vsel %vm6810, 1, 0
    %v6831 = vsel %vm6811, 1, 0
    %v6832 = vsel %vm6812, 1, 0
    %v6833 = vsel %vm6813, 1, 0
    %v6834 = vsel %vm6814, 1, 0
    %v6835 = vsel %vm6815, 1, 0
    %v6836 = vsel %vm6816, 1, 0
    %v6837 = vsel %vm6817, 1, 0
    %v6838 = vsel %vm6818, 1, 0
    %v6839 = vsel %vm6819, 1, 0
    %v6840 = vsel %vm6820, 1, 0
    %v6841 = vcvt.s32.f32 %v6821
    %v6842 = vcvt.s32.f32 %v6822
    %v6843 = vcvt.s32.f32 %v6823
    %v6844 = vcvt.s32.f32 %v6824
    %v6845 = vcvt.s32.f32 %v6825
    %v6846 = vcvt.s32.f32 %v6826
    %v6847 = vcvt.s32.f32 %v6827
    %v6848 = vcvt.s32.f32 %v6828
    %v6849 = vcvt.s32.f32 %v6829
    %v6850 = vcvt.s32.f32 %v6830
    %v6851 = vcvt.s32.f32 %v6831
    %v6852 = vcvt.s32.f32 %v6832
    %v6853 = vcvt.s32.f32 %v6833
    %v6854 = vcvt.s32.f32 %v6834
    %v6855 = vcvt.s32.f32 %v6835
    %v6856 = vcvt.s32.f32 %v6836
    %v6857 = vcvt.s32.f32 %v6837
    %v6858 = vcvt.s32.f32 %v6838
    %v6859 = vcvt.s32.f32 %v6839
    %v6860 = vcvt.s32.f32 %v6840
    %v6862 = vsel %vm6696, %v6745, 0
    %v6865 = vsel %vm6696, %v6746, 0
    %v6868 = vsel %vm604, %v6859, 0
    %v6871 = vsel %vm604, %v6860, 0
    %6873 = vmatprep.subr.mxu0 %v6841
    %6874 = vmatpush1.msra.mxu0 %v5496
    %6875 = vmatprep.subr.mxu0 %v6842
    %6876 = vmatpush1.msra.mxu0 %v5497
    %6877 = vmatprep.subr.mxu0 %v6843
    %6878 = vmatpush1.msra.mxu0 %v5498
    %6879 = vmatprep.subr.mxu0 %v6844
    %6880 = vmatpush1.msra.mxu0 %v6318
    %6881 = vmatprep.subr.mxu0 %v6845
    %6882 = vmatpush1.msra.mxu0 %v6319
    %6883 = vmatprep.subr.mxu0 %v6846
    %6884 = vmatpush1.msra.mxu0 %v6320
    %6885 = vmatprep.subr.mxu0 %v6848
    %6886 = vmatpush1.msra.mxu0 %v6847
    %6887 = vmatprep.subr.mxu0 %v6850
    %6888 = vmatpush1.msra.mxu0 %v6849
    %6889 = vmatprep.subr.mxu0 %v6852
    %6890 = vmatpush1.msra.mxu0 %v6851
    %6891 = vmatprep.subr.mxu0 %v6854
    %6892 = vmatpush1.msra.mxu0 %v6853
    %6893 = vmatprep.subr.mxu0 %v6856
    %6894 = vmatpush1.msra.mxu0 %v6855
    %6895 = vmatprep.subr.mxu0 %v6858
    %6896 = vmatpush1.msra.mxu0 %v6857
    %6897 = vmatprep.subr.mxu0 %v6871
    %6898 = vmatpush1.msra.mxu0 %v6868
    %6899 = vmatprep.subr.mxu0 0.0
    %6900 = vmatpush1.msra.mxu0 0.0
    %6901 = vmatprep.subr.mxu0 0.0
    %6902 = vmatpush1.msra.mxu0 0.0
    %6903 = vmatprep.subr.mxu0 0.0
    %6904 = vmatpush1.msra.mxu0 0.0
    %6905 = vmatprep.subr.mxu0 0.0
    %6906 = vmatpush1.msra.mxu0 0.0
    %6907 = vmatprep.subr.mxu0 0.0
    %6908 = vmatpush1.msra.mxu0 0.0
    %6909 = vmatprep.subr.mxu0 0.0
    %6910 = vmatpush1.msra.mxu0 0.0
    %6911 = vmatprep.subr.mxu0 0.0
    %6912 = vmatpush1.msra.mxu0 0.0
    %6913 = vmatprep.subr.mxu0 0.0
    %6914 = vmatpush1.msra.mxu0 0.0
    %6915 = vmatprep.subr.mxu0 0.0
    %6916 = vmatpush1.msra.mxu0 0.0
    %6917 = vmatprep.subr.mxu0 0.0
    %6918 = vmatpush1.msra.mxu0 0.0
    %6919 = vmatprep.subr.mxu0 0.0
    %6920 = vmatpush1.msra.mxu0 0.0
    %6921 = vmatprep.subr.mxu0 0.0
    %6922 = vmatpush1.msra.mxu0 0.0
    %6923 = vmatprep.subr.mxu0 0.0
    %6924 = vmatpush1.msra.mxu0 0.0
    %6925 = vmatprep.subr.mxu0 0.0
    %6926 = vmatpush1.msra.mxu0 0.0
    %6927 = vmatprep.subr.mxu0 0.0
    %6928 = vmatpush1.msra.mxu0 0.0
    %6929 = vmatprep.subr.mxu0 0.0
    %6930 = vmatpush1.msra.mxu0 0.0
    %6931 = vmatprep.subr.mxu0 0.0
    %6932 = vmatpush1.msra.mxu0 0.0
    %6933 = vmatprep.subr.mxu0 0.0
    %6934 = vmatpush1.msra.mxu0 0.0
    %6935 = vmatprep.subr.mxu0 0.0
    %6936 = vmatpush1.msra.mxu0 0.0
    %6937 = vmatprep.mubr.f32.mxu0 0.0
    %6938 = vmatmul.mubr.f32.gmra.mrb[0].mxu0 %v6862
    %v6939 = vpop.f32.mrb[0].mxu0
    %v6940 = vadd.f32 0.0, %v6939
    %v6941 = vpop.f32.mrb[0].mxu0
    %v6942 = vadd.f32 0.0, %v6941
    %6943 = vmatprep.mubr.f32.mxu0 0.0
    %6944 = vmatmul.mubr.f32.gmra.mrb[0].mxu0 %v6865
    %v6945 = vpop.f32.mrb[0].mxu0
    %v6946 = vadd.f32 0.0, %v6945
    %v6947 = vpop.f32.mrb[0].mxu0
    %v6948 = vadd.f32 0.0, %v6947
    %6949 = vdwg.mxu0
    %v6950 = vld [vmem:[%s59] sm:$0xff]
    %6953 = vrot.lane.b32.xlu0 %v6940, 2
    %v6954 = vpop.permute.xlu0 %6953
    %6955 = vrot.lane.b32.xlu0 %v6946, 2
    %v6956 = vpop.permute.xlu0 %6955
    %6961 = vrot.lane.b32.xlu0 %v6940, 6
    %v6962 = vpop.permute.xlu0 %6961
    %6963 = vrot.lane.b32.xlu0 %v6942, 6
    %v6964 = vpop.permute.xlu0 %6963
    %6965 = vrot.lane.b32.xlu0 %v6946, 6
    %v6966 = vpop.permute.xlu0 %6965
    %6967 = vrot.lane.b32.xlu0 %v6948, 6
    %v6968 = vpop.permute.xlu0 %6967
    %v6969 = vsel %vm521, %v6962, %v6964
    %v6970 = vsel %vm521, %v6966, %v6968
    %v6975 = vsel %vm516, 0.0, %v6954
    %v6976 = vsel %vm516, 0.0, %v6956
    %vm6977 = vcmask 834560
    %v6978 = vsel %vm6977, %v6975, 0.0
    %v6979 = vsel %vm6977, %v6976, 0.0
    %vm6980 = vcmask 850944
    %v6981 = vsel %vm6980, %v6978, 0.0
    %v6982 = vsel %vm6980, %v6979, 0.0
    %vm6983 = vcmask 867328
    %v6984 = vsel %vm6983, %v6981, %v6962
    %v6985 = vsel %vm6983, %v6982, %v6966
    %vm6986 = vcmask 637952
    %v6987 = vsel %vm6986, %v6969, 0.0
    %v6988 = vsel %vm6986, %v6970, 0.0
    %6993 = vrot.lane.b32.xlu0 %v6984, 124
    %v6994 = vpop.permute.xlu0 %6993
    %6995 = vrot.lane.b32.xlu0 %v6987, 124
    %v6996 = vpop.permute.xlu0 %6995
    %6997 = vrot.lane.b32.xlu0 %v6985, 124
    %v6998 = vpop.permute.xlu0 %6997
    %6999 = vrot.lane.b32.xlu0 %v6988, 124
    %v7000 = vpop.permute.xlu0 %6999
    %v7001 = vsel %vm530, %v6994, %v6996
    %v7002 = vsel %vm530, %v6998, %v7000
    %v7007 = vsel %vm6696, %v6984, %v7001
    %v7008 = vsel %vm6696, %v6985, %v7002
    %7009 = vrot.lane.b32.xlu0 %v6984, 127
    %v7010 = vpop.permute.xlu0 %7009
    %7011 = vrot.lane.b32.xlu0 %v6985, 127
    %v7012 = vpop.permute.xlu0 %7011
    %7015 = vrot.lane.b32.xlu0 %v6984, 123
    %v7016 = vpop.permute.xlu0 %7015
    %7017 = vrot.lane.b32.xlu0 %v6987, 123
    %v7018 = vpop.permute.xlu0 %7017
    %7019 = vrot.lane.b32.xlu0 %v6985, 123
    %v7020 = vpop.permute.xlu0 %7019
    %7021 = vrot.lane.b32.xlu0 %v6988, 123
    %v7022 = vpop.permute.xlu0 %7021
    %v7023 = vsel %vm544, %v7016, %v7018
    %v7024 = vsel %vm544, %v7020, %v7022
    %v7029 = vsel %vm6696, %v7010, %v7023
    %v7030 = vsel %vm6696, %v7012, %v7024
    %7031 = vrot.lane.b32.xlu0 %v6984, 126
    %v7032 = vpop.permute.xlu0 %7031
    %7033 = vrot.lane.b32.xlu0 %v6985, 126
    %v7034 = vpop.permute.xlu0 %7033
    %7037 = vrot.lane.b32.xlu0 %v6984, 122
    %v7038 = vpop.permute.xlu0 %7037
    %7039 = vrot.lane.b32.xlu0 %v6987, 122
    %v7040 = vpop.permute.xlu0 %7039
    %7041 = vrot.lane.b32.xlu0 %v6985, 122
    %v7042 = vpop.permute.xlu0 %7041
    %7043 = vrot.lane.b32.xlu0 %v6988, 122
    %v7044 = vpop.permute.xlu0 %7043
    %v7045 = vsel %vm556, %v7038, %v7040
    %v7046 = vsel %vm556, %v7042, %v7044
    %v7051 = vsel %vm6696, %v7032, %v7045
    %v7052 = vsel %vm6696, %v7034, %v7046
    %7053 = vrot.lane.b32.xlu0 %v6984, 125
    %v7054 = vpop.permute.xlu0 %7053
    %7055 = vrot.lane.b32.xlu0 %v6985, 125
    %v7056 = vpop.permute.xlu0 %7055
    %7059 = vrot.lane.b32.xlu0 %v6984, 121
    %v7060 = vpop.permute.xlu0 %7059
    %7061 = vrot.lane.b32.xlu0 %v6987, 121
    %v7062 = vpop.permute.xlu0 %7061
    %7063 = vrot.lane.b32.xlu0 %v6985, 121
    %v7064 = vpop.permute.xlu0 %7063
    %7065 = vrot.lane.b32.xlu0 %v6988, 121
    %v7066 = vpop.permute.xlu0 %7065
    %v7067 = vsel %vm568, %v7060, %v7062
    %v7068 = vsel %vm568, %v7064, %v7066
    %v7073 = vsel %vm6696, %v7054, %v7067
    %v7074 = vsel %vm6696, %v7056, %v7068
    %7077 = vrot.lane.b32.xlu0 %v6984, 120
    %v7078 = vpop.permute.xlu0 %7077
    %7079 = vrot.lane.b32.xlu0 %v6987, 120
    %v7080 = vpop.permute.xlu0 %7079
    %7081 = vrot.lane.b32.xlu0 %v6985, 120
    %v7082 = vpop.permute.xlu0 %7081
    %7083 = vrot.lane.b32.xlu0 %v6988, 120
    %v7084 = vpop.permute.xlu0 %7083
    %v7085 = vsel %vm577, %v7078, %v7080
    %v7086 = vsel %vm577, %v7082, %v7084
    %v7091 = vsel %vm6696, %v6994, %v7085
    %v7092 = vsel %vm6696, %v6998, %v7086
    %v7093 = vld [vmem:[#allocation42] sm:$0xff]
    %7095 = vset.pattern.permute.xlu0 0
    %7096 = vperm.xlu0 %7095, %v7093
    %v7097 = vpop.permute.xlu0 %7096
    %v7100 = vsel %vm1787, %v6950, 0
    %7102 = vmatprep.subr.mxu0 %v6996
    %7103 = vmatpush1.msra.mxu0 %v7007
    %7104 = vmatprep.subr.mxu0 %v7000
    %7105 = vmatpush1.msra.mxu0 %v7008
    %7106 = vmatprep.subr.mxu0 %v7018
    %7107 = vmatpush1.msra.mxu0 %v7029
    %7108 = vmatprep.subr.mxu0 %v7022
    %7109 = vmatpush1.msra.mxu0 %v7030
    %7110 = vmatprep.subr.mxu0 %v7040
    %7111 = vmatpush1.msra.mxu0 %v7051
    %7112 = vmatprep.subr.mxu0 %v7044
    %7113 = vmatpush1.msra.mxu0 %v7052
    %7114 = vmatprep.subr.mxu0 %v7062
    %7115 = vmatpush1.msra.mxu0 %v7073
    %7116 = vmatprep.subr.mxu0 %v7066
    %7117 = vmatpush1.msra.mxu0 %v7074
    %7118 = vmatprep.subr.mxu0 %v7080
    %7119 = vmatpush1.msra.mxu0 %v7091
    %7120 = vmatprep.subr.mxu0 %v7084
    %7121 = vmatpush1.msra.mxu0 %v7092
    %7122 = vmatprep.subr.mxu0 0.0
    %7123 = vmatpush1.msra.mxu0 0.0
    %7124 = vmatprep.subr.mxu0 0.0
    %7125 = vmatpush1.msra.mxu0 0.0
    %7126 = vmatprep.subr.mxu0 0.0
    %7127 = vmatpush1.msra.mxu0 0.0
    %7128 = vmatprep.subr.mxu0 0.0
    %7129 = vmatpush1.msra.mxu0 0.0
    %7130 = vmatprep.subr.mxu0 0.0
    %7131 = vmatpush1.msra.mxu0 0.0
    %7132 = vmatprep.subr.mxu0 0.0
    %7133 = vmatpush1.msra.mxu0 0.0
    %7134 = vmatprep.subr.mxu0 0.0
    %7135 = vmatpush1.msra.mxu0 0.0
    %7136 = vmatprep.subr.mxu0 0.0
    %7137 = vmatpush1.msra.mxu0 0.0
    %7138 = vmatprep.subr.mxu0 0.0
    %7139 = vmatpush1.msra.mxu0 0.0
    %7140 = vmatprep.subr.mxu0 0.0
    %7141 = vmatpush1.msra.mxu0 0.0
    %7142 = vmatprep.subr.mxu0 0.0
    %7143 = vmatpush1.msra.mxu0 0.0
    %7144 = vmatprep.subr.mxu0 0.0
    %7145 = vmatpush1.msra.mxu0 0.0
    %7146 = vmatprep.subr.mxu0 0.0
    %7147 = vmatpush1.msra.mxu0 0.0
    %7148 = vmatprep.subr.mxu0 0.0
    %7149 = vmatpush1.msra.mxu0 0.0
    %7150 = vmatprep.subr.mxu0 0.0
    %7151 = vmatpush1.msra.mxu0 0.0
    %7152 = vmatprep.subr.mxu0 0.0
    %7153 = vmatpush1.msra.mxu0 0.0
    %7154 = vmatprep.subr.mxu0 0.0
    %7155 = vmatpush1.msra.mxu0 0.0
    %7156 = vmatprep.subr.mxu0 0.0
    %7157 = vmatpush1.msra.mxu0 0.0
    %7158 = vmatprep.subr.mxu0 0.0
    %7159 = vmatpush1.msra.mxu0 0.0
    %7160 = vmatprep.subr.mxu0 0.0
    %7161 = vmatpush1.msra.mxu0 0.0
    %7162 = vmatprep.subr.mxu0 0.0
    %7163 = vmatpush1.msra.mxu0 0.0
    %7164 = vmatprep.subr.mxu0 0.0
    %7165 = vmatpush1.msra.mxu0 0.0
    %7166 = vmatprep.mubr.f32.mxu0 0.0
    %7167 = vmatmul.mubr.f32.gmra.mrb[0].mxu0 %v7100
    %v7168 = vpop.f32.mrb[0].mxu0
    %v7169 = vadd.f32 %v7097, %v7168
    %v7170 = vpop.f32.mrb[0].mxu0
    %v7171 = vadd.f32 %v7097, %v7170
    %7172 = vdwg.mxu0
    %v7173 = vmax.f32 %v7169, 0.0
    %v7174 = vmax.f32 %v7171, 0.0
    %s7175 = scalar_lea.vmem [#allocation42], 8
    %v7176 = vld [vmem:[%s7175] sm:$0xff]
    %s7177 = scalar_lea.vmem [#allocation42], 16
    %v7178 = vld [vmem:[%s7177] sm:$0xff]
    %vm7179 = vcmask 588800
    %v7180 = vsel %vm7179, %v7174, 0.0
    %v7181 = vadd.f32 %v7173, %v7180
    %7182 = vadd.xlane.f32.xlu0 %v7181
    %v7183 = vpop.xlane.xlu0 %7182
    %v7184 = vmul.f32 %v7183, 0.005
    %v7185 = vsub.f32 %v7173, %v7184
    %v7186 = vsub.f32 %v7174, %v7184
    %v7187 = vmul.f32 %v7185, %v7185
    %v7188 = vmul.f32 %v7186, %v7186
    %v7189 = vsel %vm7179, %v7188, 0.0
    %v7190 = vadd.f32 %v7187, %v7189
    %7191 = vadd.xlane.f32.xlu0 %v7190
    %v7192 = vpop.xlane.xlu0 %7191
    %v7193 = vmul.f32 %v7192, 0.005
    %v7194 = vadd.f32 %v7193, 1e-05
    %v7195 = vrsqrt.pop %v7194
    %v7196 = vmul.f32 %v7185, %v7195
    %v7197 = vmul.f32 %v7186, %v7195
    %7199 = vset.pattern.permute.xlu0 0
    %7200 = vperm.xlu0 %7199, %v7176
    %v7201 = vpop.permute.xlu0 %7200
    %v7203 = vmul.f32 %v7196, %v7201
    %v7204 = vmul.f32 %v7197, %v7201
    %7206 = vset.pattern.permute.xlu0 0
    %7207 = vperm.xlu0 %7206, %v7178
    %v7208 = vpop.permute.xlu0 %7207
    %v7210 = vadd.f32 %v7203, %v7208
    %v7211 = vadd.f32 %v7204, %v7208
    %v7212 = vadd.s32 %v723, 256
    %v7213 = vadd.s32 %v723, 384
    %v7214 = vmul.u32 %v703, 2
    %v7215 = vmul.u32 %v704, 2
    %v7216 = vmul.u32 %v705, 2
    %v7217 = vmul.u32 %v706, 2
    %v7218 = vmul.u32 %v707, 2
    %v7219 = vmul.u32 %v708, 2
    %v7220 = vmul.u32 %v709, 2
    %v7221 = vmul.u32 %v710, 2
    %v7222 = vmul.u32 %v711, 2
    %v7223 = vmul.u32 %v712, 2
    %v7224 = vmul.u32 %v713, 2
    %v7225 = vmul.u32 %v714, 2
    %vm7226 = vcmp.eq.s32.totalorder %v7212, %v2461
    %vm7227 = vcmp.eq.s32.totalorder %v7213, %v2461
    %vm7228 = vcmp.eq.s32.totalorder %v7212, %v2462
    %vm7229 = vcmp.eq.s32.totalorder %v7213, %v2462
    %vm7230 = vcmp.eq.s32.totalorder %v7212, %v2463
    %vm7231 = vcmp.eq.s32.totalorder %v7213, %v2463
    %vm7232 = vcmp.eq.s32.totalorder %v7212, %v2464
    %vm7233 = vcmp.eq.s32.totalorder %v7213, %v2464
    %vm7234 = vcmp.eq.s32.totalorder %v7212, %v6302
    %vm7235 = vcmp.eq.s32.totalorder %v7213, %v6302
    %vm7236 = vcmp.eq.s32.totalorder %v7212, %v6303
    %vm7237 = vcmp.eq.s32.totalorder %v7213, %v6303
    %vm7238 = vcmp.eq.s32.totalorder %v7212, %v6747
    %vm7239 = vcmp.eq.s32.totalorder %v7213, %v6747
    %vm7240 = vcmp.eq.s32.totalorder %v7212, %v6748
    %vm7241 = vcmp.eq.s32.totalorder %v7213, %v6748
    %vm7242 = vcmp.eq.s32.totalorder %v7212, %v6749
    %vm7243 = vcmp.eq.s32.totalorder %v7213, %v6749
    %vm7244 = vcmp.eq.s32.totalorder %v7212, %v6750
    %vm7245 = vcmp.eq.s32.totalorder %v7213, %v6750
    %vm7246 = vcmp.eq.s32.totalorder %v7212, %v6751
    %vm7247 = vcmp.eq.s32.totalorder %v7213, %v6751
    %vm7248 = vcmp.eq.s32.totalorder %v7212, %v6752
    %vm7249 = vcmp.eq.s32.totalorder %v7213, %v6752
    %vm7250 = vcmp.eq.s32.totalorder %v7212, %v6753
    %vm7251 = vcmp.eq.s32.totalorder %v7213, %v6753
    %vm7252 = vcmp.eq.s32.totalorder %v723, %v7214
    %vm7253 = vcmp.eq.s32.totalorder %v724, %v7214
    %vm7254 = vcmp.eq.s32.totalorder %v7212, %v7214
    %vm7255 = vcmp.eq.s32.totalorder %v7213, %v7214
    %vm7256 = vcmp.eq.s32.totalorder %v723, %v7215
    %vm7257 = vcmp.eq.s32.totalorder %v724, %v7215
    %vm7258 = vcmp.eq.s32.totalorder %v7212, %v7215
    %vm7259 = vcmp.eq.s32.totalorder %v7213, %v7215
    %vm7260 = vcmp.eq.s32.totalorder %v723, %v7216
    %vm7261 = vcmp.eq.s32.totalorder %v724, %v7216
    %vm7262 = vcmp.eq.s32.totalorder %v7212, %v7216
    %vm7263 = vcmp.eq.s32.totalorder %v7213, %v7216
    %vm7264 = vcmp.eq.s32.totalorder %v723, %v7217
    %vm7265 = vcmp.eq.s32.totalorder %v724, %v7217
    %vm7266 = vcmp.eq.s32.totalorder %v7212, %v7217
    %vm7267 = vcmp.eq.s32.totalorder %v7213, %v7217
    %vm7268 = vcmp.eq.s32.totalorder %v723, %v7218
    %vm7269 = vcmp.eq.s32.totalorder %v724, %v7218
    %vm7270 = vcmp.eq.s32.totalorder %v7212, %v7218
    %vm7271 = vcmp.eq.s32.totalorder %v7213, %v7218
    %vm7272 = vcmp.eq.s32.totalorder %v723, %v7219
    %vm7273 = vcmp.eq.s32.totalorder %v724, %v7219
    %vm7274 = vcmp.eq.s32.totalorder %v7212, %v7219
    %vm7275 = vcmp.eq.s32.totalorder %v7213, %v7219
    %vm7276 = vcmp.eq.s32.totalorder %v723, %v7220
    %vm7277 = vcmp.eq.s32.totalorder %v724, %v7220
    %vm7278 = vcmp.eq.s32.totalorder %v7212, %v7220
    %vm7279 = vcmp.eq.s32.totalorder %v7213, %v7220
    %vm7280 = vcmp.eq.s32.totalorder %v723, %v7221
    %vm7281 = vcmp.eq.s32.totalorder %v724, %v7221
    %vm7282 = vcmp.eq.s32.totalorder %v7212, %v7221
    %vm7283 = vcmp.eq.s32.totalorder %v7213, %v7221
    %vm7284 = vcmp.eq.s32.totalorder %v723, %v7222
    %vm7285 = vcmp.eq.s32.totalorder %v724, %v7222
    %vm7286 = vcmp.eq.s32.totalorder %v7212, %v7222
    %vm7287 = vcmp.eq.s32.totalorder %v7213, %v7222
    %vm7288 = vcmp.eq.s32.totalorder %v723, %v7223
    %vm7289 = vcmp.eq.s32.totalorder %v724, %v7223
    %vm7290 = vcmp.eq.s32.totalorder %v7212, %v7223
    %vm7291 = vcmp.eq.s32.totalorder %v7213, %v7223
    %vm7292 = vcmp.eq.s32.totalorder %v723, %v7224
    %vm7293 = vcmp.eq.s32.totalorder %v724, %v7224
    %vm7294 = vcmp.eq.s32.totalorder %v7212, %v7224
    %vm7295 = vcmp.eq.s32.totalorder %v7213, %v7224
    %vm7296 = vcmp.eq.s32.totalorder %v723, %v7225
    %vm7297 = vcmp.eq.s32.totalorder %v724, %v7225
    %vm7298 = vcmp.eq.s32.totalorder %v7212, %v7225
    %vm7299 = vcmp.eq.s32.totalorder %v7213, %v7225
    %v7300 = vadd.s32 %v7214, 1
    %v7301 = vadd.s32 %v7215, 1
    %v7302 = vadd.s32 %v7216, 1
    %v7303 = vadd.s32 %v7217, 1
    %v7304 = vadd.s32 %v7218, 1
    %v7305 = vadd.s32 %v7219, 1
    %v7306 = vadd.s32 %v7220, 1
    %v7307 = vadd.s32 %v7221, 1
    %v7308 = vadd.s32 %v7222, 1
    %v7309 = vadd.s32 %v7223, 1
    %v7310 = vadd.s32 %v7224, 1
    %v7311 = vadd.s32 %v7225, 1
    %vm7312 = vcmp.eq.s32.totalorder %v7212, %v2485
    %vm7313 = vcmp.eq.s32.totalorder %v7213, %v2485
    %vm7314 = vcmp.eq.s32.totalorder %v7212, %v5486
    %vm7315 = vcmp.eq.s32.totalorder %v7213, %v5486
    %vm7316 = vcmp.eq.s32.totalorder %v7212, %v5487
    %vm7317 = vcmp.eq.s32.totalorder %v7213, %v5487
    %vm7318 = vcmp.eq.s32.totalorder %v7212, %v6306
    %vm7319 = vcmp.eq.s32.totalorder %v7213, %v6306
    %vm7320 = vcmp.eq.s32.totalorder %v7212, %v6307
    %vm7321 = vcmp.eq.s32.totalorder %v7213, %v6307
    %vm7322 = vcmp.eq.s32.totalorder %v7212, %v6308
    %vm7323 = vcmp.eq.s32.totalorder %v7213, %v6308
    %vm7324 = vcmp.eq.s32.totalorder %v7212, %v6774
    %vm7325 = vcmp.eq.s32.totalorder %v7213, %v6774
    %vm7326 = vcmp.eq.s32.totalorder %v7212, %v6775
    %vm7327 = vcmp.eq.s32.totalorder %v7213, %v6775
    %vm7328 = vcmp.eq.s32.totalorder %v7212, %v6776
    %vm7329 = vcmp.eq.s32.totalorder %v7213, %v6776
    %vm7330 = vcmp.eq.s32.totalorder %v7212, %v6777
    %vm7331 = vcmp.eq.s32.totalorder %v7213, %v6777
    %vm7332 = vcmp.eq.s32.totalorder %v7212, %v6778
    %vm7333 = vcmp.eq.s32.totalorder %v7213, %v6778
    %vm7334 = vcmp.eq.s32.totalorder %v7212, %v6779
    %vm7335 = vcmp.eq.s32.totalorder %v7213, %v6779
    %vm7336 = vcmp.eq.s32.totalorder %v7212, %v6780
    %vm7337 = vcmp.eq.s32.totalorder %v7213, %v6780
    %vm7338 = vcmp.eq.s32.totalorder %v723, %v7300
    %vm7339 = vcmp.eq.s32.totalorder %v724, %v7300
    %vm7340 = vcmp.eq.s32.totalorder %v7212, %v7300
    %vm7341 = vcmp.eq.s32.totalorder %v7213, %v7300
    %vm7342 = vcmp.eq.s32.totalorder %v723, %v7301
    %vm7343 = vcmp.eq.s32.totalorder %v724, %v7301
    %vm7344 = vcmp.eq.s32.totalorder %v7212, %v7301
    %vm7345 = vcmp.eq.s32.totalorder %v7213, %v7301
    %vm7346 = vcmp.eq.s32.totalorder %v723, %v7302
    %vm7347 = vcmp.eq.s32.totalorder %v724, %v7302
    %vm7348 = vcmp.eq.s32.totalorder %v7212, %v7302
    %vm7349 = vcmp.eq.s32.totalorder %v7213, %v7302
    %vm7350 = vcmp.eq.s32.totalorder %v723, %v7303
    %vm7351 = vcmp.eq.s32.totalorder %v724, %v7303
    %vm7352 = vcmp.eq.s32.totalorder %v7212, %v7303
    %vm7353 = vcmp.eq.s32.totalorder %v7213, %v7303
    %vm7354 = vcmp.eq.s32.totalorder %v723, %v7304
    %vm7355 = vcmp.eq.s32.totalorder %v724, %v7304
    %vm7356 = vcmp.eq.s32.totalorder %v7212, %v7304
    %vm7357 = vcmp.eq.s32.totalorder %v7213, %v7304
    %vm7358 = vcmp.eq.s32.totalorder %v723, %v7305
    %vm7359 = vcmp.eq.s32.totalorder %v724, %v7305
    %vm7360 = vcmp.eq.s32.totalorder %v7212, %v7305
    %vm7361 = vcmp.eq.s32.totalorder %v7213, %v7305
    %vm7362 = vcmp.eq.s32.totalorder %v723, %v7306
    %vm7363 = vcmp.eq.s32.totalorder %v724, %v7306
    %vm7364 = vcmp.eq.s32.totalorder %v7212, %v7306
    %vm7365 = vcmp.eq.s32.totalorder %v7213, %v7306
    %vm7366 = vcmp.eq.s32.totalorder %v723, %v7307
    %vm7367 = vcmp.eq.s32.totalorder %v724, %v7307
    %vm7368 = vcmp.eq.s32.totalorder %v7212, %v7307
    %vm7369 = vcmp.eq.s32.totalorder %v7213, %v7307
    %vm7370 = vcmp.eq.s32.totalorder %v723, %v7308
    %vm7371 = vcmp.eq.s32.totalorder %v724, %v7308
    %vm7372 = vcmp.eq.s32.totalorder %v7212, %v7308
    %vm7373 = vcmp.eq.s32.totalorder %v7213, %v7308
    %vm7374 = vcmp.eq.s32.totalorder %v723, %v7309
    %vm7375 = vcmp.eq.s32.totalorder %v724, %v7309
    %vm7376 = vcmp.eq.s32.totalorder %v7212, %v7309
    %vm7377 = vcmp.eq.s32.totalorder %v7213, %v7309
    %vm7378 = vcmp.eq.s32.totalorder %v723, %v7310
    %vm7379 = vcmp.eq.s32.totalorder %v724, %v7310
    %vm7380 = vcmp.eq.s32.totalorder %v7212, %v7310
    %vm7381 = vcmp.eq.s32.totalorder %v7213, %v7310
    %vm7382 = vcmp.eq.s32.totalorder %v723, %v7311
    %vm7383 = vcmp.eq.s32.totalorder %v724, %v7311
    %vm7384 = vcmp.eq.s32.totalorder %v7212, %v7311
    %vm7385 = vcmp.eq.s32.totalorder %v7213, %v7311
    %vm7386 = vmor %vm7226, %vm7312
    %vm7387 = vmor %vm7227, %vm7313
    %vm7388 = vmor %vm7228, %vm7314
    %vm7389 = vmor %vm7229, %vm7315
    %vm7390 = vmor %vm7230, %vm7316
    %vm7391 = vmor %vm7231, %vm7317
    %vm7392 = vmor %vm7232, %vm7318
    %vm7393 = vmor %vm7233, %vm7319
    %vm7394 = vmor %vm7234, %vm7320
    %vm7395 = vmor %vm7235, %vm7321
    %vm7396 = vmor %vm7236, %vm7322
    %vm7397 = vmor %vm7237, %vm7323
    %vm7398 = vmor %vm7238, %vm7324
    %vm7399 = vmor %vm7239, %vm7325
    %vm7400 = vmor %vm7240, %vm7326
    %vm7401 = vmor %vm7241, %vm7327
    %vm7402 = vmor %vm7242, %vm7328
    %vm7403 = vmor %vm7243, %vm7329
    %vm7404 = vmor %vm7244, %vm7330
    %vm7405 = vmor %vm7245, %vm7331
    %vm7406 = vmor %vm7246, %vm7332
    %vm7407 = vmor %vm7247, %vm7333
    %vm7408 = vmor %vm7248, %vm7334
    %vm7409 = vmor %vm7249, %vm7335
    %vm7410 = vmor %vm7250, %vm7336
    %vm7411 = vmor %vm7251, %vm7337
    %vm7412 = vmor %vm7252, %vm7338
    %vm7413 = vmor %vm7253, %vm7339
    %vm7414 = vmor %vm7254, %vm7340
    %vm7415 = vmor %vm7255, %vm7341
    %vm7416 = vmor %vm7256, %vm7342
    %vm7417 = vmor %vm7257, %vm7343
    %vm7418 = vmor %vm7258, %vm7344
    %vm7419 = vmor %vm7259, %vm7345
    %vm7420 = vmor %vm7260, %vm7346
    %vm7421 = vmor %vm7261, %vm7347
    %vm7422 = vmor %vm7262, %vm7348
    %vm7423 = vmor %vm7263, %vm7349
    %vm7424 = vmor %vm7264, %vm7350
    %vm7425 = vmor %vm7265, %vm7351
    %vm7426 = vmor %vm7266, %vm7352
    %vm7427 = vmor %vm7267, %vm7353
    %vm7428 = vmor %vm7268, %vm7354
    %vm7429 = vmor %vm7269, %vm7355
    %vm7430 = vmor %vm7270, %vm7356
    %vm7431 = vmor %vm7271, %vm7357
    %vm7432 = vmor %vm7272, %vm7358
    %vm7433 = vmor %vm7273, %vm7359
    %vm7434 = vmor %vm7274, %vm7360
    %vm7435 = vmor %vm7275, %vm7361
    %vm7436 = vmor %vm7276, %vm7362
    %vm7437 = vmor %vm7277, %vm7363
    %vm7438 = vmor %vm7278, %vm7364
    %vm7439 = vmor %vm7279, %vm7365
    %vm7440 = vmor %vm7280, %vm7366
    %vm7441 = vmor %vm7281, %vm7367
    %vm7442 = vmor %vm7282, %vm7368
    %vm7443 = vmor %vm7283, %vm7369
    %vm7444 = vmor %vm7284, %vm7370
    %vm7445 = vmor %vm7285, %vm7371
    %vm7446 = vmor %vm7286, %vm7372
    %vm7447 = vmor %vm7287, %vm7373
    %vm7448 = vmor %vm7288, %vm7374
    %vm7449 = vmor %vm7289, %vm7375
    %vm7450 = vmor %vm7290, %vm7376
    %vm7451 = vmor %vm7291, %vm7377
    %vm7452 = vmor %vm7292, %vm7378
    %vm7453 = vmor %vm7293, %vm7379
    %vm7454 = vmor %vm7294, %vm7380
    %vm7455 = vmor %vm7295, %vm7381
    %vm7456 = vmor %vm7296, %vm7382
    %vm7457 = vmor %vm7297, %vm7383
    %vm7458 = vmor %vm7298, %vm7384
    %vm7459 = vmor %vm7299, %vm7385
    %v7460 = vsel %vm7386, 1, 0
    %v7461 = vsel %vm7387, 1, 0
    %v7462 = vsel %vm7388, 1, 0
    %v7463 = vsel %vm7389, 1, 0
    %v7464 = vsel %vm7390, 1, 0
    %v7465 = vsel %vm7391, 1, 0
    %v7466 = vsel %vm7392, 1, 0
    %v7467 = vsel %vm7393, 1, 0
    %v7468 = vsel %vm7394, 1, 0
    %v7469 = vsel %vm7395, 1, 0
    %v7470 = vsel %vm7396, 1, 0
    %v7471 = vsel %vm7397, 1, 0
    %v7472 = vsel %vm7398, 1, 0
    %v7473 = vsel %vm7399, 1, 0
    %v7474 = vsel %vm7400, 1, 0
    %v7475 = vsel %vm7401, 1, 0
    %v7476 = vsel %vm7402, 1, 0
    %v7477 = vsel %vm7403, 1, 0
    %v7478 = vsel %vm7404, 1, 0
    %v7479 = vsel %vm7405, 1, 0
    %v7480 = vsel %vm7406, 1, 0
    %v7481 = vsel %vm7407, 1, 0
    %v7482 = vsel %vm7408, 1, 0
    %v7483 = vsel %vm7409, 1, 0
    %v7484 = vsel %vm7410, 1, 0
    %v7485 = vsel %vm7411, 1, 0
    %v7486 = vsel %vm7412, 1, 0
    %v7487 = vsel %vm7413, 1, 0
    %v7488 = vsel %vm7414, 1, 0
    %v7489 = vsel %vm7415, 1, 0
    %v7490 = vsel %vm7416, 1, 0
    %v7491 = vsel %vm7417, 1, 0
    %v7492 = vsel %vm7418, 1, 0
    %v7493 = vsel %vm7419, 1, 0
    %v7494 = vsel %vm7420, 1, 0
    %v7495 = vsel %vm7421, 1, 0
    %v7496 = vsel %vm7422, 1, 0
    %v7497 = vsel %vm7423, 1, 0
    %v7498 = vsel %vm7424, 1, 0
    %v7499 = vsel %vm7425, 1, 0
    %v7500 = vsel %vm7426, 1, 0
    %v7501 = vsel %vm7427, 1, 0
    %v7502 = vsel %vm7428, 1, 0
    %v7503 = vsel %vm7429, 1, 0
    %v7504 = vsel %vm7430, 1, 0
    %v7505 = vsel %vm7431, 1, 0
    %v7506 = vsel %vm7432, 1, 0
    %v7507 = vsel %vm7433, 1, 0
    %v7508 = vsel %vm7434, 1, 0
    %v7509 = vsel %vm7435, 1, 0
    %v7510 = vsel %vm7436, 1, 0
    %v7511 = vsel %vm7437, 1, 0
    %v7512 = vsel %vm7438, 1, 0
    %v7513 = vsel %vm7439, 1, 0
    %v7514 = vsel %vm7440, 1, 0
    %v7515 = vsel %vm7441, 1, 0
    %v7516 = vsel %vm7442, 1, 0
    %v7517 = vsel %vm7443, 1, 0
    %v7518 = vsel %vm7444, 1, 0
    %v7519 = vsel %vm7445, 1, 0
    %v7520 = vsel %vm7446, 1, 0
    %v7521 = vsel %vm7447, 1, 0
    %v7522 = vsel %vm7448, 1, 0
    %v7523 = vsel %vm7449, 1, 0
    %v7524 = vsel %vm7450, 1, 0
    %v7525 = vsel %vm7451, 1, 0
    %v7526 = vsel %vm7452, 1, 0
    %v7527 = vsel %vm7453, 1, 0
    %v7528 = vsel %vm7454, 1, 0
    %v7529 = vsel %vm7455, 1, 0
    %v7530 = vsel %vm7456, 1, 0
    %v7531 = vsel %vm7457, 1, 0
    %v7532 = vsel %vm7458, 1, 0
    %v7533 = vsel %vm7459, 1, 0
    %v7534 = vcvt.s32.f32 %v7460
    %v7535 = vcvt.s32.f32 %v7461
    %v7536 = vcvt.s32.f32 %v7462
    %v7537 = vcvt.s32.f32 %v7463
    %v7538 = vcvt.s32.f32 %v7464
    %v7539 = vcvt.s32.f32 %v7465
    %v7540 = vcvt.s32.f32 %v7466
    %v7541 = vcvt.s32.f32 %v7467
    %v7542 = vcvt.s32.f32 %v7468
    %v7543 = vcvt.s32.f32 %v7469
    %v7544 = vcvt.s32.f32 %v7470
    %v7545 = vcvt.s32.f32 %v7471
    %v7546 = vcvt.s32.f32 %v7472
    %v7547 = vcvt.s32.f32 %v7473
    %v7548 = vcvt.s32.f32 %v7474
    %v7549 = vcvt.s32.f32 %v7475
    %v7550 = vcvt.s32.f32 %v7476
    %v7551 = vcvt.s32.f32 %v7477
    %v7552 = vcvt.s32.f32 %v7478
    %v7553 = vcvt.s32.f32 %v7479
    %v7554 = vcvt.s32.f32 %v7480
    %v7555 = vcvt.s32.f32 %v7481
    %v7556 = vcvt.s32.f32 %v7482
    %v7557 = vcvt.s32.f32 %v7483
    %v7558 = vcvt.s32.f32 %v7484
    %v7559 = vcvt.s32.f32 %v7485
    %v7560 = vcvt.s32.f32 %v7486
    %v7561 = vcvt.s32.f32 %v7487
    %v7562 = vcvt.s32.f32 %v7488
    %v7563 = vcvt.s32.f32 %v7489
    %v7564 = vcvt.s32.f32 %v7490
    %v7565 = vcvt.s32.f32 %v7491
    %v7566 = vcvt.s32.f32 %v7492
    %v7567 = vcvt.s32.f32 %v7493
    %v7568 = vcvt.s32.f32 %v7494
    %v7569 = vcvt.s32.f32 %v7495
    %v7570 = vcvt.s32.f32 %v7496
    %v7571 = vcvt.s32.f32 %v7497
    %v7572 = vcvt.s32.f32 %v7498
    %v7573 = vcvt.s32.f32 %v7499
    %v7574 = vcvt.s32.f32 %v7500
    %v7575 = vcvt.s32.f32 %v7501
    %v7576 = vcvt.s32.f32 %v7502
    %v7577 = vcvt.s32.f32 %v7503
    %v7578 = vcvt.s32.f32 %v7504
    %v7579 = vcvt.s32.f32 %v7505
    %v7580 = vcvt.s32.f32 %v7506
    %v7581 = vcvt.s32.f32 %v7507
    %v7582 = vcvt.s32.f32 %v7508
    %v7583 = vcvt.s32.f32 %v7509
    %v7584 = vcvt.s32.f32 %v7510
    %v7585 = vcvt.s32.f32 %v7511
    %v7586 = vcvt.s32.f32 %v7512
    %v7587 = vcvt.s32.f32 %v7513
    %v7588 = vcvt.s32.f32 %v7514
    %v7589 = vcvt.s32.f32 %v7515
    %v7590 = vcvt.s32.f32 %v7516
    %v7591 = vcvt.s32.f32 %v7517
    %v7592 = vcvt.s32.f32 %v7518
    %v7593 = vcvt.s32.f32 %v7519
    %v7594 = vcvt.s32.f32 %v7520
    %v7595 = vcvt.s32.f32 %v7521
    %v7596 = vcvt.s32.f32 %v7522
    %v7597 = vcvt.s32.f32 %v7523
    %v7598 = vcvt.s32.f32 %v7524
    %v7599 = vcvt.s32.f32 %v7525
    %v7600 = vcvt.s32.f32 %v7526
    %v7601 = vcvt.s32.f32 %v7527
    %v7602 = vcvt.s32.f32 %v7528
    %v7603 = vcvt.s32.f32 %v7529
    %v7604 = vcvt.s32.f32 %v7530
    %v7605 = vcvt.s32.f32 %v7531
    %v7606 = vcvt.s32.f32 %v7532
    %v7607 = vcvt.s32.f32 %v7533
    %v7609 = vsel %vm7179, %v7211, 0
    %7611 = vmatprep.subr.mxu0 %v6841
    %7612 = vmatpush1.msra.mxu0 %v5496
    %7613 = vmatprep.subr.mxu0 %v6842
    %7614 = vmatpush1.msra.mxu0 %v5497
    %7615 = vmatprep.subr.mxu0 %v6843
    %7616 = vmatpush1.msra.mxu0 %v5498
    %7617 = vmatprep.subr.mxu0 %v6844
    %7618 = vmatpush1.msra.mxu0 %v6318
    %7619 = vmatprep.subr.mxu0 %v6845
    %7620 = vmatpush1.msra.mxu0 %v6319
    %7621 = vmatprep.subr.mxu0 %v6846
    %7622 = vmatpush1.msra.mxu0 %v6320
    %7623 = vmatprep.subr.mxu0 %v6848
    %7624 = vmatpush1.msra.mxu0 %v6847
    %7625 = vmatprep.subr.mxu0 %v6850
    %7626 = vmatpush1.msra.mxu0 %v6849
    %7627 = vmatprep.subr.mxu0 %v6852
    %7628 = vmatpush1.msra.mxu0 %v6851
    %7629 = vmatprep.subr.mxu0 %v6854
    %7630 = vmatpush1.msra.mxu0 %v6853
    %7631 = vmatprep.subr.mxu0 %v6856
    %7632 = vmatpush1.msra.mxu0 %v6855
    %7633 = vmatprep.subr.mxu0 %v6858
    %7634 = vmatpush1.msra.mxu0 %v6857
    %7635 = vmatprep.subr.mxu0 %v6860
    %7636 = vmatpush1.msra.mxu0 %v6859
    %7637 = vmatprep.subr.mxu0 %v7561
    %7638 = vmatpush1.msra.mxu0 %v7560
    %7639 = vmatprep.subr.mxu0 %v7565
    %7640 = vmatpush1.msra.mxu0 %v7564
    %7641 = vmatprep.subr.mxu0 %v7569
    %7642 = vmatpush1.msra.mxu0 %v7568
    %7643 = vmatprep.subr.mxu0 %v7573
    %7644 = vmatpush1.msra.mxu0 %v7572
    %7645 = vmatprep.subr.mxu0 %v7577
    %7646 = vmatpush1.msra.mxu0 %v7576
    %7647 = vmatprep.subr.mxu0 %v7581
    %7648 = vmatpush1.msra.mxu0 %v7580
    %7649 = vmatprep.subr.mxu0 %v7585
    %7650 = vmatpush1.msra.mxu0 %v7584
    %7651 = vmatprep.subr.mxu0 %v7589
    %7652 = vmatpush1.msra.mxu0 %v7588
    %7653 = vmatprep.subr.mxu0 %v7593
    %7654 = vmatpush1.msra.mxu0 %v7592
    %7655 = vmatprep.subr.mxu0 %v7597
    %7656 = vmatpush1.msra.mxu0 %v7596
    %7657 = vmatprep.subr.mxu0 %v7601
    %7658 = vmatpush1.msra.mxu0 %v7600
    %7659 = vmatprep.subr.mxu0 %v7605
    %7660 = vmatpush1.msra.mxu0 %v7604
    %7661 = vmatprep.subr.mxu0 0.0
    %7662 = vmatpush1.msra.mxu0 0.0
    %7663 = vmatprep.subr.mxu0 0.0
    %7664 = vmatpush1.msra.mxu0 0.0
    %7665 = vmatprep.subr.mxu0 0.0
    %7666 = vmatpush1.msra.mxu0 0.0
    %7667 = vmatprep.subr.mxu0 0.0
    %7668 = vmatpush1.msra.mxu0 0.0
    %7669 = vmatprep.subr.mxu0 0.0
    %7670 = vmatpush1.msra.mxu0 0.0
    %7671 = vmatprep.subr.mxu0 0.0
    %7672 = vmatpush1.msra.mxu0 0.0
    %7673 = vmatprep.subr.mxu0 0.0
    %7674 = vmatpush1.msra.mxu0 0.0
    %7675 = vmatprep.mubr.f32.mxu0 %v7609
    %7676 = vmatmul.mubr.f32.gmra.mrb[0].mxu0 %v7210
    %v7677 = vpop.f32.mrb[0].mxu0
    %v7678 = vadd.f32 0.0, %v7677
    %v7679 = vpop.f32.mrb[0].mxu0
    %v7680 = vadd.f32 0.0, %v7679
    %7681 = vdwg.mxu0
    %7682 = vmatprep.subr.mxu0 %v7535
    %7683 = vmatpush1.msra.mxu0 %v7534
    %7684 = vmatprep.subr.mxu0 %v7537
    %7685 = vmatpush1.msra.mxu0 %v7536
    %7686 = vmatprep.subr.mxu0 %v7539
    %7687 = vmatpush1.msra.mxu0 %v7538
    %7688 = vmatprep.subr.mxu0 %v7541
    %7689 = vmatpush1.msra.mxu0 %v7540
    %7690 = vmatprep.subr.mxu0 %v7543
    %7691 = vmatpush1.msra.mxu0 %v7542
    %7692 = vmatprep.subr.mxu0 %v7545
    %7693 = vmatpush1.msra.mxu0 %v7544
    %7694 = vmatprep.subr.mxu0 %v7547
    %7695 = vmatpush1.msra.mxu0 %v7546
    %7696 = vmatprep.subr.mxu0 %v7549
    %7697 = vmatpush1.msra.mxu0 %v7548
    %7698 = vmatprep.subr.mxu0 %v7551
    %7699 = vmatpush1.msra.mxu0 %v7550
    %7700 = vmatprep.subr.mxu0 %v7553
    %7701 = vmatpush1.msra.mxu0 %v7552
    %7702 = vmatprep.subr.mxu0 %v7555
    %7703 = vmatpush1.msra.mxu0 %v7554
    %7704 = vmatprep.subr.mxu0 %v7557
    %7705 = vmatpush1.msra.mxu0 %v7556
    %7706 = vmatprep.subr.mxu0 %v7559
    %7707 = vmatpush1.msra.mxu0 %v7558
    %7708 = vmatprep.subr.mxu0 %v7563
    %7709 = vmatpush1.msra.mxu0 %v7562
    %7710 = vmatprep.subr.mxu0 %v7567
    %7711 = vmatpush1.msra.mxu0 %v7566
    %7712 = vmatprep.subr.mxu0 %v7571
    %7713 = vmatpush1.msra.mxu0 %v7570
    %7714 = vmatprep.subr.mxu0 %v7575
    %7715 = vmatpush1.msra.mxu0 %v7574
    %7716 = vmatprep.subr.mxu0 %v7579
    %7717 = vmatpush1.msra.mxu0 %v7578
    %7718 = vmatprep.subr.mxu0 %v7583
    %7719 = vmatpush1.msra.mxu0 %v7582
    %7720 = vmatprep.subr.mxu0 %v7587
    %7721 = vmatpush1.msra.mxu0 %v7586
    %7722 = vmatprep.subr.mxu0 %v7591
    %7723 = vmatpush1.msra.mxu0 %v7590
    %7724 = vmatprep.subr.mxu0 %v7595
    %7725 = vmatpush1.msra.mxu0 %v7594
    %7726 = vmatprep.subr.mxu0 %v7599
    %7727 = vmatpush1.msra.mxu0 %v7598
    %7728 = vmatprep.subr.mxu0 %v7603
    %7729 = vmatpush1.msra.mxu0 %v7602
    %7730 = vmatprep.subr.mxu0 %v7607
    %7731 = vmatpush1.msra.mxu0 %v7606
    %7732 = vmatprep.subr.mxu0 0.0
    %7733 = vmatpush1.msra.mxu0 0.0
    %7734 = vmatprep.subr.mxu0 0.0
    %7735 = vmatpush1.msra.mxu0 0.0
    %7736 = vmatprep.subr.mxu0 0.0
    %7737 = vmatpush1.msra.mxu0 0.0
    %7738 = vmatprep.subr.mxu0 0.0
    %7739 = vmatpush1.msra.mxu0 0.0
    %7740 = vmatprep.subr.mxu0 0.0
    %7741 = vmatpush1.msra.mxu0 0.0
    %7742 = vmatprep.subr.mxu0 0.0
    %7743 = vmatpush1.msra.mxu0 0.0
    %7744 = vmatprep.subr.mxu0 0.0
    %7745 = vmatpush1.msra.mxu0 0.0
    %7746 = vmatprep.mubr.f32.mxu0 %v7609
    %7747 = vmatmul.mubr.f32.gmra.mrb[0].mxu0 %v7210
    %v7748 = vpop.f32.mrb[0].mxu0
    %v7749 = vadd.f32 0.0, %v7748
    %v7750 = vpop.f32.mrb[0].mxu0
    %v7751 = vadd.f32 0.0, %v7750
    %7752 = vdwg.mxu0
    %v7753 = vld [vmem:[#allocation44] sm:$0x1]
    %7756 = vrot.lane.b32.xlu0 %v7678, 2
    %v7757 = vpop.permute.xlu0 %7756
    %7758 = vrot.lane.b32.xlu0 %v7680, 2
    %v7759 = vpop.permute.xlu0 %7758
    %v7760 = vsel %vm516, %v7757, %v7759
    %7765 = vrot.lane.b32.xlu0 %v7680, 6
    %v7766 = vpop.permute.xlu0 %7765
    %7767 = vrot.lane.b32.xlu0 %v7749, 6
    %v7768 = vpop.permute.xlu0 %7767
    %7769 = vrot.lane.b32.xlu0 %v7751, 6
    %v7770 = vpop.permute.xlu0 %7769
    %v7771 = vsel %vm521, %v7766, %v7768
    %v7772 = vsel %vm521, %v7768, %v7770
    %v7775 = vsel %vm516, 0.0, %v7757
    %vm7776 = vcmask 605184
    %v7777 = vsel %vm7776, %v7760, 0.0
    %vm7778 = vcmask 621568
    %v7779 = vsel %vm7778, %v7777, 0.0
    %v7780 = vsel %vm6986, %v7779, %v7766
    %vm7781 = vcmask 179200
    %v7782 = vsel %vm7781, %v7772, 0.0
    %7785 = vrot.lane.b32.xlu0 %v7780, 124
    %v7786 = vpop.permute.xlu0 %7785
    %7787 = vrot.lane.b32.xlu0 %v7771, 124
    %v7788 = vpop.permute.xlu0 %7787
    %7789 = vrot.lane.b32.xlu0 %v7782, 124
    %v7790 = vpop.permute.xlu0 %7789
    %v7791 = vsel %vm530, %v7786, %v7788
    %v7792 = vsel %vm530, %v7788, %v7790
    %v7796 = vsel %vm7179, %v7780, %v7791
    %7798 = vrot.lane.b32.xlu0 %v7775, 127
    %v7799 = vpop.permute.xlu0 %7798
    %7800 = vrot.lane.b32.xlu0 %v7780, 127
    %v7801 = vpop.permute.xlu0 %7800
    %v7802 = vsel %vm538, %v7799, %v7801
    %7805 = vrot.lane.b32.xlu0 %v7780, 123
    %v7806 = vpop.permute.xlu0 %7805
    %7807 = vrot.lane.b32.xlu0 %v7771, 123
    %v7808 = vpop.permute.xlu0 %7807
    %7809 = vrot.lane.b32.xlu0 %v7782, 123
    %v7810 = vpop.permute.xlu0 %7809
    %v7811 = vsel %vm544, %v7806, %v7808
    %v7812 = vsel %vm544, %v7808, %v7810
    %v7816 = vsel %vm7179, %v7801, %v7811
    %7817 = vrot.lane.b32.xlu0 %v7775, 126
    %v7818 = vpop.permute.xlu0 %7817
    %7819 = vrot.lane.b32.xlu0 %v7780, 126
    %v7820 = vpop.permute.xlu0 %7819
    %v7821 = vsel %vm550, %v7818, %v7820
    %7824 = vrot.lane.b32.xlu0 %v7780, 122
    %v7825 = vpop.permute.xlu0 %7824
    %7826 = vrot.lane.b32.xlu0 %v7771, 122
    %v7827 = vpop.permute.xlu0 %7826
    %7828 = vrot.lane.b32.xlu0 %v7782, 122
    %v7829 = vpop.permute.xlu0 %7828
    %v7830 = vsel %vm556, %v7825, %v7827
    %v7831 = vsel %vm556, %v7827, %v7829
    %v7835 = vsel %vm7179, %v7820, %v7830
    %7836 = vrot.lane.b32.xlu0 %v7775, 125
    %v7837 = vpop.permute.xlu0 %7836
    %7838 = vrot.lane.b32.xlu0 %v7780, 125
    %v7839 = vpop.permute.xlu0 %7838
    %v7840 = vsel %vm562, %v7837, %v7839
    %7843 = vrot.lane.b32.xlu0 %v7780, 121
    %v7844 = vpop.permute.xlu0 %7843
    %7845 = vrot.lane.b32.xlu0 %v7771, 121
    %v7846 = vpop.permute.xlu0 %7845
    %7847 = vrot.lane.b32.xlu0 %v7782, 121
    %v7848 = vpop.permute.xlu0 %7847
    %v7849 = vsel %vm568, %v7844, %v7846
    %v7850 = vsel %vm568, %v7846, %v7848
    %v7854 = vsel %vm7179, %v7839, %v7849
    %7855 = vrot.lane.b32.xlu0 %v7775, 124
    %v7856 = vpop.permute.xlu0 %7855
    %v7857 = vsel %vm530, %v7856, %v7786
    %7860 = vrot.lane.b32.xlu0 %v7780, 120
    %v7861 = vpop.permute.xlu0 %7860
    %7862 = vrot.lane.b32.xlu0 %v7771, 120
    %v7863 = vpop.permute.xlu0 %7862
    %7864 = vrot.lane.b32.xlu0 %v7782, 120
    %v7865 = vpop.permute.xlu0 %7864
    %v7866 = vsel %vm577, %v7861, %v7863
    %v7867 = vsel %vm577, %v7863, %v7865
    %v7871 = vsel %vm7179, %v7786, %v7866
    %v7872 = vld [vmem:[#allocation2] sm:$0x1]
    %7874 = vset.pattern.permute.xlu0 0
    %7875 = vperm.xlu0 %7874, %v7872
    %v7876 = vpop.permute.xlu0 %7875
    %v7878 = vlaneseq
    %v7879 = vshrl.u32 %v7878, 7
    %v7880 = vsub.s32 0, %v7879
    %v7881 = vrot.slane %v7876, %v7880
    %v7883 = vsel %vm1355, %v7753, 0
    %7885 = vmatprep.subr.mxu0 %v7796
    %7886 = vmatpush1.msra.mxu0 %v7775
    %7887 = vmatprep.subr.mxu0 %v7816
    %7888 = vmatpush1.msra.mxu0 %v7802
    %7889 = vmatprep.subr.mxu0 %v7835
    %7890 = vmatpush1.msra.mxu0 %v7821
    %7891 = vmatprep.subr.mxu0 %v7854
    %7892 = vmatpush1.msra.mxu0 %v7840
    %7893 = vmatprep.subr.mxu0 %v7871
    %7894 = vmatpush1.msra.mxu0 %v7857
    %7895 = vmatprep.subr.mxu0 0.0
    %7896 = vmatpush1.msra.mxu0 0.0
    %7897 = vmatprep.subr.mxu0 0.0
    %7898 = vmatpush1.msra.mxu0 0.0
    %7899 = vmatprep.subr.mxu0 0.0
    %7900 = vmatpush1.msra.mxu0 0.0
    %7901 = vmatprep.subr.mxu0 0.0
    %7902 = vmatpush1.msra.mxu0 0.0
    %7903 = vmatprep.subr.mxu0 0.0
    %7904 = vmatpush1.msra.mxu0 0.0
    %7905 = vmatprep.subr.mxu0 0.0
    %7906 = vmatpush1.msra.mxu0 0.0
    %7907 = vmatprep.subr.mxu0 0.0
    %7908 = vmatpush1.msra.mxu0 0.0
    %7909 = vmatprep.subr.mxu0 0.0
    %7910 = vmatpush1.msra.mxu0 0.0
    %7911 = vmatprep.subr.mxu0 0.0
    %7912 = vmatpush1.msra.mxu0 0.0
    %7913 = vmatprep.subr.mxu0 0.0
    %7914 = vmatpush1.msra.mxu0 0.0
    %7915 = vmatprep.subr.mxu0 0.0
    %7916 = vmatpush1.msra.mxu0 0.0
    %7917 = vmatprep.subr.mxu0 0.0
    %7918 = vmatpush1.msra.mxu0 0.0
    %7919 = vmatprep.subr.mxu0 0.0
    %7920 = vmatpush1.msra.mxu0 0.0
    %7921 = vmatprep.subr.mxu0 0.0
    %7922 = vmatpush1.msra.mxu0 0.0
    %7923 = vmatprep.subr.mxu0 0.0
    %7924 = vmatpush1.msra.mxu0 0.0
    %7925 = vmatprep.subr.mxu0 0.0
    %7926 = vmatpush1.msra.mxu0 0.0
    %7927 = vmatprep.subr.mxu0 0.0
    %7928 = vmatpush1.msra.mxu0 0.0
    %7929 = vmatprep.subr.mxu0 0.0
    %7930 = vmatpush1.msra.mxu0 0.0
    %7931 = vmatprep.subr.mxu0 0.0
    %7932 = vmatpush1.msra.mxu0 0.0
    %7933 = vmatprep.subr.mxu0 0.0
    %7934 = vmatpush1.msra.mxu0 0.0
    %7935 = vmatprep.subr.mxu0 0.0
    %7936 = vmatpush1.msra.mxu0 0.0
    %7937 = vmatprep.subr.mxu0 0.0
    %7938 = vmatpush1.msra.mxu0 0.0
    %7939 = vmatprep.subr.mxu0 0.0
    %7940 = vmatpush1.msra.mxu0 0.0
    %7941 = vmatprep.subr.mxu0 0.0
    %7942 = vmatpush1.msra.mxu0 0.0
    %7943 = vmatprep.subr.mxu0 0.0
    %7944 = vmatpush1.msra.mxu0 0.0
    %7945 = vmatprep.subr.mxu0 0.0
    %7946 = vmatpush1.msra.mxu0 0.0
    %7947 = vmatprep.subr.mxu0 0.0
    %7948 = vmatpush1.msra.mxu0 0.0
    %7949 = vmatprep.mubr.f32.mxu0 0.0
    %7950 = vmatmul.mubr.f32.gmra.mrb[0].mxu0 %v7883
    %v7951 = vpop.f32.mrb[0].mxu0
    %v7952 = vadd.f32 %v7881, %v7951
    %v7953 = vpop.f32.mrb[0].mxu0
    %v7954 = vadd.f32 %v7881, %v7953
    %7955 = vdwg.mxu0
    %7956 = vmatprep.subr.mxu0 %v7790
    %7957 = vmatpush1.msra.mxu0 %v7792
    %7958 = vmatprep.subr.mxu0 %v7810
    %7959 = vmatpush1.msra.mxu0 %v7812
    %7960 = vmatprep.subr.mxu0 %v7829
    %7961 = vmatpush1.msra.mxu0 %v7831
    %7962 = vmatprep.subr.mxu0 %v7848
    %7963 = vmatpush1.msra.mxu0 %v7850
    %7964 = vmatprep.subr.mxu0 %v7865
    %7965 = vmatpush1.msra.mxu0 %v7867
    %7966 = vmatprep.subr.mxu0 0.0
    %7967 = vmatpush1.msra.mxu0 0.0
    %7968 = vmatprep.subr.mxu0 0.0
    %7969 = vmatpush1.msra.mxu0 0.0
    %7970 = vmatprep.subr.mxu0 0.0
    %7971 = vmatpush1.msra.mxu0 0.0
    %7972 = vmatprep.subr.mxu0 0.0
    %7973 = vmatpush1.msra.mxu0 0.0
    %7974 = vmatprep.subr.mxu0 0.0
    %7975 = vmatpush1.msra.mxu0 0.0
    %7976 = vmatprep.subr.mxu0 0.0
    %7977 = vmatpush1.msra.mxu0 0.0
    %7978 = vmatprep.subr.mxu0 0.0
    %7979 = vmatpush1.msra.mxu0 0.0
    %7980 = vmatprep.subr.mxu0 0.0
    %7981 = vmatpush1.msra.mxu0 0.0
    %7982 = vmatprep.subr.mxu0 0.0
    %7983 = vmatpush1.msra.mxu0 0.0
    %7984 = vmatprep.subr.mxu0 0.0
    %7985 = vmatpush1.msra.mxu0 0.0
    %7986 = vmatprep.subr.mxu0 0.0
    %7987 = vmatpush1.msra.mxu0 0.0
    %7988 = vmatprep.subr.mxu0 0.0
    %7989 = vmatpush1.msra.mxu0 0.0
    %7990 = vmatprep.subr.mxu0 0.0
    %7991 = vmatpush1.msra.mxu0 0.0
    %7992 = vmatprep.subr.mxu0 0.0
    %7993 = vmatpush1.msra.mxu0 0.0
    %7994 = vmatprep.subr.mxu0 0.0
    %7995 = vmatpush1.msra.mxu0 0.0
    %7996 = vmatprep.subr.mxu0 0.0
    %7997 = vmatpush1.msra.mxu0 0.0
    %7998 = vmatprep.subr.mxu0 0.0
    %7999 = vmatpush1.msra.mxu0 0.0
    %8000 = vmatprep.subr.mxu0 0.0
    %8001 = vmatpush1.msra.mxu0 0.0
    %8002 = vmatprep.subr.mxu0 0.0
    %8003 = vmatpush1.msra.mxu0 0.0
    %8004 = vmatprep.subr.mxu0 0.0
    %8005 = vmatpush1.msra.mxu0 0.0
    %8006 = vmatprep.subr.mxu0 0.0
    %8007 = vmatpush1.msra.mxu0 0.0
    %8008 = vmatprep.subr.mxu0 0.0
    %8009 = vmatpush1.msra.mxu0 0.0
    %8010 = vmatprep.subr.mxu0 0.0
    %8011 = vmatpush1.msra.mxu0 0.0
    %8012 = vmatprep.subr.mxu0 0.0
    %8013 = vmatpush1.msra.mxu0 0.0
    %8014 = vmatprep.subr.mxu0 0.0
    %8015 = vmatpush1.msra.mxu0 0.0
    %8016 = vmatprep.subr.mxu0 0.0
    %8017 = vmatpush1.msra.mxu0 0.0
    %8018 = vmatprep.subr.mxu0 0.0
    %8019 = vmatpush1.msra.mxu0 0.0
    %8020 = vmatprep.mubr.f32.mxu0 0.0
    %8021 = vmatmul.mubr.f32.gmra.mrb[0].mxu0 %v7883
    %v8022 = vpop.f32.mrb[0].mxu0
    %v8023 = vadd.f32 %v7881, %v8022
    %v8024 = vpop.f32.mrb[0].mxu0
    %v8025 = vadd.f32 %v7881, %v8024
    %8026 = vdwg.mxu0
    %v8029 = vcombine.low %v7952, %v7954
    %v8031 = vunpack.c.l.s4 1966171168
    %v8032 = vunpack.c.0.s8 %v8031
    %v8033 = vlaneseq
    %v8034 = vshrl.u32 %v8033, 7
    %v8035 = vsub.s32 %v8032, %v8034
    %v8036 = vrot.slane %v8029, %v8035
    %v8038 = vunpack.c.l.s4 1966171168
    %v8039 = vunpack.c.0.s8 %v8038
    %v8040 = vlaneseq
    %v8041 = vshrl.u32 %v8040, 7
    %v8042 = vsub.s32 %v8039, %v8041
    %v8043 = vrot.slane %v8036, %v8042
    %v8045 = vlaneseq
    %vm8046 = vcmp.ge.s32.totalorder %v8045, 0
    %vm8047 = vcmp.lt.s32.totalorder %v8045, 200
    %vm8048 = vmand %vm8046, %vm8047
    %8049 = vst.msk [vmem:[#allocation45] sm:$0x3] %vm8048, %v8043
    %v8052 = vcombine.low %v7954, %v8023
    %v8054 = vunpack.c.l.s4 1966171168
    %v8055 = vunpack.c.0.s8 %v8054
    %v8056 = vlaneseq
    %v8057 = vshrl.u32 %v8056, 7
    %v8058 = vsub.s32 %v8055, %v8057
    %v8059 = vrot.slane %v8052, %v8058
    %v8061 = vunpack.c.l.s4 1966171168
    %v8062 = vunpack.c.0.s8 %v8061
    %v8063 = vlaneseq
    %v8064 = vshrl.u32 %v8063, 7
    %v8065 = vsub.s32 %v8062, %v8064
    %v8066 = vrot.slane %v8025, %v8065
    %v8067 = vcombine.low %v8059, %v8066
    %v8069 = vunpack.c.l.s4 1966171168
    %v8070 = vunpack.c.0.s8 %v8069
    %v8071 = vlaneseq
    %v8072 = vshrl.u32 %v8071, 7
    %v8073 = vsub.s32 %v8070, %v8072
    %v8074 = vrot.slane %v8067, %v8073
    %8075 = vrot.lane.b32.xlu0 %v8074, 56
    %v8076 = vpop.permute.xlu0 %8075
    %v8077 = vrot.slane %v8076, 1
    %vm8078 = vcmask 457728
    %v8079 = vsel %vm8078, %v8076, %v8077
    %s8081 = scalar_lea.vmem [#allocation45], 2
    %8082 = vst.msk [vmem:[%s8081] sm:$0x3] %vm8048, %v8079
    // Predicated region
    $region242: #{_lambda_.1} parent=1 // pred_check
      _
    $region243: #{_lambda_.1} parent=1 // pred_check_branch
      %8084 = sbr.rel (0) target = $region245
    $region244: #{_lambda_.1} parent=1 // pred_region
      %s8086 = ssub.s32 64, 64
      %8087 = vsyncadd [#allocation5], %s8086
      %s8088 = sshll.u32 [#allocation45], 4
      %s8089 = int_to_ptr.vmem [resolvable:$true] %s8088
      %8094 = dma.vmem_to_hbm [thread:$0]  %s8089, 64, %s67, [#allocation5], 32, 32, 2
    $region245: #{_lambda_.1} parent=1 // pred_fallthru
      _
    // Predicated region
    $region246: #{_lambda_.1} parent=1 // pred_check
      _
    $region247: #{_lambda_.1} parent=1 // pred_check_branch
      %8096 = sbr.rel (0) target = $region249
    $region248: #{_lambda_.1} parent=1 // pred_region
      %s8098 = ssub.s32 32, 32
      %8099 = vsyncadd [#allocation47], %s8098
      %s8101 = sshll.u32 [#allocation46], 4
      %s8102 = int_to_ptr.vmem [resolvable:$true] %s8101
      %8104 = dma.vmem_to_hbm [thread:$0]  %s8102, 32, %s69, [#allocation47]
    $region249: #{_lambda_.1} parent=1 // pred_fallthru
      _
    // Predicated region
    $region250: #{_lambda_.1} parent=1 // pred_check
      _
    $region251: #{_lambda_.1} parent=1 // pred_check_branch
      %8106 = sbr.rel (0) target = $region253
    $region252: #{_lambda_.1} parent=1 // pred_region
      %8107 = dma.done [#allocation5], 64
    $region253: #{_lambda_.1} parent=1 // pred_fallthru
      _
    // Predicated region
    $region254: #{_lambda_.1} parent=1 // pred_check
      _
    $region255: #{_lambda_.1} parent=1 // pred_check_branch
      %8109 = sbr.rel (0) target = $region257
    $region256: #{_lambda_.1} parent=1 // pred_region
      %8110 = dma.done [#allocation47], 32
    $region257: #{_lambda_.1} parent=1 // pred_fallthru
      _
    %8111 = vsyncpa [#allocation4], 1
    %8112 = vsyncpa [#allocation7], 1
    %8113 = vsyncpa [#allocation10], 1
    %8114 = vsyncpa [#allocation13], 1
    %8115 = vsyncpa [#allocation16], 1
    %8116 = vsyncpa [#allocation19], 1
    %8117 = vsyncpa [#allocation22], 1
    %8118 = vsyncpa [#allocation25], 1
    %8119 = vsyncpa [#allocation28], 1
    %8120 = vsyncpa [#allocation31], 1
    %8121 = vsyncpa [#allocation34], 1
    %8122 = vsyncpa [#allocation37], 1
    %8123 = vsyncpa [#allocation40], 1
    %8124 = vsyncpa [#allocation43], 1
    %8125 = vsyncpa [#allocation5], 1
    %8126 = vsyncpa [#allocation47], 1

</llo_original>
